<compile_context>
chip_gen: v7x
topology: tpu7x:2x2x1
jax: 0.10.0
libtpu: 0.0.40
codegen_flags: <defaults>
</compile_context>

<pallas_src>
import jax
import jax.numpy as jnp
from jax.experimental import pallas as pl
from jax.experimental.pallas import tpu as pltpu


def _sigmoid(y):
    # exp goes to the EUP; exact divide keeps stacked-layer error at f32 level.
    return 1.0 / (1.0 + jnp.exp(-y))


def _round_up(x, m):
    return (x + m - 1) // m * m


def _resident(arr):
    """Full-array block with a constant index_map -> stays resident in VMEM."""
    zeros = (0,) * arr.ndim
    return pl.BlockSpec(arr.shape, lambda i, _z=zeros: _z)


def _lenet_kernel(x_ref, w1_ref, b1_ref, pw1_ref,
                  w2_ref, b2_ref, pw2_ref,
                  u1_ref, bfc1_ref, wfc2_ref, bfc2_ref, wfc3_ref, bfc3_ref,
                  out_ref, s1_ref, s2_ref, h_ref):
    """One grid step == one tile of B samples.

    Activation slabs (f32, VMEM values / scratch), channels minor on lanes:
      conv1 : (B*32, 28*6)  rows r=0..27 of every 32-row block are valid
      pool1 : (B*16, 14*6)  rows q=0..13 valid
      conv2 : (B*16, 10*16) rows s=0..9  valid
      pool2 : (B*8,  5*16)  rows t=0..4  valid
      fc1   : (B*8,  120)   row 0 of every 8-row block is that sample
    Garbage rows are finite and never feed a valid row; they are dropped by
    the strided extractions.
    """
    f32 = jnp.float32
    nb = out_ref.shape[0]                 # samples in this tile

    # ---- conv1 (1->6, k=5; input pre-padded to 32x32) + sigmoid -------------
    x = x_ref[...]                                            # (B*32, 32)
    r1 = x.shape[0]
    a1 = jnp.dot(x, w1_ref[0], preferred_element_type=f32)
    for ki in range(1, 5):
        # roll by (r1 - ki) == shift rows up by ki: row i sees x[i + ki].
        a1 += jnp.dot(pltpu.roll(x, r1 - ki, axis=0), w1_ref[ki],
                      preferred_element_type=f32)
    a1 = _sigmoid(a1 + b1_ref[...])                           # (B*32, 168)

    # ---- pool1 (2x2 avg): lane half as matmul, row half as stride-2 sum -----
    s1_ref[...] = jnp.dot(a1, pw1_ref[...], preferred_element_type=f32)
    p1 = 0.5 * (s1_ref[pl.ds(0, nb * 16, stride=2), :]
                + s1_ref[pl.ds(1, nb * 16, stride=2), :])     # (B*16, 84)

    # ---- conv2 (6->16, k=5) + sigmoid ---------------------------------------
    r2 = nb * 16
    a2 = jnp.dot(p1, w2_ref[0], preferred_element_type=f32)
    for ki in range(1, 5):
        a2 += jnp.dot(pltpu.roll(p1, r2 - ki, axis=0), w2_ref[ki],
                      preferred_element_type=f32)
    a2 = _sigmoid(a2 + b2_ref[...])                           # (B*16, 160)

    # ---- pool2 ---------------------------------------------------------------
    s2_ref[...] = jnp.dot(a2, pw2_ref[...], preferred_element_type=f32)
    p2 = 0.5 * (s2_ref[pl.ds(0, nb * 8, stride=2), :]
                + s2_ref[pl.ds(1, nb * 8, stride=2), :])      # (B*8, 80)

    # ---- fc1 (400->120): torch NCHW flatten folded into u1, fused row-sum ----
    r3 = nb * 8
    h1 = jnp.dot(p2, u1_ref[0], preferred_element_type=f32)
    for t in range(1, 5):
        h1 += jnp.dot(pltpu.roll(p2, r3 - t, axis=0), u1_ref[t],
                      preferred_element_type=f32)
    h_ref[...] = h1                                           # (B*8, 120)
    hb = _sigmoid(h_ref[pl.ds(0, nb, stride=8), :] + bfc1_ref[...])   # (B, 120)

    # ---- fc2 + fc3, dense (B, 10) store --------------------------------------
    h2 = _sigmoid(jnp.dot(hb, wfc2_ref[...], preferred_element_type=f32)
                  + bfc2_ref[...])                            # (B, 84)
    logits = (jnp.dot(h2, wfc3_ref[...], preferred_element_type=f32)
              + bfc3_ref[...])                                # (B, 10)
    out_ref[...] = logits.astype(out_ref.dtype)


def lenet_forward(x, params, *, block_b=64):
    f32 = jnp.float32
    n = x.shape[0]

    # -------- batch tile choice & padding to whole tiles ----------------------
    bb = min(int(block_b), _round_up(n, 8))    # multiple of 8
    n_pad = _round_up(n, bb)
    grid = (n_pad // bb,)

    # conv1 padding=2 pre-applied; samples stacked into one (n_pad*32, 32) slab
    # so a batch tile is a single sublane-contiguous block.
    xp = jnp.pad(x.astype(f32), ((0, n_pad - n), (0, 0), (2, 2), (2, 2)))
    xs = xp.reshape(n_pad * 32, 32)

    # -------- one-time weight preprocessing (tiny, weight-sized XLA) ----------
    # conv1 banded taps: a1[r, :] = sum_ki x[r+ki, :] @ w1b[ki]
    w1t = params["w_conv1"].astype(f32).reshape(6, 5, 5).transpose(1, 2, 0)     # (ki,kj,co)
    shift1 = jnp.stack([jnp.eye(32, 28, k=-kj, dtype=f32) for kj in range(5)])  # (kj,v,w)
    w1b = jnp.einsum("jvw,ijc->ivwc", shift1, w1t).reshape(5, 32, 28 * 6)
    b1row = jnp.tile(params["b_conv1"].astype(f32), 28).reshape(1, 28 * 6)

    # conv2 banded taps acting on the pooled (w*6 + ci) lane layout.
    w2t = params["w_conv2"].astype(f32).transpose(2, 3, 1, 0)                   # (ki,kj,ci,co)
    shift2 = jnp.stack([jnp.eye(14, 10, k=-kj, dtype=f32) for kj in range(5)])  # (kj,w,u)
    w2b = jnp.einsum("jwu,ijcd->iwcud", shift2, w2t).reshape(5, 14 * 6, 10 * 16)
    b2row = jnp.tile(params["b_conv2"].astype(f32), 10).reshape(1, 10 * 16)

    # 2x2 avg pooling, lane (w, channel) half: (W*C) -> (W/2*C).
    half14 = jnp.repeat(jnp.eye(14, dtype=f32), 2, axis=0) * 0.5                # (28, 14)
    pw1 = jnp.einsum("wp,cd->wcpd", half14, jnp.eye(6, dtype=f32)).reshape(168, 84)
    half5 = jnp.repeat(jnp.eye(5, dtype=f32), 2, axis=0) * 0.5                  # (10, 5)
    pw2 = jnp.einsum("up,cd->ucpd", half5, jnp.eye(16, dtype=f32)).reshape(160, 80)

    # fc1 with torch.flatten's (c, h, w) ordering folded in:
    #   h1 = sum_h p2_row[h] @ u1[h], where p2_row lanes are (w*16 + c).
    u1 = (params["w_fc1"].astype(f32).reshape(120, 16, 5, 5)
          .transpose(2, 3, 1, 0).reshape(5, 80, 120))
    bfc1 = params["b_fc1"].astype(f32).reshape(1, 120)
    wfc2 = params["w_fc2"].astype(f32).T                                        # (120, 84)
    bfc2 = params["b_fc2"].astype(f32).reshape(1, 84)
    wfc3 = params["w_fc3"].astype(f32).T                                        # (84, 10)
    bfc3 = params["b_fc3"].astype(f32).reshape(1, 10)

    weights = [w1b, b1row, pw1, w2b, b2row, pw2, u1, bfc1, wfc2, bfc2, wfc3, bfc3]

    in_specs = [pl.BlockSpec((bb * 32, 32), lambda i: (i, 0))]
    in_specs += [_resident(w) for w in weights]

    # Cost estimate for the work actually issued (banded taps, no zero FLOPs).
    flops_block = (
        5 * (bb * 32) * 32 * 168 * 2 + (bb * 32) * 168 * 84 * 2      # conv1 + pool1
        + 5 * (bb * 16) * 84 * 160 * 2 + (bb * 16) * 160 * 80 * 2    # conv2 + pool2
        + 5 * (bb * 8) * 80 * 120 * 2                                # fc1
        + bb * 120 * 84 * 2 + bb * 84 * 10 * 2)                      # fc2 + fc3
    trans_block = bb * (32 * 168 + 16 * 160 + 120 + 84)              # exps
    bytes_accessed = (xs.size + sum(int(w.size) for w in weights) + n_pad * 10) * 4

    out = pl.pallas_call(
        _lenet_kernel,
        out_shape=jax.ShapeDtypeStruct((n_pad, 10), f32),
        grid=grid,
        in_specs=in_specs,
        out_specs=pl.BlockSpec((bb, 10), lambda i: (i, 0)),
        scratch_shapes=[
            pltpu.VMEM((bb * 32, 84), f32),     # lane-pooled conv1 output
            pltpu.VMEM((bb * 16, 80), f32),     # lane-pooled conv2 output
            pltpu.VMEM((bb * 8, 120), f32),     # fc1 output (pre row-extract)
        ],
        compiler_params=pltpu.CompilerParams(
            dimension_semantics=("parallel",),
            vmem_limit_bytes=32 * 1024 * 1024),
        cost_estimate=pl.CostEstimate(
            flops=int(flops_block) * grid[0],
            transcendentals=int(trans_block) * grid[0],
            bytes_accessed=int(bytes_accessed)),
    )(xs, *weights)
    return out[:n]


# ------------------------- pure-JAX reference ---------------------------------
def lenet_reference(x, params):
    sig = jax.nn.sigmoid
    prec = jax.lax.Precision.HIGHEST

    def conv(z, w, b, pad):
        z = jax.lax.conv_general_dilated(
            z, w, window_strides=(1, 1),
            padding=[(pad, pad), (pad, pad)],
            dimension_numbers=("NCHW", "OIHW", "NCHW"),
            precision=prec)
        return z + b.reshape(1, -1, 1, 1)

    def pool(z):
        return jax.lax.reduce_window(z, 0.0, jax.lax.add,
                                     (1, 1, 2, 2), (1, 1, 2, 2), "VALID") * 0.25

    o = pool(sig(conv(x, params["w_conv1"], params["b_conv1"], 2)))
    o = pool(sig(conv(o, params["w_conv2"], params["b_conv2"], 0)))
    o = o.reshape(o.shape[0], -1)
    o = sig(jnp.dot(o, params["w_fc1"].T, precision=prec) + params["b_fc1"])
    o = sig(jnp.dot(o, params["w_fc2"].T, precision=prec) + params["b_fc2"])
    return jnp.dot(o, params["w_fc3"].T, precision=prec) + params["b_fc3"]


def init_params(key):
    """Deterministic init with PyTorch parameter shapes (U(+/- 1/sqrt(fan_in)))."""
    ks = jax.random.split(key, 10)

    def u(k, shape, fan_in):
        bound = float(fan_in) ** -0.5
        return jax.random.uniform(k, shape, jnp.float32, -bound, bound)

    return {
        "w_conv1": u(ks[0], (6, 1, 5, 5), 1 * 5 * 5),
        "b_conv1": u(ks[1], (6,), 1 * 5 * 5),
        "w_conv2": u(ks[2], (16, 6, 5, 5), 6 * 5 * 5),
        "b_conv2": u(ks[3], (16,), 6 * 5 * 5),
        "w_fc1": u(ks[4], (120, 400), 400),
        "b_fc1": u(ks[5], (120,), 400),
        "w_fc2": u(ks[6], (84, 120), 120),
        "b_fc2": u(ks[7], (84,), 120),
        "w_fc3": u(ks[8], (10, 84), 84),
        "b_fc3": u(ks[9], (10,), 84),
    }


if __name__ == "__main__":
    key = jax.random.PRNGKey(0)
    kx, kp = jax.random.split(key)
    # fc1 expects 400 = 16*5*5 features, which pins the input to (N, 1, 28, 28).
    x = jax.random.normal(kx, (2, 1, 28, 28), jnp.float32)
    params = init_params(kp)

    fwd = jax.jit(lenet_forward)
    logits = fwd(x, params)
    jax.block_until_ready(logits)

    assert logits.shape == (2, 10) and logits.dtype == jnp.float32
    assert bool(jnp.all(jnp.isfinite(logits)))

    # Cross-check against a plain-XLA reference (exact sigmoid in-kernel now;
    # tolerance covers f32 matmul reassociation differences only).
    ref = jax.jit(lenet_reference)(x, params)
    err = float(jnp.max(jnp.abs(logits - ref)))
    assert err < 1e-2, f"mismatch vs reference: {err}"

    print("KERNEL_OK")
</pallas_src>

<mosaic_0001>
module attributes {stable_mosaic.version = 11 : i64} {
  func.func @_lenet_kernel(%arg0: i32, %arg1: memref<256x32xf32, #tpu.memory_space<vmem>>, %arg2: memref<5x32x168xf32, #tpu.memory_space<vmem>>, %arg3: memref<1x168xf32, #tpu.memory_space<vmem>>, %arg4: memref<168x84xf32, #tpu.memory_space<vmem>>, %arg5: memref<5x84x160xf32, #tpu.memory_space<vmem>>, %arg6: memref<1x160xf32, #tpu.memory_space<vmem>>, %arg7: memref<160x80xf32, #tpu.memory_space<vmem>>, %arg8: memref<5x80x120xf32, #tpu.memory_space<vmem>>, %arg9: memref<1x120xf32, #tpu.memory_space<vmem>>, %arg10: memref<120x84xf32, #tpu.memory_space<vmem>>, %arg11: memref<1x84xf32, #tpu.memory_space<vmem>>, %arg12: memref<84x10xf32, #tpu.memory_space<vmem>>, %arg13: memref<1x10xf32, #tpu.memory_space<vmem>>, %arg14: memref<8x10xf32, #tpu.memory_space<vmem>>, %arg15: memref<256x84xf32, #tpu.memory_space<vmem>>, %arg16: memref<128x80xf32, #tpu.memory_space<vmem>>, %arg17: memref<64x120xf32, #tpu.memory_space<vmem>>) attributes {dimension_semantics = [#tpu.dimension_semantics<parallel>], iteration_bounds = array<i64: 1>, scalar_prefetch = 0 : i64, scratch_operands = 3 : i64, tpu.core_type = #tpu.core_type<tc>, window_params = [{transform_indices = @transform_0, window_bounds = array<i64: 256, 32>}, {pipeline_mode = #tpu.pipeline_mode<synchronous>, transform_indices = @transform_1, window_bounds = array<i64: 5, 32, 168>}, {pipeline_mode = #tpu.pipeline_mode<synchronous>, transform_indices = @transform_2, window_bounds = array<i64: 1, 168>}, {pipeline_mode = #tpu.pipeline_mode<synchronous>, transform_indices = @transform_3, window_bounds = array<i64: 168, 84>}, {pipeline_mode = #tpu.pipeline_mode<synchronous>, transform_indices = @transform_4, window_bounds = array<i64: 5, 84, 160>}, {pipeline_mode = #tpu.pipeline_mode<synchronous>, transform_indices = @transform_5, window_bounds = array<i64: 1, 160>}, {pipeline_mode = #tpu.pipeline_mode<synchronous>, transform_indices = @transform_6, window_bounds = array<i64: 160, 80>}, {pipeline_mode = #tpu.pipeline_mode<synchronous>, transform_indices = @transform_7, window_bounds = array<i64: 5, 80, 120>}, {pipeline_mode = #tpu.pipeline_mode<synchronous>, transform_indices = @transform_8, window_bounds = array<i64: 1, 120>}, {pipeline_mode = #tpu.pipeline_mode<synchronous>, transform_indices = @transform_9, window_bounds = array<i64: 120, 84>}, {pipeline_mode = #tpu.pipeline_mode<synchronous>, transform_indices = @transform_10, window_bounds = array<i64: 1, 84>}, {pipeline_mode = #tpu.pipeline_mode<synchronous>, transform_indices = @transform_11, window_bounds = array<i64: 84, 10>}, {pipeline_mode = #tpu.pipeline_mode<synchronous>, transform_indices = @transform_12, window_bounds = array<i64: 1, 10>}, {transform_indices = @transform_13, window_bounds = array<i64: 8, 10>}]} {
    %c0 = arith.constant 0 : index
    %c0_0 = arith.constant 0 : index
    %0 = vector.load %arg1[%c0, %c0_0] : memref<256x32xf32, #tpu.memory_space<vmem>>, vector<256x32xf32>
    %c0_1 = arith.constant 0 : index
    %c0_2 = arith.constant 0 : index
    %c0_3 = arith.constant 0 : index
    %1 = vector.load %arg2[%c0_1, %c0_2, %c0_3] : memref<5x32x168xf32, #tpu.memory_space<vmem>>, vector<1x32x168xf32>
    %2 = vector.shape_cast %1 : vector<1x32x168xf32> to vector<32x168xf32>
    %cst = arith.constant dense<0.000000e+00> : vector<256x168xf32>
    %3 = tpu.matmul %0, %2, %cst {dimension_numbers = #tpu.dot_dimension_numbers<[1], [0], [0], [1], [0, 0, 1, 1], [], []>} : vector<256x32xf32>, vector<32x168xf32>, vector<256x168xf32> -> vector<256x168xf32>
    %c255_i32 = arith.constant 255 : i32
    %4 = tpu.dynamic_rotate %0 by %c255_i32 dim 0 : vector<256x32xf32>, i32 -> vector<256x32xf32>
    %c1 = arith.constant 1 : index
    %c0_4 = arith.constant 0 : index
    %c0_5 = arith.constant 0 : index
    %5 = vector.load %arg2[%c1, %c0_4, %c0_5] : memref<5x32x168xf32, #tpu.memory_space<vmem>>, vector<1x32x168xf32>
    %6 = vector.shape_cast %5 : vector<1x32x168xf32> to vector<32x168xf32>
    %cst_6 = arith.constant dense<0.000000e+00> : vector<256x168xf32>
    %7 = tpu.matmul %4, %6, %cst_6 {dimension_numbers = #tpu.dot_dimension_numbers<[1], [0], [0], [1], [0, 0, 1, 1], [], []>} : vector<256x32xf32>, vector<32x168xf32>, vector<256x168xf32> -> vector<256x168xf32>
    %8 = arith.addf %3, %7 : vector<256x168xf32>
    %c254_i32 = arith.constant 254 : i32
    %9 = tpu.dynamic_rotate %0 by %c254_i32 dim 0 : vector<256x32xf32>, i32 -> vector<256x32xf32>
    %c2 = arith.constant 2 : index
    %c0_7 = arith.constant 0 : index
    %c0_8 = arith.constant 0 : index
    %10 = vector.load %arg2[%c2, %c0_7, %c0_8] : memref<5x32x168xf32, #tpu.memory_space<vmem>>, vector<1x32x168xf32>
    %11 = vector.shape_cast %10 : vector<1x32x168xf32> to vector<32x168xf32>
    %cst_9 = arith.constant dense<0.000000e+00> : vector<256x168xf32>
    %12 = tpu.matmul %9, %11, %cst_9 {dimension_numbers = #tpu.dot_dimension_numbers<[1], [0], [0], [1], [0, 0, 1, 1], [], []>} : vector<256x32xf32>, vector<32x168xf32>, vector<256x168xf32> -> vector<256x168xf32>
    %13 = arith.addf %8, %12 : vector<256x168xf32>
    %c253_i32 = arith.constant 253 : i32
    %14 = tpu.dynamic_rotate %0 by %c253_i32 dim 0 : vector<256x32xf32>, i32 -> vector<256x32xf32>
    %c3 = arith.constant 3 : index
    %c0_10 = arith.constant 0 : index
    %c0_11 = arith.constant 0 : index
    %15 = vector.load %arg2[%c3, %c0_10, %c0_11] : memref<5x32x168xf32, #tpu.memory_space<vmem>>, vector<1x32x168xf32>
    %16 = vector.shape_cast %15 : vector<1x32x168xf32> to vector<32x168xf32>
    %cst_12 = arith.constant dense<0.000000e+00> : vector<256x168xf32>
    %17 = tpu.matmul %14, %16, %cst_12 {dimension_numbers = #tpu.dot_dimension_numbers<[1], [0], [0], [1], [0, 0, 1, 1], [], []>} : vector<256x32xf32>, vector<32x168xf32>, vector<256x168xf32> -> vector<256x168xf32>
    %18 = arith.addf %13, %17 : vector<256x168xf32>
    %c252_i32 = arith.constant 252 : i32
    %19 = tpu.dynamic_rotate %0 by %c252_i32 dim 0 : vector<256x32xf32>, i32 -> vector<256x32xf32>
    %c4 = arith.constant 4 : index
    %c0_13 = arith.constant 0 : index
    %c0_14 = arith.constant 0 : index
    %20 = vector.load %arg2[%c4, %c0_13, %c0_14] : memref<5x32x168xf32, #tpu.memory_space<vmem>>, vector<1x32x168xf32>
    %21 = vector.shape_cast %20 : vector<1x32x168xf32> to vector<32x168xf32>
    %cst_15 = arith.constant dense<0.000000e+00> : vector<256x168xf32>
    %22 = tpu.matmul %19, %21, %cst_15 {dimension_numbers = #tpu.dot_dimension_numbers<[1], [0], [0], [1], [0, 0, 1, 1], [], []>} : vector<256x32xf32>, vector<32x168xf32>, vector<256x168xf32> -> vector<256x168xf32>
    %23 = arith.addf %18, %22 : vector<256x168xf32>
    %c0_16 = arith.constant 0 : index
    %c0_17 = arith.constant 0 : index
    %24 = vector.load %arg3[%c0_16, %c0_17] : memref<1x168xf32, #tpu.memory_space<vmem>>, vector<1x168xf32>
    %25 = vector.broadcast %24 : vector<1x168xf32> to vector<256x168xf32>
    %26 = arith.addf %23, %25 : vector<256x168xf32>
    %cst_18 = arith.constant 0.000000e+00 : f32
    %27 = vector.broadcast %cst_18 : f32 to vector<256x168xf32>
    %28 = arith.subf %27, %26 : vector<256x168xf32>
    %29 = math.exp %28 : vector<256x168xf32>
    %cst_19 = arith.constant 1.000000e+00 : f32
    %30 = vector.broadcast %cst_19 : f32 to vector<256x168xf32>
    %31 = arith.addf %30, %29 : vector<256x168xf32>
    %cst_20 = arith.constant 1.000000e+00 : f32
    %32 = vector.broadcast %cst_20 : f32 to vector<256x168xf32>
    %33 = arith.divf %32, %31 : vector<256x168xf32>
    %c0_21 = arith.constant 0 : index
    %c0_22 = arith.constant 0 : index
    %34 = vector.load %arg4[%c0_21, %c0_22] : memref<168x84xf32, #tpu.memory_space<vmem>>, vector<168x84xf32>
    %cst_23 = arith.constant dense<0.000000e+00> : vector<256x84xf32>
    %35 = tpu.matmul %33, %34, %cst_23 {dimension_numbers = #tpu.dot_dimension_numbers<[1], [0], [0], [1], [0, 0, 1, 1], [], []>} : vector<256x168xf32>, vector<168x84xf32>, vector<256x84xf32> -> vector<256x84xf32>
    %c0_24 = arith.constant 0 : index
    %c0_25 = arith.constant 0 : index
    %36 = vector.load %arg15[%c0_24, %c0_25] : memref<256x84xf32, #tpu.memory_space<vmem>>, vector<256x84xf32>
    tpu.vector_store %arg15[%c0_24, %c0_25], %35 {strides = array<i32>} : memref<256x84xf32, #tpu.memory_space<vmem>>, vector<256x84xf32>,
    %c0_26 = arith.constant 0 : index
    %c0_27 = arith.constant 0 : index
    %37 = tpu.strided_load %arg15[%c0_26, %c0_27] {strides = array<i32: 2, 1>} : memref<256x84xf32, #tpu.memory_space<vmem>>, vector<128x84xf32>
    %c1_28 = arith.constant 1 : index
    %c0_29 = arith.constant 0 : index
    %38 = tpu.strided_load %arg15[%c1_28, %c0_29] {strides = array<i32: 2, 1>} : memref<256x84xf32, #tpu.memory_space<vmem>>, vector<128x84xf32>
    %39 = arith.addf %37, %38 : vector<128x84xf32>
    %cst_30 = arith.constant 5.000000e-01 : f32
    %40 = vector.broadcast %cst_30 : f32 to vector<128x84xf32>
    %41 = arith.mulf %40, %39 : vector<128x84xf32>
    %c0_31 = arith.constant 0 : index
    %c0_32 = arith.constant 0 : index
    %c0_33 = arith.constant 0 : index
    %42 = vector.load %arg5[%c0_31, %c0_32, %c0_33] : memref<5x84x160xf32, #tpu.memory_space<vmem>>, vector<1x84x160xf32>
    %43 = vector.shape_cast %42 : vector<1x84x160xf32> to vector<84x160xf32>
    %cst_34 = arith.constant dense<0.000000e+00> : vector<128x160xf32>
    %44 = tpu.matmul %41, %43, %cst_34 {dimension_numbers = #tpu.dot_dimension_numbers<[1], [0], [0], [1], [0, 0, 1, 1], [], []>} : vector<128x84xf32>, vector<84x160xf32>, vector<128x160xf32> -> vector<128x160xf32>
    %c127_i32 = arith.constant 127 : i32
    %45 = tpu.dynamic_rotate %41 by %c127_i32 dim 0 : vector<128x84xf32>, i32 -> vector<128x84xf32>
    %c1_35 = arith.constant 1 : index
    %c0_36 = arith.constant 0 : index
    %c0_37 = arith.constant 0 : index
    %46 = vector.load %arg5[%c1_35, %c0_36, %c0_37] : memref<5x84x160xf32, #tpu.memory_space<vmem>>, vector<1x84x160xf32>
    %47 = vector.shape_cast %46 : vector<1x84x160xf32> to vector<84x160xf32>
    %cst_38 = arith.constant dense<0.000000e+00> : vector<128x160xf32>
    %48 = tpu.matmul %45, %47, %cst_38 {dimension_numbers = #tpu.dot_dimension_numbers<[1], [0], [0], [1], [0, 0, 1, 1], [], []>} : vector<128x84xf32>, vector<84x160xf32>, vector<128x160xf32> -> vector<128x160xf32>
    %49 = arith.addf %44, %48 : vector<128x160xf32>
    %c126_i32 = arith.constant 126 : i32
    %50 = tpu.dynamic_rotate %41 by %c126_i32 dim 0 : vector<128x84xf32>, i32 -> vector<128x84xf32>
    %c2_39 = arith.constant 2 : index
    %c0_40 = arith.constant 0 : index
    %c0_41 = arith.constant 0 : index
    %51 = vector.load %arg5[%c2_39, %c0_40, %c0_41] : memref<5x84x160xf32, #tpu.memory_space<vmem>>, vector<1x84x160xf32>
    %52 = vector.shape_cast %51 : vector<1x84x160xf32> to vector<84x160xf32>
    %cst_42 = arith.constant dense<0.000000e+00> : vector<128x160xf32>
    %53 = tpu.matmul %50, %52, %cst_42 {dimension_numbers = #tpu.dot_dimension_numbers<[1], [0], [0], [1], [0, 0, 1, 1], [], []>} : vector<128x84xf32>, vector<84x160xf32>, vector<128x160xf32> -> vector<128x160xf32>
    %54 = arith.addf %49, %53 : vector<128x160xf32>
    %c125_i32 = arith.constant 125 : i32
    %55 = tpu.dynamic_rotate %41 by %c125_i32 dim 0 : vector<128x84xf32>, i32 -> vector<128x84xf32>
    %c3_43 = arith.constant 3 : index
    %c0_44 = arith.constant 0 : index
    %c0_45 = arith.constant 0 : index
    %56 = vector.load %arg5[%c3_43, %c0_44, %c0_45] : memref<5x84x160xf32, #tpu.memory_space<vmem>>, vector<1x84x160xf32>
    %57 = vector.shape_cast %56 : vector<1x84x160xf32> to vector<84x160xf32>
    %cst_46 = arith.constant dense<0.000000e+00> : vector<128x160xf32>
    %58 = tpu.matmul %55, %57, %cst_46 {dimension_numbers = #tpu.dot_dimension_numbers<[1], [0], [0], [1], [0, 0, 1, 1], [], []>} : vector<128x84xf32>, vector<84x160xf32>, vector<128x160xf32> -> vector<128x160xf32>
    %59 = arith.addf %54, %58 : vector<128x160xf32>
    %c124_i32 = arith.constant 124 : i32
    %60 = tpu.dynamic_rotate %41 by %c124_i32 dim 0 : vector<128x84xf32>, i32 -> vector<128x84xf32>
    %c4_47 = arith.constant 4 : index
    %c0_48 = arith.constant 0 : index
    %c0_49 = arith.constant 0 : index
    %61 = vector.load %arg5[%c4_47, %c0_48, %c0_49] : memref<5x84x160xf32, #tpu.memory_space<vmem>>, vector<1x84x160xf32>
    %62 = vector.shape_cast %61 : vector<1x84x160xf32> to vector<84x160xf32>
    %cst_50 = arith.constant dense<0.000000e+00> : vector<128x160xf32>
    %63 = tpu.matmul %60, %62, %cst_50 {dimension_numbers = #tpu.dot_dimension_numbers<[1], [0], [0], [1], [0, 0, 1, 1], [], []>} : vector<128x84xf32>, vector<84x160xf32>, vector<128x160xf32> -> vector<128x160xf32>
    %64 = arith.addf %59, %63 : vector<128x160xf32>
    %c0_51 = arith.constant 0 : index
    %c0_52 = arith.constant 0 : index
    %65 = vector.load %arg6[%c0_51, %c0_52] : memref<1x160xf32, #tpu.memory_space<vmem>>, vector<1x160xf32>
    %66 = vector.broadcast %65 : vector<1x160xf32> to vector<128x160xf32>
    %67 = arith.addf %64, %66 : vector<128x160xf32>
    %cst_53 = arith.constant 0.000000e+00 : f32
    %68 = vector.broadcast %cst_53 : f32 to vector<128x160xf32>
    %69 = arith.subf %68, %67 : vector<128x160xf32>
    %70 = math.exp %69 : vector<128x160xf32>
    %cst_54 = arith.constant 1.000000e+00 : f32
    %71 = vector.broadcast %cst_54 : f32 to vector<128x160xf32>
    %72 = arith.addf %71, %70 : vector<128x160xf32>
    %cst_55 = arith.constant 1.000000e+00 : f32
    %73 = vector.broadcast %cst_55 : f32 to vector<128x160xf32>
    %74 = arith.divf %73, %72 : vector<128x160xf32>
    %c0_56 = arith.constant 0 : index
    %c0_57 = arith.constant 0 : index
    %75 = vector.load %arg7[%c0_56, %c0_57] : memref<160x80xf32, #tpu.memory_space<vmem>>, vector<160x80xf32>
    %cst_58 = arith.constant dense<0.000000e+00> : vector<128x80xf32>
    %76 = tpu.matmul %74, %75, %cst_58 {dimension_numbers = #tpu.dot_dimension_numbers<[1], [0], [0], [1], [0, 0, 1, 1], [], []>} : vector<128x160xf32>, vector<160x80xf32>, vector<128x80xf32> -> vector<128x80xf32>
    %c0_59 = arith.constant 0 : index
    %c0_60 = arith.constant 0 : index
    %77 = vector.load %arg16[%c0_59, %c0_60] : memref<128x80xf32, #tpu.memory_space<vmem>>, vector<128x80xf32>
    tpu.vector_store %arg16[%c0_59, %c0_60], %76 {strides = array<i32>} : memref<128x80xf32, #tpu.memory_space<vmem>>, vector<128x80xf32>,
    %c0_61 = arith.constant 0 : index
    %c0_62 = arith.constant 0 : index
    %78 = tpu.strided_load %arg16[%c0_61, %c0_62] {strides = array<i32: 2, 1>} : memref<128x80xf32, #tpu.memory_space<vmem>>, vector<64x80xf32>
    %c1_63 = arith.constant 1 : index
    %c0_64 = arith.constant 0 : index
    %79 = tpu.strided_load %arg16[%c1_63, %c0_64] {strides = array<i32: 2, 1>} : memref<128x80xf32, #tpu.memory_space<vmem>>, vector<64x80xf32>
    %80 = arith.addf %78, %79 : vector<64x80xf32>
    %cst_65 = arith.constant 5.000000e-01 : f32
    %81 = vector.broadcast %cst_65 : f32 to vector<64x80xf32>
    %82 = arith.mulf %81, %80 : vector<64x80xf32>
    %c0_66 = arith.constant 0 : index
    %c0_67 = arith.constant 0 : index
    %c0_68 = arith.constant 0 : index
    %83 = vector.load %arg8[%c0_66, %c0_67, %c0_68] : memref<5x80x120xf32, #tpu.memory_space<vmem>>, vector<1x80x120xf32>
    %84 = vector.shape_cast %83 : vector<1x80x120xf32> to vector<80x120xf32>
    %cst_69 = arith.constant dense<0.000000e+00> : vector<64x120xf32>
    %85 = tpu.matmul %82, %84, %cst_69 {dimension_numbers = #tpu.dot_dimension_numbers<[1], [0], [0], [1], [0, 0, 1, 1], [], []>} : vector<64x80xf32>, vector<80x120xf32>, vector<64x120xf32> -> vector<64x120xf32>
    %c63_i32 = arith.constant 63 : i32
    %86 = tpu.dynamic_rotate %82 by %c63_i32 dim 0 : vector<64x80xf32>, i32 -> vector<64x80xf32>
    %c1_70 = arith.constant 1 : index
    %c0_71 = arith.constant 0 : index
    %c0_72 = arith.constant 0 : index
    %87 = vector.load %arg8[%c1_70, %c0_71, %c0_72] : memref<5x80x120xf32, #tpu.memory_space<vmem>>, vector<1x80x120xf32>
    %88 = vector.shape_cast %87 : vector<1x80x120xf32> to vector<80x120xf32>
    %cst_73 = arith.constant dense<0.000000e+00> : vector<64x120xf32>
    %89 = tpu.matmul %86, %88, %cst_73 {dimension_numbers = #tpu.dot_dimension_numbers<[1], [0], [0], [1], [0, 0, 1, 1], [], []>} : vector<64x80xf32>, vector<80x120xf32>, vector<64x120xf32> -> vector<64x120xf32>
    %90 = arith.addf %85, %89 : vector<64x120xf32>
    %c62_i32 = arith.constant 62 : i32
    %91 = tpu.dynamic_rotate %82 by %c62_i32 dim 0 : vector<64x80xf32>, i32 -> vector<64x80xf32>
    %c2_74 = arith.constant 2 : index
    %c0_75 = arith.constant 0 : index
    %c0_76 = arith.constant 0 : index
    %92 = vector.load %arg8[%c2_74, %c0_75, %c0_76] : memref<5x80x120xf32, #tpu.memory_space<vmem>>, vector<1x80x120xf32>
    %93 = vector.shape_cast %92 : vector<1x80x120xf32> to vector<80x120xf32>
    %cst_77 = arith.constant dense<0.000000e+00> : vector<64x120xf32>
    %94 = tpu.matmul %91, %93, %cst_77 {dimension_numbers = #tpu.dot_dimension_numbers<[1], [0], [0], [1], [0, 0, 1, 1], [], []>} : vector<64x80xf32>, vector<80x120xf32>, vector<64x120xf32> -> vector<64x120xf32>
    %95 = arith.addf %90, %94 : vector<64x120xf32>
    %c61_i32 = arith.constant 61 : i32
    %96 = tpu.dynamic_rotate %82 by %c61_i32 dim 0 : vector<64x80xf32>, i32 -> vector<64x80xf32>
    %c3_78 = arith.constant 3 : index
    %c0_79 = arith.constant 0 : index
    %c0_80 = arith.constant 0 : index
    %97 = vector.load %arg8[%c3_78, %c0_79, %c0_80] : memref<5x80x120xf32, #tpu.memory_space<vmem>>, vector<1x80x120xf32>
    %98 = vector.shape_cast %97 : vector<1x80x120xf32> to vector<80x120xf32>
    %cst_81 = arith.constant dense<0.000000e+00> : vector<64x120xf32>
    %99 = tpu.matmul %96, %98, %cst_81 {dimension_numbers = #tpu.dot_dimension_numbers<[1], [0], [0], [1], [0, 0, 1, 1], [], []>} : vector<64x80xf32>, vector<80x120xf32>, vector<64x120xf32> -> vector<64x120xf32>
    %100 = arith.addf %95, %99 : vector<64x120xf32>
    %c60_i32 = arith.constant 60 : i32
    %101 = tpu.dynamic_rotate %82 by %c60_i32 dim 0 : vector<64x80xf32>, i32 -> vector<64x80xf32>
    %c4_82 = arith.constant 4 : index
    %c0_83 = arith.constant 0 : index
    %c0_84 = arith.constant 0 : index
    %102 = vector.load %arg8[%c4_82, %c0_83, %c0_84] : memref<5x80x120xf32, #tpu.memory_space<vmem>>, vector<1x80x120xf32>
    %103 = vector.shape_cast %102 : vector<1x80x120xf32> to vector<80x120xf32>
    %cst_85 = arith.constant dense<0.000000e+00> : vector<64x120xf32>
    %104 = tpu.matmul %101, %103, %cst_85 {dimension_numbers = #tpu.dot_dimension_numbers<[1], [0], [0], [1], [0, 0, 1, 1], [], []>} : vector<64x80xf32>, vector<80x120xf32>, vector<64x120xf32> -> vector<64x120xf32>
    %105 = arith.addf %100, %104 : vector<64x120xf32>
    %c0_86 = arith.constant 0 : index
    %c0_87 = arith.constant 0 : index
    %106 = vector.load %arg17[%c0_86, %c0_87] : memref<64x120xf32, #tpu.memory_space<vmem>>, vector<64x120xf32>
    tpu.vector_store %arg17[%c0_86, %c0_87], %105 {strides = array<i32>} : memref<64x120xf32, #tpu.memory_space<vmem>>, vector<64x120xf32>,
    %c0_88 = arith.constant 0 : index
    %c0_89 = arith.constant 0 : index
    %107 = tpu.strided_load %arg17[%c0_88, %c0_89] {strides = array<i32: 8, 1>} : memref<64x120xf32, #tpu.memory_space<vmem>>, vector<8x120xf32>
    %c0_90 = arith.constant 0 : index
    %c0_91 = arith.constant 0 : index
    %108 = vector.load %arg9[%c0_90, %c0_91] : memref<1x120xf32, #tpu.memory_space<vmem>>, vector<1x120xf32>
    %109 = vector.broadcast %108 : vector<1x120xf32> to vector<8x120xf32>
    %110 = arith.addf %107, %109 : vector<8x120xf32>
    %cst_92 = arith.constant 0.000000e+00 : f32
    %111 = vector.broadcast %cst_92 : f32 to vector<8x120xf32>
    %112 = arith.subf %111, %110 : vector<8x120xf32>
    %113 = math.exp %112 : vector<8x120xf32>
    %cst_93 = arith.constant 1.000000e+00 : f32
    %114 = vector.broadcast %cst_93 : f32 to vector<8x120xf32>
    %115 = arith.addf %114, %113 : vector<8x120xf32>
    %cst_94 = arith.constant 1.000000e+00 : f32
    %116 = vector.broadcast %cst_94 : f32 to vector<8x120xf32>
    %117 = arith.divf %116, %115 : vector<8x120xf32>
    %c0_95 = arith.constant 0 : index
    %c0_96 = arith.constant 0 : index
    %118 = vector.load %arg10[%c0_95, %c0_96] : memref<120x84xf32, #tpu.memory_space<vmem>>, vector<120x84xf32>
    %cst_97 = arith.constant dense<0.000000e+00> : vector<8x84xf32>
    %119 = tpu.matmul %117, %118, %cst_97 {dimension_numbers = #tpu.dot_dimension_numbers<[1], [0], [0], [1], [0, 0, 1, 1], [], []>} : vector<8x120xf32>, vector<120x84xf32>, vector<8x84xf32> -> vector<8x84xf32>
    %c0_98 = arith.constant 0 : index
    %c0_99 = arith.constant 0 : index
    %120 = vector.load %arg11[%c0_98, %c0_99] : memref<1x84xf32, #tpu.memory_space<vmem>>, vector<1x84xf32>
    %121 = vector.broadcast %120 : vector<1x84xf32> to vector<8x84xf32>
    %122 = arith.addf %119, %121 : vector<8x84xf32>
    %cst_100 = arith.constant 0.000000e+00 : f32
    %123 = vector.broadcast %cst_100 : f32 to vector<8x84xf32>
    %124 = arith.subf %123, %122 : vector<8x84xf32>
    %125 = math.exp %124 : vector<8x84xf32>
    %cst_101 = arith.constant 1.000000e+00 : f32
    %126 = vector.broadcast %cst_101 : f32 to vector<8x84xf32>
    %127 = arith.addf %126, %125 : vector<8x84xf32>
    %cst_102 = arith.constant 1.000000e+00 : f32
    %128 = vector.broadcast %cst_102 : f32 to vector<8x84xf32>
    %129 = arith.divf %128, %127 : vector<8x84xf32>
    %c0_103 = arith.constant 0 : index
    %c0_104 = arith.constant 0 : index
    %130 = vector.load %arg12[%c0_103, %c0_104] : memref<84x10xf32, #tpu.memory_space<vmem>>, vector<84x10xf32>
    %cst_105 = arith.constant dense<0.000000e+00> : vector<8x10xf32>
    %131 = tpu.matmul %129, %130, %cst_105 {dimension_numbers = #tpu.dot_dimension_numbers<[1], [0], [0], [1], [0, 0, 1, 1], [], []>} : vector<8x84xf32>, vector<84x10xf32>, vector<8x10xf32> -> vector<8x10xf32>
    %c0_106 = arith.constant 0 : index
    %c0_107 = arith.constant 0 : index
    %132 = vector.load %arg13[%c0_106, %c0_107] : memref<1x10xf32, #tpu.memory_space<vmem>>, vector<1x10xf32>
    %133 = vector.broadcast %132 : vector<1x10xf32> to vector<8x10xf32>
    %134 = arith.addf %131, %133 : vector<8x10xf32>
    %c0_108 = arith.constant 0 : index
    %c0_109 = arith.constant 0 : index
    %135 = vector.load %arg14[%c0_108, %c0_109] : memref<8x10xf32, #tpu.memory_space<vmem>>, vector<8x10xf32>
    tpu.vector_store %arg14[%c0_108, %c0_109], %134 {strides = array<i32>} : memref<8x10xf32, #tpu.memory_space<vmem>>, vector<8x10xf32>,
    return
  }
  func.func @transform_0(%arg0: i32) -> (i32, i32) {
    %c0_i32 = arith.constant 0 : i32
    %c0_i32_0 = arith.constant 0 : i32
    return %arg0, %c0_i32 : i32, i32
  }
  func.func @transform_1(%arg0: i32) -> (i32, i32, i32) {
    %c0_i32 = arith.constant 0 : i32
    %c0_i32_0 = arith.constant 0 : i32
    %c0_i32_1 = arith.constant 0 : i32
    %c0_i32_2 = arith.constant 0 : i32
    return %c0_i32, %c0_i32_0, %c0_i32_1 : i32, i32, i32
  }
  func.func @transform_2(%arg0: i32) -> (i32, i32) {
    %c0_i32 = arith.constant 0 : i32
    %c0_i32_0 = arith.constant 0 : i32
    %c0_i32_1 = arith.constant 0 : i32
    return %c0_i32, %c0_i32_0 : i32, i32
  }
  func.func @transform_3(%arg0: i32) -> (i32, i32) {
    %c0_i32 = arith.constant 0 : i32
    %c0_i32_0 = arith.constant 0 : i32
    %c0_i32_1 = arith.constant 0 : i32
    return %c0_i32, %c0_i32_0 : i32, i32
  }
  func.func @transform_4(%arg0: i32) -> (i32, i32, i32) {
    %c0_i32 = arith.constant 0 : i32
    %c0_i32_0 = arith.constant 0 : i32
    %c0_i32_1 = arith.constant 0 : i32
    %c0_i32_2 = arith.constant 0 : i32
    return %c0_i32, %c0_i32_0, %c0_i32_1 : i32, i32, i32
  }
  func.func @transform_5(%arg0: i32) -> (i32, i32) {
    %c0_i32 = arith.constant 0 : i32
    %c0_i32_0 = arith.constant 0 : i32
    %c0_i32_1 = arith.constant 0 : i32
    return %c0_i32, %c0_i32_0 : i32, i32
  }
  func.func @transform_6(%arg0: i32) -> (i32, i32) {
    %c0_i32 = arith.constant 0 : i32
    %c0_i32_0 = arith.constant 0 : i32
    %c0_i32_1 = arith.constant 0 : i32
    return %c0_i32, %c0_i32_0 : i32, i32
  }
  func.func @transform_7(%arg0: i32) -> (i32, i32, i32) {
    %c0_i32 = arith.constant 0 : i32
    %c0_i32_0 = arith.constant 0 : i32
    %c0_i32_1 = arith.constant 0 : i32
    %c0_i32_2 = arith.constant 0 : i32
    return %c0_i32, %c0_i32_0, %c0_i32_1 : i32, i32, i32
  }
  func.func @transform_8(%arg0: i32) -> (i32, i32) {
    %c0_i32 = arith.constant 0 : i32
    %c0_i32_0 = arith.constant 0 : i32
    %c0_i32_1 = arith.constant 0 : i32
    return %c0_i32, %c0_i32_0 : i32, i32
  }
  func.func @transform_9(%arg0: i32) -> (i32, i32) {
    %c0_i32 = arith.constant 0 : i32
    %c0_i32_0 = arith.constant 0 : i32
    %c0_i32_1 = arith.constant 0 : i32
    return %c0_i32, %c0_i32_0 : i32, i32
  }
  func.func @transform_10(%arg0: i32) -> (i32, i32) {
    %c0_i32 = arith.constant 0 : i32
    %c0_i32_0 = arith.constant 0 : i32
    %c0_i32_1 = arith.constant 0 : i32
    return %c0_i32, %c0_i32_0 : i32, i32
  }
  func.func @transform_11(%arg0: i32) -> (i32, i32) {
    %c0_i32 = arith.constant 0 : i32
    %c0_i32_0 = arith.constant 0 : i32
    %c0_i32_1 = arith.constant 0 : i32
    return %c0_i32, %c0_i32_0 : i32, i32
  }
  func.func @transform_12(%arg0: i32) -> (i32, i32) {
    %c0_i32 = arith.constant 0 : i32
    %c0_i32_0 = arith.constant 0 : i32
    %c0_i32_1 = arith.constant 0 : i32
    return %c0_i32, %c0_i32_0 : i32, i32
  }
  func.func @transform_13(%arg0: i32) -> (i32, i32) {
    %c0_i32 = arith.constant 0 : i32
    %c0_i32_0 = arith.constant 0 : i32
    return %arg0, %c0_i32 : i32, i32
  }
}

</mosaic_0001>

<llo_original>
// kernel: tile.13
$region0: #{tile.13}
  #allocation0 [shape = 's32[1]{0}', space=sflag, size = 0x4, scoped, tag = 'scoped memory for tile.13']
  %s0 = inlined_call_operand.vmem [shape: f32[6], index: 0, kind: input, shape index: {}]
  %s1 = inlined_call_operand.vmem [shape: f32[28,6], index: 1, kind: output, shape index: {}]
  // Predicated region
  $region2: #{tile.13} parent=0 // pred_check
    _
  $region3: #{tile.13} parent=0 // pred_check_branch
    %3 = sbr.rel (0) target = $region5
  $region4: #{tile.13} parent=0 // pred_region
    _
  $region5: #{tile.13} parent=0 // pred_fallthru
    _
  %v4 = vld [vmem:[%s0] ss:$0 sm:$0xff]
  %5 = vst [vmem:[%s1] sm:$0xff] %v4
  %s6 = scalar_lea.vmem %s1, 8
  %7 = vst [vmem:[%s6] sm:$0xff] %v4
  %s8 = scalar_lea.vmem %s1, 16
  %9 = vst [vmem:[%s8] sm:$0xff] %v4
  %s10 = scalar_lea.vmem %s1, 24
  %11 = vst [vmem:[%s10] sm:$0xff] %v4

// kernel: tile.14
$region0: #{tile.14}
  %s0 = inlined_call_operand.vmem [shape: f32[28,6], index: 0, kind: input, shape index: {}]
  %s1 = inlined_call_operand.vmem [shape: f32[1,168], index: 1, kind: output, shape index: {}]
  $region1: #{tile.14} parent=0
    #allocation0 [shape = 'u8[8192]{0}', space=vmem, size = 0x2000, scoped, tag = 'scoped mem for output reshape']
    %v2 = vld [vmem:[%s0] sm:$0x1]
    %vm3 = vcmask 48128
    %4 = vst.msk [vmem:[#allocation0] sm:$0x1] %vm3, %v2
    %s5 = scalar_lea.vmem %s0, 21
    %v6 = vld [vmem:[%s5] sm:$0x1]
    %s7 = scalar_lea.vmem %s0, 21
    %v8 = vld [vmem:[%s7] sm:$0x1]
    %vm9 = vcmask 15360
    %v10 = vsel %vm9, %v8, %v6
    %11 = vrot.lane.b32.xlu0 %v10, 126
    %v12 = vpop.permute.xlu0 %11
    %vm13 = vcmask 31744
    %s14 = scalar_lea.vmem [#allocation0], 8
    %15 = vst.msk [vmem:[%s14] sm:$0x1] %vm13, %v12
    %vm16 = vcmask 1048560
    %17 = vst.msk [vmem:[#allocation0] sm:$0x1] %vm16, %v12
    %s18 = scalar_lea.vmem %s0, 20
    %v19 = vld [vmem:[%s18] sm:$0x1]
    %20 = vrot.lane.b32.xlu0 %v19, 120
    %v21 = vpop.permute.xlu0 %20
    %vm22 = vcmask 1032128
    %23 = vst.msk [vmem:[#allocation0] sm:$0x1] %vm22, %v21
    %s24 = scalar_lea.vmem %s0, 19
    %v25 = vld [vmem:[%s24] sm:$0x1]
    %26 = vrot.lane.b32.xlu0 %v25, 114
    %v27 = vpop.permute.xlu0 %26
    %vm28 = vcmask 982928
    %29 = vst.msk [vmem:[#allocation0] sm:$0x1] %vm28, %v27
    %s30 = scalar_lea.vmem %s0, 18
    %v31 = vld [vmem:[%s30] sm:$0x1]
    %32 = vrot.lane.b32.xlu0 %v31, 108
    %v33 = vpop.permute.xlu0 %32
    %vm34 = vcmask 933728
    %35 = vst.msk [vmem:[#allocation0] sm:$0x1] %vm34, %v33
    %s36 = scalar_lea.vmem %s0, 17
    %v37 = vld [vmem:[%s36] sm:$0x1]
    %38 = vrot.lane.b32.xlu0 %v37, 102
    %v39 = vpop.permute.xlu0 %38
    %vm40 = vcmask 884528
    %41 = vst.msk [vmem:[#allocation0] sm:$0x1] %vm40, %v39
    %s42 = scalar_lea.vmem %s0, 16
    %v43 = vld [vmem:[%s42] sm:$0x1]
    %44 = vrot.lane.b32.xlu0 %v43, 96
    %v45 = vpop.permute.xlu0 %44
    %vm46 = vcmask 835328
    %47 = vst.msk [vmem:[#allocation0] sm:$0x1] %vm46, %v45
    %s48 = scalar_lea.vmem %s0, 15
    %v49 = vld [vmem:[%s48] sm:$0x1]
    %50 = vrot.lane.b32.xlu0 %v49, 90
    %v51 = vpop.permute.xlu0 %50
    %vm52 = vcmask 786128
    %53 = vst.msk [vmem:[#allocation0] sm:$0x1] %vm52, %v51
    %s54 = scalar_lea.vmem %s0, 14
    %v55 = vld [vmem:[%s54] sm:$0x1]
    %56 = vrot.lane.b32.xlu0 %v55, 84
    %v57 = vpop.permute.xlu0 %56
    %vm58 = vcmask 736928
    %59 = vst.msk [vmem:[#allocation0] sm:$0x1] %vm58, %v57
    %s60 = scalar_lea.vmem %s0, 13
    %v61 = vld [vmem:[%s60] sm:$0x1]
    %62 = vrot.lane.b32.xlu0 %v61, 78
    %v63 = vpop.permute.xlu0 %62
    %vm64 = vcmask 687728
    %65 = vst.msk [vmem:[#allocation0] sm:$0x1] %vm64, %v63
    %s66 = scalar_lea.vmem %s0, 12
    %v67 = vld [vmem:[%s66] sm:$0x1]
    %68 = vrot.lane.b32.xlu0 %v67, 72
    %v69 = vpop.permute.xlu0 %68
    %vm70 = vcmask 638528
    %71 = vst.msk [vmem:[#allocation0] sm:$0x1] %vm70, %v69
    %s72 = scalar_lea.vmem %s0, 11
    %v73 = vld [vmem:[%s72] sm:$0x1]
    %74 = vrot.lane.b32.xlu0 %v73, 66
    %v75 = vpop.permute.xlu0 %74
    %vm76 = vcmask 589328
    %77 = vst.msk [vmem:[#allocation0] sm:$0x1] %vm76, %v75
    %s78 = scalar_lea.vmem %s0, 10
    %v79 = vld [vmem:[%s78] sm:$0x1]
    %80 = vrot.lane.b32.xlu0 %v79, 60
    %v81 = vpop.permute.xlu0 %80
    %vm82 = vcmask 540128
    %83 = vst.msk [vmem:[#allocation0] sm:$0x1] %vm82, %v81
    %s84 = scalar_lea.vmem %s0, 9
    %v85 = vld [vmem:[%s84] sm:$0x1]
    %86 = vrot.lane.b32.xlu0 %v85, 54
    %v87 = vpop.permute.xlu0 %86
    %vm88 = vcmask 490928
    %89 = vst.msk [vmem:[#allocation0] sm:$0x1] %vm88, %v87
    %s90 = scalar_lea.vmem %s0, 8
    %v91 = vld [vmem:[%s90] sm:$0x1]
    %92 = vrot.lane.b32.xlu0 %v91, 48
    %v93 = vpop.permute.xlu0 %92
    %vm94 = vcmask 441728
    %95 = vst.msk [vmem:[#allocation0] sm:$0x1] %vm94, %v93
    %s96 = scalar_lea.vmem %s0, 7
    %v97 = vld [vmem:[%s96] sm:$0x1]
    %98 = vrot.lane.b32.xlu0 %v97, 42
    %v99 = vpop.permute.xlu0 %98
    %vm100 = vcmask 392528
    %101 = vst.msk [vmem:[#allocation0] sm:$0x1] %vm100, %v99
    %s102 = scalar_lea.vmem %s0, 6
    %v103 = vld [vmem:[%s102] sm:$0x1]
    %104 = vrot.lane.b32.xlu0 %v103, 36
    %v105 = vpop.permute.xlu0 %104
    %vm106 = vcmask 343328
    %107 = vst.msk [vmem:[#allocation0] sm:$0x1] %vm106, %v105
    %s108 = scalar_lea.vmem %s0, 27
    %v109 = vld [vmem:[%s108] sm:$0x1]
    %110 = vrot.lane.b32.xlu0 %v109, 34
    %v111 = vpop.permute.xlu0 %110
    %vm112 = vcmask 326928
    %s113 = scalar_lea.vmem [#allocation0], 8
    %114 = vst.msk [vmem:[%s113] sm:$0x1] %vm112, %v111
    %s115 = scalar_lea.vmem %s0, 5
    %v116 = vld [vmem:[%s115] sm:$0x1]
    %117 = vrot.lane.b32.xlu0 %v116, 30
    %v118 = vpop.permute.xlu0 %117
    %vm119 = vcmask 294128
    %120 = vst.msk [vmem:[#allocation0] sm:$0x1] %vm119, %v118
    %s121 = scalar_lea.vmem %s0, 26
    %v122 = vld [vmem:[%s121] sm:$0x1]
    %123 = vrot.lane.b32.xlu0 %v122, 28
    %v124 = vpop.permute.xlu0 %123
    %vm125 = vcmask 277728
    %s126 = scalar_lea.vmem [#allocation0], 8
    %127 = vst.msk [vmem:[%s126] sm:$0x1] %vm125, %v124
    %s128 = scalar_lea.vmem %s0, 4
    %v129 = vld [vmem:[%s128] sm:$0x1]
    %130 = vrot.lane.b32.xlu0 %v129, 24
    %v131 = vpop.permute.xlu0 %130
    %vm132 = vcmask 244928
    %133 = vst.msk [vmem:[#allocation0] sm:$0x1] %vm132, %v131
    %s134 = scalar_lea.vmem %s0, 25
    %v135 = vld [vmem:[%s134] sm:$0x1]
    %136 = vrot.lane.b32.xlu0 %v135, 22
    %v137 = vpop.permute.xlu0 %136
    %vm138 = vcmask 228528
    %s139 = scalar_lea.vmem [#allocation0], 8
    %140 = vst.msk [vmem:[%s139] sm:$0x1] %vm138, %v137
    %s141 = scalar_lea.vmem %s0, 3
    %v142 = vld [vmem:[%s141] sm:$0x1]
    %143 = vrot.lane.b32.xlu0 %v142, 18
    %v144 = vpop.permute.xlu0 %143
    %vm145 = vcmask 195728
    %146 = vst.msk [vmem:[#allocation0] sm:$0x1] %vm145, %v144
    %s147 = scalar_lea.vmem %s0, 24
    %v148 = vld [vmem:[%s147] sm:$0x1]
    %149 = vrot.lane.b32.xlu0 %v148, 16
    %v150 = vpop.permute.xlu0 %149
    %vm151 = vcmask 179328
    %s152 = scalar_lea.vmem [#allocation0], 8
    %153 = vst.msk [vmem:[%s152] sm:$0x1] %vm151, %v150
    %s154 = scalar_lea.vmem %s0, 2
    %v155 = vld [vmem:[%s154] sm:$0x1]
    %156 = vrot.lane.b32.xlu0 %v155, 12
    %v157 = vpop.permute.xlu0 %156
    %vm158 = vcmask 146528
    %159 = vst.msk [vmem:[#allocation0] sm:$0x1] %vm158, %v157
    %s160 = scalar_lea.vmem %s0, 23
    %v161 = vld [vmem:[%s160] sm:$0x1]
    %162 = vrot.lane.b32.xlu0 %v161, 10
    %v163 = vpop.permute.xlu0 %162
    %vm164 = vcmask 130128
    %s165 = scalar_lea.vmem [#allocation0], 8
    %166 = vst.msk [vmem:[%s165] sm:$0x1] %vm164, %v163
    %s167 = scalar_lea.vmem %s0, 1
    %v168 = vld [vmem:[%s167] sm:$0x1]
    %169 = vrot.lane.b32.xlu0 %v168, 6
    %v170 = vpop.permute.xlu0 %169
    %vm171 = vcmask 97328
    %172 = vst.msk [vmem:[#allocation0] sm:$0x1] %vm171, %v170
    %s173 = scalar_lea.vmem %s0, 22
    %v174 = vld [vmem:[%s173] sm:$0x1]
    %175 = vrot.lane.b32.xlu0 %v174, 4
    %v176 = vpop.permute.xlu0 %175
    %vm177 = vcmask 80928
    %s178 = scalar_lea.vmem [#allocation0], 8
    %179 = vst.msk [vmem:[%s178] sm:$0x1] %vm177, %v176
    %s181 = sshllo.u32 0, 1
    %v183 = vld [vmem:[#allocation0] sm:%s181]
    %s184 = sshllo.u32 0, 1
    %185 = vst [vmem:[%s1] sm:%s184] %v183
    %s186 = scalar_lea.vmem [#allocation0], 8
    %v187 = vld [vmem:[%s186] sm:%s181]
    %s188 = sshllo.u32 0, 1
    %s189 = scalar_lea.vmem %s1, 1
    %190 = vst [vmem:[%s189] sm:%s188] %v187

// kernel: tile.18
$region0: #{tile.18}
  #allocation0 [shape = 's32[1]{0}', space=sflag, size = 0x4, scoped, tag = 'scoped memory for tile.18']
  %s0 = inlined_call_operand.vmem [shape: f32[16], index: 0, kind: input, shape index: {}]
  %s1 = inlined_call_operand.vmem [shape: f32[10,16], index: 1, kind: output, shape index: {}]
  // Predicated region
  $region2: #{tile.18} parent=0 // pred_check
    _
  $region3: #{tile.18} parent=0 // pred_check_branch
    %3 = sbr.rel (0) target = $region5
  $region4: #{tile.18} parent=0 // pred_region
    _
  $region5: #{tile.18} parent=0 // pred_fallthru
    _
  %v4 = vld [vmem:[%s0] ss:$0 sm:$0xff]
  %5 = vst [vmem:[%s1] sm:$0xff] %v4
  %s6 = scalar_lea.vmem %s1, 8
  %7 = vst [vmem:[%s6] sm:$0xff] %v4

// kernel: tile.19
$region0: #{tile.19}
  %s0 = inlined_call_operand.vmem [shape: f32[10,16], index: 0, kind: input, shape index: {}]
  %s1 = inlined_call_operand.vmem [shape: f32[1,160], index: 1, kind: output, shape index: {}]
  $region1: #{tile.19} parent=0
    #allocation0 [shape = 'u8[8192]{0}', space=vmem, size = 0x2000, scoped, tag = 'scoped mem for output reshape']
    %s2 = smov 3
    %v3 = vld [vmem:[%s0] ss:$8 sm:%s2]
    %vm4 = vcmask 130048
    %5 = vst.msk [vmem:[#allocation0] ss:$8 sm:$0x3] %vm4, %v3
    %s6 = scalar_lea.vmem %s0, 7
    %v7 = vld [vmem:[%s6] sm:$0x1]
    %8 = vrot.lane.b32.xlu0 %v7, 112
    %v9 = vpop.permute.xlu0 %8
    %vm10 = vcmask 1048448
    %11 = vst.msk [vmem:[#allocation0] sm:$0x1] %vm10, %v9
    %s12 = scalar_lea.vmem %s0, 6
    %v13 = vld [vmem:[%s12] sm:$0x1]
    %14 = vrot.lane.b32.xlu0 %v13, 96
    %v15 = vpop.permute.xlu0 %14
    %vm16 = vcmask 917248
    %17 = vst.msk [vmem:[#allocation0] sm:$0x1] %vm16, %v15
    %s18 = scalar_lea.vmem %s0, 5
    %v19 = vld [vmem:[%s18] sm:$0x1]
    %20 = vrot.lane.b32.xlu0 %v19, 80
    %v21 = vpop.permute.xlu0 %20
    %vm22 = vcmask 786048
    %23 = vst.msk [vmem:[#allocation0] sm:$0x1] %vm22, %v21
    %s24 = scalar_lea.vmem %s0, 4
    %v25 = vld [vmem:[%s24] sm:$0x1]
    %26 = vrot.lane.b32.xlu0 %v25, 64
    %v27 = vpop.permute.xlu0 %26
    %vm28 = vcmask 654848
    %29 = vst.msk [vmem:[#allocation0] sm:$0x1] %vm28, %v27
    %s30 = scalar_lea.vmem %s0, 3
    %v31 = vld [vmem:[%s30] sm:$0x1]
    %32 = vrot.lane.b32.xlu0 %v31, 48
    %v33 = vpop.permute.xlu0 %32
    %vm34 = vcmask 523648
    %35 = vst.msk [vmem:[#allocation0] sm:$0x1] %vm34, %v33
    %s36 = scalar_lea.vmem %s0, 2
    %v37 = vld [vmem:[%s36] sm:$0x1]
    %38 = vrot.lane.b32.xlu0 %v37, 32
    %v39 = vpop.permute.xlu0 %38
    %vm40 = vcmask 392448
    %41 = vst.msk [vmem:[#allocation0] sm:$0x1] %vm40, %v39
    %s42 = scalar_lea.vmem %s0, 1
    %s43 = smov 3
    %v44 = vld [vmem:[%s42] ss:$8 sm:%s43]
    %45 = vrot.lane.b32.xlu0 %v44, 16
    %v46 = vpop.permute.xlu0 %45
    %vm47 = vcmask 261248
    %48 = vst.msk [vmem:[#allocation0] ss:$8 sm:$0x3] %vm47, %v46
    %s50 = sshllo.u32 0, 1
    %v52 = vld [vmem:[#allocation0] sm:%s50]
    %s53 = sshllo.u32 0, 1
    %54 = vst [vmem:[%s1] sm:%s53] %v52
    %s55 = scalar_lea.vmem [#allocation0], 8
    %v56 = vld [vmem:[%s55] sm:%s50]
    %s57 = sshllo.u32 0, 1
    %s58 = scalar_lea.vmem %s1, 1
    %59 = vst [vmem:[%s58] sm:%s57] %v56

// kernel: lenet_forward.1
$region0: #{lenet_forward.1}
  #allocation0 [shape = 'u32[]', space=smem, size = 0x4, offset = 0x4, fixed_abs, tag = 'smem constant byte address 0x4 - core index']
  #allocation1 [shape = 'u32[144,128]{1,0:T(1,128)}', space=vmem, size = 0x12000, scoped, tag = 'internal scratch']
  #allocation2 [shape = 'f32[256,84]{1,0:T(8,128)}', space=vmem, size = 0x20000, scoped, tag = 'scratch operand']
  #allocation3 [shape = 'f32[128,80]{1,0:T(8,128)}', space=vmem, size = 0x10000, scoped, tag = 'scratch operand']
  #allocation4 [shape = 'f32[64,120]{1,0:T(8,128)}', space=vmem, size = 0x8000, scoped, tag = 'scratch operand']
  %s0 = inlined_call_operand.vmem [shape: f32[256,32], index: 0, kind: input, shape index: {}]
  %s1 = inlined_call_operand.vmem [shape: f32[5,32,168], index: 1, kind: input, shape index: {}]
  %s2 = inlined_call_operand.vmem [shape: f32[1,168], index: 2, kind: input, shape index: {}]
  %s3 = inlined_call_operand.vmem [shape: f32[168,84], index: 3, kind: input, shape index: {}]
  %s4 = inlined_call_operand.vmem [shape: f32[5,84,160], index: 4, kind: input, shape index: {}]
  %s5 = inlined_call_operand.vmem [shape: f32[1,160], index: 5, kind: input, shape index: {}]
  %s6 = inlined_call_operand.vmem [shape: f32[160,80], index: 6, kind: input, shape index: {}]
  %s7 = inlined_call_operand.vmem [shape: f32[5,80,120], index: 7, kind: input, shape index: {}]
  %s8 = inlined_call_operand.vmem [shape: f32[1,120], index: 8, kind: input, shape index: {}]
  %s9 = inlined_call_operand.vmem [shape: f32[120,84], index: 9, kind: input, shape index: {}]
  %s10 = inlined_call_operand.vmem [shape: f32[1,84], index: 10, kind: input, shape index: {}]
  %s11 = inlined_call_operand.vmem [shape: f32[84,10], index: 11, kind: input, shape index: {}]
  %s12 = inlined_call_operand.vmem [shape: f32[1,10], index: 12, kind: input, shape index: {}]
  %s13 = inlined_call_operand.vmem [shape: f32[8,10], index: 13, kind: output, shape index: {}]
  %s14 = sld [smem:[#allocation0]]
  $region62: #{lenet_forward.1} parent=0
    _
  %s16 = ssub.s32 1, %s14
  %s17 = scalar_select 0, %s16, %s14
  // Predicated region
  $region2: #{lenet_forward.1} parent=0 // pred_check
    _
  $region3: #{lenet_forward.1} parent=0 // pred_check_branch
    %19 = sbr.rel (0) target = $region5
  $region4: #{lenet_forward.1} parent=0 // pred_region
    _
  $region5: #{lenet_forward.1} parent=0 // pred_fallthru
    _
  // Predicated region
  $region6: #{lenet_forward.1} parent=0 // pred_check
    _
  $region7: #{lenet_forward.1} parent=0 // pred_check_branch
    %21 = sbr.rel (0) target = $region9
  $region8: #{lenet_forward.1} parent=0 // pred_region
    _
  $region9: #{lenet_forward.1} parent=0 // pred_fallthru
    _
  // Predicated region
  $region10: #{lenet_forward.1} parent=0 // pred_check
    _
  $region11: #{lenet_forward.1} parent=0 // pred_check_branch
    %23 = sbr.rel (0) target = $region13
  $region12: #{lenet_forward.1} parent=0 // pred_region
    _
  $region13: #{lenet_forward.1} parent=0 // pred_fallthru
    _
  // Predicated region
  $region14: #{lenet_forward.1} parent=0 // pred_check
    _
  $region15: #{lenet_forward.1} parent=0 // pred_check_branch
    %25 = sbr.rel (0) target = $region17
  $region16: #{lenet_forward.1} parent=0 // pred_region
    _
  $region17: #{lenet_forward.1} parent=0 // pred_fallthru
    _
  // Predicated region
  $region18: #{lenet_forward.1} parent=0 // pred_check
    _
  $region19: #{lenet_forward.1} parent=0 // pred_check_branch
    %27 = sbr.rel (0) target = $region21
  $region20: #{lenet_forward.1} parent=0 // pred_region
    _
  $region21: #{lenet_forward.1} parent=0 // pred_fallthru
    _
  // Predicated region
  $region22: #{lenet_forward.1} parent=0 // pred_check
    _
  $region23: #{lenet_forward.1} parent=0 // pred_check_branch
    %29 = sbr.rel (0) target = $region25
  $region24: #{lenet_forward.1} parent=0 // pred_region
    _
  $region25: #{lenet_forward.1} parent=0 // pred_fallthru
    _
  // Predicated region
  $region26: #{lenet_forward.1} parent=0 // pred_check
    _
  $region27: #{lenet_forward.1} parent=0 // pred_check_branch
    %31 = sbr.rel (0) target = $region29
  $region28: #{lenet_forward.1} parent=0 // pred_region
    _
  $region29: #{lenet_forward.1} parent=0 // pred_fallthru
    _
  // Predicated region
  $region30: #{lenet_forward.1} parent=0 // pred_check
    _
  $region31: #{lenet_forward.1} parent=0 // pred_check_branch
    %33 = sbr.rel (0) target = $region33
  $region32: #{lenet_forward.1} parent=0 // pred_region
    _
  $region33: #{lenet_forward.1} parent=0 // pred_fallthru
    _
  // Predicated region
  $region34: #{lenet_forward.1} parent=0 // pred_check
    _
  $region35: #{lenet_forward.1} parent=0 // pred_check_branch
    %35 = sbr.rel (0) target = $region37
  $region36: #{lenet_forward.1} parent=0 // pred_region
    _
  $region37: #{lenet_forward.1} parent=0 // pred_fallthru
    _
  // Predicated region
  $region38: #{lenet_forward.1} parent=0 // pred_check
    _
  $region39: #{lenet_forward.1} parent=0 // pred_check_branch
    %37 = sbr.rel (0) target = $region41
  $region40: #{lenet_forward.1} parent=0 // pred_region
    _
  $region41: #{lenet_forward.1} parent=0 // pred_fallthru
    _
  // Predicated region
  $region42: #{lenet_forward.1} parent=0 // pred_check
    _
  $region43: #{lenet_forward.1} parent=0 // pred_check_branch
    %39 = sbr.rel (0) target = $region45
  $region44: #{lenet_forward.1} parent=0 // pred_region
    _
  $region45: #{lenet_forward.1} parent=0 // pred_fallthru
    _
  // Predicated region
  $region46: #{lenet_forward.1} parent=0 // pred_check
    _
  $region47: #{lenet_forward.1} parent=0 // pred_check_branch
    %41 = sbr.rel (0) target = $region49
  $region48: #{lenet_forward.1} parent=0 // pred_region
    _
  $region49: #{lenet_forward.1} parent=0 // pred_fallthru
    _
  // Predicated region
  $region50: #{lenet_forward.1} parent=0 // pred_check
    _
  $region51: #{lenet_forward.1} parent=0 // pred_check_branch
    %43 = sbr.rel (0) target = $region53
  $region52: #{lenet_forward.1} parent=0 // pred_region
    _
  $region53: #{lenet_forward.1} parent=0 // pred_fallthru
    _
  %v44 = vld [vmem:[%s0] sm:$0xff]
  %v45 = vld [vmem:[%s0 + $0x8] sm:$0xff]
  %v46 = vld [vmem:[%s0 + $0x10] sm:$0xff]
  %v47 = vld [vmem:[%s0 + $0x18] sm:$0xff]
  %v48 = vld [vmem:[%s0 + $0x20] sm:$0xff]
  %v49 = vld [vmem:[%s0 + $0x28] sm:$0xff]
  %v50 = vld [vmem:[%s0 + $0x30] sm:$0xff]
  %v51 = vld [vmem:[%s0 + $0x38] sm:$0xff]
  %v52 = vld [vmem:[%s0 + $0x40] sm:$0xff]
  %v53 = vld [vmem:[%s0 + $0x48] sm:$0xff]
  %v54 = vld [vmem:[%s0 + $0x50] sm:$0xff]
  %v55 = vld [vmem:[%s0 + $0x58] sm:$0xff]
  %v56 = vld [vmem:[%s0 + $0x60] sm:$0xff]
  %v57 = vld [vmem:[%s0 + $0x68] sm:$0xff]
  %v58 = vld [vmem:[%s0 + $0x70] sm:$0xff]
  %v59 = vld [vmem:[%s0 + $0x78] sm:$0xff]
  %v60 = vld [vmem:[%s0 + $0x80] sm:$0xff]
  %v61 = vld [vmem:[%s0 + $0x88] sm:$0xff]
  %v62 = vld [vmem:[%s0 + $0x90] sm:$0xff]
  %v63 = vld [vmem:[%s0 + $0x98] sm:$0xff]
  %v64 = vld [vmem:[%s0 + $0xa0] sm:$0xff]
  %v65 = vld [vmem:[%s0 + $0xa8] sm:$0xff]
  %v66 = vld [vmem:[%s0 + $0xb0] sm:$0xff]
  %v67 = vld [vmem:[%s0 + $0xb8] sm:$0xff]
  %v68 = vld [vmem:[%s0 + $0xc0] sm:$0xff]
  %v69 = vld [vmem:[%s0 + $0xc8] sm:$0xff]
  %v70 = vld [vmem:[%s0 + $0xd0] sm:$0xff]
  %v71 = vld [vmem:[%s0 + $0xd8] sm:$0xff]
  %v72 = vld [vmem:[%s0 + $0xe0] sm:$0xff]
  %v73 = vld [vmem:[%s0 + $0xe8] sm:$0xff]
  %v74 = vld [vmem:[%s0 + $0xf0] sm:$0xff]
  %v75 = vld [vmem:[%s0 + $0xf8] sm:$0xff]
  %v76 = vld [vmem:[%s1] sm:$0xff]
  %v77 = vld [vmem:[%s1 + $0x8] sm:$0xff]
  %v78 = vld [vmem:[%s1 + $0x10] sm:$0xff]
  %v79 = vld [vmem:[%s1 + $0x18] sm:$0xff]
  %v80 = vld [vmem:[%s1 + $0x20] sm:$0xff]
  %v81 = vld [vmem:[%s1 + $0x28] sm:$0xff]
  %v82 = vld [vmem:[%s1 + $0x30] sm:$0xff]
  %v83 = vld [vmem:[%s1 + $0x38] sm:$0xff]
  %v84 = vrot.slane %v44, 1
  %v85 = vrot.slane %v45, 1
  %v86 = vrot.slane %v46, 1
  %v87 = vrot.slane %v47, 1
  %v88 = vrot.slane %v48, 1
  %v89 = vrot.slane %v49, 1
  %v90 = vrot.slane %v50, 1
  %v91 = vrot.slane %v51, 1
  %v92 = vrot.slane %v52, 1
  %v93 = vrot.slane %v53, 1
  %v94 = vrot.slane %v54, 1
  %v95 = vrot.slane %v55, 1
  %v96 = vrot.slane %v56, 1
  %v97 = vrot.slane %v57, 1
  %v98 = vrot.slane %v58, 1
  %v99 = vrot.slane %v59, 1
  %v100 = vrot.slane %v60, 1
  %v101 = vrot.slane %v61, 1
  %v102 = vrot.slane %v62, 1
  %v103 = vrot.slane %v63, 1
  %v104 = vrot.slane %v64, 1
  %v105 = vrot.slane %v65, 1
  %v106 = vrot.slane %v66, 1
  %v107 = vrot.slane %v67, 1
  %v108 = vrot.slane %v68, 1
  %v109 = vrot.slane %v69, 1
  %v110 = vrot.slane %v70, 1
  %v111 = vrot.slane %v71, 1
  %v112 = vrot.slane %v72, 1
  %v113 = vrot.slane %v73, 1
  %v114 = vrot.slane %v74, 1
  %v115 = vrot.slane %v75, 1
  %v116 = vlaneseq
  %v117 = vshrl.u32 %v116, 7
  %vm118 = vcmp.lt.s32.totalorder %v117, 7
  %v119 = vsel %vm118, %v114, %v115
  %v120 = vsel %vm118, %v113, %v114
  %v121 = vsel %vm118, %v112, %v113
  %v122 = vsel %vm118, %v111, %v112
  %v123 = vsel %vm118, %v110, %v111
  %v124 = vsel %vm118, %v109, %v110
  %v125 = vsel %vm118, %v108, %v109
  %v126 = vsel %vm118, %v107, %v108
  %v127 = vsel %vm118, %v106, %v107
  %v128 = vsel %vm118, %v105, %v106
  %v129 = vsel %vm118, %v104, %v105
  %v130 = vsel %vm118, %v103, %v104
  %v131 = vsel %vm118, %v102, %v103
  %v132 = vsel %vm118, %v101, %v102
  %v133 = vsel %vm118, %v100, %v101
  %v134 = vsel %vm118, %v99, %v100
  %v135 = vsel %vm118, %v98, %v99
  %v136 = vsel %vm118, %v97, %v98
  %v137 = vsel %vm118, %v96, %v97
  %v138 = vsel %vm118, %v95, %v96
  %v139 = vsel %vm118, %v94, %v95
  %v140 = vsel %vm118, %v93, %v94
  %v141 = vsel %vm118, %v92, %v93
  %v142 = vsel %vm118, %v91, %v92
  %v143 = vsel %vm118, %v90, %v91
  %v144 = vsel %vm118, %v89, %v90
  %v145 = vsel %vm118, %v88, %v89
  %v146 = vsel %vm118, %v87, %v88
  %v147 = vsel %vm118, %v86, %v87
  %v148 = vsel %vm118, %v85, %v86
  %v149 = vsel %vm118, %v84, %v85
  %v150 = vsel %vm118, %v115, %v84
  %s151 = scalar_lea.vmem %s1, 64
  %v152 = vld [vmem:[%s151] sm:$0xff]
  %v153 = vld [vmem:[%s151 + $0x8] sm:$0xff]
  %v154 = vld [vmem:[%s151 + $0x10] sm:$0xff]
  %v155 = vld [vmem:[%s151 + $0x18] sm:$0xff]
  %v156 = vld [vmem:[%s151 + $0x20] sm:$0xff]
  %v157 = vld [vmem:[%s151 + $0x28] sm:$0xff]
  %v158 = vld [vmem:[%s151 + $0x30] sm:$0xff]
  %v159 = vld [vmem:[%s151 + $0x38] sm:$0xff]
  %vm160 = vcmask 261120
  %v162 = vsel %vm160, %v149, 0
  %v165 = vsel %vm160, %v148, 0
  %v168 = vsel %vm160, %v147, 0
  %v171 = vsel %vm160, %v146, 0
  %v174 = vsel %vm160, %v145, 0
  %v177 = vsel %vm160, %v144, 0
  %v180 = vsel %vm160, %v143, 0
  %v183 = vsel %vm160, %v142, 0
  %v186 = vsel %vm160, %v141, 0
  %v189 = vsel %vm160, %v140, 0
  %v192 = vsel %vm160, %v139, 0
  %v195 = vsel %vm160, %v138, 0
  %v198 = vsel %vm160, %v137, 0
  %v201 = vsel %vm160, %v136, 0
  %v204 = vsel %vm160, %v135, 0
  %v207 = vsel %vm160, %v134, 0
  %v210 = vsel %vm160, %v133, 0
  %v213 = vsel %vm160, %v132, 0
  %v216 = vsel %vm160, %v131, 0
  %v219 = vsel %vm160, %v130, 0
  %v222 = vsel %vm160, %v129, 0
  %v225 = vsel %vm160, %v128, 0
  %v228 = vsel %vm160, %v127, 0
  %v231 = vsel %vm160, %v126, 0
  %v234 = vsel %vm160, %v125, 0
  %v237 = vsel %vm160, %v124, 0
  %v240 = vsel %vm160, %v123, 0
  %v243 = vsel %vm160, %v122, 0
  %v246 = vsel %vm160, %v121, 0
  %v249 = vsel %vm160, %v120, 0
  %v252 = vsel %vm160, %v119, 0
  %v255 = vsel %vm160, %v150, 0
  %257 = vmatprep.subr.mxu0 %v153
  %258 = vmatpush1.msra.mxu0 %v152
  %259 = vmatprep.subr.mxu0 %v155
  %260 = vmatpush1.msra.mxu0 %v154
  %261 = vmatprep.subr.mxu0 %v157
  %262 = vmatpush1.msra.mxu0 %v156
  %263 = vmatprep.subr.mxu0 %v159
  %264 = vmatpush1.msra.mxu0 %v158
  %265 = vmatprep.subr.mxu0 0.0
  %266 = vmatpush1.msra.mxu0 0.0
  %267 = vmatprep.subr.mxu0 0.0
  %268 = vmatpush1.msra.mxu0 0.0
  %269 = vmatprep.subr.mxu0 0.0
  %270 = vmatpush1.msra.mxu0 0.0
  %271 = vmatprep.subr.mxu0 0.0
  %272 = vmatpush1.msra.mxu0 0.0
  %273 = vmatprep.subr.mxu0 0.0
  %274 = vmatpush1.msra.mxu0 0.0
  %275 = vmatprep.subr.mxu0 0.0
  %276 = vmatpush1.msra.mxu0 0.0
  %277 = vmatprep.subr.mxu0 0.0
  %278 = vmatpush1.msra.mxu0 0.0
  %279 = vmatprep.subr.mxu0 0.0
  %280 = vmatpush1.msra.mxu0 0.0
  %281 = vmatprep.subr.mxu0 0.0
  %282 = vmatpush1.msra.mxu0 0.0
  %283 = vmatprep.subr.mxu0 0.0
  %284 = vmatpush1.msra.mxu0 0.0
  %285 = vmatprep.subr.mxu0 0.0
  %286 = vmatpush1.msra.mxu0 0.0
  %287 = vmatprep.subr.mxu0 0.0
  %288 = vmatpush1.msra.mxu0 0.0
  %289 = vmatprep.subr.mxu0 0.0
  %290 = vmatpush1.msra.mxu0 0.0
  %291 = vmatprep.subr.mxu0 0.0
  %292 = vmatpush1.msra.mxu0 0.0
  %293 = vmatprep.subr.mxu0 0.0
  %294 = vmatpush1.msra.mxu0 0.0
  %295 = vmatprep.subr.mxu0 0.0
  %296 = vmatpush1.msra.mxu0 0.0
  %297 = vmatprep.subr.mxu0 0.0
  %298 = vmatpush1.msra.mxu0 0.0
  %299 = vmatprep.subr.mxu0 0.0
  %300 = vmatpush1.msra.mxu0 0.0
  %301 = vmatprep.subr.mxu0 0.0
  %302 = vmatpush1.msra.mxu0 0.0
  %303 = vmatprep.subr.mxu0 0.0
  %304 = vmatpush1.msra.mxu0 0.0
  %305 = vmatprep.subr.mxu0 0.0
  %306 = vmatpush1.msra.mxu0 0.0
  %307 = vmatprep.subr.mxu0 0.0
  %308 = vmatpush1.msra.mxu0 0.0
  %309 = vmatprep.subr.mxu0 0.0
  %310 = vmatpush1.msra.mxu0 0.0
  %311 = vmatprep.subr.mxu0 0.0
  %312 = vmatpush1.msra.mxu0 0.0
  %313 = vmatprep.subr.mxu0 0.0
  %314 = vmatpush1.msra.mxu0 0.0
  %315 = vmatprep.subr.mxu0 0.0
  %316 = vmatpush1.msra.mxu0 0.0
  %317 = vmatprep.subr.mxu0 0.0
  %318 = vmatpush1.msra.mxu0 0.0
  %319 = vmatprep.subr.mxu0 0.0
  %320 = vmatpush1.msra.mxu0 0.0
  %321 = vmatprep.mubr.f32.mxu0 0.0
  %322 = vmatmul.mubr.f32.gmra.mrb[0].mxu0 %v162
  %v323 = vpop.f32.mrb[0].mxu0
  %v324 = vadd.f32 0.0, %v323
  %v325 = vpop.f32.mrb[0].mxu0
  %v326 = vadd.f32 0.0, %v325
  %327 = vmatprep.mubr.f32.mxu0 0.0
  %328 = vmatmul.mubr.f32.gmra.mrb[0].mxu0 %v165
  %v329 = vpop.f32.mrb[0].mxu0
  %v330 = vadd.f32 0.0, %v329
  %v331 = vpop.f32.mrb[0].mxu0
  %v332 = vadd.f32 0.0, %v331
  %333 = vmatprep.mubr.f32.mxu0 0.0
  %334 = vmatmul.mubr.f32.gmra.mrb[0].mxu0 %v168
  %v335 = vpop.f32.mrb[0].mxu0
  %v336 = vadd.f32 0.0, %v335
  %v337 = vpop.f32.mrb[0].mxu0
  %v338 = vadd.f32 0.0, %v337
  %339 = vmatprep.mubr.f32.mxu0 0.0
  %340 = vmatmul.mubr.f32.gmra.mrb[0].mxu0 %v171
  %v341 = vpop.f32.mrb[0].mxu0
  %v342 = vadd.f32 0.0, %v341
  %v343 = vpop.f32.mrb[0].mxu0
  %v344 = vadd.f32 0.0, %v343
  %345 = vmatprep.mubr.f32.mxu0 0.0
  %346 = vmatmul.mubr.f32.gmra.mrb[0].mxu0 %v174
  %v347 = vpop.f32.mrb[0].mxu0
  %v348 = vadd.f32 0.0, %v347
  %v349 = vpop.f32.mrb[0].mxu0
  %v350 = vadd.f32 0.0, %v349
  %351 = vmatprep.mubr.f32.mxu0 0.0
  %352 = vmatmul.mubr.f32.gmra.mrb[0].mxu0 %v177
  %v353 = vpop.f32.mrb[0].mxu0
  %v354 = vadd.f32 0.0, %v353
  %v355 = vpop.f32.mrb[0].mxu0
  %v356 = vadd.f32 0.0, %v355
  %357 = vmatprep.mubr.f32.mxu0 0.0
  %358 = vmatmul.mubr.f32.gmra.mrb[0].mxu0 %v180
  %v359 = vpop.f32.mrb[0].mxu0
  %v360 = vadd.f32 0.0, %v359
  %v361 = vpop.f32.mrb[0].mxu0
  %v362 = vadd.f32 0.0, %v361
  %363 = vmatprep.mubr.f32.mxu0 0.0
  %364 = vmatmul.mubr.f32.gmra.mrb[0].mxu0 %v183
  %v365 = vpop.f32.mrb[0].mxu0
  %v366 = vadd.f32 0.0, %v365
  %v367 = vpop.f32.mrb[0].mxu0
  %v368 = vadd.f32 0.0, %v367
  %369 = vmatprep.mubr.f32.mxu0 0.0
  %370 = vmatmul.mubr.f32.gmra.mrb[0].mxu0 %v186
  %v371 = vpop.f32.mrb[0].mxu0
  %v372 = vadd.f32 0.0, %v371
  %v373 = vpop.f32.mrb[0].mxu0
  %v374 = vadd.f32 0.0, %v373
  %375 = vmatprep.mubr.f32.mxu0 0.0
  %376 = vmatmul.mubr.f32.gmra.mrb[0].mxu0 %v189
  %v377 = vpop.f32.mrb[0].mxu0
  %v378 = vadd.f32 0.0, %v377
  %v379 = vpop.f32.mrb[0].mxu0
  %v380 = vadd.f32 0.0, %v379
  %381 = vmatprep.mubr.f32.mxu0 0.0
  %382 = vmatmul.mubr.f32.gmra.mrb[0].mxu0 %v192
  %v383 = vpop.f32.mrb[0].mxu0
  %v384 = vadd.f32 0.0, %v383
  %v385 = vpop.f32.mrb[0].mxu0
  %v386 = vadd.f32 0.0, %v385
  %387 = vmatprep.mubr.f32.mxu0 0.0
  %388 = vmatmul.mubr.f32.gmra.mrb[0].mxu0 %v195
  %v389 = vpop.f32.mrb[0].mxu0
  %v390 = vadd.f32 0.0, %v389
  %v391 = vpop.f32.mrb[0].mxu0
  %v392 = vadd.f32 0.0, %v391
  %393 = vmatprep.mubr.f32.mxu0 0.0
  %394 = vmatmul.mubr.f32.gmra.mrb[0].mxu0 %v198
  %v395 = vpop.f32.mrb[0].mxu0
  %v396 = vadd.f32 0.0, %v395
  %v397 = vpop.f32.mrb[0].mxu0
  %v398 = vadd.f32 0.0, %v397
  %399 = vmatprep.mubr.f32.mxu0 0.0
  %400 = vmatmul.mubr.f32.gmra.mrb[0].mxu0 %v201
  %v401 = vpop.f32.mrb[0].mxu0
  %v402 = vadd.f32 0.0, %v401
  %v403 = vpop.f32.mrb[0].mxu0
  %v404 = vadd.f32 0.0, %v403
  %405 = vmatprep.mubr.f32.mxu0 0.0
  %406 = vmatmul.mubr.f32.gmra.mrb[0].mxu0 %v204
  %v407 = vpop.f32.mrb[0].mxu0
  %v408 = vadd.f32 0.0, %v407
  %v409 = vpop.f32.mrb[0].mxu0
  %v410 = vadd.f32 0.0, %v409
  %411 = vmatprep.mubr.f32.mxu0 0.0
  %412 = vmatmul.mubr.f32.gmra.mrb[0].mxu0 %v207
  %v413 = vpop.f32.mrb[0].mxu0
  %v414 = vadd.f32 0.0, %v413
  %v415 = vpop.f32.mrb[0].mxu0
  %v416 = vadd.f32 0.0, %v415
  %417 = vmatprep.mubr.f32.mxu0 0.0
  %418 = vmatmul.mubr.f32.gmra.mrb[0].mxu0 %v210
  %v419 = vpop.f32.mrb[0].mxu0
  %v420 = vadd.f32 0.0, %v419
  %v421 = vpop.f32.mrb[0].mxu0
  %v422 = vadd.f32 0.0, %v421
  %423 = vmatprep.mubr.f32.mxu0 0.0
  %424 = vmatmul.mubr.f32.gmra.mrb[0].mxu0 %v213
  %v425 = vpop.f32.mrb[0].mxu0
  %v426 = vadd.f32 0.0, %v425
  %v427 = vpop.f32.mrb[0].mxu0
  %v428 = vadd.f32 0.0, %v427
  %429 = vmatprep.mubr.f32.mxu0 0.0
  %430 = vmatmul.mubr.f32.gmra.mrb[0].mxu0 %v216
  %v431 = vpop.f32.mrb[0].mxu0
  %v432 = vadd.f32 0.0, %v431
  %v433 = vpop.f32.mrb[0].mxu0
  %v434 = vadd.f32 0.0, %v433
  %435 = vmatprep.mubr.f32.mxu0 0.0
  %436 = vmatmul.mubr.f32.gmra.mrb[0].mxu0 %v219
  %v437 = vpop.f32.mrb[0].mxu0
  %v438 = vadd.f32 0.0, %v437
  %v439 = vpop.f32.mrb[0].mxu0
  %v440 = vadd.f32 0.0, %v439
  %441 = vmatprep.mubr.f32.mxu0 0.0
  %442 = vmatmul.mubr.f32.gmra.mrb[0].mxu0 %v222
  %v443 = vpop.f32.mrb[0].mxu0
  %v444 = vadd.f32 0.0, %v443
  %v445 = vpop.f32.mrb[0].mxu0
  %v446 = vadd.f32 0.0, %v445
  %447 = vmatprep.mubr.f32.mxu0 0.0
  %448 = vmatmul.mubr.f32.gmra.mrb[0].mxu0 %v225
  %v449 = vpop.f32.mrb[0].mxu0
  %v450 = vadd.f32 0.0, %v449
  %v451 = vpop.f32.mrb[0].mxu0
  %v452 = vadd.f32 0.0, %v451
  %453 = vmatprep.mubr.f32.mxu0 0.0
  %454 = vmatmul.mubr.f32.gmra.mrb[0].mxu0 %v228
  %v455 = vpop.f32.mrb[0].mxu0
  %v456 = vadd.f32 0.0, %v455
  %v457 = vpop.f32.mrb[0].mxu0
  %v458 = vadd.f32 0.0, %v457
  %459 = vmatprep.mubr.f32.mxu0 0.0
  %460 = vmatmul.mubr.f32.gmra.mrb[0].mxu0 %v231
  %v461 = vpop.f32.mrb[0].mxu0
  %v462 = vadd.f32 0.0, %v461
  %v463 = vpop.f32.mrb[0].mxu0
  %v464 = vadd.f32 0.0, %v463
  %465 = vmatprep.mubr.f32.mxu0 0.0
  %466 = vmatmul.mubr.f32.gmra.mrb[0].mxu0 %v234
  %v467 = vpop.f32.mrb[0].mxu0
  %v468 = vadd.f32 0.0, %v467
  %v469 = vpop.f32.mrb[0].mxu0
  %v470 = vadd.f32 0.0, %v469
  %471 = vmatprep.mubr.f32.mxu0 0.0
  %472 = vmatmul.mubr.f32.gmra.mrb[0].mxu0 %v237
  %v473 = vpop.f32.mrb[0].mxu0
  %v474 = vadd.f32 0.0, %v473
  %v475 = vpop.f32.mrb[0].mxu0
  %v476 = vadd.f32 0.0, %v475
  %477 = vmatprep.mubr.f32.mxu0 0.0
  %478 = vmatmul.mubr.f32.gmra.mrb[0].mxu0 %v240
  %v479 = vpop.f32.mrb[0].mxu0
  %v480 = vadd.f32 0.0, %v479
  %v481 = vpop.f32.mrb[0].mxu0
  %v482 = vadd.f32 0.0, %v481
  %483 = vmatprep.mubr.f32.mxu0 0.0
  %484 = vmatmul.mubr.f32.gmra.mrb[0].mxu0 %v243
  %v485 = vpop.f32.mrb[0].mxu0
  %v486 = vadd.f32 0.0, %v485
  %v487 = vpop.f32.mrb[0].mxu0
  %v488 = vadd.f32 0.0, %v487
  %489 = vmatprep.mubr.f32.mxu0 0.0
  %490 = vmatmul.mubr.f32.gmra.mrb[0].mxu0 %v246
  %v491 = vpop.f32.mrb[0].mxu0
  %v492 = vadd.f32 0.0, %v491
  %v493 = vpop.f32.mrb[0].mxu0
  %v494 = vadd.f32 0.0, %v493
  %495 = vmatprep.mubr.f32.mxu0 0.0
  %496 = vmatmul.mubr.f32.gmra.mrb[0].mxu0 %v249
  %v497 = vpop.f32.mrb[0].mxu0
  %v498 = vadd.f32 0.0, %v497
  %v499 = vpop.f32.mrb[0].mxu0
  %v500 = vadd.f32 0.0, %v499
  %501 = vmatprep.mubr.f32.mxu0 0.0
  %502 = vmatmul.mubr.f32.gmra.mrb[0].mxu0 %v252
  %v503 = vpop.f32.mrb[0].mxu0
  %v504 = vadd.f32 0.0, %v503
  %v505 = vpop.f32.mrb[0].mxu0
  %v506 = vadd.f32 0.0, %v505
  %507 = vmatprep.mubr.f32.mxu0 0.0
  %508 = vmatmul.mubr.f32.gmra.mrb[0].mxu0 %v255
  %v509 = vpop.f32.mrb[0].mxu0
  %v510 = vadd.f32 0.0, %v509
  %v511 = vpop.f32.mrb[0].mxu0
  %v512 = vadd.f32 0.0, %v511
  %513 = vdwg.mxu0
  %v515 = vsel %vm160, %v44, 0
  %v518 = vsel %vm160, %v45, 0
  %v521 = vsel %vm160, %v46, 0
  %v524 = vsel %vm160, %v47, 0
  %v527 = vsel %vm160, %v48, 0
  %v530 = vsel %vm160, %v49, 0
  %v533 = vsel %vm160, %v50, 0
  %v536 = vsel %vm160, %v51, 0
  %v539 = vsel %vm160, %v52, 0
  %v542 = vsel %vm160, %v53, 0
  %v545 = vsel %vm160, %v54, 0
  %v548 = vsel %vm160, %v55, 0
  %v551 = vsel %vm160, %v56, 0
  %v554 = vsel %vm160, %v57, 0
  %v557 = vsel %vm160, %v58, 0
  %v560 = vsel %vm160, %v59, 0
  %v563 = vsel %vm160, %v60, 0
  %v566 = vsel %vm160, %v61, 0
  %v569 = vsel %vm160, %v62, 0
  %v572 = vsel %vm160, %v63, 0
  %v575 = vsel %vm160, %v64, 0
  %v578 = vsel %vm160, %v65, 0
  %v581 = vsel %vm160, %v66, 0
  %v584 = vsel %vm160, %v67, 0
  %v587 = vsel %vm160, %v68, 0
  %v590 = vsel %vm160, %v69, 0
  %v593 = vsel %vm160, %v70, 0
  %v596 = vsel %vm160, %v71, 0
  %v599 = vsel %vm160, %v72, 0
  %v602 = vsel %vm160, %v73, 0
  %v605 = vsel %vm160, %v74, 0
  %v608 = vsel %vm160, %v75, 0
  %610 = vmatprep.subr.mxu0 %v77
  %611 = vmatpush1.msra.mxu0 %v76
  %612 = vmatprep.subr.mxu0 %v79
  %613 = vmatpush1.msra.mxu0 %v78
  %614 = vmatprep.subr.mxu0 %v81
  %615 = vmatpush1.msra.mxu0 %v80
  %616 = vmatprep.subr.mxu0 %v83
  %617 = vmatpush1.msra.mxu0 %v82
  %618 = vmatprep.subr.mxu0 0.0
  %619 = vmatpush1.msra.mxu0 0.0
  %620 = vmatprep.subr.mxu0 0.0
  %621 = vmatpush1.msra.mxu0 0.0
  %622 = vmatprep.subr.mxu0 0.0
  %623 = vmatpush1.msra.mxu0 0.0
  %624 = vmatprep.subr.mxu0 0.0
  %625 = vmatpush1.msra.mxu0 0.0
  %626 = vmatprep.subr.mxu0 0.0
  %627 = vmatpush1.msra.mxu0 0.0
  %628 = vmatprep.subr.mxu0 0.0
  %629 = vmatpush1.msra.mxu0 0.0
  %630 = vmatprep.subr.mxu0 0.0
  %631 = vmatpush1.msra.mxu0 0.0
  %632 = vmatprep.subr.mxu0 0.0
  %633 = vmatpush1.msra.mxu0 0.0
  %634 = vmatprep.subr.mxu0 0.0
  %635 = vmatpush1.msra.mxu0 0.0
  %636 = vmatprep.subr.mxu0 0.0
  %637 = vmatpush1.msra.mxu0 0.0
  %638 = vmatprep.subr.mxu0 0.0
  %639 = vmatpush1.msra.mxu0 0.0
  %640 = vmatprep.subr.mxu0 0.0
  %641 = vmatpush1.msra.mxu0 0.0
  %642 = vmatprep.subr.mxu0 0.0
  %643 = vmatpush1.msra.mxu0 0.0
  %644 = vmatprep.subr.mxu0 0.0
  %645 = vmatpush1.msra.mxu0 0.0
  %646 = vmatprep.subr.mxu0 0.0
  %647 = vmatpush1.msra.mxu0 0.0
  %648 = vmatprep.subr.mxu0 0.0
  %649 = vmatpush1.msra.mxu0 0.0
  %650 = vmatprep.subr.mxu0 0.0
  %651 = vmatpush1.msra.mxu0 0.0
  %652 = vmatprep.subr.mxu0 0.0
  %653 = vmatpush1.msra.mxu0 0.0
  %654 = vmatprep.subr.mxu0 0.0
  %655 = vmatpush1.msra.mxu0 0.0
  %656 = vmatprep.subr.mxu0 0.0
  %657 = vmatpush1.msra.mxu0 0.0
  %658 = vmatprep.subr.mxu0 0.0
  %659 = vmatpush1.msra.mxu0 0.0
  %660 = vmatprep.subr.mxu0 0.0
  %661 = vmatpush1.msra.mxu0 0.0
  %662 = vmatprep.subr.mxu0 0.0
  %663 = vmatpush1.msra.mxu0 0.0
  %664 = vmatprep.subr.mxu0 0.0
  %665 = vmatpush1.msra.mxu0 0.0
  %666 = vmatprep.subr.mxu0 0.0
  %667 = vmatpush1.msra.mxu0 0.0
  %668 = vmatprep.subr.mxu0 0.0
  %669 = vmatpush1.msra.mxu0 0.0
  %670 = vmatprep.subr.mxu0 0.0
  %671 = vmatpush1.msra.mxu0 0.0
  %672 = vmatprep.subr.mxu0 0.0
  %673 = vmatpush1.msra.mxu0 0.0
  %674 = vmatprep.mubr.f32.mxu0 0.0
  %675 = vmatmul.mubr.f32.gmra.mrb[0].mxu0 %v515
  %v676 = vpop.f32.mrb[0].mxu0
  %v677 = vadd.f32 %v324, %v676
  %v678 = vpop.f32.mrb[0].mxu0
  %v679 = vadd.f32 %v326, %v678
  %680 = vmatprep.mubr.f32.mxu0 0.0
  %681 = vmatmul.mubr.f32.gmra.mrb[0].mxu0 %v518
  %v682 = vpop.f32.mrb[0].mxu0
  %v683 = vadd.f32 %v330, %v682
  %v684 = vpop.f32.mrb[0].mxu0
  %v685 = vadd.f32 %v332, %v684
  %686 = vmatprep.mubr.f32.mxu0 0.0
  %687 = vmatmul.mubr.f32.gmra.mrb[0].mxu0 %v521
  %v688 = vpop.f32.mrb[0].mxu0
  %v689 = vadd.f32 %v336, %v688
  %v690 = vpop.f32.mrb[0].mxu0
  %v691 = vadd.f32 %v338, %v690
  %692 = vmatprep.mubr.f32.mxu0 0.0
  %693 = vmatmul.mubr.f32.gmra.mrb[0].mxu0 %v524
  %v694 = vpop.f32.mrb[0].mxu0
  %v695 = vadd.f32 %v342, %v694
  %v696 = vpop.f32.mrb[0].mxu0
  %v697 = vadd.f32 %v344, %v696
  %698 = vmatprep.mubr.f32.mxu0 0.0
  %699 = vmatmul.mubr.f32.gmra.mrb[0].mxu0 %v527
  %v700 = vpop.f32.mrb[0].mxu0
  %v701 = vadd.f32 %v348, %v700
  %v702 = vpop.f32.mrb[0].mxu0
  %v703 = vadd.f32 %v350, %v702
  %704 = vmatprep.mubr.f32.mxu0 0.0
  %705 = vmatmul.mubr.f32.gmra.mrb[0].mxu0 %v530
  %v706 = vpop.f32.mrb[0].mxu0
  %v707 = vadd.f32 %v354, %v706
  %v708 = vpop.f32.mrb[0].mxu0
  %v709 = vadd.f32 %v356, %v708
  %710 = vmatprep.mubr.f32.mxu0 0.0
  %711 = vmatmul.mubr.f32.gmra.mrb[0].mxu0 %v533
  %v712 = vpop.f32.mrb[0].mxu0
  %v713 = vadd.f32 %v360, %v712
  %v714 = vpop.f32.mrb[0].mxu0
  %v715 = vadd.f32 %v362, %v714
  %716 = vmatprep.mubr.f32.mxu0 0.0
  %717 = vmatmul.mubr.f32.gmra.mrb[0].mxu0 %v536
  %v718 = vpop.f32.mrb[0].mxu0
  %v719 = vadd.f32 %v366, %v718
  %v720 = vpop.f32.mrb[0].mxu0
  %v721 = vadd.f32 %v368, %v720
  %722 = vmatprep.mubr.f32.mxu0 0.0
  %723 = vmatmul.mubr.f32.gmra.mrb[0].mxu0 %v539
  %v724 = vpop.f32.mrb[0].mxu0
  %v725 = vadd.f32 %v372, %v724
  %v726 = vpop.f32.mrb[0].mxu0
  %v727 = vadd.f32 %v374, %v726
  %728 = vmatprep.mubr.f32.mxu0 0.0
  %729 = vmatmul.mubr.f32.gmra.mrb[0].mxu0 %v542
  %v730 = vpop.f32.mrb[0].mxu0
  %v731 = vadd.f32 %v378, %v730
  %v732 = vpop.f32.mrb[0].mxu0
  %v733 = vadd.f32 %v380, %v732
  %734 = vmatprep.mubr.f32.mxu0 0.0
  %735 = vmatmul.mubr.f32.gmra.mrb[0].mxu0 %v545
  %v736 = vpop.f32.mrb[0].mxu0
  %v737 = vadd.f32 %v384, %v736
  %v738 = vpop.f32.mrb[0].mxu0
  %v739 = vadd.f32 %v386, %v738
  %740 = vmatprep.mubr.f32.mxu0 0.0
  %741 = vmatmul.mubr.f32.gmra.mrb[0].mxu0 %v548
  %v742 = vpop.f32.mrb[0].mxu0
  %v743 = vadd.f32 %v390, %v742
  %v744 = vpop.f32.mrb[0].mxu0
  %v745 = vadd.f32 %v392, %v744
  %746 = vmatprep.mubr.f32.mxu0 0.0
  %747 = vmatmul.mubr.f32.gmra.mrb[0].mxu0 %v551
  %v748 = vpop.f32.mrb[0].mxu0
  %v749 = vadd.f32 %v396, %v748
  %v750 = vpop.f32.mrb[0].mxu0
  %v751 = vadd.f32 %v398, %v750
  %752 = vmatprep.mubr.f32.mxu0 0.0
  %753 = vmatmul.mubr.f32.gmra.mrb[0].mxu0 %v554
  %v754 = vpop.f32.mrb[0].mxu0
  %v755 = vadd.f32 %v402, %v754
  %v756 = vpop.f32.mrb[0].mxu0
  %v757 = vadd.f32 %v404, %v756
  %758 = vmatprep.mubr.f32.mxu0 0.0
  %759 = vmatmul.mubr.f32.gmra.mrb[0].mxu0 %v557
  %v760 = vpop.f32.mrb[0].mxu0
  %v761 = vadd.f32 %v408, %v760
  %v762 = vpop.f32.mrb[0].mxu0
  %v763 = vadd.f32 %v410, %v762
  %764 = vmatprep.mubr.f32.mxu0 0.0
  %765 = vmatmul.mubr.f32.gmra.mrb[0].mxu0 %v560
  %v766 = vpop.f32.mrb[0].mxu0
  %v767 = vadd.f32 %v414, %v766
  %v768 = vpop.f32.mrb[0].mxu0
  %v769 = vadd.f32 %v416, %v768
  %770 = vmatprep.mubr.f32.mxu0 0.0
  %771 = vmatmul.mubr.f32.gmra.mrb[0].mxu0 %v563
  %v772 = vpop.f32.mrb[0].mxu0
  %v773 = vadd.f32 %v420, %v772
  %v774 = vpop.f32.mrb[0].mxu0
  %v775 = vadd.f32 %v422, %v774
  %776 = vmatprep.mubr.f32.mxu0 0.0
  %777 = vmatmul.mubr.f32.gmra.mrb[0].mxu0 %v566
  %v778 = vpop.f32.mrb[0].mxu0
  %v779 = vadd.f32 %v426, %v778
  %v780 = vpop.f32.mrb[0].mxu0
  %v781 = vadd.f32 %v428, %v780
  %782 = vmatprep.mubr.f32.mxu0 0.0
  %783 = vmatmul.mubr.f32.gmra.mrb[0].mxu0 %v569
  %v784 = vpop.f32.mrb[0].mxu0
  %v785 = vadd.f32 %v432, %v784
  %v786 = vpop.f32.mrb[0].mxu0
  %v787 = vadd.f32 %v434, %v786
  %788 = vmatprep.mubr.f32.mxu0 0.0
  %789 = vmatmul.mubr.f32.gmra.mrb[0].mxu0 %v572
  %v790 = vpop.f32.mrb[0].mxu0
  %v791 = vadd.f32 %v438, %v790
  %v792 = vpop.f32.mrb[0].mxu0
  %v793 = vadd.f32 %v440, %v792
  %794 = vmatprep.mubr.f32.mxu0 0.0
  %795 = vmatmul.mubr.f32.gmra.mrb[0].mxu0 %v575
  %v796 = vpop.f32.mrb[0].mxu0
  %v797 = vadd.f32 %v444, %v796
  %v798 = vpop.f32.mrb[0].mxu0
  %v799 = vadd.f32 %v446, %v798
  %800 = vmatprep.mubr.f32.mxu0 0.0
  %801 = vmatmul.mubr.f32.gmra.mrb[0].mxu0 %v578
  %v802 = vpop.f32.mrb[0].mxu0
  %v803 = vadd.f32 %v450, %v802
  %v804 = vpop.f32.mrb[0].mxu0
  %v805 = vadd.f32 %v452, %v804
  %806 = vmatprep.mubr.f32.mxu0 0.0
  %807 = vmatmul.mubr.f32.gmra.mrb[0].mxu0 %v581
  %v808 = vpop.f32.mrb[0].mxu0
  %v809 = vadd.f32 %v456, %v808
  %v810 = vpop.f32.mrb[0].mxu0
  %v811 = vadd.f32 %v458, %v810
  %812 = vmatprep.mubr.f32.mxu0 0.0
  %813 = vmatmul.mubr.f32.gmra.mrb[0].mxu0 %v584
  %v814 = vpop.f32.mrb[0].mxu0
  %v815 = vadd.f32 %v462, %v814
  %v816 = vpop.f32.mrb[0].mxu0
  %v817 = vadd.f32 %v464, %v816
  %818 = vmatprep.mubr.f32.mxu0 0.0
  %819 = vmatmul.mubr.f32.gmra.mrb[0].mxu0 %v587
  %v820 = vpop.f32.mrb[0].mxu0
  %v821 = vadd.f32 %v468, %v820
  %v822 = vpop.f32.mrb[0].mxu0
  %v823 = vadd.f32 %v470, %v822
  %824 = vmatprep.mubr.f32.mxu0 0.0
  %825 = vmatmul.mubr.f32.gmra.mrb[0].mxu0 %v590
  %v826 = vpop.f32.mrb[0].mxu0
  %v827 = vadd.f32 %v474, %v826
  %v828 = vpop.f32.mrb[0].mxu0
  %v829 = vadd.f32 %v476, %v828
  %830 = vmatprep.mubr.f32.mxu0 0.0
  %831 = vmatmul.mubr.f32.gmra.mrb[0].mxu0 %v593
  %v832 = vpop.f32.mrb[0].mxu0
  %v833 = vadd.f32 %v480, %v832
  %v834 = vpop.f32.mrb[0].mxu0
  %v835 = vadd.f32 %v482, %v834
  %836 = vmatprep.mubr.f32.mxu0 0.0
  %837 = vmatmul.mubr.f32.gmra.mrb[0].mxu0 %v596
  %v838 = vpop.f32.mrb[0].mxu0
  %v839 = vadd.f32 %v486, %v838
  %v840 = vpop.f32.mrb[0].mxu0
  %v841 = vadd.f32 %v488, %v840
  %842 = vmatprep.mubr.f32.mxu0 0.0
  %843 = vmatmul.mubr.f32.gmra.mrb[0].mxu0 %v599
  %v844 = vpop.f32.mrb[0].mxu0
  %v845 = vadd.f32 %v492, %v844
  %v846 = vpop.f32.mrb[0].mxu0
  %v847 = vadd.f32 %v494, %v846
  %848 = vmatprep.mubr.f32.mxu0 0.0
  %849 = vmatmul.mubr.f32.gmra.mrb[0].mxu0 %v602
  %v850 = vpop.f32.mrb[0].mxu0
  %v851 = vadd.f32 %v498, %v850
  %v852 = vpop.f32.mrb[0].mxu0
  %v853 = vadd.f32 %v500, %v852
  %854 = vmatprep.mubr.f32.mxu0 0.0
  %855 = vmatmul.mubr.f32.gmra.mrb[0].mxu0 %v605
  %v856 = vpop.f32.mrb[0].mxu0
  %v857 = vadd.f32 %v504, %v856
  %v858 = vpop.f32.mrb[0].mxu0
  %v859 = vadd.f32 %v506, %v858
  %860 = vmatprep.mubr.f32.mxu0 0.0
  %861 = vmatmul.mubr.f32.gmra.mrb[0].mxu0 %v608
  %v862 = vpop.f32.mrb[0].mxu0
  %v863 = vadd.f32 %v510, %v862
  %v864 = vpop.f32.mrb[0].mxu0
  %v865 = vadd.f32 %v512, %v864
  %866 = vdwg.mxu0
  %v867 = vrot.slane %v44, 2
  %v868 = vrot.slane %v45, 2
  %v869 = vrot.slane %v46, 2
  %v870 = vrot.slane %v47, 2
  %v871 = vrot.slane %v48, 2
  %v872 = vrot.slane %v49, 2
  %v873 = vrot.slane %v50, 2
  %v874 = vrot.slane %v51, 2
  %v875 = vrot.slane %v52, 2
  %v876 = vrot.slane %v53, 2
  %v877 = vrot.slane %v54, 2
  %v878 = vrot.slane %v55, 2
  %v879 = vrot.slane %v56, 2
  %v880 = vrot.slane %v57, 2
  %v881 = vrot.slane %v58, 2
  %v882 = vrot.slane %v59, 2
  %v883 = vrot.slane %v60, 2
  %v884 = vrot.slane %v61, 2
  %v885 = vrot.slane %v62, 2
  %v886 = vrot.slane %v63, 2
  %v887 = vrot.slane %v64, 2
  %v888 = vrot.slane %v65, 2
  %v889 = vrot.slane %v66, 2
  %v890 = vrot.slane %v67, 2
  %v891 = vrot.slane %v68, 2
  %v892 = vrot.slane %v69, 2
  %v893 = vrot.slane %v70, 2
  %v894 = vrot.slane %v71, 2
  %v895 = vrot.slane %v72, 2
  %v896 = vrot.slane %v73, 2
  %v897 = vrot.slane %v74, 2
  %v898 = vrot.slane %v75, 2
  %vm899 = vcmp.lt.s32.totalorder %v117, 6
  %v900 = vsel %vm899, %v897, %v898
  %v901 = vsel %vm899, %v896, %v897
  %v902 = vsel %vm899, %v895, %v896
  %v903 = vsel %vm899, %v894, %v895
  %v904 = vsel %vm899, %v893, %v894
  %v905 = vsel %vm899, %v892, %v893
  %v906 = vsel %vm899, %v891, %v892
  %v907 = vsel %vm899, %v890, %v891
  %v908 = vsel %vm899, %v889, %v890
  %v909 = vsel %vm899, %v888, %v889
  %v910 = vsel %vm899, %v887, %v888
  %v911 = vsel %vm899, %v886, %v887
  %v912 = vsel %vm899, %v885, %v886
  %v913 = vsel %vm899, %v884, %v885
  %v914 = vsel %vm899, %v883, %v884
  %v915 = vsel %vm899, %v882, %v883
  %v916 = vsel %vm899, %v881, %v882
  %v917 = vsel %vm899, %v880, %v881
  %v918 = vsel %vm899, %v879, %v880
  %v919 = vsel %vm899, %v878, %v879
  %v920 = vsel %vm899, %v877, %v878
  %v921 = vsel %vm899, %v876, %v877
  %v922 = vsel %vm899, %v875, %v876
  %v923 = vsel %vm899, %v874, %v875
  %v924 = vsel %vm899, %v873, %v874
  %v925 = vsel %vm899, %v872, %v873
  %v926 = vsel %vm899, %v871, %v872
  %v927 = vsel %vm899, %v870, %v871
  %v928 = vsel %vm899, %v869, %v870
  %v929 = vsel %vm899, %v868, %v869
  %v930 = vsel %vm899, %v867, %v868
  %v931 = vsel %vm899, %v898, %v867
  %s932 = scalar_lea.vmem %s1, 128
  %v933 = vld [vmem:[%s932] sm:$0xff]
  %v934 = vld [vmem:[%s932 + $0x8] sm:$0xff]
  %v935 = vld [vmem:[%s932 + $0x10] sm:$0xff]
  %v936 = vld [vmem:[%s932 + $0x18] sm:$0xff]
  %v937 = vld [vmem:[%s932 + $0x20] sm:$0xff]
  %v938 = vld [vmem:[%s932 + $0x28] sm:$0xff]
  %v939 = vld [vmem:[%s932 + $0x30] sm:$0xff]
  %v940 = vld [vmem:[%s932 + $0x38] sm:$0xff]
  %v942 = vsel %vm160, %v930, 0
  %v945 = vsel %vm160, %v929, 0
  %v948 = vsel %vm160, %v928, 0
  %v951 = vsel %vm160, %v927, 0
  %v954 = vsel %vm160, %v926, 0
  %v957 = vsel %vm160, %v925, 0
  %v960 = vsel %vm160, %v924, 0
  %v963 = vsel %vm160, %v923, 0
  %v966 = vsel %vm160, %v922, 0
  %v969 = vsel %vm160, %v921, 0
  %v972 = vsel %vm160, %v920, 0
  %v975 = vsel %vm160, %v919, 0
  %v978 = vsel %vm160, %v918, 0
  %v981 = vsel %vm160, %v917, 0
  %v984 = vsel %vm160, %v916, 0
  %v987 = vsel %vm160, %v915, 0
  %v990 = vsel %vm160, %v914, 0
  %v993 = vsel %vm160, %v913, 0
  %v996 = vsel %vm160, %v912, 0
  %v999 = vsel %vm160, %v911, 0
  %v1002 = vsel %vm160, %v910, 0
  %v1005 = vsel %vm160, %v909, 0
  %v1008 = vsel %vm160, %v908, 0
  %v1011 = vsel %vm160, %v907, 0
  %v1014 = vsel %vm160, %v906, 0
  %v1017 = vsel %vm160, %v905, 0
  %v1020 = vsel %vm160, %v904, 0
  %v1023 = vsel %vm160, %v903, 0
  %v1026 = vsel %vm160, %v902, 0
  %v1029 = vsel %vm160, %v901, 0
  %v1032 = vsel %vm160, %v900, 0
  %v1035 = vsel %vm160, %v931, 0
  %1037 = vmatprep.subr.mxu0 %v934
  %1038 = vmatpush1.msra.mxu0 %v933
  %1039 = vmatprep.subr.mxu0 %v936
  %1040 = vmatpush1.msra.mxu0 %v935
  %1041 = vmatprep.subr.mxu0 %v938
  %1042 = vmatpush1.msra.mxu0 %v937
  %1043 = vmatprep.subr.mxu0 %v940
  %1044 = vmatpush1.msra.mxu0 %v939
  %1045 = vmatprep.subr.mxu0 0.0
  %1046 = vmatpush1.msra.mxu0 0.0
  %1047 = vmatprep.subr.mxu0 0.0
  %1048 = vmatpush1.msra.mxu0 0.0
  %1049 = vmatprep.subr.mxu0 0.0
  %1050 = vmatpush1.msra.mxu0 0.0
  %1051 = vmatprep.subr.mxu0 0.0
  %1052 = vmatpush1.msra.mxu0 0.0
  %1053 = vmatprep.subr.mxu0 0.0
  %1054 = vmatpush1.msra.mxu0 0.0
  %1055 = vmatprep.subr.mxu0 0.0
  %1056 = vmatpush1.msra.mxu0 0.0
  %1057 = vmatprep.subr.mxu0 0.0
  %1058 = vmatpush1.msra.mxu0 0.0
  %1059 = vmatprep.subr.mxu0 0.0
  %1060 = vmatpush1.msra.mxu0 0.0
  %1061 = vmatprep.subr.mxu0 0.0
  %1062 = vmatpush1.msra.mxu0 0.0
  %1063 = vmatprep.subr.mxu0 0.0
  %1064 = vmatpush1.msra.mxu0 0.0
  %1065 = vmatprep.subr.mxu0 0.0
  %1066 = vmatpush1.msra.mxu0 0.0
  %1067 = vmatprep.subr.mxu0 0.0
  %1068 = vmatpush1.msra.mxu0 0.0
  %1069 = vmatprep.subr.mxu0 0.0
  %1070 = vmatpush1.msra.mxu0 0.0
  %1071 = vmatprep.subr.mxu0 0.0
  %1072 = vmatpush1.msra.mxu0 0.0
  %1073 = vmatprep.subr.mxu0 0.0
  %1074 = vmatpush1.msra.mxu0 0.0
  %1075 = vmatprep.subr.mxu0 0.0
  %1076 = vmatpush1.msra.mxu0 0.0
  %1077 = vmatprep.subr.mxu0 0.0
  %1078 = vmatpush1.msra.mxu0 0.0
  %1079 = vmatprep.subr.mxu0 0.0
  %1080 = vmatpush1.msra.mxu0 0.0
  %1081 = vmatprep.subr.mxu0 0.0
  %1082 = vmatpush1.msra.mxu0 0.0
  %1083 = vmatprep.subr.mxu0 0.0
  %1084 = vmatpush1.msra.mxu0 0.0
  %1085 = vmatprep.subr.mxu0 0.0
  %1086 = vmatpush1.msra.mxu0 0.0
  %1087 = vmatprep.subr.mxu0 0.0
  %1088 = vmatpush1.msra.mxu0 0.0
  %1089 = vmatprep.subr.mxu0 0.0
  %1090 = vmatpush1.msra.mxu0 0.0
  %1091 = vmatprep.subr.mxu0 0.0
  %1092 = vmatpush1.msra.mxu0 0.0
  %1093 = vmatprep.subr.mxu0 0.0
  %1094 = vmatpush1.msra.mxu0 0.0
  %1095 = vmatprep.subr.mxu0 0.0
  %1096 = vmatpush1.msra.mxu0 0.0
  %1097 = vmatprep.subr.mxu0 0.0
  %1098 = vmatpush1.msra.mxu0 0.0
  %1099 = vmatprep.subr.mxu0 0.0
  %1100 = vmatpush1.msra.mxu0 0.0
  %1101 = vmatprep.mubr.f32.mxu0 0.0
  %1102 = vmatmul.mubr.f32.gmra.mrb[0].mxu0 %v942
  %v1103 = vpop.f32.mrb[0].mxu0
  %v1104 = vadd.f32 0.0, %v1103
  %v1105 = vpop.f32.mrb[0].mxu0
  %v1106 = vadd.f32 0.0, %v1105
  %1107 = vmatprep.mubr.f32.mxu0 0.0
  %1108 = vmatmul.mubr.f32.gmra.mrb[0].mxu0 %v945
  %v1109 = vpop.f32.mrb[0].mxu0
  %v1110 = vadd.f32 0.0, %v1109
  %v1111 = vpop.f32.mrb[0].mxu0
  %v1112 = vadd.f32 0.0, %v1111
  %1113 = vmatprep.mubr.f32.mxu0 0.0
  %1114 = vmatmul.mubr.f32.gmra.mrb[0].mxu0 %v948
  %v1115 = vpop.f32.mrb[0].mxu0
  %v1116 = vadd.f32 0.0, %v1115
  %v1117 = vpop.f32.mrb[0].mxu0
  %v1118 = vadd.f32 0.0, %v1117
  %1119 = vmatprep.mubr.f32.mxu0 0.0
  %1120 = vmatmul.mubr.f32.gmra.mrb[0].mxu0 %v951
  %v1121 = vpop.f32.mrb[0].mxu0
  %v1122 = vadd.f32 0.0, %v1121
  %v1123 = vpop.f32.mrb[0].mxu0
  %v1124 = vadd.f32 0.0, %v1123
  %1125 = vmatprep.mubr.f32.mxu0 0.0
  %1126 = vmatmul.mubr.f32.gmra.mrb[0].mxu0 %v954
  %v1127 = vpop.f32.mrb[0].mxu0
  %v1128 = vadd.f32 0.0, %v1127
  %v1129 = vpop.f32.mrb[0].mxu0
  %v1130 = vadd.f32 0.0, %v1129
  %1131 = vmatprep.mubr.f32.mxu0 0.0
  %1132 = vmatmul.mubr.f32.gmra.mrb[0].mxu0 %v957
  %v1133 = vpop.f32.mrb[0].mxu0
  %v1134 = vadd.f32 0.0, %v1133
  %v1135 = vpop.f32.mrb[0].mxu0
  %v1136 = vadd.f32 0.0, %v1135
  %1137 = vmatprep.mubr.f32.mxu0 0.0
  %1138 = vmatmul.mubr.f32.gmra.mrb[0].mxu0 %v960
  %v1139 = vpop.f32.mrb[0].mxu0
  %v1140 = vadd.f32 0.0, %v1139
  %v1141 = vpop.f32.mrb[0].mxu0
  %v1142 = vadd.f32 0.0, %v1141
  %1143 = vmatprep.mubr.f32.mxu0 0.0
  %1144 = vmatmul.mubr.f32.gmra.mrb[0].mxu0 %v963
  %v1145 = vpop.f32.mrb[0].mxu0
  %v1146 = vadd.f32 0.0, %v1145
  %v1147 = vpop.f32.mrb[0].mxu0
  %v1148 = vadd.f32 0.0, %v1147
  %1149 = vmatprep.mubr.f32.mxu0 0.0
  %1150 = vmatmul.mubr.f32.gmra.mrb[0].mxu0 %v966
  %v1151 = vpop.f32.mrb[0].mxu0
  %v1152 = vadd.f32 0.0, %v1151
  %v1153 = vpop.f32.mrb[0].mxu0
  %v1154 = vadd.f32 0.0, %v1153
  %1155 = vmatprep.mubr.f32.mxu0 0.0
  %1156 = vmatmul.mubr.f32.gmra.mrb[0].mxu0 %v969
  %v1157 = vpop.f32.mrb[0].mxu0
  %v1158 = vadd.f32 0.0, %v1157
  %v1159 = vpop.f32.mrb[0].mxu0
  %v1160 = vadd.f32 0.0, %v1159
  %1161 = vmatprep.mubr.f32.mxu0 0.0
  %1162 = vmatmul.mubr.f32.gmra.mrb[0].mxu0 %v972
  %v1163 = vpop.f32.mrb[0].mxu0
  %v1164 = vadd.f32 0.0, %v1163
  %v1165 = vpop.f32.mrb[0].mxu0
  %v1166 = vadd.f32 0.0, %v1165
  %1167 = vmatprep.mubr.f32.mxu0 0.0
  %1168 = vmatmul.mubr.f32.gmra.mrb[0].mxu0 %v975
  %v1169 = vpop.f32.mrb[0].mxu0
  %v1170 = vadd.f32 0.0, %v1169
  %v1171 = vpop.f32.mrb[0].mxu0
  %v1172 = vadd.f32 0.0, %v1171
  %1173 = vmatprep.mubr.f32.mxu0 0.0
  %1174 = vmatmul.mubr.f32.gmra.mrb[0].mxu0 %v978
  %v1175 = vpop.f32.mrb[0].mxu0
  %v1176 = vadd.f32 0.0, %v1175
  %v1177 = vpop.f32.mrb[0].mxu0
  %v1178 = vadd.f32 0.0, %v1177
  %1179 = vmatprep.mubr.f32.mxu0 0.0
  %1180 = vmatmul.mubr.f32.gmra.mrb[0].mxu0 %v981
  %v1181 = vpop.f32.mrb[0].mxu0
  %v1182 = vadd.f32 0.0, %v1181
  %v1183 = vpop.f32.mrb[0].mxu0
  %v1184 = vadd.f32 0.0, %v1183
  %1185 = vmatprep.mubr.f32.mxu0 0.0
  %1186 = vmatmul.mubr.f32.gmra.mrb[0].mxu0 %v984
  %v1187 = vpop.f32.mrb[0].mxu0
  %v1188 = vadd.f32 0.0, %v1187
  %v1189 = vpop.f32.mrb[0].mxu0
  %v1190 = vadd.f32 0.0, %v1189
  %1191 = vmatprep.mubr.f32.mxu0 0.0
  %1192 = vmatmul.mubr.f32.gmra.mrb[0].mxu0 %v987
  %v1193 = vpop.f32.mrb[0].mxu0
  %v1194 = vadd.f32 0.0, %v1193
  %v1195 = vpop.f32.mrb[0].mxu0
  %v1196 = vadd.f32 0.0, %v1195
  %1197 = vmatprep.mubr.f32.mxu0 0.0
  %1198 = vmatmul.mubr.f32.gmra.mrb[0].mxu0 %v990
  %v1199 = vpop.f32.mrb[0].mxu0
  %v1200 = vadd.f32 0.0, %v1199
  %v1201 = vpop.f32.mrb[0].mxu0
  %v1202 = vadd.f32 0.0, %v1201
  %1203 = vmatprep.mubr.f32.mxu0 0.0
  %1204 = vmatmul.mubr.f32.gmra.mrb[0].mxu0 %v993
  %v1205 = vpop.f32.mrb[0].mxu0
  %v1206 = vadd.f32 0.0, %v1205
  %v1207 = vpop.f32.mrb[0].mxu0
  %v1208 = vadd.f32 0.0, %v1207
  %1209 = vmatprep.mubr.f32.mxu0 0.0
  %1210 = vmatmul.mubr.f32.gmra.mrb[0].mxu0 %v996
  %v1211 = vpop.f32.mrb[0].mxu0
  %v1212 = vadd.f32 0.0, %v1211
  %v1213 = vpop.f32.mrb[0].mxu0
  %v1214 = vadd.f32 0.0, %v1213
  %1215 = vmatprep.mubr.f32.mxu0 0.0
  %1216 = vmatmul.mubr.f32.gmra.mrb[0].mxu0 %v999
  %v1217 = vpop.f32.mrb[0].mxu0
  %v1218 = vadd.f32 0.0, %v1217
  %v1219 = vpop.f32.mrb[0].mxu0
  %v1220 = vadd.f32 0.0, %v1219
  %1221 = vmatprep.mubr.f32.mxu0 0.0
  %1222 = vmatmul.mubr.f32.gmra.mrb[0].mxu0 %v1002
  %v1223 = vpop.f32.mrb[0].mxu0
  %v1224 = vadd.f32 0.0, %v1223
  %v1225 = vpop.f32.mrb[0].mxu0
  %v1226 = vadd.f32 0.0, %v1225
  %1227 = vmatprep.mubr.f32.mxu0 0.0
  %1228 = vmatmul.mubr.f32.gmra.mrb[0].mxu0 %v1005
  %v1229 = vpop.f32.mrb[0].mxu0
  %v1230 = vadd.f32 0.0, %v1229
  %v1231 = vpop.f32.mrb[0].mxu0
  %v1232 = vadd.f32 0.0, %v1231
  %1233 = vmatprep.mubr.f32.mxu0 0.0
  %1234 = vmatmul.mubr.f32.gmra.mrb[0].mxu0 %v1008
  %v1235 = vpop.f32.mrb[0].mxu0
  %v1236 = vadd.f32 0.0, %v1235
  %v1237 = vpop.f32.mrb[0].mxu0
  %v1238 = vadd.f32 0.0, %v1237
  %1239 = vmatprep.mubr.f32.mxu0 0.0
  %1240 = vmatmul.mubr.f32.gmra.mrb[0].mxu0 %v1011
  %v1241 = vpop.f32.mrb[0].mxu0
  %v1242 = vadd.f32 0.0, %v1241
  %v1243 = vpop.f32.mrb[0].mxu0
  %v1244 = vadd.f32 0.0, %v1243
  %1245 = vmatprep.mubr.f32.mxu0 0.0
  %1246 = vmatmul.mubr.f32.gmra.mrb[0].mxu0 %v1014
  %v1247 = vpop.f32.mrb[0].mxu0
  %v1248 = vadd.f32 0.0, %v1247
  %v1249 = vpop.f32.mrb[0].mxu0
  %v1250 = vadd.f32 0.0, %v1249
  %1251 = vmatprep.mubr.f32.mxu0 0.0
  %1252 = vmatmul.mubr.f32.gmra.mrb[0].mxu0 %v1017
  %v1253 = vpop.f32.mrb[0].mxu0
  %v1254 = vadd.f32 0.0, %v1253
  %v1255 = vpop.f32.mrb[0].mxu0
  %v1256 = vadd.f32 0.0, %v1255
  %1257 = vmatprep.mubr.f32.mxu0 0.0
  %1258 = vmatmul.mubr.f32.gmra.mrb[0].mxu0 %v1020
  %v1259 = vpop.f32.mrb[0].mxu0
  %v1260 = vadd.f32 0.0, %v1259
  %v1261 = vpop.f32.mrb[0].mxu0
  %v1262 = vadd.f32 0.0, %v1261
  %1263 = vmatprep.mubr.f32.mxu0 0.0
  %1264 = vmatmul.mubr.f32.gmra.mrb[0].mxu0 %v1023
  %v1265 = vpop.f32.mrb[0].mxu0
  %v1266 = vadd.f32 0.0, %v1265
  %v1267 = vpop.f32.mrb[0].mxu0
  %v1268 = vadd.f32 0.0, %v1267
  %1269 = vmatprep.mubr.f32.mxu0 0.0
  %1270 = vmatmul.mubr.f32.gmra.mrb[0].mxu0 %v1026
  %v1271 = vpop.f32.mrb[0].mxu0
  %v1272 = vadd.f32 0.0, %v1271
  %v1273 = vpop.f32.mrb[0].mxu0
  %v1274 = vadd.f32 0.0, %v1273
  %1275 = vmatprep.mubr.f32.mxu0 0.0
  %1276 = vmatmul.mubr.f32.gmra.mrb[0].mxu0 %v1029
  %v1277 = vpop.f32.mrb[0].mxu0
  %v1278 = vadd.f32 0.0, %v1277
  %v1279 = vpop.f32.mrb[0].mxu0
  %v1280 = vadd.f32 0.0, %v1279
  %1281 = vmatprep.mubr.f32.mxu0 0.0
  %1282 = vmatmul.mubr.f32.gmra.mrb[0].mxu0 %v1032
  %v1283 = vpop.f32.mrb[0].mxu0
  %v1284 = vadd.f32 0.0, %v1283
  %v1285 = vpop.f32.mrb[0].mxu0
  %v1286 = vadd.f32 0.0, %v1285
  %1287 = vmatprep.mubr.f32.mxu0 0.0
  %1288 = vmatmul.mubr.f32.gmra.mrb[0].mxu0 %v1035
  %v1289 = vpop.f32.mrb[0].mxu0
  %v1290 = vadd.f32 0.0, %v1289
  %v1291 = vpop.f32.mrb[0].mxu0
  %v1292 = vadd.f32 0.0, %v1291
  %1293 = vdwg.mxu0
  %v1294 = vadd.f32 %v677, %v1104
  %v1295 = vadd.f32 %v679, %v1106
  %v1296 = vadd.f32 %v683, %v1110
  %v1297 = vadd.f32 %v685, %v1112
  %v1298 = vadd.f32 %v689, %v1116
  %v1299 = vadd.f32 %v691, %v1118
  %v1300 = vadd.f32 %v695, %v1122
  %v1301 = vadd.f32 %v697, %v1124
  %v1302 = vadd.f32 %v701, %v1128
  %v1303 = vadd.f32 %v703, %v1130
  %v1304 = vadd.f32 %v707, %v1134
  %v1305 = vadd.f32 %v709, %v1136
  %v1306 = vadd.f32 %v713, %v1140
  %v1307 = vadd.f32 %v715, %v1142
  %v1308 = vadd.f32 %v719, %v1146
  %v1309 = vadd.f32 %v721, %v1148
  %v1310 = vadd.f32 %v725, %v1152
  %v1311 = vadd.f32 %v727, %v1154
  %v1312 = vadd.f32 %v731, %v1158
  %v1313 = vadd.f32 %v733, %v1160
  %v1314 = vadd.f32 %v737, %v1164
  %v1315 = vadd.f32 %v739, %v1166
  %v1316 = vadd.f32 %v743, %v1170
  %v1317 = vadd.f32 %v745, %v1172
  %v1318 = vadd.f32 %v749, %v1176
  %v1319 = vadd.f32 %v751, %v1178
  %v1320 = vadd.f32 %v755, %v1182
  %v1321 = vadd.f32 %v757, %v1184
  %v1322 = vadd.f32 %v761, %v1188
  %v1323 = vadd.f32 %v763, %v1190
  %v1324 = vadd.f32 %v767, %v1194
  %v1325 = vadd.f32 %v769, %v1196
  %v1326 = vadd.f32 %v773, %v1200
  %v1327 = vadd.f32 %v775, %v1202
  %v1328 = vadd.f32 %v779, %v1206
  %v1329 = vadd.f32 %v781, %v1208
  %v1330 = vadd.f32 %v785, %v1212
  %v1331 = vadd.f32 %v787, %v1214
  %v1332 = vadd.f32 %v791, %v1218
  %v1333 = vadd.f32 %v793, %v1220
  %v1334 = vadd.f32 %v797, %v1224
  %v1335 = vadd.f32 %v799, %v1226
  %v1336 = vadd.f32 %v803, %v1230
  %v1337 = vadd.f32 %v805, %v1232
  %v1338 = vadd.f32 %v809, %v1236
  %v1339 = vadd.f32 %v811, %v1238
  %v1340 = vadd.f32 %v815, %v1242
  %v1341 = vadd.f32 %v817, %v1244
  %v1342 = vadd.f32 %v821, %v1248
  %v1343 = vadd.f32 %v823, %v1250
  %v1344 = vadd.f32 %v827, %v1254
  %v1345 = vadd.f32 %v829, %v1256
  %v1346 = vadd.f32 %v833, %v1260
  %v1347 = vadd.f32 %v835, %v1262
  %v1348 = vadd.f32 %v839, %v1266
  %v1349 = vadd.f32 %v841, %v1268
  %v1350 = vadd.f32 %v845, %v1272
  %v1351 = vadd.f32 %v847, %v1274
  %v1352 = vadd.f32 %v851, %v1278
  %v1353 = vadd.f32 %v853, %v1280
  %v1354 = vadd.f32 %v857, %v1284
  %v1355 = vadd.f32 %v859, %v1286
  %v1356 = vadd.f32 %v863, %v1290
  %v1357 = vadd.f32 %v865, %v1292
  %v1358 = vrot.slane %v44, 3
  %v1359 = vrot.slane %v45, 3
  %v1360 = vrot.slane %v46, 3
  %v1361 = vrot.slane %v47, 3
  %v1362 = vrot.slane %v48, 3
  %v1363 = vrot.slane %v49, 3
  %v1364 = vrot.slane %v50, 3
  %v1365 = vrot.slane %v51, 3
  %v1366 = vrot.slane %v52, 3
  %v1367 = vrot.slane %v53, 3
  %v1368 = vrot.slane %v54, 3
  %v1369 = vrot.slane %v55, 3
  %v1370 = vrot.slane %v56, 3
  %v1371 = vrot.slane %v57, 3
  %v1372 = vrot.slane %v58, 3
  %v1373 = vrot.slane %v59, 3
  %v1374 = vrot.slane %v60, 3
  %v1375 = vrot.slane %v61, 3
  %v1376 = vrot.slane %v62, 3
  %v1377 = vrot.slane %v63, 3
  %v1378 = vrot.slane %v64, 3
  %v1379 = vrot.slane %v65, 3
  %v1380 = vrot.slane %v66, 3
  %v1381 = vrot.slane %v67, 3
  %v1382 = vrot.slane %v68, 3
  %v1383 = vrot.slane %v69, 3
  %v1384 = vrot.slane %v70, 3
  %v1385 = vrot.slane %v71, 3
  %v1386 = vrot.slane %v72, 3
  %v1387 = vrot.slane %v73, 3
  %v1388 = vrot.slane %v74, 3
  %v1389 = vrot.slane %v75, 3
  %vm1390 = vcmp.lt.s32.totalorder %v117, 5
  %v1391 = vsel %vm1390, %v1388, %v1389
  %v1392 = vsel %vm1390, %v1387, %v1388
  %v1393 = vsel %vm1390, %v1386, %v1387
  %v1394 = vsel %vm1390, %v1385, %v1386
  %v1395 = vsel %vm1390, %v1384, %v1385
  %v1396 = vsel %vm1390, %v1383, %v1384
  %v1397 = vsel %vm1390, %v1382, %v1383
  %v1398 = vsel %vm1390, %v1381, %v1382
  %v1399 = vsel %vm1390, %v1380, %v1381
  %v1400 = vsel %vm1390, %v1379, %v1380
  %v1401 = vsel %vm1390, %v1378, %v1379
  %v1402 = vsel %vm1390, %v1377, %v1378
  %v1403 = vsel %vm1390, %v1376, %v1377
  %v1404 = vsel %vm1390, %v1375, %v1376
  %v1405 = vsel %vm1390, %v1374, %v1375
  %v1406 = vsel %vm1390, %v1373, %v1374
  %v1407 = vsel %vm1390, %v1372, %v1373
  %v1408 = vsel %vm1390, %v1371, %v1372
  %v1409 = vsel %vm1390, %v1370, %v1371
  %v1410 = vsel %vm1390, %v1369, %v1370
  %v1411 = vsel %vm1390, %v1368, %v1369
  %v1412 = vsel %vm1390, %v1367, %v1368
  %v1413 = vsel %vm1390, %v1366, %v1367
  %v1414 = vsel %vm1390, %v1365, %v1366
  %v1415 = vsel %vm1390, %v1364, %v1365
  %v1416 = vsel %vm1390, %v1363, %v1364
  %v1417 = vsel %vm1390, %v1362, %v1363
  %v1418 = vsel %vm1390, %v1361, %v1362
  %v1419 = vsel %vm1390, %v1360, %v1361
  %v1420 = vsel %vm1390, %v1359, %v1360
  %v1421 = vsel %vm1390, %v1358, %v1359
  %v1422 = vsel %vm1390, %v1389, %v1358
  %s1423 = scalar_lea.vmem %s1, 192
  %v1424 = vld [vmem:[%s1423] sm:$0xff]
  %v1425 = vld [vmem:[%s1423 + $0x8] sm:$0xff]
  %v1426 = vld [vmem:[%s1423 + $0x10] sm:$0xff]
  %v1427 = vld [vmem:[%s1423 + $0x18] sm:$0xff]
  %v1428 = vld [vmem:[%s1423 + $0x20] sm:$0xff]
  %v1429 = vld [vmem:[%s1423 + $0x28] sm:$0xff]
  %v1430 = vld [vmem:[%s1423 + $0x30] sm:$0xff]
  %v1431 = vld [vmem:[%s1423 + $0x38] sm:$0xff]
  %v1433 = vsel %vm160, %v1421, 0
  %v1436 = vsel %vm160, %v1420, 0
  %v1439 = vsel %vm160, %v1419, 0
  %v1442 = vsel %vm160, %v1418, 0
  %v1445 = vsel %vm160, %v1417, 0
  %v1448 = vsel %vm160, %v1416, 0
  %v1451 = vsel %vm160, %v1415, 0
  %v1454 = vsel %vm160, %v1414, 0
  %v1457 = vsel %vm160, %v1413, 0
  %v1460 = vsel %vm160, %v1412, 0
  %v1463 = vsel %vm160, %v1411, 0
  %v1466 = vsel %vm160, %v1410, 0
  %v1469 = vsel %vm160, %v1409, 0
  %v1472 = vsel %vm160, %v1408, 0
  %v1475 = vsel %vm160, %v1407, 0
  %v1478 = vsel %vm160, %v1406, 0
  %v1481 = vsel %vm160, %v1405, 0
  %v1484 = vsel %vm160, %v1404, 0
  %v1487 = vsel %vm160, %v1403, 0
  %v1490 = vsel %vm160, %v1402, 0
  %v1493 = vsel %vm160, %v1401, 0
  %v1496 = vsel %vm160, %v1400, 0
  %v1499 = vsel %vm160, %v1399, 0
  %v1502 = vsel %vm160, %v1398, 0
  %v1505 = vsel %vm160, %v1397, 0
  %v1508 = vsel %vm160, %v1396, 0
  %v1511 = vsel %vm160, %v1395, 0
  %v1514 = vsel %vm160, %v1394, 0
  %v1517 = vsel %vm160, %v1393, 0
  %v1520 = vsel %vm160, %v1392, 0
  %v1523 = vsel %vm160, %v1391, 0
  %v1526 = vsel %vm160, %v1422, 0
  %1528 = vmatprep.subr.mxu0 %v1425
  %1529 = vmatpush1.msra.mxu0 %v1424
  %1530 = vmatprep.subr.mxu0 %v1427
  %1531 = vmatpush1.msra.mxu0 %v1426
  %1532 = vmatprep.subr.mxu0 %v1429
  %1533 = vmatpush1.msra.mxu0 %v1428
  %1534 = vmatprep.subr.mxu0 %v1431
  %1535 = vmatpush1.msra.mxu0 %v1430
  %1536 = vmatprep.subr.mxu0 0.0
  %1537 = vmatpush1.msra.mxu0 0.0
  %1538 = vmatprep.subr.mxu0 0.0
  %1539 = vmatpush1.msra.mxu0 0.0
  %1540 = vmatprep.subr.mxu0 0.0
  %1541 = vmatpush1.msra.mxu0 0.0
  %1542 = vmatprep.subr.mxu0 0.0
  %1543 = vmatpush1.msra.mxu0 0.0
  %1544 = vmatprep.subr.mxu0 0.0
  %1545 = vmatpush1.msra.mxu0 0.0
  %1546 = vmatprep.subr.mxu0 0.0
  %1547 = vmatpush1.msra.mxu0 0.0
  %1548 = vmatprep.subr.mxu0 0.0
  %1549 = vmatpush1.msra.mxu0 0.0
  %1550 = vmatprep.subr.mxu0 0.0
  %1551 = vmatpush1.msra.mxu0 0.0
  %1552 = vmatprep.subr.mxu0 0.0
  %1553 = vmatpush1.msra.mxu0 0.0
  %1554 = vmatprep.subr.mxu0 0.0
  %1555 = vmatpush1.msra.mxu0 0.0
  %1556 = vmatprep.subr.mxu0 0.0
  %1557 = vmatpush1.msra.mxu0 0.0
  %1558 = vmatprep.subr.mxu0 0.0
  %1559 = vmatpush1.msra.mxu0 0.0
  %1560 = vmatprep.subr.mxu0 0.0
  %1561 = vmatpush1.msra.mxu0 0.0
  %1562 = vmatprep.subr.mxu0 0.0
  %1563 = vmatpush1.msra.mxu0 0.0
  %1564 = vmatprep.subr.mxu0 0.0
  %1565 = vmatpush1.msra.mxu0 0.0
  %1566 = vmatprep.subr.mxu0 0.0
  %1567 = vmatpush1.msra.mxu0 0.0
  %1568 = vmatprep.subr.mxu0 0.0
  %1569 = vmatpush1.msra.mxu0 0.0
  %1570 = vmatprep.subr.mxu0 0.0
  %1571 = vmatpush1.msra.mxu0 0.0
  %1572 = vmatprep.subr.mxu0 0.0
  %1573 = vmatpush1.msra.mxu0 0.0
  %1574 = vmatprep.subr.mxu0 0.0
  %1575 = vmatpush1.msra.mxu0 0.0
  %1576 = vmatprep.subr.mxu0 0.0
  %1577 = vmatpush1.msra.mxu0 0.0
  %1578 = vmatprep.subr.mxu0 0.0
  %1579 = vmatpush1.msra.mxu0 0.0
  %1580 = vmatprep.subr.mxu0 0.0
  %1581 = vmatpush1.msra.mxu0 0.0
  %1582 = vmatprep.subr.mxu0 0.0
  %1583 = vmatpush1.msra.mxu0 0.0
  %1584 = vmatprep.subr.mxu0 0.0
  %1585 = vmatpush1.msra.mxu0 0.0
  %1586 = vmatprep.subr.mxu0 0.0
  %1587 = vmatpush1.msra.mxu0 0.0
  %1588 = vmatprep.subr.mxu0 0.0
  %1589 = vmatpush1.msra.mxu0 0.0
  %1590 = vmatprep.subr.mxu0 0.0
  %1591 = vmatpush1.msra.mxu0 0.0
  %1592 = vmatprep.mubr.f32.mxu0 0.0
  %1593 = vmatmul.mubr.f32.gmra.mrb[0].mxu0 %v1433
  %v1594 = vpop.f32.mrb[0].mxu0
  %v1595 = vadd.f32 0.0, %v1594
  %v1596 = vpop.f32.mrb[0].mxu0
  %v1597 = vadd.f32 0.0, %v1596
  %1598 = vmatprep.mubr.f32.mxu0 0.0
  %1599 = vmatmul.mubr.f32.gmra.mrb[0].mxu0 %v1436
  %v1600 = vpop.f32.mrb[0].mxu0
  %v1601 = vadd.f32 0.0, %v1600
  %v1602 = vpop.f32.mrb[0].mxu0
  %v1603 = vadd.f32 0.0, %v1602
  %1604 = vmatprep.mubr.f32.mxu0 0.0
  %1605 = vmatmul.mubr.f32.gmra.mrb[0].mxu0 %v1439
  %v1606 = vpop.f32.mrb[0].mxu0
  %v1607 = vadd.f32 0.0, %v1606
  %v1608 = vpop.f32.mrb[0].mxu0
  %v1609 = vadd.f32 0.0, %v1608
  %1610 = vmatprep.mubr.f32.mxu0 0.0
  %1611 = vmatmul.mubr.f32.gmra.mrb[0].mxu0 %v1442
  %v1612 = vpop.f32.mrb[0].mxu0
  %v1613 = vadd.f32 0.0, %v1612
  %v1614 = vpop.f32.mrb[0].mxu0
  %v1615 = vadd.f32 0.0, %v1614
  %1616 = vmatprep.mubr.f32.mxu0 0.0
  %1617 = vmatmul.mubr.f32.gmra.mrb[0].mxu0 %v1445
  %v1618 = vpop.f32.mrb[0].mxu0
  %v1619 = vadd.f32 0.0, %v1618
  %v1620 = vpop.f32.mrb[0].mxu0
  %v1621 = vadd.f32 0.0, %v1620
  %1622 = vmatprep.mubr.f32.mxu0 0.0
  %1623 = vmatmul.mubr.f32.gmra.mrb[0].mxu0 %v1448
  %v1624 = vpop.f32.mrb[0].mxu0
  %v1625 = vadd.f32 0.0, %v1624
  %v1626 = vpop.f32.mrb[0].mxu0
  %v1627 = vadd.f32 0.0, %v1626
  %1628 = vmatprep.mubr.f32.mxu0 0.0
  %1629 = vmatmul.mubr.f32.gmra.mrb[0].mxu0 %v1451
  %v1630 = vpop.f32.mrb[0].mxu0
  %v1631 = vadd.f32 0.0, %v1630
  %v1632 = vpop.f32.mrb[0].mxu0
  %v1633 = vadd.f32 0.0, %v1632
  %1634 = vmatprep.mubr.f32.mxu0 0.0
  %1635 = vmatmul.mubr.f32.gmra.mrb[0].mxu0 %v1454
  %v1636 = vpop.f32.mrb[0].mxu0
  %v1637 = vadd.f32 0.0, %v1636
  %v1638 = vpop.f32.mrb[0].mxu0
  %v1639 = vadd.f32 0.0, %v1638
  %1640 = vmatprep.mubr.f32.mxu0 0.0
  %1641 = vmatmul.mubr.f32.gmra.mrb[0].mxu0 %v1457
  %v1642 = vpop.f32.mrb[0].mxu0
  %v1643 = vadd.f32 0.0, %v1642
  %v1644 = vpop.f32.mrb[0].mxu0
  %v1645 = vadd.f32 0.0, %v1644
  %1646 = vmatprep.mubr.f32.mxu0 0.0
  %1647 = vmatmul.mubr.f32.gmra.mrb[0].mxu0 %v1460
  %v1648 = vpop.f32.mrb[0].mxu0
  %v1649 = vadd.f32 0.0, %v1648
  %v1650 = vpop.f32.mrb[0].mxu0
  %v1651 = vadd.f32 0.0, %v1650
  %1652 = vmatprep.mubr.f32.mxu0 0.0
  %1653 = vmatmul.mubr.f32.gmra.mrb[0].mxu0 %v1463
  %v1654 = vpop.f32.mrb[0].mxu0
  %v1655 = vadd.f32 0.0, %v1654
  %v1656 = vpop.f32.mrb[0].mxu0
  %v1657 = vadd.f32 0.0, %v1656
  %1658 = vmatprep.mubr.f32.mxu0 0.0
  %1659 = vmatmul.mubr.f32.gmra.mrb[0].mxu0 %v1466
  %v1660 = vpop.f32.mrb[0].mxu0
  %v1661 = vadd.f32 0.0, %v1660
  %v1662 = vpop.f32.mrb[0].mxu0
  %v1663 = vadd.f32 0.0, %v1662
  %1664 = vmatprep.mubr.f32.mxu0 0.0
  %1665 = vmatmul.mubr.f32.gmra.mrb[0].mxu0 %v1469
  %v1666 = vpop.f32.mrb[0].mxu0
  %v1667 = vadd.f32 0.0, %v1666
  %v1668 = vpop.f32.mrb[0].mxu0
  %v1669 = vadd.f32 0.0, %v1668
  %1670 = vmatprep.mubr.f32.mxu0 0.0
  %1671 = vmatmul.mubr.f32.gmra.mrb[0].mxu0 %v1472
  %v1672 = vpop.f32.mrb[0].mxu0
  %v1673 = vadd.f32 0.0, %v1672
  %v1674 = vpop.f32.mrb[0].mxu0
  %v1675 = vadd.f32 0.0, %v1674
  %1676 = vmatprep.mubr.f32.mxu0 0.0
  %1677 = vmatmul.mubr.f32.gmra.mrb[0].mxu0 %v1475
  %v1678 = vpop.f32.mrb[0].mxu0
  %v1679 = vadd.f32 0.0, %v1678
  %v1680 = vpop.f32.mrb[0].mxu0
  %v1681 = vadd.f32 0.0, %v1680
  %1682 = vmatprep.mubr.f32.mxu0 0.0
  %1683 = vmatmul.mubr.f32.gmra.mrb[0].mxu0 %v1478
  %v1684 = vpop.f32.mrb[0].mxu0
  %v1685 = vadd.f32 0.0, %v1684
  %v1686 = vpop.f32.mrb[0].mxu0
  %v1687 = vadd.f32 0.0, %v1686
  %1688 = vmatprep.mubr.f32.mxu0 0.0
  %1689 = vmatmul.mubr.f32.gmra.mrb[0].mxu0 %v1481
  %v1690 = vpop.f32.mrb[0].mxu0
  %v1691 = vadd.f32 0.0, %v1690
  %v1692 = vpop.f32.mrb[0].mxu0
  %v1693 = vadd.f32 0.0, %v1692
  %1694 = vmatprep.mubr.f32.mxu0 0.0
  %1695 = vmatmul.mubr.f32.gmra.mrb[0].mxu0 %v1484
  %v1696 = vpop.f32.mrb[0].mxu0
  %v1697 = vadd.f32 0.0, %v1696
  %v1698 = vpop.f32.mrb[0].mxu0
  %v1699 = vadd.f32 0.0, %v1698
  %1700 = vmatprep.mubr.f32.mxu0 0.0
  %1701 = vmatmul.mubr.f32.gmra.mrb[0].mxu0 %v1487
  %v1702 = vpop.f32.mrb[0].mxu0
  %v1703 = vadd.f32 0.0, %v1702
  %v1704 = vpop.f32.mrb[0].mxu0
  %v1705 = vadd.f32 0.0, %v1704
  %1706 = vmatprep.mubr.f32.mxu0 0.0
  %1707 = vmatmul.mubr.f32.gmra.mrb[0].mxu0 %v1490
  %v1708 = vpop.f32.mrb[0].mxu0
  %v1709 = vadd.f32 0.0, %v1708
  %v1710 = vpop.f32.mrb[0].mxu0
  %v1711 = vadd.f32 0.0, %v1710
  %1712 = vmatprep.mubr.f32.mxu0 0.0
  %1713 = vmatmul.mubr.f32.gmra.mrb[0].mxu0 %v1493
  %v1714 = vpop.f32.mrb[0].mxu0
  %v1715 = vadd.f32 0.0, %v1714
  %v1716 = vpop.f32.mrb[0].mxu0
  %v1717 = vadd.f32 0.0, %v1716
  %1718 = vmatprep.mubr.f32.mxu0 0.0
  %1719 = vmatmul.mubr.f32.gmra.mrb[0].mxu0 %v1496
  %v1720 = vpop.f32.mrb[0].mxu0
  %v1721 = vadd.f32 0.0, %v1720
  %v1722 = vpop.f32.mrb[0].mxu0
  %v1723 = vadd.f32 0.0, %v1722
  %1724 = vmatprep.mubr.f32.mxu0 0.0
  %1725 = vmatmul.mubr.f32.gmra.mrb[0].mxu0 %v1499
  %v1726 = vpop.f32.mrb[0].mxu0
  %v1727 = vadd.f32 0.0, %v1726
  %v1728 = vpop.f32.mrb[0].mxu0
  %v1729 = vadd.f32 0.0, %v1728
  %1730 = vmatprep.mubr.f32.mxu0 0.0
  %1731 = vmatmul.mubr.f32.gmra.mrb[0].mxu0 %v1502
  %v1732 = vpop.f32.mrb[0].mxu0
  %v1733 = vadd.f32 0.0, %v1732
  %v1734 = vpop.f32.mrb[0].mxu0
  %v1735 = vadd.f32 0.0, %v1734
  %1736 = vmatprep.mubr.f32.mxu0 0.0
  %1737 = vmatmul.mubr.f32.gmra.mrb[0].mxu0 %v1505
  %v1738 = vpop.f32.mrb[0].mxu0
  %v1739 = vadd.f32 0.0, %v1738
  %v1740 = vpop.f32.mrb[0].mxu0
  %v1741 = vadd.f32 0.0, %v1740
  %1742 = vmatprep.mubr.f32.mxu0 0.0
  %1743 = vmatmul.mubr.f32.gmra.mrb[0].mxu0 %v1508
  %v1744 = vpop.f32.mrb[0].mxu0
  %v1745 = vadd.f32 0.0, %v1744
  %v1746 = vpop.f32.mrb[0].mxu0
  %v1747 = vadd.f32 0.0, %v1746
  %1748 = vmatprep.mubr.f32.mxu0 0.0
  %1749 = vmatmul.mubr.f32.gmra.mrb[0].mxu0 %v1511
  %v1750 = vpop.f32.mrb[0].mxu0
  %v1751 = vadd.f32 0.0, %v1750
  %v1752 = vpop.f32.mrb[0].mxu0
  %v1753 = vadd.f32 0.0, %v1752
  %1754 = vmatprep.mubr.f32.mxu0 0.0
  %1755 = vmatmul.mubr.f32.gmra.mrb[0].mxu0 %v1514
  %v1756 = vpop.f32.mrb[0].mxu0
  %v1757 = vadd.f32 0.0, %v1756
  %v1758 = vpop.f32.mrb[0].mxu0
  %v1759 = vadd.f32 0.0, %v1758
  %1760 = vmatprep.mubr.f32.mxu0 0.0
  %1761 = vmatmul.mubr.f32.gmra.mrb[0].mxu0 %v1517
  %v1762 = vpop.f32.mrb[0].mxu0
  %v1763 = vadd.f32 0.0, %v1762
  %v1764 = vpop.f32.mrb[0].mxu0
  %v1765 = vadd.f32 0.0, %v1764
  %1766 = vmatprep.mubr.f32.mxu0 0.0
  %1767 = vmatmul.mubr.f32.gmra.mrb[0].mxu0 %v1520
  %v1768 = vpop.f32.mrb[0].mxu0
  %v1769 = vadd.f32 0.0, %v1768
  %v1770 = vpop.f32.mrb[0].mxu0
  %v1771 = vadd.f32 0.0, %v1770
  %1772 = vmatprep.mubr.f32.mxu0 0.0
  %1773 = vmatmul.mubr.f32.gmra.mrb[0].mxu0 %v1523
  %v1774 = vpop.f32.mrb[0].mxu0
  %v1775 = vadd.f32 0.0, %v1774
  %v1776 = vpop.f32.mrb[0].mxu0
  %v1777 = vadd.f32 0.0, %v1776
  %1778 = vmatprep.mubr.f32.mxu0 0.0
  %1779 = vmatmul.mubr.f32.gmra.mrb[0].mxu0 %v1526
  %v1780 = vpop.f32.mrb[0].mxu0
  %v1781 = vadd.f32 0.0, %v1780
  %v1782 = vpop.f32.mrb[0].mxu0
  %v1783 = vadd.f32 0.0, %v1782
  %1784 = vdwg.mxu0
  %v1785 = vadd.f32 %v1294, %v1595
  %v1786 = vadd.f32 %v1295, %v1597
  %v1787 = vadd.f32 %v1296, %v1601
  %v1788 = vadd.f32 %v1297, %v1603
  %v1789 = vadd.f32 %v1298, %v1607
  %v1790 = vadd.f32 %v1299, %v1609
  %v1791 = vadd.f32 %v1300, %v1613
  %v1792 = vadd.f32 %v1301, %v1615
  %v1793 = vadd.f32 %v1302, %v1619
  %v1794 = vadd.f32 %v1303, %v1621
  %v1795 = vadd.f32 %v1304, %v1625
  %v1796 = vadd.f32 %v1305, %v1627
  %v1797 = vadd.f32 %v1306, %v1631
  %v1798 = vadd.f32 %v1307, %v1633
  %v1799 = vadd.f32 %v1308, %v1637
  %v1800 = vadd.f32 %v1309, %v1639
  %v1801 = vadd.f32 %v1310, %v1643
  %v1802 = vadd.f32 %v1311, %v1645
  %v1803 = vadd.f32 %v1312, %v1649
  %v1804 = vadd.f32 %v1313, %v1651
  %v1805 = vadd.f32 %v1314, %v1655
  %v1806 = vadd.f32 %v1315, %v1657
  %v1807 = vadd.f32 %v1316, %v1661
  %v1808 = vadd.f32 %v1317, %v1663
  %v1809 = vadd.f32 %v1318, %v1667
  %v1810 = vadd.f32 %v1319, %v1669
  %v1811 = vadd.f32 %v1320, %v1673
  %v1812 = vadd.f32 %v1321, %v1675
  %v1813 = vadd.f32 %v1322, %v1679
  %v1814 = vadd.f32 %v1323, %v1681
  %v1815 = vadd.f32 %v1324, %v1685
  %v1816 = vadd.f32 %v1325, %v1687
  %v1817 = vadd.f32 %v1326, %v1691
  %v1818 = vadd.f32 %v1327, %v1693
  %v1819 = vadd.f32 %v1328, %v1697
  %v1820 = vadd.f32 %v1329, %v1699
  %v1821 = vadd.f32 %v1330, %v1703
  %v1822 = vadd.f32 %v1331, %v1705
  %v1823 = vadd.f32 %v1332, %v1709
  %v1824 = vadd.f32 %v1333, %v1711
  %v1825 = vadd.f32 %v1334, %v1715
  %v1826 = vadd.f32 %v1335, %v1717
  %v1827 = vadd.f32 %v1336, %v1721
  %v1828 = vadd.f32 %v1337, %v1723
  %v1829 = vadd.f32 %v1338, %v1727
  %v1830 = vadd.f32 %v1339, %v1729
  %v1831 = vadd.f32 %v1340, %v1733
  %v1832 = vadd.f32 %v1341, %v1735
  %v1833 = vadd.f32 %v1342, %v1739
  %v1834 = vadd.f32 %v1343, %v1741
  %v1835 = vadd.f32 %v1344, %v1745
  %v1836 = vadd.f32 %v1345, %v1747
  %v1837 = vadd.f32 %v1346, %v1751
  %v1838 = vadd.f32 %v1347, %v1753
  %v1839 = vadd.f32 %v1348, %v1757
  %v1840 = vadd.f32 %v1349, %v1759
  %v1841 = vadd.f32 %v1350, %v1763
  %v1842 = vadd.f32 %v1351, %v1765
  %v1843 = vadd.f32 %v1352, %v1769
  %v1844 = vadd.f32 %v1353, %v1771
  %v1845 = vadd.f32 %v1354, %v1775
  %v1846 = vadd.f32 %v1355, %v1777
  %v1847 = vadd.f32 %v1356, %v1781
  %v1848 = vadd.f32 %v1357, %v1783
  %v1849 = vrot.slane %v44, 4
  %v1850 = vrot.slane %v45, 4
  %v1851 = vrot.slane %v46, 4
  %v1852 = vrot.slane %v47, 4
  %v1853 = vrot.slane %v48, 4
  %v1854 = vrot.slane %v49, 4
  %v1855 = vrot.slane %v50, 4
  %v1856 = vrot.slane %v51, 4
  %v1857 = vrot.slane %v52, 4
  %v1858 = vrot.slane %v53, 4
  %v1859 = vrot.slane %v54, 4
  %v1860 = vrot.slane %v55, 4
  %v1861 = vrot.slane %v56, 4
  %v1862 = vrot.slane %v57, 4
  %v1863 = vrot.slane %v58, 4
  %v1864 = vrot.slane %v59, 4
  %v1865 = vrot.slane %v60, 4
  %v1866 = vrot.slane %v61, 4
  %v1867 = vrot.slane %v62, 4
  %v1868 = vrot.slane %v63, 4
  %v1869 = vrot.slane %v64, 4
  %v1870 = vrot.slane %v65, 4
  %v1871 = vrot.slane %v66, 4
  %v1872 = vrot.slane %v67, 4
  %v1873 = vrot.slane %v68, 4
  %v1874 = vrot.slane %v69, 4
  %v1875 = vrot.slane %v70, 4
  %v1876 = vrot.slane %v71, 4
  %v1877 = vrot.slane %v72, 4
  %v1878 = vrot.slane %v73, 4
  %v1879 = vrot.slane %v74, 4
  %v1880 = vrot.slane %v75, 4
  %vm1881 = vcmp.lt.s32.totalorder %v117, 4
  %v1882 = vsel %vm1881, %v1879, %v1880
  %v1883 = vsel %vm1881, %v1878, %v1879
  %v1884 = vsel %vm1881, %v1877, %v1878
  %v1885 = vsel %vm1881, %v1876, %v1877
  %v1886 = vsel %vm1881, %v1875, %v1876
  %v1887 = vsel %vm1881, %v1874, %v1875
  %v1888 = vsel %vm1881, %v1873, %v1874
  %v1889 = vsel %vm1881, %v1872, %v1873
  %v1890 = vsel %vm1881, %v1871, %v1872
  %v1891 = vsel %vm1881, %v1870, %v1871
  %v1892 = vsel %vm1881, %v1869, %v1870
  %v1893 = vsel %vm1881, %v1868, %v1869
  %v1894 = vsel %vm1881, %v1867, %v1868
  %v1895 = vsel %vm1881, %v1866, %v1867
  %v1896 = vsel %vm1881, %v1865, %v1866
  %v1897 = vsel %vm1881, %v1864, %v1865
  %v1898 = vsel %vm1881, %v1863, %v1864
  %v1899 = vsel %vm1881, %v1862, %v1863
  %v1900 = vsel %vm1881, %v1861, %v1862
  %v1901 = vsel %vm1881, %v1860, %v1861
  %v1902 = vsel %vm1881, %v1859, %v1860
  %v1903 = vsel %vm1881, %v1858, %v1859
  %v1904 = vsel %vm1881, %v1857, %v1858
  %v1905 = vsel %vm1881, %v1856, %v1857
  %v1906 = vsel %vm1881, %v1855, %v1856
  %v1907 = vsel %vm1881, %v1854, %v1855
  %v1908 = vsel %vm1881, %v1853, %v1854
  %v1909 = vsel %vm1881, %v1852, %v1853
  %v1910 = vsel %vm1881, %v1851, %v1852
  %v1911 = vsel %vm1881, %v1850, %v1851
  %v1912 = vsel %vm1881, %v1849, %v1850
  %v1913 = vsel %vm1881, %v1880, %v1849
  %s1914 = scalar_lea.vmem %s1, 256
  %v1915 = vld [vmem:[%s1914] sm:$0xff]
  %v1916 = vld [vmem:[%s1914 + $0x8] sm:$0xff]
  %v1917 = vld [vmem:[%s1914 + $0x10] sm:$0xff]
  %v1918 = vld [vmem:[%s1914 + $0x18] sm:$0xff]
  %v1919 = vld [vmem:[%s1914 + $0x20] sm:$0xff]
  %v1920 = vld [vmem:[%s1914 + $0x28] sm:$0xff]
  %v1921 = vld [vmem:[%s1914 + $0x30] sm:$0xff]
  %v1922 = vld [vmem:[%s1914 + $0x38] sm:$0xff]
  %v1924 = vsel %vm160, %v1912, 0
  %v1927 = vsel %vm160, %v1911, 0
  %v1930 = vsel %vm160, %v1910, 0
  %v1933 = vsel %vm160, %v1909, 0
  %v1936 = vsel %vm160, %v1908, 0
  %v1939 = vsel %vm160, %v1907, 0
  %v1942 = vsel %vm160, %v1906, 0
  %v1945 = vsel %vm160, %v1905, 0
  %v1948 = vsel %vm160, %v1904, 0
  %v1951 = vsel %vm160, %v1903, 0
  %v1954 = vsel %vm160, %v1902, 0
  %v1957 = vsel %vm160, %v1901, 0
  %v1960 = vsel %vm160, %v1900, 0
  %v1963 = vsel %vm160, %v1899, 0
  %v1966 = vsel %vm160, %v1898, 0
  %v1969 = vsel %vm160, %v1897, 0
  %v1972 = vsel %vm160, %v1896, 0
  %v1975 = vsel %vm160, %v1895, 0
  %v1978 = vsel %vm160, %v1894, 0
  %v1981 = vsel %vm160, %v1893, 0
  %v1984 = vsel %vm160, %v1892, 0
  %v1987 = vsel %vm160, %v1891, 0
  %v1990 = vsel %vm160, %v1890, 0
  %v1993 = vsel %vm160, %v1889, 0
  %v1996 = vsel %vm160, %v1888, 0
  %v1999 = vsel %vm160, %v1887, 0
  %v2002 = vsel %vm160, %v1886, 0
  %v2005 = vsel %vm160, %v1885, 0
  %v2008 = vsel %vm160, %v1884, 0
  %v2011 = vsel %vm160, %v1883, 0
  %v2014 = vsel %vm160, %v1882, 0
  %v2017 = vsel %vm160, %v1913, 0
  %2019 = vmatprep.subr.mxu0 %v1916
  %2020 = vmatpush1.msra.mxu0 %v1915
  %2021 = vmatprep.subr.mxu0 %v1918
  %2022 = vmatpush1.msra.mxu0 %v1917
  %2023 = vmatprep.subr.mxu0 %v1920
  %2024 = vmatpush1.msra.mxu0 %v1919
  %2025 = vmatprep.subr.mxu0 %v1922
  %2026 = vmatpush1.msra.mxu0 %v1921
  %2027 = vmatprep.subr.mxu0 0.0
  %2028 = vmatpush1.msra.mxu0 0.0
  %2029 = vmatprep.subr.mxu0 0.0
  %2030 = vmatpush1.msra.mxu0 0.0
  %2031 = vmatprep.subr.mxu0 0.0
  %2032 = vmatpush1.msra.mxu0 0.0
  %2033 = vmatprep.subr.mxu0 0.0
  %2034 = vmatpush1.msra.mxu0 0.0
  %2035 = vmatprep.subr.mxu0 0.0
  %2036 = vmatpush1.msra.mxu0 0.0
  %2037 = vmatprep.subr.mxu0 0.0
  %2038 = vmatpush1.msra.mxu0 0.0
  %2039 = vmatprep.subr.mxu0 0.0
  %2040 = vmatpush1.msra.mxu0 0.0
  %2041 = vmatprep.subr.mxu0 0.0
  %2042 = vmatpush1.msra.mxu0 0.0
  %2043 = vmatprep.subr.mxu0 0.0
  %2044 = vmatpush1.msra.mxu0 0.0
  %2045 = vmatprep.subr.mxu0 0.0
  %2046 = vmatpush1.msra.mxu0 0.0
  %2047 = vmatprep.subr.mxu0 0.0
  %2048 = vmatpush1.msra.mxu0 0.0
  %2049 = vmatprep.subr.mxu0 0.0
  %2050 = vmatpush1.msra.mxu0 0.0
  %2051 = vmatprep.subr.mxu0 0.0
  %2052 = vmatpush1.msra.mxu0 0.0
  %2053 = vmatprep.subr.mxu0 0.0
  %2054 = vmatpush1.msra.mxu0 0.0
  %2055 = vmatprep.subr.mxu0 0.0
  %2056 = vmatpush1.msra.mxu0 0.0
  %2057 = vmatprep.subr.mxu0 0.0
  %2058 = vmatpush1.msra.mxu0 0.0
  %2059 = vmatprep.subr.mxu0 0.0
  %2060 = vmatpush1.msra.mxu0 0.0
  %2061 = vmatprep.subr.mxu0 0.0
  %2062 = vmatpush1.msra.mxu0 0.0
  %2063 = vmatprep.subr.mxu0 0.0
  %2064 = vmatpush1.msra.mxu0 0.0
  %2065 = vmatprep.subr.mxu0 0.0
  %2066 = vmatpush1.msra.mxu0 0.0
  %2067 = vmatprep.subr.mxu0 0.0
  %2068 = vmatpush1.msra.mxu0 0.0
  %2069 = vmatprep.subr.mxu0 0.0
  %2070 = vmatpush1.msra.mxu0 0.0
  %2071 = vmatprep.subr.mxu0 0.0
  %2072 = vmatpush1.msra.mxu0 0.0
  %2073 = vmatprep.subr.mxu0 0.0
  %2074 = vmatpush1.msra.mxu0 0.0
  %2075 = vmatprep.subr.mxu0 0.0
  %2076 = vmatpush1.msra.mxu0 0.0
  %2077 = vmatprep.subr.mxu0 0.0
  %2078 = vmatpush1.msra.mxu0 0.0
  %2079 = vmatprep.subr.mxu0 0.0
  %2080 = vmatpush1.msra.mxu0 0.0
  %2081 = vmatprep.subr.mxu0 0.0
  %2082 = vmatpush1.msra.mxu0 0.0
  %2083 = vmatprep.mubr.f32.mxu0 0.0
  %2084 = vmatmul.mubr.f32.gmra.mrb[0].mxu0 %v1924
  %v2085 = vpop.f32.mrb[0].mxu0
  %v2086 = vadd.f32 0.0, %v2085
  %v2087 = vpop.f32.mrb[0].mxu0
  %v2088 = vadd.f32 0.0, %v2087
  %2089 = vmatprep.mubr.f32.mxu0 0.0
  %2090 = vmatmul.mubr.f32.gmra.mrb[0].mxu0 %v1927
  %v2091 = vpop.f32.mrb[0].mxu0
  %v2092 = vadd.f32 0.0, %v2091
  %v2093 = vpop.f32.mrb[0].mxu0
  %v2094 = vadd.f32 0.0, %v2093
  %2095 = vmatprep.mubr.f32.mxu0 0.0
  %2096 = vmatmul.mubr.f32.gmra.mrb[0].mxu0 %v1930
  %v2097 = vpop.f32.mrb[0].mxu0
  %v2098 = vadd.f32 0.0, %v2097
  %v2099 = vpop.f32.mrb[0].mxu0
  %v2100 = vadd.f32 0.0, %v2099
  %2101 = vmatprep.mubr.f32.mxu0 0.0
  %2102 = vmatmul.mubr.f32.gmra.mrb[0].mxu0 %v1933
  %v2103 = vpop.f32.mrb[0].mxu0
  %v2104 = vadd.f32 0.0, %v2103
  %v2105 = vpop.f32.mrb[0].mxu0
  %v2106 = vadd.f32 0.0, %v2105
  %2107 = vmatprep.mubr.f32.mxu0 0.0
  %2108 = vmatmul.mubr.f32.gmra.mrb[0].mxu0 %v1936
  %v2109 = vpop.f32.mrb[0].mxu0
  %v2110 = vadd.f32 0.0, %v2109
  %v2111 = vpop.f32.mrb[0].mxu0
  %v2112 = vadd.f32 0.0, %v2111
  %2113 = vmatprep.mubr.f32.mxu0 0.0
  %2114 = vmatmul.mubr.f32.gmra.mrb[0].mxu0 %v1939
  %v2115 = vpop.f32.mrb[0].mxu0
  %v2116 = vadd.f32 0.0, %v2115
  %v2117 = vpop.f32.mrb[0].mxu0
  %v2118 = vadd.f32 0.0, %v2117
  %2119 = vmatprep.mubr.f32.mxu0 0.0
  %2120 = vmatmul.mubr.f32.gmra.mrb[0].mxu0 %v1942
  %v2121 = vpop.f32.mrb[0].mxu0
  %v2122 = vadd.f32 0.0, %v2121
  %v2123 = vpop.f32.mrb[0].mxu0
  %v2124 = vadd.f32 0.0, %v2123
  %2125 = vmatprep.mubr.f32.mxu0 0.0
  %2126 = vmatmul.mubr.f32.gmra.mrb[0].mxu0 %v1945
  %v2127 = vpop.f32.mrb[0].mxu0
  %v2128 = vadd.f32 0.0, %v2127
  %v2129 = vpop.f32.mrb[0].mxu0
  %v2130 = vadd.f32 0.0, %v2129
  %2131 = vmatprep.mubr.f32.mxu0 0.0
  %2132 = vmatmul.mubr.f32.gmra.mrb[0].mxu0 %v1948
  %v2133 = vpop.f32.mrb[0].mxu0
  %v2134 = vadd.f32 0.0, %v2133
  %v2135 = vpop.f32.mrb[0].mxu0
  %v2136 = vadd.f32 0.0, %v2135
  %2137 = vmatprep.mubr.f32.mxu0 0.0
  %2138 = vmatmul.mubr.f32.gmra.mrb[0].mxu0 %v1951
  %v2139 = vpop.f32.mrb[0].mxu0
  %v2140 = vadd.f32 0.0, %v2139
  %v2141 = vpop.f32.mrb[0].mxu0
  %v2142 = vadd.f32 0.0, %v2141
  %2143 = vmatprep.mubr.f32.mxu0 0.0
  %2144 = vmatmul.mubr.f32.gmra.mrb[0].mxu0 %v1954
  %v2145 = vpop.f32.mrb[0].mxu0
  %v2146 = vadd.f32 0.0, %v2145
  %v2147 = vpop.f32.mrb[0].mxu0
  %v2148 = vadd.f32 0.0, %v2147
  %2149 = vmatprep.mubr.f32.mxu0 0.0
  %2150 = vmatmul.mubr.f32.gmra.mrb[0].mxu0 %v1957
  %v2151 = vpop.f32.mrb[0].mxu0
  %v2152 = vadd.f32 0.0, %v2151
  %v2153 = vpop.f32.mrb[0].mxu0
  %v2154 = vadd.f32 0.0, %v2153
  %2155 = vmatprep.mubr.f32.mxu0 0.0
  %2156 = vmatmul.mubr.f32.gmra.mrb[0].mxu0 %v1960
  %v2157 = vpop.f32.mrb[0].mxu0
  %v2158 = vadd.f32 0.0, %v2157
  %v2159 = vpop.f32.mrb[0].mxu0
  %v2160 = vadd.f32 0.0, %v2159
  %2161 = vmatprep.mubr.f32.mxu0 0.0
  %2162 = vmatmul.mubr.f32.gmra.mrb[0].mxu0 %v1963
  %v2163 = vpop.f32.mrb[0].mxu0
  %v2164 = vadd.f32 0.0, %v2163
  %v2165 = vpop.f32.mrb[0].mxu0
  %v2166 = vadd.f32 0.0, %v2165
  %2167 = vmatprep.mubr.f32.mxu0 0.0
  %2168 = vmatmul.mubr.f32.gmra.mrb[0].mxu0 %v1966
  %v2169 = vpop.f32.mrb[0].mxu0
  %v2170 = vadd.f32 0.0, %v2169
  %v2171 = vpop.f32.mrb[0].mxu0
  %v2172 = vadd.f32 0.0, %v2171
  %2173 = vmatprep.mubr.f32.mxu0 0.0
  %2174 = vmatmul.mubr.f32.gmra.mrb[0].mxu0 %v1969
  %v2175 = vpop.f32.mrb[0].mxu0
  %v2176 = vadd.f32 0.0, %v2175
  %v2177 = vpop.f32.mrb[0].mxu0
  %v2178 = vadd.f32 0.0, %v2177
  %2179 = vmatprep.mubr.f32.mxu0 0.0
  %2180 = vmatmul.mubr.f32.gmra.mrb[0].mxu0 %v1972
  %v2181 = vpop.f32.mrb[0].mxu0
  %v2182 = vadd.f32 0.0, %v2181
  %v2183 = vpop.f32.mrb[0].mxu0
  %v2184 = vadd.f32 0.0, %v2183
  %2185 = vmatprep.mubr.f32.mxu0 0.0
  %2186 = vmatmul.mubr.f32.gmra.mrb[0].mxu0 %v1975
  %v2187 = vpop.f32.mrb[0].mxu0
  %v2188 = vadd.f32 0.0, %v2187
  %v2189 = vpop.f32.mrb[0].mxu0
  %v2190 = vadd.f32 0.0, %v2189
  %2191 = vmatprep.mubr.f32.mxu0 0.0
  %2192 = vmatmul.mubr.f32.gmra.mrb[0].mxu0 %v1978
  %v2193 = vpop.f32.mrb[0].mxu0
  %v2194 = vadd.f32 0.0, %v2193
  %v2195 = vpop.f32.mrb[0].mxu0
  %v2196 = vadd.f32 0.0, %v2195
  %2197 = vmatprep.mubr.f32.mxu0 0.0
  %2198 = vmatmul.mubr.f32.gmra.mrb[0].mxu0 %v1981
  %v2199 = vpop.f32.mrb[0].mxu0
  %v2200 = vadd.f32 0.0, %v2199
  %v2201 = vpop.f32.mrb[0].mxu0
  %v2202 = vadd.f32 0.0, %v2201
  %2203 = vmatprep.mubr.f32.mxu0 0.0
  %2204 = vmatmul.mubr.f32.gmra.mrb[0].mxu0 %v1984
  %v2205 = vpop.f32.mrb[0].mxu0
  %v2206 = vadd.f32 0.0, %v2205
  %v2207 = vpop.f32.mrb[0].mxu0
  %v2208 = vadd.f32 0.0, %v2207
  %2209 = vmatprep.mubr.f32.mxu0 0.0
  %2210 = vmatmul.mubr.f32.gmra.mrb[0].mxu0 %v1987
  %v2211 = vpop.f32.mrb[0].mxu0
  %v2212 = vadd.f32 0.0, %v2211
  %v2213 = vpop.f32.mrb[0].mxu0
  %v2214 = vadd.f32 0.0, %v2213
  %2215 = vmatprep.mubr.f32.mxu0 0.0
  %2216 = vmatmul.mubr.f32.gmra.mrb[0].mxu0 %v1990
  %v2217 = vpop.f32.mrb[0].mxu0
  %v2218 = vadd.f32 0.0, %v2217
  %v2219 = vpop.f32.mrb[0].mxu0
  %v2220 = vadd.f32 0.0, %v2219
  %2221 = vmatprep.mubr.f32.mxu0 0.0
  %2222 = vmatmul.mubr.f32.gmra.mrb[0].mxu0 %v1993
  %v2223 = vpop.f32.mrb[0].mxu0
  %v2224 = vadd.f32 0.0, %v2223
  %v2225 = vpop.f32.mrb[0].mxu0
  %v2226 = vadd.f32 0.0, %v2225
  %2227 = vmatprep.mubr.f32.mxu0 0.0
  %2228 = vmatmul.mubr.f32.gmra.mrb[0].mxu0 %v1996
  %v2229 = vpop.f32.mrb[0].mxu0
  %v2230 = vadd.f32 0.0, %v2229
  %v2231 = vpop.f32.mrb[0].mxu0
  %v2232 = vadd.f32 0.0, %v2231
  %2233 = vmatprep.mubr.f32.mxu0 0.0
  %2234 = vmatmul.mubr.f32.gmra.mrb[0].mxu0 %v1999
  %v2235 = vpop.f32.mrb[0].mxu0
  %v2236 = vadd.f32 0.0, %v2235
  %v2237 = vpop.f32.mrb[0].mxu0
  %v2238 = vadd.f32 0.0, %v2237
  %2239 = vmatprep.mubr.f32.mxu0 0.0
  %2240 = vmatmul.mubr.f32.gmra.mrb[0].mxu0 %v2002
  %v2241 = vpop.f32.mrb[0].mxu0
  %v2242 = vadd.f32 0.0, %v2241
  %v2243 = vpop.f32.mrb[0].mxu0
  %v2244 = vadd.f32 0.0, %v2243
  %2245 = vmatprep.mubr.f32.mxu0 0.0
  %2246 = vmatmul.mubr.f32.gmra.mrb[0].mxu0 %v2005
  %v2247 = vpop.f32.mrb[0].mxu0
  %v2248 = vadd.f32 0.0, %v2247
  %v2249 = vpop.f32.mrb[0].mxu0
  %v2250 = vadd.f32 0.0, %v2249
  %2251 = vmatprep.mubr.f32.mxu0 0.0
  %2252 = vmatmul.mubr.f32.gmra.mrb[0].mxu0 %v2008
  %v2253 = vpop.f32.mrb[0].mxu0
  %v2254 = vadd.f32 0.0, %v2253
  %v2255 = vpop.f32.mrb[0].mxu0
  %v2256 = vadd.f32 0.0, %v2255
  %2257 = vmatprep.mubr.f32.mxu0 0.0
  %2258 = vmatmul.mubr.f32.gmra.mrb[0].mxu0 %v2011
  %v2259 = vpop.f32.mrb[0].mxu0
  %v2260 = vadd.f32 0.0, %v2259
  %v2261 = vpop.f32.mrb[0].mxu0
  %v2262 = vadd.f32 0.0, %v2261
  %2263 = vmatprep.mubr.f32.mxu0 0.0
  %2264 = vmatmul.mubr.f32.gmra.mrb[0].mxu0 %v2014
  %v2265 = vpop.f32.mrb[0].mxu0
  %v2266 = vadd.f32 0.0, %v2265
  %v2267 = vpop.f32.mrb[0].mxu0
  %v2268 = vadd.f32 0.0, %v2267
  %2269 = vmatprep.mubr.f32.mxu0 0.0
  %2270 = vmatmul.mubr.f32.gmra.mrb[0].mxu0 %v2017
  %v2271 = vpop.f32.mrb[0].mxu0
  %v2272 = vadd.f32 0.0, %v2271
  %v2273 = vpop.f32.mrb[0].mxu0
  %v2274 = vadd.f32 0.0, %v2273
  %2275 = vdwg.mxu0
  %v2276 = vadd.f32 %v1785, %v2086
  %v2277 = vadd.f32 %v1786, %v2088
  %v2278 = vadd.f32 %v1787, %v2092
  %v2279 = vadd.f32 %v1788, %v2094
  %v2280 = vadd.f32 %v1789, %v2098
  %v2281 = vadd.f32 %v1790, %v2100
  %v2282 = vadd.f32 %v1791, %v2104
  %v2283 = vadd.f32 %v1792, %v2106
  %v2284 = vadd.f32 %v1793, %v2110
  %v2285 = vadd.f32 %v1794, %v2112
  %v2286 = vadd.f32 %v1795, %v2116
  %v2287 = vadd.f32 %v1796, %v2118
  %v2288 = vadd.f32 %v1797, %v2122
  %v2289 = vadd.f32 %v1798, %v2124
  %v2290 = vadd.f32 %v1799, %v2128
  %v2291 = vadd.f32 %v1800, %v2130
  %v2292 = vadd.f32 %v1801, %v2134
  %v2293 = vadd.f32 %v1802, %v2136
  %v2294 = vadd.f32 %v1803, %v2140
  %v2295 = vadd.f32 %v1804, %v2142
  %v2296 = vadd.f32 %v1805, %v2146
  %v2297 = vadd.f32 %v1806, %v2148
  %v2298 = vadd.f32 %v1807, %v2152
  %v2299 = vadd.f32 %v1808, %v2154
  %v2300 = vadd.f32 %v1809, %v2158
  %v2301 = vadd.f32 %v1810, %v2160
  %v2302 = vadd.f32 %v1811, %v2164
  %v2303 = vadd.f32 %v1812, %v2166
  %v2304 = vadd.f32 %v1813, %v2170
  %v2305 = vadd.f32 %v1814, %v2172
  %v2306 = vadd.f32 %v1815, %v2176
  %v2307 = vadd.f32 %v1816, %v2178
  %v2308 = vadd.f32 %v1817, %v2182
  %v2309 = vadd.f32 %v1818, %v2184
  %v2310 = vadd.f32 %v1819, %v2188
  %v2311 = vadd.f32 %v1820, %v2190
  %v2312 = vadd.f32 %v1821, %v2194
  %v2313 = vadd.f32 %v1822, %v2196
  %v2314 = vadd.f32 %v1823, %v2200
  %v2315 = vadd.f32 %v1824, %v2202
  %v2316 = vadd.f32 %v1825, %v2206
  %v2317 = vadd.f32 %v1826, %v2208
  %v2318 = vadd.f32 %v1827, %v2212
  %v2319 = vadd.f32 %v1828, %v2214
  %v2320 = vadd.f32 %v1829, %v2218
  %v2321 = vadd.f32 %v1830, %v2220
  %v2322 = vadd.f32 %v1831, %v2224
  %v2323 = vadd.f32 %v1832, %v2226
  %v2324 = vadd.f32 %v1833, %v2230
  %v2325 = vadd.f32 %v1834, %v2232
  %v2326 = vadd.f32 %v1835, %v2236
  %v2327 = vadd.f32 %v1836, %v2238
  %v2328 = vadd.f32 %v1837, %v2242
  %v2329 = vadd.f32 %v1838, %v2244
  %v2330 = vadd.f32 %v1839, %v2248
  %v2331 = vadd.f32 %v1840, %v2250
  %v2332 = vadd.f32 %v1841, %v2254
  %v2333 = vadd.f32 %v1842, %v2256
  %v2334 = vadd.f32 %v1843, %v2260
  %v2335 = vadd.f32 %v1844, %v2262
  %v2336 = vadd.f32 %v1845, %v2266
  %v2337 = vadd.f32 %v1846, %v2268
  %v2338 = vadd.f32 %v1847, %v2272
  %v2339 = vadd.f32 %v1848, %v2274
  %v2340 = vld [vmem:[%s2] sm:$0x3]
  %v2342 = vlaneseq
  %v2343 = vshrl.u32 %v2342, 7
  %v2344 = vsub.s32 0, %v2343
  %v2345 = vrot.slane %v2340, %v2344
  %v2346 = vlaneseq
  %v2347 = vshrl.u32 %v2346, 7
  %v2348 = vsub.s32 1, %v2347
  %v2349 = vrot.slane %v2340, %v2348
  %v2352 = vadd.f32 %v2276, %v2345
  %v2353 = vadd.f32 %v2277, %v2349
  %v2354 = vadd.f32 %v2278, %v2345
  %v2355 = vadd.f32 %v2279, %v2349
  %v2356 = vadd.f32 %v2280, %v2345
  %v2357 = vadd.f32 %v2281, %v2349
  %v2358 = vadd.f32 %v2282, %v2345
  %v2359 = vadd.f32 %v2283, %v2349
  %v2360 = vadd.f32 %v2284, %v2345
  %v2361 = vadd.f32 %v2285, %v2349
  %v2362 = vadd.f32 %v2286, %v2345
  %v2363 = vadd.f32 %v2287, %v2349
  %v2364 = vadd.f32 %v2288, %v2345
  %v2365 = vadd.f32 %v2289, %v2349
  %v2366 = vadd.f32 %v2290, %v2345
  %v2367 = vadd.f32 %v2291, %v2349
  %v2368 = vadd.f32 %v2292, %v2345
  %v2369 = vadd.f32 %v2293, %v2349
  %v2370 = vadd.f32 %v2294, %v2345
  %v2371 = vadd.f32 %v2295, %v2349
  %v2372 = vadd.f32 %v2296, %v2345
  %v2373 = vadd.f32 %v2297, %v2349
  %v2374 = vadd.f32 %v2298, %v2345
  %v2375 = vadd.f32 %v2299, %v2349
  %v2376 = vadd.f32 %v2300, %v2345
  %v2377 = vadd.f32 %v2301, %v2349
  %v2378 = vadd.f32 %v2302, %v2345
  %v2379 = vadd.f32 %v2303, %v2349
  %v2380 = vadd.f32 %v2304, %v2345
  %v2381 = vadd.f32 %v2305, %v2349
  %v2382 = vadd.f32 %v2306, %v2345
  %v2383 = vadd.f32 %v2307, %v2349
  %v2384 = vadd.f32 %v2308, %v2345
  %v2385 = vadd.f32 %v2309, %v2349
  %v2386 = vadd.f32 %v2310, %v2345
  %v2387 = vadd.f32 %v2311, %v2349
  %v2388 = vadd.f32 %v2312, %v2345
  %v2389 = vadd.f32 %v2313, %v2349
  %v2390 = vadd.f32 %v2314, %v2345
  %v2391 = vadd.f32 %v2315, %v2349
  %v2392 = vadd.f32 %v2316, %v2345
  %v2393 = vadd.f32 %v2317, %v2349
  %v2394 = vadd.f32 %v2318, %v2345
  %v2395 = vadd.f32 %v2319, %v2349
  %v2396 = vadd.f32 %v2320, %v2345
  %v2397 = vadd.f32 %v2321, %v2349
  %v2398 = vadd.f32 %v2322, %v2345
  %v2399 = vadd.f32 %v2323, %v2349
  %v2400 = vadd.f32 %v2324, %v2345
  %v2401 = vadd.f32 %v2325, %v2349
  %v2402 = vadd.f32 %v2326, %v2345
  %v2403 = vadd.f32 %v2327, %v2349
  %v2404 = vadd.f32 %v2328, %v2345
  %v2405 = vadd.f32 %v2329, %v2349
  %v2406 = vadd.f32 %v2330, %v2345
  %v2407 = vadd.f32 %v2331, %v2349
  %v2408 = vadd.f32 %v2332, %v2345
  %v2409 = vadd.f32 %v2333, %v2349
  %v2410 = vadd.f32 %v2334, %v2345
  %v2411 = vadd.f32 %v2335, %v2349
  %v2412 = vadd.f32 %v2336, %v2345
  %v2413 = vadd.f32 %v2337, %v2349
  %v2414 = vadd.f32 %v2338, %v2345
  %v2415 = vadd.f32 %v2339, %v2349
  %v2416 = vsub.f32 0.0, %v2352
  %v2417 = vsub.f32 0.0, %v2353
  %v2418 = vsub.f32 0.0, %v2354
  %v2419 = vsub.f32 0.0, %v2355
  %v2420 = vsub.f32 0.0, %v2356
  %v2421 = vsub.f32 0.0, %v2357
  %v2422 = vsub.f32 0.0, %v2358
  %v2423 = vsub.f32 0.0, %v2359
  %v2424 = vsub.f32 0.0, %v2360
  %v2425 = vsub.f32 0.0, %v2361
  %v2426 = vsub.f32 0.0, %v2362
  %v2427 = vsub.f32 0.0, %v2363
  %v2428 = vsub.f32 0.0, %v2364
  %v2429 = vsub.f32 0.0, %v2365
  %v2430 = vsub.f32 0.0, %v2366
  %v2431 = vsub.f32 0.0, %v2367
  %v2432 = vsub.f32 0.0, %v2368
  %v2433 = vsub.f32 0.0, %v2369
  %v2434 = vsub.f32 0.0, %v2370
  %v2435 = vsub.f32 0.0, %v2371
  %v2436 = vsub.f32 0.0, %v2372
  %v2437 = vsub.f32 0.0, %v2373
  %v2438 = vsub.f32 0.0, %v2374
  %v2439 = vsub.f32 0.0, %v2375
  %v2440 = vsub.f32 0.0, %v2376
  %v2441 = vsub.f32 0.0, %v2377
  %v2442 = vsub.f32 0.0, %v2378
  %v2443 = vsub.f32 0.0, %v2379
  %v2444 = vsub.f32 0.0, %v2380
  %v2445 = vsub.f32 0.0, %v2381
  %v2446 = vsub.f32 0.0, %v2382
  %v2447 = vsub.f32 0.0, %v2383
  %v2448 = vsub.f32 0.0, %v2384
  %v2449 = vsub.f32 0.0, %v2385
  %v2450 = vsub.f32 0.0, %v2386
  %v2451 = vsub.f32 0.0, %v2387
  %v2452 = vsub.f32 0.0, %v2388
  %v2453 = vsub.f32 0.0, %v2389
  %v2454 = vsub.f32 0.0, %v2390
  %v2455 = vsub.f32 0.0, %v2391
  %v2456 = vsub.f32 0.0, %v2392
  %v2457 = vsub.f32 0.0, %v2393
  %v2458 = vsub.f32 0.0, %v2394
  %v2459 = vsub.f32 0.0, %v2395
  %v2460 = vsub.f32 0.0, %v2396
  %v2461 = vsub.f32 0.0, %v2397
  %v2462 = vsub.f32 0.0, %v2398
  %v2463 = vsub.f32 0.0, %v2399
  %v2464 = vsub.f32 0.0, %v2400
  %v2465 = vsub.f32 0.0, %v2401
  %v2466 = vsub.f32 0.0, %v2402
  %v2467 = vsub.f32 0.0, %v2403
  %v2468 = vsub.f32 0.0, %v2404
  %v2469 = vsub.f32 0.0, %v2405
  %v2470 = vsub.f32 0.0, %v2406
  %v2471 = vsub.f32 0.0, %v2407
  %v2472 = vsub.f32 0.0, %v2408
  %v2473 = vsub.f32 0.0, %v2409
  %v2474 = vsub.f32 0.0, %v2410
  %v2475 = vsub.f32 0.0, %v2411
  %v2476 = vsub.f32 0.0, %v2412
  %v2477 = vsub.f32 0.0, %v2413
  %v2478 = vsub.f32 0.0, %v2414
  %v2479 = vsub.f32 0.0, %v2415
  %v2480 = vmul.f32 %v2416, 1.442695
  %v2481 = vpow.pop %v2480
  %v2482 = vmul.f32 %v2417, 1.442695
  %v2483 = vpow.pop %v2482
  %v2484 = vmul.f32 %v2418, 1.442695
  %v2485 = vpow.pop %v2484
  %v2486 = vmul.f32 %v2419, 1.442695
  %v2487 = vpow.pop %v2486
  %v2488 = vmul.f32 %v2420, 1.442695
  %v2489 = vpow.pop %v2488
  %v2490 = vmul.f32 %v2421, 1.442695
  %v2491 = vpow.pop %v2490
  %v2492 = vmul.f32 %v2422, 1.442695
  %v2493 = vpow.pop %v2492
  %v2494 = vmul.f32 %v2423, 1.442695
  %v2495 = vpow.pop %v2494
  %v2496 = vmul.f32 %v2424, 1.442695
  %v2497 = vpow.pop %v2496
  %v2498 = vmul.f32 %v2425, 1.442695
  %v2499 = vpow.pop %v2498
  %v2500 = vmul.f32 %v2426, 1.442695
  %v2501 = vpow.pop %v2500
  %v2502 = vmul.f32 %v2427, 1.442695
  %v2503 = vpow.pop %v2502
  %v2504 = vmul.f32 %v2428, 1.442695
  %v2505 = vpow.pop %v2504
  %v2506 = vmul.f32 %v2429, 1.442695
  %v2507 = vpow.pop %v2506
  %v2508 = vmul.f32 %v2430, 1.442695
  %v2509 = vpow.pop %v2508
  %v2510 = vmul.f32 %v2431, 1.442695
  %v2511 = vpow.pop %v2510
  %v2512 = vmul.f32 %v2432, 1.442695
  %v2513 = vpow.pop %v2512
  %v2514 = vmul.f32 %v2433, 1.442695
  %v2515 = vpow.pop %v2514
  %v2516 = vmul.f32 %v2434, 1.442695
  %v2517 = vpow.pop %v2516
  %v2518 = vmul.f32 %v2435, 1.442695
  %v2519 = vpow.pop %v2518
  %v2520 = vmul.f32 %v2436, 1.442695
  %v2521 = vpow.pop %v2520
  %v2522 = vmul.f32 %v2437, 1.442695
  %v2523 = vpow.pop %v2522
  %v2524 = vmul.f32 %v2438, 1.442695
  %v2525 = vpow.pop %v2524
  %v2526 = vmul.f32 %v2439, 1.442695
  %v2527 = vpow.pop %v2526
  %v2528 = vmul.f32 %v2440, 1.442695
  %v2529 = vpow.pop %v2528
  %v2530 = vmul.f32 %v2441, 1.442695
  %v2531 = vpow.pop %v2530
  %v2532 = vmul.f32 %v2442, 1.442695
  %v2533 = vpow.pop %v2532
  %v2534 = vmul.f32 %v2443, 1.442695
  %v2535 = vpow.pop %v2534
  %v2536 = vmul.f32 %v2444, 1.442695
  %v2537 = vpow.pop %v2536
  %v2538 = vmul.f32 %v2445, 1.442695
  %v2539 = vpow.pop %v2538
  %v2540 = vmul.f32 %v2446, 1.442695
  %v2541 = vpow.pop %v2540
  %v2542 = vmul.f32 %v2447, 1.442695
  %v2543 = vpow.pop %v2542
  %v2544 = vmul.f32 %v2448, 1.442695
  %v2545 = vpow.pop %v2544
  %v2546 = vmul.f32 %v2449, 1.442695
  %v2547 = vpow.pop %v2546
  %v2548 = vmul.f32 %v2450, 1.442695
  %v2549 = vpow.pop %v2548
  %v2550 = vmul.f32 %v2451, 1.442695
  %v2551 = vpow.pop %v2550
  %v2552 = vmul.f32 %v2452, 1.442695
  %v2553 = vpow.pop %v2552
  %v2554 = vmul.f32 %v2453, 1.442695
  %v2555 = vpow.pop %v2554
  %v2556 = vmul.f32 %v2454, 1.442695
  %v2557 = vpow.pop %v2556
  %v2558 = vmul.f32 %v2455, 1.442695
  %v2559 = vpow.pop %v2558
  %v2560 = vmul.f32 %v2456, 1.442695
  %v2561 = vpow.pop %v2560
  %v2562 = vmul.f32 %v2457, 1.442695
  %v2563 = vpow.pop %v2562
  %v2564 = vmul.f32 %v2458, 1.442695
  %v2565 = vpow.pop %v2564
  %v2566 = vmul.f32 %v2459, 1.442695
  %v2567 = vpow.pop %v2566
  %v2568 = vmul.f32 %v2460, 1.442695
  %v2569 = vpow.pop %v2568
  %v2570 = vmul.f32 %v2461, 1.442695
  %v2571 = vpow.pop %v2570
  %v2572 = vmul.f32 %v2462, 1.442695
  %v2573 = vpow.pop %v2572
  %v2574 = vmul.f32 %v2463, 1.442695
  %v2575 = vpow.pop %v2574
  %v2576 = vmul.f32 %v2464, 1.442695
  %v2577 = vpow.pop %v2576
  %v2578 = vmul.f32 %v2465, 1.442695
  %v2579 = vpow.pop %v2578
  %v2580 = vmul.f32 %v2466, 1.442695
  %v2581 = vpow.pop %v2580
  %v2582 = vmul.f32 %v2467, 1.442695
  %v2583 = vpow.pop %v2582
  %v2584 = vmul.f32 %v2468, 1.442695
  %v2585 = vpow.pop %v2584
  %v2586 = vmul.f32 %v2469, 1.442695
  %v2587 = vpow.pop %v2586
  %v2588 = vmul.f32 %v2470, 1.442695
  %v2589 = vpow.pop %v2588
  %v2590 = vmul.f32 %v2471, 1.442695
  %v2591 = vpow.pop %v2590
  %v2592 = vmul.f32 %v2472, 1.442695
  %v2593 = vpow.pop %v2592
  %v2594 = vmul.f32 %v2473, 1.442695
  %v2595 = vpow.pop %v2594
  %v2596 = vmul.f32 %v2474, 1.442695
  %v2597 = vpow.pop %v2596
  %v2598 = vmul.f32 %v2475, 1.442695
  %v2599 = vpow.pop %v2598
  %v2600 = vmul.f32 %v2476, 1.442695
  %v2601 = vpow.pop %v2600
  %v2602 = vmul.f32 %v2477, 1.442695
  %v2603 = vpow.pop %v2602
  %v2604 = vmul.f32 %v2478, 1.442695
  %v2605 = vpow.pop %v2604
  %v2606 = vmul.f32 %v2479, 1.442695
  %v2607 = vpow.pop %v2606
  %v2608 = vadd.f32 %v2481, 1.0
  %v2609 = vadd.f32 %v2483, 1.0
  %v2610 = vadd.f32 %v2485, 1.0
  %v2611 = vadd.f32 %v2487, 1.0
  %v2612 = vadd.f32 %v2489, 1.0
  %v2613 = vadd.f32 %v2491, 1.0
  %v2614 = vadd.f32 %v2493, 1.0
  %v2615 = vadd.f32 %v2495, 1.0
  %v2616 = vadd.f32 %v2497, 1.0
  %v2617 = vadd.f32 %v2499, 1.0
  %v2618 = vadd.f32 %v2501, 1.0
  %v2619 = vadd.f32 %v2503, 1.0
  %v2620 = vadd.f32 %v2505, 1.0
  %v2621 = vadd.f32 %v2507, 1.0
  %v2622 = vadd.f32 %v2509, 1.0
  %v2623 = vadd.f32 %v2511, 1.0
  %v2624 = vadd.f32 %v2513, 1.0
  %v2625 = vadd.f32 %v2515, 1.0
  %v2626 = vadd.f32 %v2517, 1.0
  %v2627 = vadd.f32 %v2519, 1.0
  %v2628 = vadd.f32 %v2521, 1.0
  %v2629 = vadd.f32 %v2523, 1.0
  %v2630 = vadd.f32 %v2525, 1.0
  %v2631 = vadd.f32 %v2527, 1.0
  %v2632 = vadd.f32 %v2529, 1.0
  %v2633 = vadd.f32 %v2531, 1.0
  %v2634 = vadd.f32 %v2533, 1.0
  %v2635 = vadd.f32 %v2535, 1.0
  %v2636 = vadd.f32 %v2537, 1.0
  %v2637 = vadd.f32 %v2539, 1.0
  %v2638 = vadd.f32 %v2541, 1.0
  %v2639 = vadd.f32 %v2543, 1.0
  %v2640 = vadd.f32 %v2545, 1.0
  %v2641 = vadd.f32 %v2547, 1.0
  %v2642 = vadd.f32 %v2549, 1.0
  %v2643 = vadd.f32 %v2551, 1.0
  %v2644 = vadd.f32 %v2553, 1.0
  %v2645 = vadd.f32 %v2555, 1.0
  %v2646 = vadd.f32 %v2557, 1.0
  %v2647 = vadd.f32 %v2559, 1.0
  %v2648 = vadd.f32 %v2561, 1.0
  %v2649 = vadd.f32 %v2563, 1.0
  %v2650 = vadd.f32 %v2565, 1.0
  %v2651 = vadd.f32 %v2567, 1.0
  %v2652 = vadd.f32 %v2569, 1.0
  %v2653 = vadd.f32 %v2571, 1.0
  %v2654 = vadd.f32 %v2573, 1.0
  %v2655 = vadd.f32 %v2575, 1.0
  %v2656 = vadd.f32 %v2577, 1.0
  %v2657 = vadd.f32 %v2579, 1.0
  %v2658 = vadd.f32 %v2581, 1.0
  %v2659 = vadd.f32 %v2583, 1.0
  %v2660 = vadd.f32 %v2585, 1.0
  %v2661 = vadd.f32 %v2587, 1.0
  %v2662 = vadd.f32 %v2589, 1.0
  %v2663 = vadd.f32 %v2591, 1.0
  %v2664 = vadd.f32 %v2593, 1.0
  %v2665 = vadd.f32 %v2595, 1.0
  %v2666 = vadd.f32 %v2597, 1.0
  %v2667 = vadd.f32 %v2599, 1.0
  %v2668 = vadd.f32 %v2601, 1.0
  %v2669 = vadd.f32 %v2603, 1.0
  %v2670 = vadd.f32 %v2605, 1.0
  %v2671 = vadd.f32 %v2607, 1.0
  %v2672 = vrcp.pop %v2608
  %v2673 = vmul.f32 1.0, %v2672
  %v2674 = vrcp.pop %v2609
  %v2675 = vmul.f32 1.0, %v2674
  %v2676 = vrcp.pop %v2610
  %v2677 = vmul.f32 1.0, %v2676
  %v2678 = vrcp.pop %v2611
  %v2679 = vmul.f32 1.0, %v2678
  %v2680 = vrcp.pop %v2612
  %v2681 = vmul.f32 1.0, %v2680
  %v2682 = vrcp.pop %v2613
  %v2683 = vmul.f32 1.0, %v2682
  %v2684 = vrcp.pop %v2614
  %v2685 = vmul.f32 1.0, %v2684
  %v2686 = vrcp.pop %v2615
  %v2687 = vmul.f32 1.0, %v2686
  %v2688 = vrcp.pop %v2616
  %v2689 = vmul.f32 1.0, %v2688
  %v2690 = vrcp.pop %v2617
  %v2691 = vmul.f32 1.0, %v2690
  %v2692 = vrcp.pop %v2618
  %v2693 = vmul.f32 1.0, %v2692
  %v2694 = vrcp.pop %v2619
  %v2695 = vmul.f32 1.0, %v2694
  %v2696 = vrcp.pop %v2620
  %v2697 = vmul.f32 1.0, %v2696
  %v2698 = vrcp.pop %v2621
  %v2699 = vmul.f32 1.0, %v2698
  %v2700 = vrcp.pop %v2622
  %v2701 = vmul.f32 1.0, %v2700
  %v2702 = vrcp.pop %v2623
  %v2703 = vmul.f32 1.0, %v2702
  %v2704 = vrcp.pop %v2624
  %v2705 = vmul.f32 1.0, %v2704
  %v2706 = vrcp.pop %v2625
  %v2707 = vmul.f32 1.0, %v2706
  %v2708 = vrcp.pop %v2626
  %v2709 = vmul.f32 1.0, %v2708
  %v2710 = vrcp.pop %v2627
  %v2711 = vmul.f32 1.0, %v2710
  %v2712 = vrcp.pop %v2628
  %v2713 = vmul.f32 1.0, %v2712
  %v2714 = vrcp.pop %v2629
  %v2715 = vmul.f32 1.0, %v2714
  %v2716 = vrcp.pop %v2630
  %v2717 = vmul.f32 1.0, %v2716
  %v2718 = vrcp.pop %v2631
  %v2719 = vmul.f32 1.0, %v2718
  %v2720 = vrcp.pop %v2632
  %v2721 = vmul.f32 1.0, %v2720
  %v2722 = vrcp.pop %v2633
  %v2723 = vmul.f32 1.0, %v2722
  %v2724 = vrcp.pop %v2634
  %v2725 = vmul.f32 1.0, %v2724
  %v2726 = vrcp.pop %v2635
  %v2727 = vmul.f32 1.0, %v2726
  %v2728 = vrcp.pop %v2636
  %v2729 = vmul.f32 1.0, %v2728
  %v2730 = vrcp.pop %v2637
  %v2731 = vmul.f32 1.0, %v2730
  %v2732 = vrcp.pop %v2638
  %v2733 = vmul.f32 1.0, %v2732
  %v2734 = vrcp.pop %v2639
  %v2735 = vmul.f32 1.0, %v2734
  %v2736 = vrcp.pop %v2640
  %v2737 = vmul.f32 1.0, %v2736
  %v2738 = vrcp.pop %v2641
  %v2739 = vmul.f32 1.0, %v2738
  %v2740 = vrcp.pop %v2642
  %v2741 = vmul.f32 1.0, %v2740
  %v2742 = vrcp.pop %v2643
  %v2743 = vmul.f32 1.0, %v2742
  %v2744 = vrcp.pop %v2644
  %v2745 = vmul.f32 1.0, %v2744
  %v2746 = vrcp.pop %v2645
  %v2747 = vmul.f32 1.0, %v2746
  %v2748 = vrcp.pop %v2646
  %v2749 = vmul.f32 1.0, %v2748
  %v2750 = vrcp.pop %v2647
  %v2751 = vmul.f32 1.0, %v2750
  %v2752 = vrcp.pop %v2648
  %v2753 = vmul.f32 1.0, %v2752
  %v2754 = vrcp.pop %v2649
  %v2755 = vmul.f32 1.0, %v2754
  %v2756 = vrcp.pop %v2650
  %v2757 = vmul.f32 1.0, %v2756
  %v2758 = vrcp.pop %v2651
  %v2759 = vmul.f32 1.0, %v2758
  %v2760 = vrcp.pop %v2652
  %v2761 = vmul.f32 1.0, %v2760
  %v2762 = vrcp.pop %v2653
  %v2763 = vmul.f32 1.0, %v2762
  %v2764 = vrcp.pop %v2654
  %v2765 = vmul.f32 1.0, %v2764
  %v2766 = vrcp.pop %v2655
  %v2767 = vmul.f32 1.0, %v2766
  %v2768 = vrcp.pop %v2656
  %v2769 = vmul.f32 1.0, %v2768
  %v2770 = vrcp.pop %v2657
  %v2771 = vmul.f32 1.0, %v2770
  %v2772 = vrcp.pop %v2658
  %v2773 = vmul.f32 1.0, %v2772
  %v2774 = vrcp.pop %v2659
  %v2775 = vmul.f32 1.0, %v2774
  %v2776 = vrcp.pop %v2660
  %v2777 = vmul.f32 1.0, %v2776
  %v2778 = vrcp.pop %v2661
  %v2779 = vmul.f32 1.0, %v2778
  %v2780 = vrcp.pop %v2662
  %v2781 = vmul.f32 1.0, %v2780
  %v2782 = vrcp.pop %v2663
  %v2783 = vmul.f32 1.0, %v2782
  %v2784 = vrcp.pop %v2664
  %v2785 = vmul.f32 1.0, %v2784
  %v2786 = vrcp.pop %v2665
  %v2787 = vmul.f32 1.0, %v2786
  %v2788 = vrcp.pop %v2666
  %v2789 = vmul.f32 1.0, %v2788
  %v2790 = vrcp.pop %v2667
  %v2791 = vmul.f32 1.0, %v2790
  %v2792 = vrcp.pop %v2668
  %v2793 = vmul.f32 1.0, %v2792
  %v2794 = vrcp.pop %v2669
  %v2795 = vmul.f32 1.0, %v2794
  %v2796 = vrcp.pop %v2670
  %v2797 = vmul.f32 1.0, %v2796
  %v2798 = vrcp.pop %v2671
  %v2799 = vmul.f32 1.0, %v2798
  %v2800 = vld [vmem:[%s3] sm:$0xff]
  %v2801 = vld [vmem:[%s3 + $0x8] sm:$0xff]
  %v2802 = vld [vmem:[%s3 + $0x10] sm:$0xff]
  %v2803 = vld [vmem:[%s3 + $0x18] sm:$0xff]
  %v2804 = vld [vmem:[%s3 + $0x20] sm:$0xff]
  %v2805 = vld [vmem:[%s3 + $0x28] sm:$0xff]
  %v2806 = vld [vmem:[%s3 + $0x30] sm:$0xff]
  %v2807 = vld [vmem:[%s3 + $0x38] sm:$0xff]
  %v2808 = vld [vmem:[%s3 + $0x40] sm:$0xff]
  %v2809 = vld [vmem:[%s3 + $0x48] sm:$0xff]
  %v2810 = vld [vmem:[%s3 + $0x50] sm:$0xff]
  %v2811 = vld [vmem:[%s3 + $0x58] sm:$0xff]
  %v2812 = vld [vmem:[%s3 + $0x60] sm:$0xff]
  %v2813 = vld [vmem:[%s3 + $0x68] sm:$0xff]
  %v2814 = vld [vmem:[%s3 + $0x70] sm:$0xff]
  %v2815 = vld [vmem:[%s3 + $0x78] sm:$0xff]
  %v2816 = vld [vmem:[%s3 + $0x80] sm:$0xff]
  %v2817 = vld [vmem:[%s3 + $0x88] sm:$0xff]
  %v2818 = vld [vmem:[%s3 + $0x90] sm:$0xff]
  %v2819 = vld [vmem:[%s3 + $0x98] sm:$0xff]
  %v2820 = vld [vmem:[%s3 + $0xa0] sm:$0xff]
  %vm2821 = vcmask 326656
  %v2823 = vsel %vm2821, %v2675, 0
  %v2826 = vsel %vm2821, %v2679, 0
  %v2829 = vsel %vm2821, %v2683, 0
  %v2832 = vsel %vm2821, %v2687, 0
  %v2835 = vsel %vm2821, %v2691, 0
  %v2838 = vsel %vm2821, %v2695, 0
  %v2841 = vsel %vm2821, %v2699, 0
  %v2844 = vsel %vm2821, %v2703, 0
  %v2847 = vsel %vm2821, %v2707, 0
  %v2850 = vsel %vm2821, %v2711, 0
  %v2853 = vsel %vm2821, %v2715, 0
  %v2856 = vsel %vm2821, %v2719, 0
  %v2859 = vsel %vm2821, %v2723, 0
  %v2862 = vsel %vm2821, %v2727, 0
  %v2865 = vsel %vm2821, %v2731, 0
  %v2868 = vsel %vm2821, %v2735, 0
  %v2871 = vsel %vm2821, %v2739, 0
  %v2874 = vsel %vm2821, %v2743, 0
  %v2877 = vsel %vm2821, %v2747, 0
  %v2880 = vsel %vm2821, %v2751, 0
  %v2883 = vsel %vm2821, %v2755, 0
  %v2886 = vsel %vm2821, %v2759, 0
  %v2889 = vsel %vm2821, %v2763, 0
  %v2892 = vsel %vm2821, %v2767, 0
  %v2895 = vsel %vm2821, %v2771, 0
  %v2898 = vsel %vm2821, %v2775, 0
  %v2901 = vsel %vm2821, %v2779, 0
  %v2904 = vsel %vm2821, %v2783, 0
  %v2907 = vsel %vm2821, %v2787, 0
  %v2910 = vsel %vm2821, %v2791, 0
  %v2913 = vsel %vm2821, %v2795, 0
  %v2916 = vsel %vm2821, %v2799, 0
  %2918 = vmatprep.subr.mxu0 0.0
  %2919 = vmatpush1.msra.mxu0 %v2800
  %2920 = vmatprep.subr.mxu0 0.0
  %2921 = vmatpush1.msra.mxu0 %v2801
  %2922 = vmatprep.subr.mxu0 0.0
  %2923 = vmatpush1.msra.mxu0 %v2802
  %2924 = vmatprep.subr.mxu0 0.0
  %2925 = vmatpush1.msra.mxu0 %v2803
  %2926 = vmatprep.subr.mxu0 0.0
  %2927 = vmatpush1.msra.mxu0 %v2804
  %2928 = vmatprep.subr.mxu0 0.0
  %2929 = vmatpush1.msra.mxu0 %v2805
  %2930 = vmatprep.subr.mxu0 0.0
  %2931 = vmatpush1.msra.mxu0 %v2806
  %2932 = vmatprep.subr.mxu0 0.0
  %2933 = vmatpush1.msra.mxu0 %v2807
  %2934 = vmatprep.subr.mxu0 0.0
  %2935 = vmatpush1.msra.mxu0 %v2808
  %2936 = vmatprep.subr.mxu0 0.0
  %2937 = vmatpush1.msra.mxu0 %v2809
  %2938 = vmatprep.subr.mxu0 0.0
  %2939 = vmatpush1.msra.mxu0 %v2810
  %2940 = vmatprep.subr.mxu0 0.0
  %2941 = vmatpush1.msra.mxu0 %v2811
  %2942 = vmatprep.subr.mxu0 0.0
  %2943 = vmatpush1.msra.mxu0 %v2812
  %2944 = vmatprep.subr.mxu0 0.0
  %2945 = vmatpush1.msra.mxu0 %v2813
  %2946 = vmatprep.subr.mxu0 0.0
  %2947 = vmatpush1.msra.mxu0 %v2814
  %2948 = vmatprep.subr.mxu0 0.0
  %2949 = vmatpush1.msra.mxu0 %v2815
  %2950 = vmatprep.subr.mxu0 0.0
  %2951 = vmatpush1.msra.mxu0 %v2816
  %2952 = vmatprep.subr.mxu0 0.0
  %2953 = vmatpush1.msra.mxu0 %v2817
  %2954 = vmatprep.subr.mxu0 0.0
  %2955 = vmatpush1.msra.mxu0 %v2818
  %2956 = vmatprep.subr.mxu0 0.0
  %2957 = vmatpush1.msra.mxu0 %v2819
  %2958 = vmatprep.subr.mxu0 0.0
  %2959 = vmatpush1.msra.mxu0 %v2820
  %2960 = vmatprep.subr.mxu0 0.0
  %2961 = vmatpush1.msra.mxu0 0.0
  %2962 = vmatprep.subr.mxu0 0.0
  %2963 = vmatpush1.msra.mxu0 0.0
  %2964 = vmatprep.subr.mxu0 0.0
  %2965 = vmatpush1.msra.mxu0 0.0
  %2966 = vmatprep.subr.mxu0 0.0
  %2967 = vmatpush1.msra.mxu0 0.0
  %2968 = vmatprep.subr.mxu0 0.0
  %2969 = vmatpush1.msra.mxu0 0.0
  %2970 = vmatprep.subr.mxu0 0.0
  %2971 = vmatpush1.msra.mxu0 0.0
  %2972 = vmatprep.subr.mxu0 0.0
  %2973 = vmatpush1.msra.mxu0 0.0
  %2974 = vmatprep.subr.mxu0 0.0
  %2975 = vmatpush1.msra.mxu0 0.0
  %2976 = vmatprep.subr.mxu0 0.0
  %2977 = vmatpush1.msra.mxu0 0.0
  %2978 = vmatprep.subr.mxu0 0.0
  %2979 = vmatpush1.msra.mxu0 0.0
  %2980 = vmatprep.subr.mxu0 0.0
  %2981 = vmatpush1.msra.mxu0 0.0
  %2982 = vmatprep.mubr.f32.mxu0 %v2823
  %2983 = vmatmul.mubr.f32.gmra.mrb[0].mxu0 %v2673
  %v2984 = vpop.f32.mrb[0].mxu0
  %v2985 = vadd.f32 0.0, %v2984
  %v2986 = vpop.f32.mrb[0].mxu0
  %2987 = vmatprep.mubr.f32.mxu0 %v2826
  %2988 = vmatmul.mubr.f32.gmra.mrb[0].mxu0 %v2677
  %v2989 = vpop.f32.mrb[0].mxu0
  %v2990 = vadd.f32 0.0, %v2989
  %v2991 = vpop.f32.mrb[0].mxu0
  %2992 = vmatprep.mubr.f32.mxu0 %v2829
  %2993 = vmatmul.mubr.f32.gmra.mrb[0].mxu0 %v2681
  %v2994 = vpop.f32.mrb[0].mxu0
  %v2995 = vadd.f32 0.0, %v2994
  %v2996 = vpop.f32.mrb[0].mxu0
  %2997 = vmatprep.mubr.f32.mxu0 %v2832
  %2998 = vmatmul.mubr.f32.gmra.mrb[0].mxu0 %v2685
  %v2999 = vpop.f32.mrb[0].mxu0
  %v3000 = vadd.f32 0.0, %v2999
  %v3001 = vpop.f32.mrb[0].mxu0
  %3002 = vmatprep.mubr.f32.mxu0 %v2835
  %3003 = vmatmul.mubr.f32.gmra.mrb[0].mxu0 %v2689
  %v3004 = vpop.f32.mrb[0].mxu0
  %v3005 = vadd.f32 0.0, %v3004
  %v3006 = vpop.f32.mrb[0].mxu0
  %3007 = vmatprep.mubr.f32.mxu0 %v2838
  %3008 = vmatmul.mubr.f32.gmra.mrb[0].mxu0 %v2693
  %v3009 = vpop.f32.mrb[0].mxu0
  %v3010 = vadd.f32 0.0, %v3009
  %v3011 = vpop.f32.mrb[0].mxu0
  %3012 = vmatprep.mubr.f32.mxu0 %v2841
  %3013 = vmatmul.mubr.f32.gmra.mrb[0].mxu0 %v2697
  %v3014 = vpop.f32.mrb[0].mxu0
  %v3015 = vadd.f32 0.0, %v3014
  %v3016 = vpop.f32.mrb[0].mxu0
  %3017 = vmatprep.mubr.f32.mxu0 %v2844
  %3018 = vmatmul.mubr.f32.gmra.mrb[0].mxu0 %v2701
  %v3019 = vpop.f32.mrb[0].mxu0
  %v3020 = vadd.f32 0.0, %v3019
  %v3021 = vpop.f32.mrb[0].mxu0
  %3022 = vmatprep.mubr.f32.mxu0 %v2847
  %3023 = vmatmul.mubr.f32.gmra.mrb[0].mxu0 %v2705
  %v3024 = vpop.f32.mrb[0].mxu0
  %v3025 = vadd.f32 0.0, %v3024
  %v3026 = vpop.f32.mrb[0].mxu0
  %3027 = vmatprep.mubr.f32.mxu0 %v2850
  %3028 = vmatmul.mubr.f32.gmra.mrb[0].mxu0 %v2709
  %v3029 = vpop.f32.mrb[0].mxu0
  %v3030 = vadd.f32 0.0, %v3029
  %v3031 = vpop.f32.mrb[0].mxu0
  %3032 = vmatprep.mubr.f32.mxu0 %v2853
  %3033 = vmatmul.mubr.f32.gmra.mrb[0].mxu0 %v2713
  %v3034 = vpop.f32.mrb[0].mxu0
  %v3035 = vadd.f32 0.0, %v3034
  %v3036 = vpop.f32.mrb[0].mxu0
  %3037 = vmatprep.mubr.f32.mxu0 %v2856
  %3038 = vmatmul.mubr.f32.gmra.mrb[0].mxu0 %v2717
  %v3039 = vpop.f32.mrb[0].mxu0
  %v3040 = vadd.f32 0.0, %v3039
  %v3041 = vpop.f32.mrb[0].mxu0
  %3042 = vmatprep.mubr.f32.mxu0 %v2859
  %3043 = vmatmul.mubr.f32.gmra.mrb[0].mxu0 %v2721
  %v3044 = vpop.f32.mrb[0].mxu0
  %v3045 = vadd.f32 0.0, %v3044
  %v3046 = vpop.f32.mrb[0].mxu0
  %3047 = vmatprep.mubr.f32.mxu0 %v2862
  %3048 = vmatmul.mubr.f32.gmra.mrb[0].mxu0 %v2725
  %v3049 = vpop.f32.mrb[0].mxu0
  %v3050 = vadd.f32 0.0, %v3049
  %v3051 = vpop.f32.mrb[0].mxu0
  %3052 = vmatprep.mubr.f32.mxu0 %v2865
  %3053 = vmatmul.mubr.f32.gmra.mrb[0].mxu0 %v2729
  %v3054 = vpop.f32.mrb[0].mxu0
  %v3055 = vadd.f32 0.0, %v3054
  %v3056 = vpop.f32.mrb[0].mxu0
  %3057 = vmatprep.mubr.f32.mxu0 %v2868
  %3058 = vmatmul.mubr.f32.gmra.mrb[0].mxu0 %v2733
  %v3059 = vpop.f32.mrb[0].mxu0
  %v3060 = vadd.f32 0.0, %v3059
  %v3061 = vpop.f32.mrb[0].mxu0
  %3062 = vmatprep.mubr.f32.mxu0 %v2871
  %3063 = vmatmul.mubr.f32.gmra.mrb[0].mxu0 %v2737
  %v3064 = vpop.f32.mrb[0].mxu0
  %v3065 = vadd.f32 0.0, %v3064
  %v3066 = vpop.f32.mrb[0].mxu0
  %3067 = vmatprep.mubr.f32.mxu0 %v2874
  %3068 = vmatmul.mubr.f32.gmra.mrb[0].mxu0 %v2741
  %v3069 = vpop.f32.mrb[0].mxu0
  %v3070 = vadd.f32 0.0, %v3069
  %v3071 = vpop.f32.mrb[0].mxu0
  %3072 = vmatprep.mubr.f32.mxu0 %v2877
  %3073 = vmatmul.mubr.f32.gmra.mrb[0].mxu0 %v2745
  %v3074 = vpop.f32.mrb[0].mxu0
  %v3075 = vadd.f32 0.0, %v3074
  %v3076 = vpop.f32.mrb[0].mxu0
  %3077 = vmatprep.mubr.f32.mxu0 %v2880
  %3078 = vmatmul.mubr.f32.gmra.mrb[0].mxu0 %v2749
  %v3079 = vpop.f32.mrb[0].mxu0
  %v3080 = vadd.f32 0.0, %v3079
  %v3081 = vpop.f32.mrb[0].mxu0
  %3082 = vmatprep.mubr.f32.mxu0 %v2883
  %3083 = vmatmul.mubr.f32.gmra.mrb[0].mxu0 %v2753
  %v3084 = vpop.f32.mrb[0].mxu0
  %v3085 = vadd.f32 0.0, %v3084
  %v3086 = vpop.f32.mrb[0].mxu0
  %3087 = vmatprep.mubr.f32.mxu0 %v2886
  %3088 = vmatmul.mubr.f32.gmra.mrb[0].mxu0 %v2757
  %v3089 = vpop.f32.mrb[0].mxu0
  %v3090 = vadd.f32 0.0, %v3089
  %v3091 = vpop.f32.mrb[0].mxu0
  %3092 = vmatprep.mubr.f32.mxu0 %v2889
  %3093 = vmatmul.mubr.f32.gmra.mrb[0].mxu0 %v2761
  %v3094 = vpop.f32.mrb[0].mxu0
  %v3095 = vadd.f32 0.0, %v3094
  %v3096 = vpop.f32.mrb[0].mxu0
  %3097 = vmatprep.mubr.f32.mxu0 %v2892
  %3098 = vmatmul.mubr.f32.gmra.mrb[0].mxu0 %v2765
  %v3099 = vpop.f32.mrb[0].mxu0
  %v3100 = vadd.f32 0.0, %v3099
  %v3101 = vpop.f32.mrb[0].mxu0
  %3102 = vmatprep.mubr.f32.mxu0 %v2895
  %3103 = vmatmul.mubr.f32.gmra.mrb[0].mxu0 %v2769
  %v3104 = vpop.f32.mrb[0].mxu0
  %v3105 = vadd.f32 0.0, %v3104
  %v3106 = vpop.f32.mrb[0].mxu0
  %3107 = vmatprep.mubr.f32.mxu0 %v2898
  %3108 = vmatmul.mubr.f32.gmra.mrb[0].mxu0 %v2773
  %v3109 = vpop.f32.mrb[0].mxu0
  %v3110 = vadd.f32 0.0, %v3109
  %v3111 = vpop.f32.mrb[0].mxu0
  %3112 = vmatprep.mubr.f32.mxu0 %v2901
  %3113 = vmatmul.mubr.f32.gmra.mrb[0].mxu0 %v2777
  %v3114 = vpop.f32.mrb[0].mxu0
  %v3115 = vadd.f32 0.0, %v3114
  %v3116 = vpop.f32.mrb[0].mxu0
  %3117 = vmatprep.mubr.f32.mxu0 %v2904
  %3118 = vmatmul.mubr.f32.gmra.mrb[0].mxu0 %v2781
  %v3119 = vpop.f32.mrb[0].mxu0
  %v3120 = vadd.f32 0.0, %v3119
  %v3121 = vpop.f32.mrb[0].mxu0
  %3122 = vmatprep.mubr.f32.mxu0 %v2907
  %3123 = vmatmul.mubr.f32.gmra.mrb[0].mxu0 %v2785
  %v3124 = vpop.f32.mrb[0].mxu0
  %v3125 = vadd.f32 0.0, %v3124
  %v3126 = vpop.f32.mrb[0].mxu0
  %3127 = vmatprep.mubr.f32.mxu0 %v2910
  %3128 = vmatmul.mubr.f32.gmra.mrb[0].mxu0 %v2789
  %v3129 = vpop.f32.mrb[0].mxu0
  %v3130 = vadd.f32 0.0, %v3129
  %v3131 = vpop.f32.mrb[0].mxu0
  %3132 = vmatprep.mubr.f32.mxu0 %v2913
  %3133 = vmatmul.mubr.f32.gmra.mrb[0].mxu0 %v2793
  %v3134 = vpop.f32.mrb[0].mxu0
  %v3135 = vadd.f32 0.0, %v3134
  %v3136 = vpop.f32.mrb[0].mxu0
  %3137 = vmatprep.mubr.f32.mxu0 %v2916
  %3138 = vmatmul.mubr.f32.gmra.mrb[0].mxu0 %v2797
  %v3139 = vpop.f32.mrb[0].mxu0
  %v3140 = vadd.f32 0.0, %v3139
  %v3141 = vpop.f32.mrb[0].mxu0
  %3142 = vdwg.mxu0
  %vm3143 = vcmask 687104
  %3144 = vst.msk [vmem:[#allocation2] sm:$0xff] %vm3143, %v2985
  %3145 = vst.msk [vmem:[#allocation2 + $0x8] sm:$0xff] %vm3143, %v2990
  %3146 = vst.msk [vmem:[#allocation2 + $0x10] sm:$0xff] %vm3143, %v2995
  %3147 = vst.msk [vmem:[#allocation2 + $0x18] sm:$0xff] %vm3143, %v3000
  %3148 = vst.msk [vmem:[#allocation2 + $0x20] sm:$0xff] %vm3143, %v3005
  %3149 = vst.msk [vmem:[#allocation2 + $0x28] sm:$0xff] %vm3143, %v3010
  %3150 = vst.msk [vmem:[#allocation2 + $0x30] sm:$0xff] %vm3143, %v3015
  %3151 = vst.msk [vmem:[#allocation2 + $0x38] sm:$0xff] %vm3143, %v3020
  %3152 = vst.msk [vmem:[#allocation2 + $0x40] sm:$0xff] %vm3143, %v3025
  %3153 = vst.msk [vmem:[#allocation2 + $0x48] sm:$0xff] %vm3143, %v3030
  %3154 = vst.msk [vmem:[#allocation2 + $0x50] sm:$0xff] %vm3143, %v3035
  %3155 = vst.msk [vmem:[#allocation2 + $0x58] sm:$0xff] %vm3143, %v3040
  %3156 = vst.msk [vmem:[#allocation2 + $0x60] sm:$0xff] %vm3143, %v3045
  %3157 = vst.msk [vmem:[#allocation2 + $0x68] sm:$0xff] %vm3143, %v3050
  %3158 = vst.msk [vmem:[#allocation2 + $0x70] sm:$0xff] %vm3143, %v3055
  %3159 = vst.msk [vmem:[#allocation2 + $0x78] sm:$0xff] %vm3143, %v3060
  %3160 = vst.msk [vmem:[#allocation2 + $0x80] sm:$0xff] %vm3143, %v3065
  %3161 = vst.msk [vmem:[#allocation2 + $0x88] sm:$0xff] %vm3143, %v3070
  %3162 = vst.msk [vmem:[#allocation2 + $0x90] sm:$0xff] %vm3143, %v3075
  %3163 = vst.msk [vmem:[#allocation2 + $0x98] sm:$0xff] %vm3143, %v3080
  %3164 = vst.msk [vmem:[#allocation2 + $0xa0] sm:$0xff] %vm3143, %v3085
  %3165 = vst.msk [vmem:[#allocation2 + $0xa8] sm:$0xff] %vm3143, %v3090
  %3166 = vst.msk [vmem:[#allocation2 + $0xb0] sm:$0xff] %vm3143, %v3095
  %3167 = vst.msk [vmem:[#allocation2 + $0xb8] sm:$0xff] %vm3143, %v3100
  %3168 = vst.msk [vmem:[#allocation2 + $0xc0] sm:$0xff] %vm3143, %v3105
  %3169 = vst.msk [vmem:[#allocation2 + $0xc8] sm:$0xff] %vm3143, %v3110
  %3170 = vst.msk [vmem:[#allocation2 + $0xd0] sm:$0xff] %vm3143, %v3115
  %3171 = vst.msk [vmem:[#allocation2 + $0xd8] sm:$0xff] %vm3143, %v3120
  %3172 = vst.msk [vmem:[#allocation2 + $0xe0] sm:$0xff] %vm3143, %v3125
  %3173 = vst.msk [vmem:[#allocation2 + $0xe8] sm:$0xff] %vm3143, %v3130
  %3174 = vst.msk [vmem:[#allocation2 + $0xf0] sm:$0xff] %vm3143, %v3135
  %3175 = vst.msk [vmem:[#allocation2 + $0xf8] sm:$0xff] %vm3143, %v3140
  %v3176 = vld [vmem:[#allocation2] ss:$2 sm:$0xff]
  %s3177 = scalar_lea.vmem [#allocation2], 16
  %v3178 = vld [vmem:[%s3177] ss:$2 sm:$0xff]
  %s3179 = scalar_lea.vmem [#allocation2], 32
  %v3180 = vld [vmem:[%s3179] ss:$2 sm:$0xff]
  %s3181 = scalar_lea.vmem [#allocation2], 48
  %v3182 = vld [vmem:[%s3181] ss:$2 sm:$0xff]
  %s3183 = scalar_lea.vmem [#allocation2], 64
  %v3184 = vld [vmem:[%s3183] ss:$2 sm:$0xff]
  %s3185 = scalar_lea.vmem [#allocation2], 80
  %v3186 = vld [vmem:[%s3185] ss:$2 sm:$0xff]
  %s3187 = scalar_lea.vmem [#allocation2], 96
  %v3188 = vld [vmem:[%s3187] ss:$2 sm:$0xff]
  %s3189 = scalar_lea.vmem [#allocation2], 112
  %v3190 = vld [vmem:[%s3189] ss:$2 sm:$0xff]
  %s3191 = scalar_lea.vmem [#allocation2], 128
  %v3192 = vld [vmem:[%s3191] ss:$2 sm:$0xff]
  %s3193 = scalar_lea.vmem [#allocation2], 144
  %v3194 = vld [vmem:[%s3193] ss:$2 sm:$0xff]
  %s3195 = scalar_lea.vmem [#allocation2], 160
  %v3196 = vld [vmem:[%s3195] ss:$2 sm:$0xff]
  %s3197 = scalar_lea.vmem [#allocation2], 176
  %v3198 = vld [vmem:[%s3197] ss:$2 sm:$0xff]
  %s3199 = scalar_lea.vmem [#allocation2], 192
  %v3200 = vld [vmem:[%s3199] ss:$2 sm:$0xff]
  %s3201 = scalar_lea.vmem [#allocation2], 208
  %v3202 = vld [vmem:[%s3201] ss:$2 sm:$0xff]
  %s3203 = scalar_lea.vmem [#allocation2], 224
  %v3204 = vld [vmem:[%s3203] ss:$2 sm:$0xff]
  %s3205 = scalar_lea.vmem [#allocation2], 240
  %v3206 = vld [vmem:[%s3205] ss:$2 sm:$0xff]
  %s3207 = scalar_lea.vmem [#allocation2], 1
  %v3208 = vld [vmem:[%s3207] ss:$2 sm:$0xff]
  %s3209 = scalar_lea.vmem [#allocation2], 17
  %v3210 = vld [vmem:[%s3209] ss:$2 sm:$0xff]
  %s3211 = scalar_lea.vmem [#allocation2], 33
  %v3212 = vld [vmem:[%s3211] ss:$2 sm:$0xff]
  %s3213 = scalar_lea.vmem [#allocation2], 49
  %v3214 = vld [vmem:[%s3213] ss:$2 sm:$0xff]
  %s3215 = scalar_lea.vmem [#allocation2], 65
  %v3216 = vld [vmem:[%s3215] ss:$2 sm:$0xff]
  %s3217 = scalar_lea.vmem [#allocation2], 81
  %v3218 = vld [vmem:[%s3217] ss:$2 sm:$0xff]
  %s3219 = scalar_lea.vmem [#allocation2], 97
  %v3220 = vld [vmem:[%s3219] ss:$2 sm:$0xff]
  %s3221 = scalar_lea.vmem [#allocation2], 113
  %v3222 = vld [vmem:[%s3221] ss:$2 sm:$0xff]
  %s3223 = scalar_lea.vmem [#allocation2], 129
  %v3224 = vld [vmem:[%s3223] ss:$2 sm:$0xff]
  %s3225 = scalar_lea.vmem [#allocation2], 145
  %v3226 = vld [vmem:[%s3225] ss:$2 sm:$0xff]
  %s3227 = scalar_lea.vmem [#allocation2], 161
  %v3228 = vld [vmem:[%s3227] ss:$2 sm:$0xff]
  %s3229 = scalar_lea.vmem [#allocation2], 177
  %v3230 = vld [vmem:[%s3229] ss:$2 sm:$0xff]
  %s3231 = scalar_lea.vmem [#allocation2], 193
  %v3232 = vld [vmem:[%s3231] ss:$2 sm:$0xff]
  %s3233 = scalar_lea.vmem [#allocation2], 209
  %v3234 = vld [vmem:[%s3233] ss:$2 sm:$0xff]
  %s3235 = scalar_lea.vmem [#allocation2], 225
  %v3236 = vld [vmem:[%s3235] ss:$2 sm:$0xff]
  %s3237 = scalar_lea.vmem [#allocation2], 241
  %v3238 = vld [vmem:[%s3237] ss:$2 sm:$0xff]
  %v3239 = vadd.f32 %v3176, %v3208
  %v3240 = vadd.f32 %v3178, %v3210
  %v3241 = vadd.f32 %v3180, %v3212
  %v3242 = vadd.f32 %v3182, %v3214
  %v3243 = vadd.f32 %v3184, %v3216
  %v3244 = vadd.f32 %v3186, %v3218
  %v3245 = vadd.f32 %v3188, %v3220
  %v3246 = vadd.f32 %v3190, %v3222
  %v3247 = vadd.f32 %v3192, %v3224
  %v3248 = vadd.f32 %v3194, %v3226
  %v3249 = vadd.f32 %v3196, %v3228
  %v3250 = vadd.f32 %v3198, %v3230
  %v3251 = vadd.f32 %v3200, %v3232
  %v3252 = vadd.f32 %v3202, %v3234
  %v3253 = vadd.f32 %v3204, %v3236
  %v3254 = vadd.f32 %v3206, %v3238
  %v3255 = vmul.f32 %v3239, 0.5
  %v3256 = vmul.f32 %v3240, 0.5
  %v3257 = vmul.f32 %v3241, 0.5
  %v3258 = vmul.f32 %v3242, 0.5
  %v3259 = vmul.f32 %v3243, 0.5
  %v3260 = vmul.f32 %v3244, 0.5
  %v3261 = vmul.f32 %v3245, 0.5
  %v3262 = vmul.f32 %v3246, 0.5
  %v3263 = vmul.f32 %v3247, 0.5
  %v3264 = vmul.f32 %v3248, 0.5
  %v3265 = vmul.f32 %v3249, 0.5
  %v3266 = vmul.f32 %v3250, 0.5
  %v3267 = vmul.f32 %v3251, 0.5
  %v3268 = vmul.f32 %v3252, 0.5
  %v3269 = vmul.f32 %v3253, 0.5
  %v3270 = vmul.f32 %v3254, 0.5
  %v3271 = vld [vmem:[%s4] sm:$0xff]
  %v3272 = vld [vmem:[%s4 + $0x8] sm:$0xff]
  %v3273 = vld [vmem:[%s4 + $0x10] sm:$0xff]
  %v3274 = vld [vmem:[%s4 + $0x18] sm:$0xff]
  %v3275 = vld [vmem:[%s4 + $0x20] sm:$0xff]
  %v3276 = vld [vmem:[%s4 + $0x28] sm:$0xff]
  %v3277 = vld [vmem:[%s4 + $0x30] sm:$0xff]
  %v3278 = vld [vmem:[%s4 + $0x38] sm:$0xff]
  %v3279 = vld [vmem:[%s4 + $0x40] sm:$0xff]
  %v3280 = vld [vmem:[%s4 + $0x48] sm:$0xff]
  %v3281 = vld [vmem:[%s4 + $0x50] sm:$0xff]
  %v3282 = vld [vmem:[%s4 + $0x58] sm:$0xff]
  %v3283 = vld [vmem:[%s4 + $0x60] sm:$0xff]
  %v3284 = vld [vmem:[%s4 + $0x68] sm:$0xff]
  %v3285 = vld [vmem:[%s4 + $0x70] sm:$0xff]
  %v3286 = vld [vmem:[%s4 + $0x78] sm:$0xff]
  %v3287 = vld [vmem:[%s4 + $0x80] sm:$0xff]
  %v3288 = vld [vmem:[%s4 + $0x88] sm:$0xff]
  %v3289 = vld [vmem:[%s4 + $0x90] sm:$0xff]
  %v3290 = vld [vmem:[%s4 + $0x98] sm:$0xff]
  %v3291 = vld [vmem:[%s4 + $0xa0] sm:$0xf]
  %v3292 = vld [vmem:[%s4 + $0xa8] sm:$0xf]
  %v3293 = vrot.slane %v3255, 1
  %v3294 = vrot.slane %v3256, 1
  %v3295 = vrot.slane %v3257, 1
  %v3296 = vrot.slane %v3258, 1
  %v3297 = vrot.slane %v3259, 1
  %v3298 = vrot.slane %v3260, 1
  %v3299 = vrot.slane %v3261, 1
  %v3300 = vrot.slane %v3262, 1
  %v3301 = vrot.slane %v3263, 1
  %v3302 = vrot.slane %v3264, 1
  %v3303 = vrot.slane %v3265, 1
  %v3304 = vrot.slane %v3266, 1
  %v3305 = vrot.slane %v3267, 1
  %v3306 = vrot.slane %v3268, 1
  %v3307 = vrot.slane %v3269, 1
  %v3308 = vrot.slane %v3270, 1
  %v3309 = vsel %vm118, %v3307, %v3308
  %v3310 = vsel %vm118, %v3306, %v3307
  %v3311 = vsel %vm118, %v3305, %v3306
  %v3312 = vsel %vm118, %v3304, %v3305
  %v3313 = vsel %vm118, %v3303, %v3304
  %v3314 = vsel %vm118, %v3302, %v3303
  %v3315 = vsel %vm118, %v3301, %v3302
  %v3316 = vsel %vm118, %v3300, %v3301
  %v3317 = vsel %vm118, %v3299, %v3300
  %v3318 = vsel %vm118, %v3298, %v3299
  %v3319 = vsel %vm118, %v3297, %v3298
  %v3320 = vsel %vm118, %v3296, %v3297
  %v3321 = vsel %vm118, %v3295, %v3296
  %v3322 = vsel %vm118, %v3294, %v3295
  %v3323 = vsel %vm118, %v3293, %v3294
  %v3324 = vsel %vm118, %v3308, %v3293
  %s3325 = scalar_lea.vmem %s4, 176
  %v3326 = vld [vmem:[%s3325] sm:$0xff]
  %v3327 = vld [vmem:[%s3325 + $0x8] sm:$0xff]
  %v3328 = vld [vmem:[%s3325 + $0x10] sm:$0xff]
  %v3329 = vld [vmem:[%s3325 + $0x18] sm:$0xff]
  %v3330 = vld [vmem:[%s3325 + $0x20] sm:$0xff]
  %v3331 = vld [vmem:[%s3325 + $0x28] sm:$0xff]
  %v3332 = vld [vmem:[%s3325 + $0x30] sm:$0xff]
  %v3333 = vld [vmem:[%s3325 + $0x38] sm:$0xff]
  %v3334 = vld [vmem:[%s3325 + $0x40] sm:$0xff]
  %v3335 = vld [vmem:[%s3325 + $0x48] sm:$0xff]
  %v3336 = vld [vmem:[%s3325 + $0x50] sm:$0xff]
  %v3337 = vld [vmem:[%s3325 + $0x58] sm:$0xff]
  %v3338 = vld [vmem:[%s3325 + $0x60] sm:$0xff]
  %v3339 = vld [vmem:[%s3325 + $0x68] sm:$0xff]
  %v3340 = vld [vmem:[%s3325 + $0x70] sm:$0xff]
  %v3341 = vld [vmem:[%s3325 + $0x78] sm:$0xff]
  %v3342 = vld [vmem:[%s3325 + $0x80] sm:$0xff]
  %v3343 = vld [vmem:[%s3325 + $0x88] sm:$0xff]
  %v3344 = vld [vmem:[%s3325 + $0x90] sm:$0xff]
  %v3345 = vld [vmem:[%s3325 + $0x98] sm:$0xff]
  %v3346 = vld [vmem:[%s3325 + $0xa0] sm:$0xf]
  %v3347 = vld [vmem:[%s3325 + $0xa8] sm:$0xf]
  %v3349 = vsel %vm3143, %v3323, 0
  %v3352 = vsel %vm3143, %v3322, 0
  %v3355 = vsel %vm3143, %v3321, 0
  %v3358 = vsel %vm3143, %v3320, 0
  %v3361 = vsel %vm3143, %v3319, 0
  %v3364 = vsel %vm3143, %v3318, 0
  %v3367 = vsel %vm3143, %v3317, 0
  %v3370 = vsel %vm3143, %v3316, 0
  %v3373 = vsel %vm3143, %v3315, 0
  %v3376 = vsel %vm3143, %v3314, 0
  %v3379 = vsel %vm3143, %v3313, 0
  %v3382 = vsel %vm3143, %v3312, 0
  %v3385 = vsel %vm3143, %v3311, 0
  %v3388 = vsel %vm3143, %v3310, 0
  %v3391 = vsel %vm3143, %v3309, 0
  %v3394 = vsel %vm3143, %v3324, 0
  %vm3396 = vcmask 1043456
  %v3398 = vsel %vm3396, %v3346, 0
  %v3401 = vsel %vm3396, %v3347, 0
  %3403 = vmatprep.subr.mxu0 %v3327
  %3404 = vmatpush1.msra.mxu0 %v3326
  %3405 = vmatprep.subr.mxu0 %v3329
  %3406 = vmatpush1.msra.mxu0 %v3328
  %3407 = vmatprep.subr.mxu0 %v3331
  %3408 = vmatpush1.msra.mxu0 %v3330
  %3409 = vmatprep.subr.mxu0 %v3333
  %3410 = vmatpush1.msra.mxu0 %v3332
  %3411 = vmatprep.subr.mxu0 %v3335
  %3412 = vmatpush1.msra.mxu0 %v3334
  %3413 = vmatprep.subr.mxu0 %v3337
  %3414 = vmatpush1.msra.mxu0 %v3336
  %3415 = vmatprep.subr.mxu0 %v3339
  %3416 = vmatpush1.msra.mxu0 %v3338
  %3417 = vmatprep.subr.mxu0 %v3341
  %3418 = vmatpush1.msra.mxu0 %v3340
  %3419 = vmatprep.subr.mxu0 %v3343
  %3420 = vmatpush1.msra.mxu0 %v3342
  %3421 = vmatprep.subr.mxu0 %v3345
  %3422 = vmatpush1.msra.mxu0 %v3344
  %3423 = vmatprep.subr.mxu0 %v3401
  %3424 = vmatpush1.msra.mxu0 %v3398
  %3425 = vmatprep.subr.mxu0 0.0
  %3426 = vmatpush1.msra.mxu0 0.0
  %3427 = vmatprep.subr.mxu0 0.0
  %3428 = vmatpush1.msra.mxu0 0.0
  %3429 = vmatprep.subr.mxu0 0.0
  %3430 = vmatpush1.msra.mxu0 0.0
  %3431 = vmatprep.subr.mxu0 0.0
  %3432 = vmatpush1.msra.mxu0 0.0
  %3433 = vmatprep.subr.mxu0 0.0
  %3434 = vmatpush1.msra.mxu0 0.0
  %3435 = vmatprep.subr.mxu0 0.0
  %3436 = vmatpush1.msra.mxu0 0.0
  %3437 = vmatprep.subr.mxu0 0.0
  %3438 = vmatpush1.msra.mxu0 0.0
  %3439 = vmatprep.subr.mxu0 0.0
  %3440 = vmatpush1.msra.mxu0 0.0
  %3441 = vmatprep.subr.mxu0 0.0
  %3442 = vmatpush1.msra.mxu0 0.0
  %3443 = vmatprep.subr.mxu0 0.0
  %3444 = vmatpush1.msra.mxu0 0.0
  %3445 = vmatprep.subr.mxu0 0.0
  %3446 = vmatpush1.msra.mxu0 0.0
  %3447 = vmatprep.subr.mxu0 0.0
  %3448 = vmatpush1.msra.mxu0 0.0
  %3449 = vmatprep.subr.mxu0 0.0
  %3450 = vmatpush1.msra.mxu0 0.0
  %3451 = vmatprep.subr.mxu0 0.0
  %3452 = vmatpush1.msra.mxu0 0.0
  %3453 = vmatprep.subr.mxu0 0.0
  %3454 = vmatpush1.msra.mxu0 0.0
  %3455 = vmatprep.subr.mxu0 0.0
  %3456 = vmatpush1.msra.mxu0 0.0
  %3457 = vmatprep.subr.mxu0 0.0
  %3458 = vmatpush1.msra.mxu0 0.0
  %3459 = vmatprep.subr.mxu0 0.0
  %3460 = vmatpush1.msra.mxu0 0.0
  %3461 = vmatprep.subr.mxu0 0.0
  %3462 = vmatpush1.msra.mxu0 0.0
  %3463 = vmatprep.subr.mxu0 0.0
  %3464 = vmatpush1.msra.mxu0 0.0
  %3465 = vmatprep.subr.mxu0 0.0
  %3466 = vmatpush1.msra.mxu0 0.0
  %3467 = vmatprep.mubr.f32.mxu0 0.0
  %3468 = vmatmul.mubr.f32.gmra.mrb[0].mxu0 %v3349
  %v3469 = vpop.f32.mrb[0].mxu0
  %v3470 = vadd.f32 0.0, %v3469
  %v3471 = vpop.f32.mrb[0].mxu0
  %v3472 = vadd.f32 0.0, %v3471
  %3473 = vmatprep.mubr.f32.mxu0 0.0
  %3474 = vmatmul.mubr.f32.gmra.mrb[0].mxu0 %v3352
  %v3475 = vpop.f32.mrb[0].mxu0
  %v3476 = vadd.f32 0.0, %v3475
  %v3477 = vpop.f32.mrb[0].mxu0
  %v3478 = vadd.f32 0.0, %v3477
  %3479 = vmatprep.mubr.f32.mxu0 0.0
  %3480 = vmatmul.mubr.f32.gmra.mrb[0].mxu0 %v3355
  %v3481 = vpop.f32.mrb[0].mxu0
  %v3482 = vadd.f32 0.0, %v3481
  %v3483 = vpop.f32.mrb[0].mxu0
  %v3484 = vadd.f32 0.0, %v3483
  %3485 = vmatprep.mubr.f32.mxu0 0.0
  %3486 = vmatmul.mubr.f32.gmra.mrb[0].mxu0 %v3358
  %v3487 = vpop.f32.mrb[0].mxu0
  %v3488 = vadd.f32 0.0, %v3487
  %v3489 = vpop.f32.mrb[0].mxu0
  %v3490 = vadd.f32 0.0, %v3489
  %3491 = vmatprep.mubr.f32.mxu0 0.0
  %3492 = vmatmul.mubr.f32.gmra.mrb[0].mxu0 %v3361
  %v3493 = vpop.f32.mrb[0].mxu0
  %v3494 = vadd.f32 0.0, %v3493
  %v3495 = vpop.f32.mrb[0].mxu0
  %v3496 = vadd.f32 0.0, %v3495
  %3497 = vmatprep.mubr.f32.mxu0 0.0
  %3498 = vmatmul.mubr.f32.gmra.mrb[0].mxu0 %v3364
  %v3499 = vpop.f32.mrb[0].mxu0
  %v3500 = vadd.f32 0.0, %v3499
  %v3501 = vpop.f32.mrb[0].mxu0
  %v3502 = vadd.f32 0.0, %v3501
  %3503 = vmatprep.mubr.f32.mxu0 0.0
  %3504 = vmatmul.mubr.f32.gmra.mrb[0].mxu0 %v3367
  %v3505 = vpop.f32.mrb[0].mxu0
  %v3506 = vadd.f32 0.0, %v3505
  %v3507 = vpop.f32.mrb[0].mxu0
  %v3508 = vadd.f32 0.0, %v3507
  %3509 = vmatprep.mubr.f32.mxu0 0.0
  %3510 = vmatmul.mubr.f32.gmra.mrb[0].mxu0 %v3370
  %v3511 = vpop.f32.mrb[0].mxu0
  %v3512 = vadd.f32 0.0, %v3511
  %v3513 = vpop.f32.mrb[0].mxu0
  %v3514 = vadd.f32 0.0, %v3513
  %3515 = vmatprep.mubr.f32.mxu0 0.0
  %3516 = vmatmul.mubr.f32.gmra.mrb[0].mxu0 %v3373
  %v3517 = vpop.f32.mrb[0].mxu0
  %v3518 = vadd.f32 0.0, %v3517
  %v3519 = vpop.f32.mrb[0].mxu0
  %v3520 = vadd.f32 0.0, %v3519
  %3521 = vmatprep.mubr.f32.mxu0 0.0
  %3522 = vmatmul.mubr.f32.gmra.mrb[0].mxu0 %v3376
  %v3523 = vpop.f32.mrb[0].mxu0
  %v3524 = vadd.f32 0.0, %v3523
  %v3525 = vpop.f32.mrb[0].mxu0
  %v3526 = vadd.f32 0.0, %v3525
  %3527 = vmatprep.mubr.f32.mxu0 0.0
  %3528 = vmatmul.mubr.f32.gmra.mrb[0].mxu0 %v3379
  %v3529 = vpop.f32.mrb[0].mxu0
  %v3530 = vadd.f32 0.0, %v3529
  %v3531 = vpop.f32.mrb[0].mxu0
  %v3532 = vadd.f32 0.0, %v3531
  %3533 = vmatprep.mubr.f32.mxu0 0.0
  %3534 = vmatmul.mubr.f32.gmra.mrb[0].mxu0 %v3382
  %v3535 = vpop.f32.mrb[0].mxu0
  %v3536 = vadd.f32 0.0, %v3535
  %v3537 = vpop.f32.mrb[0].mxu0
  %v3538 = vadd.f32 0.0, %v3537
  %3539 = vmatprep.mubr.f32.mxu0 0.0
  %3540 = vmatmul.mubr.f32.gmra.mrb[0].mxu0 %v3385
  %v3541 = vpop.f32.mrb[0].mxu0
  %v3542 = vadd.f32 0.0, %v3541
  %v3543 = vpop.f32.mrb[0].mxu0
  %v3544 = vadd.f32 0.0, %v3543
  %3545 = vmatprep.mubr.f32.mxu0 0.0
  %3546 = vmatmul.mubr.f32.gmra.mrb[0].mxu0 %v3388
  %v3547 = vpop.f32.mrb[0].mxu0
  %v3548 = vadd.f32 0.0, %v3547
  %v3549 = vpop.f32.mrb[0].mxu0
  %v3550 = vadd.f32 0.0, %v3549
  %3551 = vmatprep.mubr.f32.mxu0 0.0
  %3552 = vmatmul.mubr.f32.gmra.mrb[0].mxu0 %v3391
  %v3553 = vpop.f32.mrb[0].mxu0
  %v3554 = vadd.f32 0.0, %v3553
  %v3555 = vpop.f32.mrb[0].mxu0
  %v3556 = vadd.f32 0.0, %v3555
  %3557 = vmatprep.mubr.f32.mxu0 0.0
  %3558 = vmatmul.mubr.f32.gmra.mrb[0].mxu0 %v3394
  %v3559 = vpop.f32.mrb[0].mxu0
  %v3560 = vadd.f32 0.0, %v3559
  %v3561 = vpop.f32.mrb[0].mxu0
  %v3562 = vadd.f32 0.0, %v3561
  %3563 = vdwg.mxu0
  %v3565 = vsel %vm3143, %v3255, 0
  %v3568 = vsel %vm3143, %v3256, 0
  %v3571 = vsel %vm3143, %v3257, 0
  %v3574 = vsel %vm3143, %v3258, 0
  %v3577 = vsel %vm3143, %v3259, 0
  %v3580 = vsel %vm3143, %v3260, 0
  %v3583 = vsel %vm3143, %v3261, 0
  %v3586 = vsel %vm3143, %v3262, 0
  %v3589 = vsel %vm3143, %v3263, 0
  %v3592 = vsel %vm3143, %v3264, 0
  %v3595 = vsel %vm3143, %v3265, 0
  %v3598 = vsel %vm3143, %v3266, 0
  %v3601 = vsel %vm3143, %v3267, 0
  %v3604 = vsel %vm3143, %v3268, 0
  %v3607 = vsel %vm3143, %v3269, 0
  %v3610 = vsel %vm3143, %v3270, 0
  %v3613 = vsel %vm3396, %v3291, 0
  %v3616 = vsel %vm3396, %v3292, 0
  %3618 = vmatprep.subr.mxu0 %v3272
  %3619 = vmatpush1.msra.mxu0 %v3271
  %3620 = vmatprep.subr.mxu0 %v3274
  %3621 = vmatpush1.msra.mxu0 %v3273
  %3622 = vmatprep.subr.mxu0 %v3276
  %3623 = vmatpush1.msra.mxu0 %v3275
  %3624 = vmatprep.subr.mxu0 %v3278
  %3625 = vmatpush1.msra.mxu0 %v3277
  %3626 = vmatprep.subr.mxu0 %v3280
  %3627 = vmatpush1.msra.mxu0 %v3279
  %3628 = vmatprep.subr.mxu0 %v3282
  %3629 = vmatpush1.msra.mxu0 %v3281
  %3630 = vmatprep.subr.mxu0 %v3284
  %3631 = vmatpush1.msra.mxu0 %v3283
  %3632 = vmatprep.subr.mxu0 %v3286
  %3633 = vmatpush1.msra.mxu0 %v3285
  %3634 = vmatprep.subr.mxu0 %v3288
  %3635 = vmatpush1.msra.mxu0 %v3287
  %3636 = vmatprep.subr.mxu0 %v3290
  %3637 = vmatpush1.msra.mxu0 %v3289
  %3638 = vmatprep.subr.mxu0 %v3616
  %3639 = vmatpush1.msra.mxu0 %v3613
  %3640 = vmatprep.subr.mxu0 0.0
  %3641 = vmatpush1.msra.mxu0 0.0
  %3642 = vmatprep.subr.mxu0 0.0
  %3643 = vmatpush1.msra.mxu0 0.0
  %3644 = vmatprep.subr.mxu0 0.0
  %3645 = vmatpush1.msra.mxu0 0.0
  %3646 = vmatprep.subr.mxu0 0.0
  %3647 = vmatpush1.msra.mxu0 0.0
  %3648 = vmatprep.subr.mxu0 0.0
  %3649 = vmatpush1.msra.mxu0 0.0
  %3650 = vmatprep.subr.mxu0 0.0
  %3651 = vmatpush1.msra.mxu0 0.0
  %3652 = vmatprep.subr.mxu0 0.0
  %3653 = vmatpush1.msra.mxu0 0.0
  %3654 = vmatprep.subr.mxu0 0.0
  %3655 = vmatpush1.msra.mxu0 0.0
  %3656 = vmatprep.subr.mxu0 0.0
  %3657 = vmatpush1.msra.mxu0 0.0
  %3658 = vmatprep.subr.mxu0 0.0
  %3659 = vmatpush1.msra.mxu0 0.0
  %3660 = vmatprep.subr.mxu0 0.0
  %3661 = vmatpush1.msra.mxu0 0.0
  %3662 = vmatprep.subr.mxu0 0.0
  %3663 = vmatpush1.msra.mxu0 0.0
  %3664 = vmatprep.subr.mxu0 0.0
  %3665 = vmatpush1.msra.mxu0 0.0
  %3666 = vmatprep.subr.mxu0 0.0
  %3667 = vmatpush1.msra.mxu0 0.0
  %3668 = vmatprep.subr.mxu0 0.0
  %3669 = vmatpush1.msra.mxu0 0.0
  %3670 = vmatprep.subr.mxu0 0.0
  %3671 = vmatpush1.msra.mxu0 0.0
  %3672 = vmatprep.subr.mxu0 0.0
  %3673 = vmatpush1.msra.mxu0 0.0
  %3674 = vmatprep.subr.mxu0 0.0
  %3675 = vmatpush1.msra.mxu0 0.0
  %3676 = vmatprep.subr.mxu0 0.0
  %3677 = vmatpush1.msra.mxu0 0.0
  %3678 = vmatprep.subr.mxu0 0.0
  %3679 = vmatpush1.msra.mxu0 0.0
  %3680 = vmatprep.subr.mxu0 0.0
  %3681 = vmatpush1.msra.mxu0 0.0
  %3682 = vmatprep.mubr.f32.mxu0 0.0
  %3683 = vmatmul.mubr.f32.gmra.mrb[0].mxu0 %v3565
  %v3684 = vpop.f32.mrb[0].mxu0
  %v3685 = vadd.f32 %v3470, %v3684
  %v3686 = vpop.f32.mrb[0].mxu0
  %v3687 = vadd.f32 %v3472, %v3686
  %3688 = vmatprep.mubr.f32.mxu0 0.0
  %3689 = vmatmul.mubr.f32.gmra.mrb[0].mxu0 %v3568
  %v3690 = vpop.f32.mrb[0].mxu0
  %v3691 = vadd.f32 %v3476, %v3690
  %v3692 = vpop.f32.mrb[0].mxu0
  %v3693 = vadd.f32 %v3478, %v3692
  %3694 = vmatprep.mubr.f32.mxu0 0.0
  %3695 = vmatmul.mubr.f32.gmra.mrb[0].mxu0 %v3571
  %v3696 = vpop.f32.mrb[0].mxu0
  %v3697 = vadd.f32 %v3482, %v3696
  %v3698 = vpop.f32.mrb[0].mxu0
  %v3699 = vadd.f32 %v3484, %v3698
  %3700 = vmatprep.mubr.f32.mxu0 0.0
  %3701 = vmatmul.mubr.f32.gmra.mrb[0].mxu0 %v3574
  %v3702 = vpop.f32.mrb[0].mxu0
  %v3703 = vadd.f32 %v3488, %v3702
  %v3704 = vpop.f32.mrb[0].mxu0
  %v3705 = vadd.f32 %v3490, %v3704
  %3706 = vmatprep.mubr.f32.mxu0 0.0
  %3707 = vmatmul.mubr.f32.gmra.mrb[0].mxu0 %v3577
  %v3708 = vpop.f32.mrb[0].mxu0
  %v3709 = vadd.f32 %v3494, %v3708
  %v3710 = vpop.f32.mrb[0].mxu0
  %v3711 = vadd.f32 %v3496, %v3710
  %3712 = vmatprep.mubr.f32.mxu0 0.0
  %3713 = vmatmul.mubr.f32.gmra.mrb[0].mxu0 %v3580
  %v3714 = vpop.f32.mrb[0].mxu0
  %v3715 = vadd.f32 %v3500, %v3714
  %v3716 = vpop.f32.mrb[0].mxu0
  %v3717 = vadd.f32 %v3502, %v3716
  %3718 = vmatprep.mubr.f32.mxu0 0.0
  %3719 = vmatmul.mubr.f32.gmra.mrb[0].mxu0 %v3583
  %v3720 = vpop.f32.mrb[0].mxu0
  %v3721 = vadd.f32 %v3506, %v3720
  %v3722 = vpop.f32.mrb[0].mxu0
  %v3723 = vadd.f32 %v3508, %v3722
  %3724 = vmatprep.mubr.f32.mxu0 0.0
  %3725 = vmatmul.mubr.f32.gmra.mrb[0].mxu0 %v3586
  %v3726 = vpop.f32.mrb[0].mxu0
  %v3727 = vadd.f32 %v3512, %v3726
  %v3728 = vpop.f32.mrb[0].mxu0
  %v3729 = vadd.f32 %v3514, %v3728
  %3730 = vmatprep.mubr.f32.mxu0 0.0
  %3731 = vmatmul.mubr.f32.gmra.mrb[0].mxu0 %v3589
  %v3732 = vpop.f32.mrb[0].mxu0
  %v3733 = vadd.f32 %v3518, %v3732
  %v3734 = vpop.f32.mrb[0].mxu0
  %v3735 = vadd.f32 %v3520, %v3734
  %3736 = vmatprep.mubr.f32.mxu0 0.0
  %3737 = vmatmul.mubr.f32.gmra.mrb[0].mxu0 %v3592
  %v3738 = vpop.f32.mrb[0].mxu0
  %v3739 = vadd.f32 %v3524, %v3738
  %v3740 = vpop.f32.mrb[0].mxu0
  %v3741 = vadd.f32 %v3526, %v3740
  %3742 = vmatprep.mubr.f32.mxu0 0.0
  %3743 = vmatmul.mubr.f32.gmra.mrb[0].mxu0 %v3595
  %v3744 = vpop.f32.mrb[0].mxu0
  %v3745 = vadd.f32 %v3530, %v3744
  %v3746 = vpop.f32.mrb[0].mxu0
  %v3747 = vadd.f32 %v3532, %v3746
  %3748 = vmatprep.mubr.f32.mxu0 0.0
  %3749 = vmatmul.mubr.f32.gmra.mrb[0].mxu0 %v3598
  %v3750 = vpop.f32.mrb[0].mxu0
  %v3751 = vadd.f32 %v3536, %v3750
  %v3752 = vpop.f32.mrb[0].mxu0
  %v3753 = vadd.f32 %v3538, %v3752
  %3754 = vmatprep.mubr.f32.mxu0 0.0
  %3755 = vmatmul.mubr.f32.gmra.mrb[0].mxu0 %v3601
  %v3756 = vpop.f32.mrb[0].mxu0
  %v3757 = vadd.f32 %v3542, %v3756
  %v3758 = vpop.f32.mrb[0].mxu0
  %v3759 = vadd.f32 %v3544, %v3758
  %3760 = vmatprep.mubr.f32.mxu0 0.0
  %3761 = vmatmul.mubr.f32.gmra.mrb[0].mxu0 %v3604
  %v3762 = vpop.f32.mrb[0].mxu0
  %v3763 = vadd.f32 %v3548, %v3762
  %v3764 = vpop.f32.mrb[0].mxu0
  %v3765 = vadd.f32 %v3550, %v3764
  %3766 = vmatprep.mubr.f32.mxu0 0.0
  %3767 = vmatmul.mubr.f32.gmra.mrb[0].mxu0 %v3607
  %v3768 = vpop.f32.mrb[0].mxu0
  %v3769 = vadd.f32 %v3554, %v3768
  %v3770 = vpop.f32.mrb[0].mxu0
  %v3771 = vadd.f32 %v3556, %v3770
  %3772 = vmatprep.mubr.f32.mxu0 0.0
  %3773 = vmatmul.mubr.f32.gmra.mrb[0].mxu0 %v3610
  %v3774 = vpop.f32.mrb[0].mxu0
  %v3775 = vadd.f32 %v3560, %v3774
  %v3776 = vpop.f32.mrb[0].mxu0
  %v3777 = vadd.f32 %v3562, %v3776
  %3778 = vdwg.mxu0
  %v3779 = vrot.slane %v3255, 2
  %v3780 = vrot.slane %v3256, 2
  %v3781 = vrot.slane %v3257, 2
  %v3782 = vrot.slane %v3258, 2
  %v3783 = vrot.slane %v3259, 2
  %v3784 = vrot.slane %v3260, 2
  %v3785 = vrot.slane %v3261, 2
  %v3786 = vrot.slane %v3262, 2
  %v3787 = vrot.slane %v3263, 2
  %v3788 = vrot.slane %v3264, 2
  %v3789 = vrot.slane %v3265, 2
  %v3790 = vrot.slane %v3266, 2
  %v3791 = vrot.slane %v3267, 2
  %v3792 = vrot.slane %v3268, 2
  %v3793 = vrot.slane %v3269, 2
  %v3794 = vrot.slane %v3270, 2
  %v3795 = vsel %vm899, %v3793, %v3794
  %v3796 = vsel %vm899, %v3792, %v3793
  %v3797 = vsel %vm899, %v3791, %v3792
  %v3798 = vsel %vm899, %v3790, %v3791
  %v3799 = vsel %vm899, %v3789, %v3790
  %v3800 = vsel %vm899, %v3788, %v3789
  %v3801 = vsel %vm899, %v3787, %v3788
  %v3802 = vsel %vm899, %v3786, %v3787
  %v3803 = vsel %vm899, %v3785, %v3786
  %v3804 = vsel %vm899, %v3784, %v3785
  %v3805 = vsel %vm899, %v3783, %v3784
  %v3806 = vsel %vm899, %v3782, %v3783
  %v3807 = vsel %vm899, %v3781, %v3782
  %v3808 = vsel %vm899, %v3780, %v3781
  %v3809 = vsel %vm899, %v3779, %v3780
  %v3810 = vsel %vm899, %v3794, %v3779
  %s3811 = scalar_lea.vmem %s4, 352
  %v3812 = vld [vmem:[%s3811] sm:$0xff]
  %v3813 = vld [vmem:[%s3811 + $0x8] sm:$0xff]
  %v3814 = vld [vmem:[%s3811 + $0x10] sm:$0xff]
  %v3815 = vld [vmem:[%s3811 + $0x18] sm:$0xff]
  %v3816 = vld [vmem:[%s3811 + $0x20] sm:$0xff]
  %v3817 = vld [vmem:[%s3811 + $0x28] sm:$0xff]
  %v3818 = vld [vmem:[%s3811 + $0x30] sm:$0xff]
  %v3819 = vld [vmem:[%s3811 + $0x38] sm:$0xff]
  %v3820 = vld [vmem:[%s3811 + $0x40] sm:$0xff]
  %v3821 = vld [vmem:[%s3811 + $0x48] sm:$0xff]
  %v3822 = vld [vmem:[%s3811 + $0x50] sm:$0xff]
  %v3823 = vld [vmem:[%s3811 + $0x58] sm:$0xff]
  %v3824 = vld [vmem:[%s3811 + $0x60] sm:$0xff]
  %v3825 = vld [vmem:[%s3811 + $0x68] sm:$0xff]
  %v3826 = vld [vmem:[%s3811 + $0x70] sm:$0xff]
  %v3827 = vld [vmem:[%s3811 + $0x78] sm:$0xff]
  %v3828 = vld [vmem:[%s3811 + $0x80] sm:$0xff]
  %v3829 = vld [vmem:[%s3811 + $0x88] sm:$0xff]
  %v3830 = vld [vmem:[%s3811 + $0x90] sm:$0xff]
  %v3831 = vld [vmem:[%s3811 + $0x98] sm:$0xff]
  %v3832 = vld [vmem:[%s3811 + $0xa0] sm:$0xf]
  %v3833 = vld [vmem:[%s3811 + $0xa8] sm:$0xf]
  %v3835 = vsel %vm3143, %v3809, 0
  %v3838 = vsel %vm3143, %v3808, 0
  %v3841 = vsel %vm3143, %v3807, 0
  %v3844 = vsel %vm3143, %v3806, 0
  %v3847 = vsel %vm3143, %v3805, 0
  %v3850 = vsel %vm3143, %v3804, 0
  %v3853 = vsel %vm3143, %v3803, 0
  %v3856 = vsel %vm3143, %v3802, 0
  %v3859 = vsel %vm3143, %v3801, 0
  %v3862 = vsel %vm3143, %v3800, 0
  %v3865 = vsel %vm3143, %v3799, 0
  %v3868 = vsel %vm3143, %v3798, 0
  %v3871 = vsel %vm3143, %v3797, 0
  %v3874 = vsel %vm3143, %v3796, 0
  %v3877 = vsel %vm3143, %v3795, 0
  %v3880 = vsel %vm3143, %v3810, 0
  %v3883 = vsel %vm3396, %v3832, 0
  %v3886 = vsel %vm3396, %v3833, 0
  %3888 = vmatprep.subr.mxu0 %v3813
  %3889 = vmatpush1.msra.mxu0 %v3812
  %3890 = vmatprep.subr.mxu0 %v3815
  %3891 = vmatpush1.msra.mxu0 %v3814
  %3892 = vmatprep.subr.mxu0 %v3817
  %3893 = vmatpush1.msra.mxu0 %v3816
  %3894 = vmatprep.subr.mxu0 %v3819
  %3895 = vmatpush1.msra.mxu0 %v3818
  %3896 = vmatprep.subr.mxu0 %v3821
  %3897 = vmatpush1.msra.mxu0 %v3820
  %3898 = vmatprep.subr.mxu0 %v3823
  %3899 = vmatpush1.msra.mxu0 %v3822
  %3900 = vmatprep.subr.mxu0 %v3825
  %3901 = vmatpush1.msra.mxu0 %v3824
  %3902 = vmatprep.subr.mxu0 %v3827
  %3903 = vmatpush1.msra.mxu0 %v3826
  %3904 = vmatprep.subr.mxu0 %v3829
  %3905 = vmatpush1.msra.mxu0 %v3828
  %3906 = vmatprep.subr.mxu0 %v3831
  %3907 = vmatpush1.msra.mxu0 %v3830
  %3908 = vmatprep.subr.mxu0 %v3886
  %3909 = vmatpush1.msra.mxu0 %v3883
  %3910 = vmatprep.subr.mxu0 0.0
  %3911 = vmatpush1.msra.mxu0 0.0
  %3912 = vmatprep.subr.mxu0 0.0
  %3913 = vmatpush1.msra.mxu0 0.0
  %3914 = vmatprep.subr.mxu0 0.0
  %3915 = vmatpush1.msra.mxu0 0.0
  %3916 = vmatprep.subr.mxu0 0.0
  %3917 = vmatpush1.msra.mxu0 0.0
  %3918 = vmatprep.subr.mxu0 0.0
  %3919 = vmatpush1.msra.mxu0 0.0
  %3920 = vmatprep.subr.mxu0 0.0
  %3921 = vmatpush1.msra.mxu0 0.0
  %3922 = vmatprep.subr.mxu0 0.0
  %3923 = vmatpush1.msra.mxu0 0.0
  %3924 = vmatprep.subr.mxu0 0.0
  %3925 = vmatpush1.msra.mxu0 0.0
  %3926 = vmatprep.subr.mxu0 0.0
  %3927 = vmatpush1.msra.mxu0 0.0
  %3928 = vmatprep.subr.mxu0 0.0
  %3929 = vmatpush1.msra.mxu0 0.0
  %3930 = vmatprep.subr.mxu0 0.0
  %3931 = vmatpush1.msra.mxu0 0.0
  %3932 = vmatprep.subr.mxu0 0.0
  %3933 = vmatpush1.msra.mxu0 0.0
  %3934 = vmatprep.subr.mxu0 0.0
  %3935 = vmatpush1.msra.mxu0 0.0
  %3936 = vmatprep.subr.mxu0 0.0
  %3937 = vmatpush1.msra.mxu0 0.0
  %3938 = vmatprep.subr.mxu0 0.0
  %3939 = vmatpush1.msra.mxu0 0.0
  %3940 = vmatprep.subr.mxu0 0.0
  %3941 = vmatpush1.msra.mxu0 0.0
  %3942 = vmatprep.subr.mxu0 0.0
  %3943 = vmatpush1.msra.mxu0 0.0
  %3944 = vmatprep.subr.mxu0 0.0
  %3945 = vmatpush1.msra.mxu0 0.0
  %3946 = vmatprep.subr.mxu0 0.0
  %3947 = vmatpush1.msra.mxu0 0.0
  %3948 = vmatprep.subr.mxu0 0.0
  %3949 = vmatpush1.msra.mxu0 0.0
  %3950 = vmatprep.subr.mxu0 0.0
  %3951 = vmatpush1.msra.mxu0 0.0
  %3952 = vmatprep.mubr.f32.mxu0 0.0
  %3953 = vmatmul.mubr.f32.gmra.mrb[0].mxu0 %v3835
  %v3954 = vpop.f32.mrb[0].mxu0
  %v3955 = vadd.f32 0.0, %v3954
  %v3956 = vpop.f32.mrb[0].mxu0
  %v3957 = vadd.f32 0.0, %v3956
  %3958 = vmatprep.mubr.f32.mxu0 0.0
  %3959 = vmatmul.mubr.f32.gmra.mrb[0].mxu0 %v3838
  %v3960 = vpop.f32.mrb[0].mxu0
  %v3961 = vadd.f32 0.0, %v3960
  %v3962 = vpop.f32.mrb[0].mxu0
  %v3963 = vadd.f32 0.0, %v3962
  %3964 = vmatprep.mubr.f32.mxu0 0.0
  %3965 = vmatmul.mubr.f32.gmra.mrb[0].mxu0 %v3841
  %v3966 = vpop.f32.mrb[0].mxu0
  %v3967 = vadd.f32 0.0, %v3966
  %v3968 = vpop.f32.mrb[0].mxu0
  %v3969 = vadd.f32 0.0, %v3968
  %3970 = vmatprep.mubr.f32.mxu0 0.0
  %3971 = vmatmul.mubr.f32.gmra.mrb[0].mxu0 %v3844
  %v3972 = vpop.f32.mrb[0].mxu0
  %v3973 = vadd.f32 0.0, %v3972
  %v3974 = vpop.f32.mrb[0].mxu0
  %v3975 = vadd.f32 0.0, %v3974
  %3976 = vmatprep.mubr.f32.mxu0 0.0
  %3977 = vmatmul.mubr.f32.gmra.mrb[0].mxu0 %v3847
  %v3978 = vpop.f32.mrb[0].mxu0
  %v3979 = vadd.f32 0.0, %v3978
  %v3980 = vpop.f32.mrb[0].mxu0
  %v3981 = vadd.f32 0.0, %v3980
  %3982 = vmatprep.mubr.f32.mxu0 0.0
  %3983 = vmatmul.mubr.f32.gmra.mrb[0].mxu0 %v3850
  %v3984 = vpop.f32.mrb[0].mxu0
  %v3985 = vadd.f32 0.0, %v3984
  %v3986 = vpop.f32.mrb[0].mxu0
  %v3987 = vadd.f32 0.0, %v3986
  %3988 = vmatprep.mubr.f32.mxu0 0.0
  %3989 = vmatmul.mubr.f32.gmra.mrb[0].mxu0 %v3853
  %v3990 = vpop.f32.mrb[0].mxu0
  %v3991 = vadd.f32 0.0, %v3990
  %v3992 = vpop.f32.mrb[0].mxu0
  %v3993 = vadd.f32 0.0, %v3992
  %3994 = vmatprep.mubr.f32.mxu0 0.0
  %3995 = vmatmul.mubr.f32.gmra.mrb[0].mxu0 %v3856
  %v3996 = vpop.f32.mrb[0].mxu0
  %v3997 = vadd.f32 0.0, %v3996
  %v3998 = vpop.f32.mrb[0].mxu0
  %v3999 = vadd.f32 0.0, %v3998
  %4000 = vmatprep.mubr.f32.mxu0 0.0
  %4001 = vmatmul.mubr.f32.gmra.mrb[0].mxu0 %v3859
  %v4002 = vpop.f32.mrb[0].mxu0
  %v4003 = vadd.f32 0.0, %v4002
  %v4004 = vpop.f32.mrb[0].mxu0
  %v4005 = vadd.f32 0.0, %v4004
  %4006 = vmatprep.mubr.f32.mxu0 0.0
  %4007 = vmatmul.mubr.f32.gmra.mrb[0].mxu0 %v3862
  %v4008 = vpop.f32.mrb[0].mxu0
  %v4009 = vadd.f32 0.0, %v4008
  %v4010 = vpop.f32.mrb[0].mxu0
  %v4011 = vadd.f32 0.0, %v4010
  %4012 = vmatprep.mubr.f32.mxu0 0.0
  %4013 = vmatmul.mubr.f32.gmra.mrb[0].mxu0 %v3865
  %v4014 = vpop.f32.mrb[0].mxu0
  %v4015 = vadd.f32 0.0, %v4014
  %v4016 = vpop.f32.mrb[0].mxu0
  %v4017 = vadd.f32 0.0, %v4016
  %4018 = vmatprep.mubr.f32.mxu0 0.0
  %4019 = vmatmul.mubr.f32.gmra.mrb[0].mxu0 %v3868
  %v4020 = vpop.f32.mrb[0].mxu0
  %v4021 = vadd.f32 0.0, %v4020
  %v4022 = vpop.f32.mrb[0].mxu0
  %v4023 = vadd.f32 0.0, %v4022
  %4024 = vmatprep.mubr.f32.mxu0 0.0
  %4025 = vmatmul.mubr.f32.gmra.mrb[0].mxu0 %v3871
  %v4026 = vpop.f32.mrb[0].mxu0
  %v4027 = vadd.f32 0.0, %v4026
  %v4028 = vpop.f32.mrb[0].mxu0
  %v4029 = vadd.f32 0.0, %v4028
  %4030 = vmatprep.mubr.f32.mxu0 0.0
  %4031 = vmatmul.mubr.f32.gmra.mrb[0].mxu0 %v3874
  %v4032 = vpop.f32.mrb[0].mxu0
  %v4033 = vadd.f32 0.0, %v4032
  %v4034 = vpop.f32.mrb[0].mxu0
  %v4035 = vadd.f32 0.0, %v4034
  %4036 = vmatprep.mubr.f32.mxu0 0.0
  %4037 = vmatmul.mubr.f32.gmra.mrb[0].mxu0 %v3877
  %v4038 = vpop.f32.mrb[0].mxu0
  %v4039 = vadd.f32 0.0, %v4038
  %v4040 = vpop.f32.mrb[0].mxu0
  %v4041 = vadd.f32 0.0, %v4040
  %4042 = vmatprep.mubr.f32.mxu0 0.0
  %4043 = vmatmul.mubr.f32.gmra.mrb[0].mxu0 %v3880
  %v4044 = vpop.f32.mrb[0].mxu0
  %v4045 = vadd.f32 0.0, %v4044
  %v4046 = vpop.f32.mrb[0].mxu0
  %v4047 = vadd.f32 0.0, %v4046
  %4048 = vdwg.mxu0
  %v4049 = vadd.f32 %v3685, %v3955
  %v4050 = vadd.f32 %v3687, %v3957
  %v4051 = vadd.f32 %v3691, %v3961
  %v4052 = vadd.f32 %v3693, %v3963
  %v4053 = vadd.f32 %v3697, %v3967
  %v4054 = vadd.f32 %v3699, %v3969
  %v4055 = vadd.f32 %v3703, %v3973
  %v4056 = vadd.f32 %v3705, %v3975
  %v4057 = vadd.f32 %v3709, %v3979
  %v4058 = vadd.f32 %v3711, %v3981
  %v4059 = vadd.f32 %v3715, %v3985
  %v4060 = vadd.f32 %v3717, %v3987
  %v4061 = vadd.f32 %v3721, %v3991
  %v4062 = vadd.f32 %v3723, %v3993
  %v4063 = vadd.f32 %v3727, %v3997
  %v4064 = vadd.f32 %v3729, %v3999
  %v4065 = vadd.f32 %v3733, %v4003
  %v4066 = vadd.f32 %v3735, %v4005
  %v4067 = vadd.f32 %v3739, %v4009
  %v4068 = vadd.f32 %v3741, %v4011
  %v4069 = vadd.f32 %v3745, %v4015
  %v4070 = vadd.f32 %v3747, %v4017
  %v4071 = vadd.f32 %v3751, %v4021
  %v4072 = vadd.f32 %v3753, %v4023
  %v4073 = vadd.f32 %v3757, %v4027
  %v4074 = vadd.f32 %v3759, %v4029
  %v4075 = vadd.f32 %v3763, %v4033
  %v4076 = vadd.f32 %v3765, %v4035
  %v4077 = vadd.f32 %v3769, %v4039
  %v4078 = vadd.f32 %v3771, %v4041
  %v4079 = vadd.f32 %v3775, %v4045
  %v4080 = vadd.f32 %v3777, %v4047
  %v4081 = vrot.slane %v3255, 3
  %v4082 = vrot.slane %v3256, 3
  %v4083 = vrot.slane %v3257, 3
  %v4084 = vrot.slane %v3258, 3
  %v4085 = vrot.slane %v3259, 3
  %v4086 = vrot.slane %v3260, 3
  %v4087 = vrot.slane %v3261, 3
  %v4088 = vrot.slane %v3262, 3
  %v4089 = vrot.slane %v3263, 3
  %v4090 = vrot.slane %v3264, 3
  %v4091 = vrot.slane %v3265, 3
  %v4092 = vrot.slane %v3266, 3
  %v4093 = vrot.slane %v3267, 3
  %v4094 = vrot.slane %v3268, 3
  %v4095 = vrot.slane %v3269, 3
  %v4096 = vrot.slane %v3270, 3
  %v4097 = vsel %vm1390, %v4095, %v4096
  %v4098 = vsel %vm1390, %v4094, %v4095
  %v4099 = vsel %vm1390, %v4093, %v4094
  %v4100 = vsel %vm1390, %v4092, %v4093
  %v4101 = vsel %vm1390, %v4091, %v4092
  %v4102 = vsel %vm1390, %v4090, %v4091
  %v4103 = vsel %vm1390, %v4089, %v4090
  %v4104 = vsel %vm1390, %v4088, %v4089
  %v4105 = vsel %vm1390, %v4087, %v4088
  %v4106 = vsel %vm1390, %v4086, %v4087
  %v4107 = vsel %vm1390, %v4085, %v4086
  %v4108 = vsel %vm1390, %v4084, %v4085
  %v4109 = vsel %vm1390, %v4083, %v4084
  %v4110 = vsel %vm1390, %v4082, %v4083
  %v4111 = vsel %vm1390, %v4081, %v4082
  %v4112 = vsel %vm1390, %v4096, %v4081
  %s4113 = scalar_lea.vmem %s4, 528
  %v4114 = vld [vmem:[%s4113] sm:$0xff]
  %v4115 = vld [vmem:[%s4113 + $0x8] sm:$0xff]
  %v4116 = vld [vmem:[%s4113 + $0x10] sm:$0xff]
  %v4117 = vld [vmem:[%s4113 + $0x18] sm:$0xff]
  %v4118 = vld [vmem:[%s4113 + $0x20] sm:$0xff]
  %v4119 = vld [vmem:[%s4113 + $0x28] sm:$0xff]
  %v4120 = vld [vmem:[%s4113 + $0x30] sm:$0xff]
  %v4121 = vld [vmem:[%s4113 + $0x38] sm:$0xff]
  %v4122 = vld [vmem:[%s4113 + $0x40] sm:$0xff]
  %v4123 = vld [vmem:[%s4113 + $0x48] sm:$0xff]
  %v4124 = vld [vmem:[%s4113 + $0x50] sm:$0xff]
  %v4125 = vld [vmem:[%s4113 + $0x58] sm:$0xff]
  %v4126 = vld [vmem:[%s4113 + $0x60] sm:$0xff]
  %v4127 = vld [vmem:[%s4113 + $0x68] sm:$0xff]
  %v4128 = vld [vmem:[%s4113 + $0x70] sm:$0xff]
  %v4129 = vld [vmem:[%s4113 + $0x78] sm:$0xff]
  %v4130 = vld [vmem:[%s4113 + $0x80] sm:$0xff]
  %v4131 = vld [vmem:[%s4113 + $0x88] sm:$0xff]
  %v4132 = vld [vmem:[%s4113 + $0x90] sm:$0xff]
  %v4133 = vld [vmem:[%s4113 + $0x98] sm:$0xff]
  %v4134 = vld [vmem:[%s4113 + $0xa0] sm:$0xf]
  %v4135 = vld [vmem:[%s4113 + $0xa8] sm:$0xf]
  %v4137 = vsel %vm3143, %v4111, 0
  %v4140 = vsel %vm3143, %v4110, 0
  %v4143 = vsel %vm3143, %v4109, 0
  %v4146 = vsel %vm3143, %v4108, 0
  %v4149 = vsel %vm3143, %v4107, 0
  %v4152 = vsel %vm3143, %v4106, 0
  %v4155 = vsel %vm3143, %v4105, 0
  %v4158 = vsel %vm3143, %v4104, 0
  %v4161 = vsel %vm3143, %v4103, 0
  %v4164 = vsel %vm3143, %v4102, 0
  %v4167 = vsel %vm3143, %v4101, 0
  %v4170 = vsel %vm3143, %v4100, 0
  %v4173 = vsel %vm3143, %v4099, 0
  %v4176 = vsel %vm3143, %v4098, 0
  %v4179 = vsel %vm3143, %v4097, 0
  %v4182 = vsel %vm3143, %v4112, 0
  %v4185 = vsel %vm3396, %v4134, 0
  %v4188 = vsel %vm3396, %v4135, 0
  %4190 = vmatprep.subr.mxu0 %v4115
  %4191 = vmatpush1.msra.mxu0 %v4114
  %4192 = vmatprep.subr.mxu0 %v4117
  %4193 = vmatpush1.msra.mxu0 %v4116
  %4194 = vmatprep.subr.mxu0 %v4119
  %4195 = vmatpush1.msra.mxu0 %v4118
  %4196 = vmatprep.subr.mxu0 %v4121
  %4197 = vmatpush1.msra.mxu0 %v4120
  %4198 = vmatprep.subr.mxu0 %v4123
  %4199 = vmatpush1.msra.mxu0 %v4122
  %4200 = vmatprep.subr.mxu0 %v4125
  %4201 = vmatpush1.msra.mxu0 %v4124
  %4202 = vmatprep.subr.mxu0 %v4127
  %4203 = vmatpush1.msra.mxu0 %v4126
  %4204 = vmatprep.subr.mxu0 %v4129
  %4205 = vmatpush1.msra.mxu0 %v4128
  %4206 = vmatprep.subr.mxu0 %v4131
  %4207 = vmatpush1.msra.mxu0 %v4130
  %4208 = vmatprep.subr.mxu0 %v4133
  %4209 = vmatpush1.msra.mxu0 %v4132
  %4210 = vmatprep.subr.mxu0 %v4188
  %4211 = vmatpush1.msra.mxu0 %v4185
  %4212 = vmatprep.subr.mxu0 0.0
  %4213 = vmatpush1.msra.mxu0 0.0
  %4214 = vmatprep.subr.mxu0 0.0
  %4215 = vmatpush1.msra.mxu0 0.0
  %4216 = vmatprep.subr.mxu0 0.0
  %4217 = vmatpush1.msra.mxu0 0.0
  %4218 = vmatprep.subr.mxu0 0.0
  %4219 = vmatpush1.msra.mxu0 0.0
  %4220 = vmatprep.subr.mxu0 0.0
  %4221 = vmatpush1.msra.mxu0 0.0
  %4222 = vmatprep.subr.mxu0 0.0
  %4223 = vmatpush1.msra.mxu0 0.0
  %4224 = vmatprep.subr.mxu0 0.0
  %4225 = vmatpush1.msra.mxu0 0.0
  %4226 = vmatprep.subr.mxu0 0.0
  %4227 = vmatpush1.msra.mxu0 0.0
  %4228 = vmatprep.subr.mxu0 0.0
  %4229 = vmatpush1.msra.mxu0 0.0
  %4230 = vmatprep.subr.mxu0 0.0
  %4231 = vmatpush1.msra.mxu0 0.0
  %4232 = vmatprep.subr.mxu0 0.0
  %4233 = vmatpush1.msra.mxu0 0.0
  %4234 = vmatprep.subr.mxu0 0.0
  %4235 = vmatpush1.msra.mxu0 0.0
  %4236 = vmatprep.subr.mxu0 0.0
  %4237 = vmatpush1.msra.mxu0 0.0
  %4238 = vmatprep.subr.mxu0 0.0
  %4239 = vmatpush1.msra.mxu0 0.0
  %4240 = vmatprep.subr.mxu0 0.0
  %4241 = vmatpush1.msra.mxu0 0.0
  %4242 = vmatprep.subr.mxu0 0.0
  %4243 = vmatpush1.msra.mxu0 0.0
  %4244 = vmatprep.subr.mxu0 0.0
  %4245 = vmatpush1.msra.mxu0 0.0
  %4246 = vmatprep.subr.mxu0 0.0
  %4247 = vmatpush1.msra.mxu0 0.0
  %4248 = vmatprep.subr.mxu0 0.0
  %4249 = vmatpush1.msra.mxu0 0.0
  %4250 = vmatprep.subr.mxu0 0.0
  %4251 = vmatpush1.msra.mxu0 0.0
  %4252 = vmatprep.subr.mxu0 0.0
  %4253 = vmatpush1.msra.mxu0 0.0
  %4254 = vmatprep.mubr.f32.mxu0 0.0
  %4255 = vmatmul.mubr.f32.gmra.mrb[0].mxu0 %v4137
  %v4256 = vpop.f32.mrb[0].mxu0
  %v4257 = vadd.f32 0.0, %v4256
  %v4258 = vpop.f32.mrb[0].mxu0
  %v4259 = vadd.f32 0.0, %v4258
  %4260 = vmatprep.mubr.f32.mxu0 0.0
  %4261 = vmatmul.mubr.f32.gmra.mrb[0].mxu0 %v4140
  %v4262 = vpop.f32.mrb[0].mxu0
  %v4263 = vadd.f32 0.0, %v4262
  %v4264 = vpop.f32.mrb[0].mxu0
  %v4265 = vadd.f32 0.0, %v4264
  %4266 = vmatprep.mubr.f32.mxu0 0.0
  %4267 = vmatmul.mubr.f32.gmra.mrb[0].mxu0 %v4143
  %v4268 = vpop.f32.mrb[0].mxu0
  %v4269 = vadd.f32 0.0, %v4268
  %v4270 = vpop.f32.mrb[0].mxu0
  %v4271 = vadd.f32 0.0, %v4270
  %4272 = vmatprep.mubr.f32.mxu0 0.0
  %4273 = vmatmul.mubr.f32.gmra.mrb[0].mxu0 %v4146
  %v4274 = vpop.f32.mrb[0].mxu0
  %v4275 = vadd.f32 0.0, %v4274
  %v4276 = vpop.f32.mrb[0].mxu0
  %v4277 = vadd.f32 0.0, %v4276
  %4278 = vmatprep.mubr.f32.mxu0 0.0
  %4279 = vmatmul.mubr.f32.gmra.mrb[0].mxu0 %v4149
  %v4280 = vpop.f32.mrb[0].mxu0
  %v4281 = vadd.f32 0.0, %v4280
  %v4282 = vpop.f32.mrb[0].mxu0
  %v4283 = vadd.f32 0.0, %v4282
  %4284 = vmatprep.mubr.f32.mxu0 0.0
  %4285 = vmatmul.mubr.f32.gmra.mrb[0].mxu0 %v4152
  %v4286 = vpop.f32.mrb[0].mxu0
  %v4287 = vadd.f32 0.0, %v4286
  %v4288 = vpop.f32.mrb[0].mxu0
  %v4289 = vadd.f32 0.0, %v4288
  %4290 = vmatprep.mubr.f32.mxu0 0.0
  %4291 = vmatmul.mubr.f32.gmra.mrb[0].mxu0 %v4155
  %v4292 = vpop.f32.mrb[0].mxu0
  %v4293 = vadd.f32 0.0, %v4292
  %v4294 = vpop.f32.mrb[0].mxu0
  %v4295 = vadd.f32 0.0, %v4294
  %4296 = vmatprep.mubr.f32.mxu0 0.0
  %4297 = vmatmul.mubr.f32.gmra.mrb[0].mxu0 %v4158
  %v4298 = vpop.f32.mrb[0].mxu0
  %v4299 = vadd.f32 0.0, %v4298
  %v4300 = vpop.f32.mrb[0].mxu0
  %v4301 = vadd.f32 0.0, %v4300
  %4302 = vmatprep.mubr.f32.mxu0 0.0
  %4303 = vmatmul.mubr.f32.gmra.mrb[0].mxu0 %v4161
  %v4304 = vpop.f32.mrb[0].mxu0
  %v4305 = vadd.f32 0.0, %v4304
  %v4306 = vpop.f32.mrb[0].mxu0
  %v4307 = vadd.f32 0.0, %v4306
  %4308 = vmatprep.mubr.f32.mxu0 0.0
  %4309 = vmatmul.mubr.f32.gmra.mrb[0].mxu0 %v4164
  %v4310 = vpop.f32.mrb[0].mxu0
  %v4311 = vadd.f32 0.0, %v4310
  %v4312 = vpop.f32.mrb[0].mxu0
  %v4313 = vadd.f32 0.0, %v4312
  %4314 = vmatprep.mubr.f32.mxu0 0.0
  %4315 = vmatmul.mubr.f32.gmra.mrb[0].mxu0 %v4167
  %v4316 = vpop.f32.mrb[0].mxu0
  %v4317 = vadd.f32 0.0, %v4316
  %v4318 = vpop.f32.mrb[0].mxu0
  %v4319 = vadd.f32 0.0, %v4318
  %4320 = vmatprep.mubr.f32.mxu0 0.0
  %4321 = vmatmul.mubr.f32.gmra.mrb[0].mxu0 %v4170
  %v4322 = vpop.f32.mrb[0].mxu0
  %v4323 = vadd.f32 0.0, %v4322
  %v4324 = vpop.f32.mrb[0].mxu0
  %v4325 = vadd.f32 0.0, %v4324
  %4326 = vmatprep.mubr.f32.mxu0 0.0
  %4327 = vmatmul.mubr.f32.gmra.mrb[0].mxu0 %v4173
  %v4328 = vpop.f32.mrb[0].mxu0
  %v4329 = vadd.f32 0.0, %v4328
  %v4330 = vpop.f32.mrb[0].mxu0
  %v4331 = vadd.f32 0.0, %v4330
  %4332 = vmatprep.mubr.f32.mxu0 0.0
  %4333 = vmatmul.mubr.f32.gmra.mrb[0].mxu0 %v4176
  %v4334 = vpop.f32.mrb[0].mxu0
  %v4335 = vadd.f32 0.0, %v4334
  %v4336 = vpop.f32.mrb[0].mxu0
  %v4337 = vadd.f32 0.0, %v4336
  %4338 = vmatprep.mubr.f32.mxu0 0.0
  %4339 = vmatmul.mubr.f32.gmra.mrb[0].mxu0 %v4179
  %v4340 = vpop.f32.mrb[0].mxu0
  %v4341 = vadd.f32 0.0, %v4340
  %v4342 = vpop.f32.mrb[0].mxu0
  %v4343 = vadd.f32 0.0, %v4342
  %4344 = vmatprep.mubr.f32.mxu0 0.0
  %4345 = vmatmul.mubr.f32.gmra.mrb[0].mxu0 %v4182
  %v4346 = vpop.f32.mrb[0].mxu0
  %v4347 = vadd.f32 0.0, %v4346
  %v4348 = vpop.f32.mrb[0].mxu0
  %v4349 = vadd.f32 0.0, %v4348
  %4350 = vdwg.mxu0
  %v4351 = vadd.f32 %v4049, %v4257
  %v4352 = vadd.f32 %v4050, %v4259
  %v4353 = vadd.f32 %v4051, %v4263
  %v4354 = vadd.f32 %v4052, %v4265
  %v4355 = vadd.f32 %v4053, %v4269
  %v4356 = vadd.f32 %v4054, %v4271
  %v4357 = vadd.f32 %v4055, %v4275
  %v4358 = vadd.f32 %v4056, %v4277
  %v4359 = vadd.f32 %v4057, %v4281
  %v4360 = vadd.f32 %v4058, %v4283
  %v4361 = vadd.f32 %v4059, %v4287
  %v4362 = vadd.f32 %v4060, %v4289
  %v4363 = vadd.f32 %v4061, %v4293
  %v4364 = vadd.f32 %v4062, %v4295
  %v4365 = vadd.f32 %v4063, %v4299
  %v4366 = vadd.f32 %v4064, %v4301
  %v4367 = vadd.f32 %v4065, %v4305
  %v4368 = vadd.f32 %v4066, %v4307
  %v4369 = vadd.f32 %v4067, %v4311
  %v4370 = vadd.f32 %v4068, %v4313
  %v4371 = vadd.f32 %v4069, %v4317
  %v4372 = vadd.f32 %v4070, %v4319
  %v4373 = vadd.f32 %v4071, %v4323
  %v4374 = vadd.f32 %v4072, %v4325
  %v4375 = vadd.f32 %v4073, %v4329
  %v4376 = vadd.f32 %v4074, %v4331
  %v4377 = vadd.f32 %v4075, %v4335
  %v4378 = vadd.f32 %v4076, %v4337
  %v4379 = vadd.f32 %v4077, %v4341
  %v4380 = vadd.f32 %v4078, %v4343
  %v4381 = vadd.f32 %v4079, %v4347
  %v4382 = vadd.f32 %v4080, %v4349
  %v4383 = vrot.slane %v3255, 4
  %v4384 = vrot.slane %v3256, 4
  %v4385 = vrot.slane %v3257, 4
  %v4386 = vrot.slane %v3258, 4
  %v4387 = vrot.slane %v3259, 4
  %v4388 = vrot.slane %v3260, 4
  %v4389 = vrot.slane %v3261, 4
  %v4390 = vrot.slane %v3262, 4
  %v4391 = vrot.slane %v3263, 4
  %v4392 = vrot.slane %v3264, 4
  %v4393 = vrot.slane %v3265, 4
  %v4394 = vrot.slane %v3266, 4
  %v4395 = vrot.slane %v3267, 4
  %v4396 = vrot.slane %v3268, 4
  %v4397 = vrot.slane %v3269, 4
  %v4398 = vrot.slane %v3270, 4
  %v4399 = vsel %vm1881, %v4397, %v4398
  %v4400 = vsel %vm1881, %v4396, %v4397
  %v4401 = vsel %vm1881, %v4395, %v4396
  %v4402 = vsel %vm1881, %v4394, %v4395
  %v4403 = vsel %vm1881, %v4393, %v4394
  %v4404 = vsel %vm1881, %v4392, %v4393
  %v4405 = vsel %vm1881, %v4391, %v4392
  %v4406 = vsel %vm1881, %v4390, %v4391
  %v4407 = vsel %vm1881, %v4389, %v4390
  %v4408 = vsel %vm1881, %v4388, %v4389
  %v4409 = vsel %vm1881, %v4387, %v4388
  %v4410 = vsel %vm1881, %v4386, %v4387
  %v4411 = vsel %vm1881, %v4385, %v4386
  %v4412 = vsel %vm1881, %v4384, %v4385
  %v4413 = vsel %vm1881, %v4383, %v4384
  %v4414 = vsel %vm1881, %v4398, %v4383
  %s4415 = scalar_lea.vmem %s4, 704
  %v4416 = vld [vmem:[%s4415] sm:$0xff]
  %v4417 = vld [vmem:[%s4415 + $0x8] sm:$0xff]
  %v4418 = vld [vmem:[%s4415 + $0x10] sm:$0xff]
  %v4419 = vld [vmem:[%s4415 + $0x18] sm:$0xff]
  %v4420 = vld [vmem:[%s4415 + $0x20] sm:$0xff]
  %v4421 = vld [vmem:[%s4415 + $0x28] sm:$0xff]
  %v4422 = vld [vmem:[%s4415 + $0x30] sm:$0xff]
  %v4423 = vld [vmem:[%s4415 + $0x38] sm:$0xff]
  %v4424 = vld [vmem:[%s4415 + $0x40] sm:$0xff]
  %v4425 = vld [vmem:[%s4415 + $0x48] sm:$0xff]
  %v4426 = vld [vmem:[%s4415 + $0x50] sm:$0xff]
  %v4427 = vld [vmem:[%s4415 + $0x58] sm:$0xff]
  %v4428 = vld [vmem:[%s4415 + $0x60] sm:$0xff]
  %v4429 = vld [vmem:[%s4415 + $0x68] sm:$0xff]
  %v4430 = vld [vmem:[%s4415 + $0x70] sm:$0xff]
  %v4431 = vld [vmem:[%s4415 + $0x78] sm:$0xff]
  %v4432 = vld [vmem:[%s4415 + $0x80] sm:$0xff]
  %v4433 = vld [vmem:[%s4415 + $0x88] sm:$0xff]
  %v4434 = vld [vmem:[%s4415 + $0x90] sm:$0xff]
  %v4435 = vld [vmem:[%s4415 + $0x98] sm:$0xff]
  %v4436 = vld [vmem:[%s4415 + $0xa0] sm:$0xf]
  %v4437 = vld [vmem:[%s4415 + $0xa8] sm:$0xf]
  %v4439 = vsel %vm3143, %v4413, 0
  %v4442 = vsel %vm3143, %v4412, 0
  %v4445 = vsel %vm3143, %v4411, 0
  %v4448 = vsel %vm3143, %v4410, 0
  %v4451 = vsel %vm3143, %v4409, 0
  %v4454 = vsel %vm3143, %v4408, 0
  %v4457 = vsel %vm3143, %v4407, 0
  %v4460 = vsel %vm3143, %v4406, 0
  %v4463 = vsel %vm3143, %v4405, 0
  %v4466 = vsel %vm3143, %v4404, 0
  %v4469 = vsel %vm3143, %v4403, 0
  %v4472 = vsel %vm3143, %v4402, 0
  %v4475 = vsel %vm3143, %v4401, 0
  %v4478 = vsel %vm3143, %v4400, 0
  %v4481 = vsel %vm3143, %v4399, 0
  %v4484 = vsel %vm3143, %v4414, 0
  %v4487 = vsel %vm3396, %v4436, 0
  %v4490 = vsel %vm3396, %v4437, 0
  %4492 = vmatprep.subr.mxu0 %v4417
  %4493 = vmatpush1.msra.mxu0 %v4416
  %4494 = vmatprep.subr.mxu0 %v4419
  %4495 = vmatpush1.msra.mxu0 %v4418
  %4496 = vmatprep.subr.mxu0 %v4421
  %4497 = vmatpush1.msra.mxu0 %v4420
  %4498 = vmatprep.subr.mxu0 %v4423
  %4499 = vmatpush1.msra.mxu0 %v4422
  %4500 = vmatprep.subr.mxu0 %v4425
  %4501 = vmatpush1.msra.mxu0 %v4424
  %4502 = vmatprep.subr.mxu0 %v4427
  %4503 = vmatpush1.msra.mxu0 %v4426
  %4504 = vmatprep.subr.mxu0 %v4429
  %4505 = vmatpush1.msra.mxu0 %v4428
  %4506 = vmatprep.subr.mxu0 %v4431
  %4507 = vmatpush1.msra.mxu0 %v4430
  %4508 = vmatprep.subr.mxu0 %v4433
  %4509 = vmatpush1.msra.mxu0 %v4432
  %4510 = vmatprep.subr.mxu0 %v4435
  %4511 = vmatpush1.msra.mxu0 %v4434
  %4512 = vmatprep.subr.mxu0 %v4490
  %4513 = vmatpush1.msra.mxu0 %v4487
  %4514 = vmatprep.subr.mxu0 0.0
  %4515 = vmatpush1.msra.mxu0 0.0
  %4516 = vmatprep.subr.mxu0 0.0
  %4517 = vmatpush1.msra.mxu0 0.0
  %4518 = vmatprep.subr.mxu0 0.0
  %4519 = vmatpush1.msra.mxu0 0.0
  %4520 = vmatprep.subr.mxu0 0.0
  %4521 = vmatpush1.msra.mxu0 0.0
  %4522 = vmatprep.subr.mxu0 0.0
  %4523 = vmatpush1.msra.mxu0 0.0
  %4524 = vmatprep.subr.mxu0 0.0
  %4525 = vmatpush1.msra.mxu0 0.0
  %4526 = vmatprep.subr.mxu0 0.0
  %4527 = vmatpush1.msra.mxu0 0.0
  %4528 = vmatprep.subr.mxu0 0.0
  %4529 = vmatpush1.msra.mxu0 0.0
  %4530 = vmatprep.subr.mxu0 0.0
  %4531 = vmatpush1.msra.mxu0 0.0
  %4532 = vmatprep.subr.mxu0 0.0
  %4533 = vmatpush1.msra.mxu0 0.0
  %4534 = vmatprep.subr.mxu0 0.0
  %4535 = vmatpush1.msra.mxu0 0.0
  %4536 = vmatprep.subr.mxu0 0.0
  %4537 = vmatpush1.msra.mxu0 0.0
  %4538 = vmatprep.subr.mxu0 0.0
  %4539 = vmatpush1.msra.mxu0 0.0
  %4540 = vmatprep.subr.mxu0 0.0
  %4541 = vmatpush1.msra.mxu0 0.0
  %4542 = vmatprep.subr.mxu0 0.0
  %4543 = vmatpush1.msra.mxu0 0.0
  %4544 = vmatprep.subr.mxu0 0.0
  %4545 = vmatpush1.msra.mxu0 0.0
  %4546 = vmatprep.subr.mxu0 0.0
  %4547 = vmatpush1.msra.mxu0 0.0
  %4548 = vmatprep.subr.mxu0 0.0
  %4549 = vmatpush1.msra.mxu0 0.0
  %4550 = vmatprep.subr.mxu0 0.0
  %4551 = vmatpush1.msra.mxu0 0.0
  %4552 = vmatprep.subr.mxu0 0.0
  %4553 = vmatpush1.msra.mxu0 0.0
  %4554 = vmatprep.subr.mxu0 0.0
  %4555 = vmatpush1.msra.mxu0 0.0
  %4556 = vmatprep.mubr.f32.mxu0 0.0
  %4557 = vmatmul.mubr.f32.gmra.mrb[0].mxu0 %v4439
  %v4558 = vpop.f32.mrb[0].mxu0
  %v4559 = vadd.f32 0.0, %v4558
  %v4560 = vpop.f32.mrb[0].mxu0
  %v4561 = vadd.f32 0.0, %v4560
  %4562 = vmatprep.mubr.f32.mxu0 0.0
  %4563 = vmatmul.mubr.f32.gmra.mrb[0].mxu0 %v4442
  %v4564 = vpop.f32.mrb[0].mxu0
  %v4565 = vadd.f32 0.0, %v4564
  %v4566 = vpop.f32.mrb[0].mxu0
  %v4567 = vadd.f32 0.0, %v4566
  %4568 = vmatprep.mubr.f32.mxu0 0.0
  %4569 = vmatmul.mubr.f32.gmra.mrb[0].mxu0 %v4445
  %v4570 = vpop.f32.mrb[0].mxu0
  %v4571 = vadd.f32 0.0, %v4570
  %v4572 = vpop.f32.mrb[0].mxu0
  %v4573 = vadd.f32 0.0, %v4572
  %4574 = vmatprep.mubr.f32.mxu0 0.0
  %4575 = vmatmul.mubr.f32.gmra.mrb[0].mxu0 %v4448
  %v4576 = vpop.f32.mrb[0].mxu0
  %v4577 = vadd.f32 0.0, %v4576
  %v4578 = vpop.f32.mrb[0].mxu0
  %v4579 = vadd.f32 0.0, %v4578
  %4580 = vmatprep.mubr.f32.mxu0 0.0
  %4581 = vmatmul.mubr.f32.gmra.mrb[0].mxu0 %v4451
  %v4582 = vpop.f32.mrb[0].mxu0
  %v4583 = vadd.f32 0.0, %v4582
  %v4584 = vpop.f32.mrb[0].mxu0
  %v4585 = vadd.f32 0.0, %v4584
  %4586 = vmatprep.mubr.f32.mxu0 0.0
  %4587 = vmatmul.mubr.f32.gmra.mrb[0].mxu0 %v4454
  %v4588 = vpop.f32.mrb[0].mxu0
  %v4589 = vadd.f32 0.0, %v4588
  %v4590 = vpop.f32.mrb[0].mxu0
  %v4591 = vadd.f32 0.0, %v4590
  %4592 = vmatprep.mubr.f32.mxu0 0.0
  %4593 = vmatmul.mubr.f32.gmra.mrb[0].mxu0 %v4457
  %v4594 = vpop.f32.mrb[0].mxu0
  %v4595 = vadd.f32 0.0, %v4594
  %v4596 = vpop.f32.mrb[0].mxu0
  %v4597 = vadd.f32 0.0, %v4596
  %4598 = vmatprep.mubr.f32.mxu0 0.0
  %4599 = vmatmul.mubr.f32.gmra.mrb[0].mxu0 %v4460
  %v4600 = vpop.f32.mrb[0].mxu0
  %v4601 = vadd.f32 0.0, %v4600
  %v4602 = vpop.f32.mrb[0].mxu0
  %v4603 = vadd.f32 0.0, %v4602
  %4604 = vmatprep.mubr.f32.mxu0 0.0
  %4605 = vmatmul.mubr.f32.gmra.mrb[0].mxu0 %v4463
  %v4606 = vpop.f32.mrb[0].mxu0
  %v4607 = vadd.f32 0.0, %v4606
  %v4608 = vpop.f32.mrb[0].mxu0
  %v4609 = vadd.f32 0.0, %v4608
  %4610 = vmatprep.mubr.f32.mxu0 0.0
  %4611 = vmatmul.mubr.f32.gmra.mrb[0].mxu0 %v4466
  %v4612 = vpop.f32.mrb[0].mxu0
  %v4613 = vadd.f32 0.0, %v4612
  %v4614 = vpop.f32.mrb[0].mxu0
  %v4615 = vadd.f32 0.0, %v4614
  %4616 = vmatprep.mubr.f32.mxu0 0.0
  %4617 = vmatmul.mubr.f32.gmra.mrb[0].mxu0 %v4469
  %v4618 = vpop.f32.mrb[0].mxu0
  %v4619 = vadd.f32 0.0, %v4618
  %v4620 = vpop.f32.mrb[0].mxu0
  %v4621 = vadd.f32 0.0, %v4620
  %4622 = vmatprep.mubr.f32.mxu0 0.0
  %4623 = vmatmul.mubr.f32.gmra.mrb[0].mxu0 %v4472
  %v4624 = vpop.f32.mrb[0].mxu0
  %v4625 = vadd.f32 0.0, %v4624
  %v4626 = vpop.f32.mrb[0].mxu0
  %v4627 = vadd.f32 0.0, %v4626
  %4628 = vmatprep.mubr.f32.mxu0 0.0
  %4629 = vmatmul.mubr.f32.gmra.mrb[0].mxu0 %v4475
  %v4630 = vpop.f32.mrb[0].mxu0
  %v4631 = vadd.f32 0.0, %v4630
  %v4632 = vpop.f32.mrb[0].mxu0
  %v4633 = vadd.f32 0.0, %v4632
  %4634 = vmatprep.mubr.f32.mxu0 0.0
  %4635 = vmatmul.mubr.f32.gmra.mrb[0].mxu0 %v4478
  %v4636 = vpop.f32.mrb[0].mxu0
  %v4637 = vadd.f32 0.0, %v4636
  %v4638 = vpop.f32.mrb[0].mxu0
  %v4639 = vadd.f32 0.0, %v4638
  %4640 = vmatprep.mubr.f32.mxu0 0.0
  %4641 = vmatmul.mubr.f32.gmra.mrb[0].mxu0 %v4481
  %v4642 = vpop.f32.mrb[0].mxu0
  %v4643 = vadd.f32 0.0, %v4642
  %v4644 = vpop.f32.mrb[0].mxu0
  %v4645 = vadd.f32 0.0, %v4644
  %4646 = vmatprep.mubr.f32.mxu0 0.0
  %4647 = vmatmul.mubr.f32.gmra.mrb[0].mxu0 %v4484
  %v4648 = vpop.f32.mrb[0].mxu0
  %v4649 = vadd.f32 0.0, %v4648
  %v4650 = vpop.f32.mrb[0].mxu0
  %v4651 = vadd.f32 0.0, %v4650
  %4652 = vdwg.mxu0
  %v4653 = vadd.f32 %v4351, %v4559
  %v4654 = vadd.f32 %v4352, %v4561
  %v4655 = vadd.f32 %v4353, %v4565
  %v4656 = vadd.f32 %v4354, %v4567
  %v4657 = vadd.f32 %v4355, %v4571
  %v4658 = vadd.f32 %v4356, %v4573
  %v4659 = vadd.f32 %v4357, %v4577
  %v4660 = vadd.f32 %v4358, %v4579
  %v4661 = vadd.f32 %v4359, %v4583
  %v4662 = vadd.f32 %v4360, %v4585
  %v4663 = vadd.f32 %v4361, %v4589
  %v4664 = vadd.f32 %v4362, %v4591
  %v4665 = vadd.f32 %v4363, %v4595
  %v4666 = vadd.f32 %v4364, %v4597
  %v4667 = vadd.f32 %v4365, %v4601
  %v4668 = vadd.f32 %v4366, %v4603
  %v4669 = vadd.f32 %v4367, %v4607
  %v4670 = vadd.f32 %v4368, %v4609
  %v4671 = vadd.f32 %v4369, %v4613
  %v4672 = vadd.f32 %v4370, %v4615
  %v4673 = vadd.f32 %v4371, %v4619
  %v4674 = vadd.f32 %v4372, %v4621
  %v4675 = vadd.f32 %v4373, %v4625
  %v4676 = vadd.f32 %v4374, %v4627
  %v4677 = vadd.f32 %v4375, %v4631
  %v4678 = vadd.f32 %v4376, %v4633
  %v4679 = vadd.f32 %v4377, %v4637
  %v4680 = vadd.f32 %v4378, %v4639
  %v4681 = vadd.f32 %v4379, %v4643
  %v4682 = vadd.f32 %v4380, %v4645
  %v4683 = vadd.f32 %v4381, %v4649
  %v4684 = vadd.f32 %v4382, %v4651
  %v4685 = vld [vmem:[%s5] sm:$0x3]
  %v4687 = vlaneseq
  %v4688 = vshrl.u32 %v4687, 7
  %v4689 = vsub.s32 0, %v4688
  %v4690 = vrot.slane %v4685, %v4689
  %v4691 = vlaneseq
  %v4692 = vshrl.u32 %v4691, 7
  %v4693 = vsub.s32 1, %v4692
  %v4694 = vrot.slane %v4685, %v4693
  %v4697 = vadd.f32 %v4653, %v4690
  %v4698 = vadd.f32 %v4654, %v4694
  %v4699 = vadd.f32 %v4655, %v4690
  %v4700 = vadd.f32 %v4656, %v4694
  %v4701 = vadd.f32 %v4657, %v4690
  %v4702 = vadd.f32 %v4658, %v4694
  %v4703 = vadd.f32 %v4659, %v4690
  %v4704 = vadd.f32 %v4660, %v4694
  %v4705 = vadd.f32 %v4661, %v4690
  %v4706 = vadd.f32 %v4662, %v4694
  %v4707 = vadd.f32 %v4663, %v4690
  %v4708 = vadd.f32 %v4664, %v4694
  %v4709 = vadd.f32 %v4665, %v4690
  %v4710 = vadd.f32 %v4666, %v4694
  %v4711 = vadd.f32 %v4667, %v4690
  %v4712 = vadd.f32 %v4668, %v4694
  %v4713 = vadd.f32 %v4669, %v4690
  %v4714 = vadd.f32 %v4670, %v4694
  %v4715 = vadd.f32 %v4671, %v4690
  %v4716 = vadd.f32 %v4672, %v4694
  %v4717 = vadd.f32 %v4673, %v4690
  %v4718 = vadd.f32 %v4674, %v4694
  %v4719 = vadd.f32 %v4675, %v4690
  %v4720 = vadd.f32 %v4676, %v4694
  %v4721 = vadd.f32 %v4677, %v4690
  %v4722 = vadd.f32 %v4678, %v4694
  %v4723 = vadd.f32 %v4679, %v4690
  %v4724 = vadd.f32 %v4680, %v4694
  %v4725 = vadd.f32 %v4681, %v4690
  %v4726 = vadd.f32 %v4682, %v4694
  %v4727 = vadd.f32 %v4683, %v4690
  %v4728 = vadd.f32 %v4684, %v4694
  %v4729 = vsub.f32 0.0, %v4697
  %v4730 = vsub.f32 0.0, %v4698
  %v4731 = vsub.f32 0.0, %v4699
  %v4732 = vsub.f32 0.0, %v4700
  %v4733 = vsub.f32 0.0, %v4701
  %v4734 = vsub.f32 0.0, %v4702
  %v4735 = vsub.f32 0.0, %v4703
  %v4736 = vsub.f32 0.0, %v4704
  %v4737 = vsub.f32 0.0, %v4705
  %v4738 = vsub.f32 0.0, %v4706
  %v4739 = vsub.f32 0.0, %v4707
  %v4740 = vsub.f32 0.0, %v4708
  %v4741 = vsub.f32 0.0, %v4709
  %v4742 = vsub.f32 0.0, %v4710
  %v4743 = vsub.f32 0.0, %v4711
  %v4744 = vsub.f32 0.0, %v4712
  %v4745 = vsub.f32 0.0, %v4713
  %v4746 = vsub.f32 0.0, %v4714
  %v4747 = vsub.f32 0.0, %v4715
  %v4748 = vsub.f32 0.0, %v4716
  %v4749 = vsub.f32 0.0, %v4717
  %v4750 = vsub.f32 0.0, %v4718
  %v4751 = vsub.f32 0.0, %v4719
  %v4752 = vsub.f32 0.0, %v4720
  %v4753 = vsub.f32 0.0, %v4721
  %v4754 = vsub.f32 0.0, %v4722
  %v4755 = vsub.f32 0.0, %v4723
  %v4756 = vsub.f32 0.0, %v4724
  %v4757 = vsub.f32 0.0, %v4725
  %v4758 = vsub.f32 0.0, %v4726
  %v4759 = vsub.f32 0.0, %v4727
  %v4760 = vsub.f32 0.0, %v4728
  %v4761 = vmul.f32 %v4729, 1.442695
  %v4762 = vpow.pop %v4761
  %v4763 = vmul.f32 %v4730, 1.442695
  %v4764 = vpow.pop %v4763
  %v4765 = vmul.f32 %v4731, 1.442695
  %v4766 = vpow.pop %v4765
  %v4767 = vmul.f32 %v4732, 1.442695
  %v4768 = vpow.pop %v4767
  %v4769 = vmul.f32 %v4733, 1.442695
  %v4770 = vpow.pop %v4769
  %v4771 = vmul.f32 %v4734, 1.442695
  %v4772 = vpow.pop %v4771
  %v4773 = vmul.f32 %v4735, 1.442695
  %v4774 = vpow.pop %v4773
  %v4775 = vmul.f32 %v4736, 1.442695
  %v4776 = vpow.pop %v4775
  %v4777 = vmul.f32 %v4737, 1.442695
  %v4778 = vpow.pop %v4777
  %v4779 = vmul.f32 %v4738, 1.442695
  %v4780 = vpow.pop %v4779
  %v4781 = vmul.f32 %v4739, 1.442695
  %v4782 = vpow.pop %v4781
  %v4783 = vmul.f32 %v4740, 1.442695
  %v4784 = vpow.pop %v4783
  %v4785 = vmul.f32 %v4741, 1.442695
  %v4786 = vpow.pop %v4785
  %v4787 = vmul.f32 %v4742, 1.442695
  %v4788 = vpow.pop %v4787
  %v4789 = vmul.f32 %v4743, 1.442695
  %v4790 = vpow.pop %v4789
  %v4791 = vmul.f32 %v4744, 1.442695
  %v4792 = vpow.pop %v4791
  %v4793 = vmul.f32 %v4745, 1.442695
  %v4794 = vpow.pop %v4793
  %v4795 = vmul.f32 %v4746, 1.442695
  %v4796 = vpow.pop %v4795
  %v4797 = vmul.f32 %v4747, 1.442695
  %v4798 = vpow.pop %v4797
  %v4799 = vmul.f32 %v4748, 1.442695
  %v4800 = vpow.pop %v4799
  %v4801 = vmul.f32 %v4749, 1.442695
  %v4802 = vpow.pop %v4801
  %v4803 = vmul.f32 %v4750, 1.442695
  %v4804 = vpow.pop %v4803
  %v4805 = vmul.f32 %v4751, 1.442695
  %v4806 = vpow.pop %v4805
  %v4807 = vmul.f32 %v4752, 1.442695
  %v4808 = vpow.pop %v4807
  %v4809 = vmul.f32 %v4753, 1.442695
  %v4810 = vpow.pop %v4809
  %v4811 = vmul.f32 %v4754, 1.442695
  %v4812 = vpow.pop %v4811
  %v4813 = vmul.f32 %v4755, 1.442695
  %v4814 = vpow.pop %v4813
  %v4815 = vmul.f32 %v4756, 1.442695
  %v4816 = vpow.pop %v4815
  %v4817 = vmul.f32 %v4757, 1.442695
  %v4818 = vpow.pop %v4817
  %v4819 = vmul.f32 %v4758, 1.442695
  %v4820 = vpow.pop %v4819
  %v4821 = vmul.f32 %v4759, 1.442695
  %v4822 = vpow.pop %v4821
  %v4823 = vmul.f32 %v4760, 1.442695
  %v4824 = vpow.pop %v4823
  %v4825 = vadd.f32 %v4762, 1.0
  %v4826 = vadd.f32 %v4764, 1.0
  %v4827 = vadd.f32 %v4766, 1.0
  %v4828 = vadd.f32 %v4768, 1.0
  %v4829 = vadd.f32 %v4770, 1.0
  %v4830 = vadd.f32 %v4772, 1.0
  %v4831 = vadd.f32 %v4774, 1.0
  %v4832 = vadd.f32 %v4776, 1.0
  %v4833 = vadd.f32 %v4778, 1.0
  %v4834 = vadd.f32 %v4780, 1.0
  %v4835 = vadd.f32 %v4782, 1.0
  %v4836 = vadd.f32 %v4784, 1.0
  %v4837 = vadd.f32 %v4786, 1.0
  %v4838 = vadd.f32 %v4788, 1.0
  %v4839 = vadd.f32 %v4790, 1.0
  %v4840 = vadd.f32 %v4792, 1.0
  %v4841 = vadd.f32 %v4794, 1.0
  %v4842 = vadd.f32 %v4796, 1.0
  %v4843 = vadd.f32 %v4798, 1.0
  %v4844 = vadd.f32 %v4800, 1.0
  %v4845 = vadd.f32 %v4802, 1.0
  %v4846 = vadd.f32 %v4804, 1.0
  %v4847 = vadd.f32 %v4806, 1.0
  %v4848 = vadd.f32 %v4808, 1.0
  %v4849 = vadd.f32 %v4810, 1.0
  %v4850 = vadd.f32 %v4812, 1.0
  %v4851 = vadd.f32 %v4814, 1.0
  %v4852 = vadd.f32 %v4816, 1.0
  %v4853 = vadd.f32 %v4818, 1.0
  %v4854 = vadd.f32 %v4820, 1.0
  %v4855 = vadd.f32 %v4822, 1.0
  %v4856 = vadd.f32 %v4824, 1.0
  %v4857 = vrcp.pop %v4825
  %v4858 = vmul.f32 1.0, %v4857
  %v4859 = vrcp.pop %v4826
  %v4860 = vmul.f32 1.0, %v4859
  %v4861 = vrcp.pop %v4827
  %v4862 = vmul.f32 1.0, %v4861
  %v4863 = vrcp.pop %v4828
  %v4864 = vmul.f32 1.0, %v4863
  %v4865 = vrcp.pop %v4829
  %v4866 = vmul.f32 1.0, %v4865
  %v4867 = vrcp.pop %v4830
  %v4868 = vmul.f32 1.0, %v4867
  %v4869 = vrcp.pop %v4831
  %v4870 = vmul.f32 1.0, %v4869
  %v4871 = vrcp.pop %v4832
  %v4872 = vmul.f32 1.0, %v4871
  %v4873 = vrcp.pop %v4833
  %v4874 = vmul.f32 1.0, %v4873
  %v4875 = vrcp.pop %v4834
  %v4876 = vmul.f32 1.0, %v4875
  %v4877 = vrcp.pop %v4835
  %v4878 = vmul.f32 1.0, %v4877
  %v4879 = vrcp.pop %v4836
  %v4880 = vmul.f32 1.0, %v4879
  %v4881 = vrcp.pop %v4837
  %v4882 = vmul.f32 1.0, %v4881
  %v4883 = vrcp.pop %v4838
  %v4884 = vmul.f32 1.0, %v4883
  %v4885 = vrcp.pop %v4839
  %v4886 = vmul.f32 1.0, %v4885
  %v4887 = vrcp.pop %v4840
  %v4888 = vmul.f32 1.0, %v4887
  %v4889 = vrcp.pop %v4841
  %v4890 = vmul.f32 1.0, %v4889
  %v4891 = vrcp.pop %v4842
  %v4892 = vmul.f32 1.0, %v4891
  %v4893 = vrcp.pop %v4843
  %v4894 = vmul.f32 1.0, %v4893
  %v4895 = vrcp.pop %v4844
  %v4896 = vmul.f32 1.0, %v4895
  %v4897 = vrcp.pop %v4845
  %v4898 = vmul.f32 1.0, %v4897
  %v4899 = vrcp.pop %v4846
  %v4900 = vmul.f32 1.0, %v4899
  %v4901 = vrcp.pop %v4847
  %v4902 = vmul.f32 1.0, %v4901
  %v4903 = vrcp.pop %v4848
  %v4904 = vmul.f32 1.0, %v4903
  %v4905 = vrcp.pop %v4849
  %v4906 = vmul.f32 1.0, %v4905
  %v4907 = vrcp.pop %v4850
  %v4908 = vmul.f32 1.0, %v4907
  %v4909 = vrcp.pop %v4851
  %v4910 = vmul.f32 1.0, %v4909
  %v4911 = vrcp.pop %v4852
  %v4912 = vmul.f32 1.0, %v4911
  %v4913 = vrcp.pop %v4853
  %v4914 = vmul.f32 1.0, %v4913
  %v4915 = vrcp.pop %v4854
  %v4916 = vmul.f32 1.0, %v4915
  %v4917 = vrcp.pop %v4855
  %v4918 = vmul.f32 1.0, %v4917
  %v4919 = vrcp.pop %v4856
  %v4920 = vmul.f32 1.0, %v4919
  %v4921 = vld [vmem:[%s6] sm:$0xff]
  %v4922 = vld [vmem:[%s6 + $0x8] sm:$0xff]
  %v4923 = vld [vmem:[%s6 + $0x10] sm:$0xff]
  %v4924 = vld [vmem:[%s6 + $0x18] sm:$0xff]
  %v4925 = vld [vmem:[%s6 + $0x20] sm:$0xff]
  %v4926 = vld [vmem:[%s6 + $0x28] sm:$0xff]
  %v4927 = vld [vmem:[%s6 + $0x30] sm:$0xff]
  %v4928 = vld [vmem:[%s6 + $0x38] sm:$0xff]
  %v4929 = vld [vmem:[%s6 + $0x40] sm:$0xff]
  %v4930 = vld [vmem:[%s6 + $0x48] sm:$0xff]
  %v4931 = vld [vmem:[%s6 + $0x50] sm:$0xff]
  %v4932 = vld [vmem:[%s6 + $0x58] sm:$0xff]
  %v4933 = vld [vmem:[%s6 + $0x60] sm:$0xff]
  %v4934 = vld [vmem:[%s6 + $0x68] sm:$0xff]
  %v4935 = vld [vmem:[%s6 + $0x70] sm:$0xff]
  %v4936 = vld [vmem:[%s6 + $0x78] sm:$0xff]
  %v4937 = vld [vmem:[%s6 + $0x80] sm:$0xff]
  %v4938 = vld [vmem:[%s6 + $0x88] sm:$0xff]
  %v4939 = vld [vmem:[%s6 + $0x90] sm:$0xff]
  %v4940 = vld [vmem:[%s6 + $0x98] sm:$0xff]
  %v4942 = vsel %vm160, %v4860, 0
  %v4945 = vsel %vm160, %v4864, 0
  %v4948 = vsel %vm160, %v4868, 0
  %v4951 = vsel %vm160, %v4872, 0
  %v4954 = vsel %vm160, %v4876, 0
  %v4957 = vsel %vm160, %v4880, 0
  %v4960 = vsel %vm160, %v4884, 0
  %v4963 = vsel %vm160, %v4888, 0
  %v4966 = vsel %vm160, %v4892, 0
  %v4969 = vsel %vm160, %v4896, 0
  %v4972 = vsel %vm160, %v4900, 0
  %v4975 = vsel %vm160, %v4904, 0
  %v4978 = vsel %vm160, %v4908, 0
  %v4981 = vsel %vm160, %v4912, 0
  %v4984 = vsel %vm160, %v4916, 0
  %v4987 = vsel %vm160, %v4920, 0
  %4989 = vmatprep.subr.mxu0 0.0
  %4990 = vmatpush1.msra.mxu0 %v4921
  %4991 = vmatprep.subr.mxu0 0.0
  %4992 = vmatpush1.msra.mxu0 %v4922
  %4993 = vmatprep.subr.mxu0 0.0
  %4994 = vmatpush1.msra.mxu0 %v4923
  %4995 = vmatprep.subr.mxu0 0.0
  %4996 = vmatpush1.msra.mxu0 %v4924
  %4997 = vmatprep.subr.mxu0 0.0
  %4998 = vmatpush1.msra.mxu0 %v4925
  %4999 = vmatprep.subr.mxu0 0.0
  %5000 = vmatpush1.msra.mxu0 %v4926
  %5001 = vmatprep.subr.mxu0 0.0
  %5002 = vmatpush1.msra.mxu0 %v4927
  %5003 = vmatprep.subr.mxu0 0.0
  %5004 = vmatpush1.msra.mxu0 %v4928
  %5005 = vmatprep.subr.mxu0 0.0
  %5006 = vmatpush1.msra.mxu0 %v4929
  %5007 = vmatprep.subr.mxu0 0.0
  %5008 = vmatpush1.msra.mxu0 %v4930
  %5009 = vmatprep.subr.mxu0 0.0
  %5010 = vmatpush1.msra.mxu0 %v4931
  %5011 = vmatprep.subr.mxu0 0.0
  %5012 = vmatpush1.msra.mxu0 %v4932
  %5013 = vmatprep.subr.mxu0 0.0
  %5014 = vmatpush1.msra.mxu0 %v4933
  %5015 = vmatprep.subr.mxu0 0.0
  %5016 = vmatpush1.msra.mxu0 %v4934
  %5017 = vmatprep.subr.mxu0 0.0
  %5018 = vmatpush1.msra.mxu0 %v4935
  %5019 = vmatprep.subr.mxu0 0.0
  %5020 = vmatpush1.msra.mxu0 %v4936
  %5021 = vmatprep.subr.mxu0 0.0
  %5022 = vmatpush1.msra.mxu0 %v4937
  %5023 = vmatprep.subr.mxu0 0.0
  %5024 = vmatpush1.msra.mxu0 %v4938
  %5025 = vmatprep.subr.mxu0 0.0
  %5026 = vmatpush1.msra.mxu0 %v4939
  %5027 = vmatprep.subr.mxu0 0.0
  %5028 = vmatpush1.msra.mxu0 %v4940
  %5029 = vmatprep.subr.mxu0 0.0
  %5030 = vmatpush1.msra.mxu0 0.0
  %5031 = vmatprep.subr.mxu0 0.0
  %5032 = vmatpush1.msra.mxu0 0.0
  %5033 = vmatprep.subr.mxu0 0.0
  %5034 = vmatpush1.msra.mxu0 0.0
  %5035 = vmatprep.subr.mxu0 0.0
  %5036 = vmatpush1.msra.mxu0 0.0
  %5037 = vmatprep.subr.mxu0 0.0
  %5038 = vmatpush1.msra.mxu0 0.0
  %5039 = vmatprep.subr.mxu0 0.0
  %5040 = vmatpush1.msra.mxu0 0.0
  %5041 = vmatprep.subr.mxu0 0.0
  %5042 = vmatpush1.msra.mxu0 0.0
  %5043 = vmatprep.subr.mxu0 0.0
  %5044 = vmatpush1.msra.mxu0 0.0
  %5045 = vmatprep.subr.mxu0 0.0
  %5046 = vmatpush1.msra.mxu0 0.0
  %5047 = vmatprep.subr.mxu0 0.0
  %5048 = vmatpush1.msra.mxu0 0.0
  %5049 = vmatprep.subr.mxu0 0.0
  %5050 = vmatpush1.msra.mxu0 0.0
  %5051 = vmatprep.subr.mxu0 0.0
  %5052 = vmatpush1.msra.mxu0 0.0
  %5053 = vmatprep.mubr.f32.mxu0 %v4942
  %5054 = vmatmul.mubr.f32.gmra.mrb[0].mxu0 %v4858
  %v5055 = vpop.f32.mrb[0].mxu0
  %v5056 = vadd.f32 0.0, %v5055
  %v5057 = vpop.f32.mrb[0].mxu0
  %5058 = vmatprep.mubr.f32.mxu0 %v4945
  %5059 = vmatmul.mubr.f32.gmra.mrb[0].mxu0 %v4862
  %v5060 = vpop.f32.mrb[0].mxu0
  %v5061 = vadd.f32 0.0, %v5060
  %v5062 = vpop.f32.mrb[0].mxu0
  %5063 = vmatprep.mubr.f32.mxu0 %v4948
  %5064 = vmatmul.mubr.f32.gmra.mrb[0].mxu0 %v4866
  %v5065 = vpop.f32.mrb[0].mxu0
  %v5066 = vadd.f32 0.0, %v5065
  %v5067 = vpop.f32.mrb[0].mxu0
  %5068 = vmatprep.mubr.f32.mxu0 %v4951
  %5069 = vmatmul.mubr.f32.gmra.mrb[0].mxu0 %v4870
  %v5070 = vpop.f32.mrb[0].mxu0
  %v5071 = vadd.f32 0.0, %v5070
  %v5072 = vpop.f32.mrb[0].mxu0
  %5073 = vmatprep.mubr.f32.mxu0 %v4954
  %5074 = vmatmul.mubr.f32.gmra.mrb[0].mxu0 %v4874
  %v5075 = vpop.f32.mrb[0].mxu0
  %v5076 = vadd.f32 0.0, %v5075
  %v5077 = vpop.f32.mrb[0].mxu0
  %5078 = vmatprep.mubr.f32.mxu0 %v4957
  %5079 = vmatmul.mubr.f32.gmra.mrb[0].mxu0 %v4878
  %v5080 = vpop.f32.mrb[0].mxu0
  %v5081 = vadd.f32 0.0, %v5080
  %v5082 = vpop.f32.mrb[0].mxu0
  %5083 = vmatprep.mubr.f32.mxu0 %v4960
  %5084 = vmatmul.mubr.f32.gmra.mrb[0].mxu0 %v4882
  %v5085 = vpop.f32.mrb[0].mxu0
  %v5086 = vadd.f32 0.0, %v5085
  %v5087 = vpop.f32.mrb[0].mxu0
  %5088 = vmatprep.mubr.f32.mxu0 %v4963
  %5089 = vmatmul.mubr.f32.gmra.mrb[0].mxu0 %v4886
  %v5090 = vpop.f32.mrb[0].mxu0
  %v5091 = vadd.f32 0.0, %v5090
  %v5092 = vpop.f32.mrb[0].mxu0
  %5093 = vmatprep.mubr.f32.mxu0 %v4966
  %5094 = vmatmul.mubr.f32.gmra.mrb[0].mxu0 %v4890
  %v5095 = vpop.f32.mrb[0].mxu0
  %v5096 = vadd.f32 0.0, %v5095
  %v5097 = vpop.f32.mrb[0].mxu0
  %5098 = vmatprep.mubr.f32.mxu0 %v4969
  %5099 = vmatmul.mubr.f32.gmra.mrb[0].mxu0 %v4894
  %v5100 = vpop.f32.mrb[0].mxu0
  %v5101 = vadd.f32 0.0, %v5100
  %v5102 = vpop.f32.mrb[0].mxu0
  %5103 = vmatprep.mubr.f32.mxu0 %v4972
  %5104 = vmatmul.mubr.f32.gmra.mrb[0].mxu0 %v4898
  %v5105 = vpop.f32.mrb[0].mxu0
  %v5106 = vadd.f32 0.0, %v5105
  %v5107 = vpop.f32.mrb[0].mxu0
  %5108 = vmatprep.mubr.f32.mxu0 %v4975
  %5109 = vmatmul.mubr.f32.gmra.mrb[0].mxu0 %v4902
  %v5110 = vpop.f32.mrb[0].mxu0
  %v5111 = vadd.f32 0.0, %v5110
  %v5112 = vpop.f32.mrb[0].mxu0
  %5113 = vmatprep.mubr.f32.mxu0 %v4978
  %5114 = vmatmul.mubr.f32.gmra.mrb[0].mxu0 %v4906
  %v5115 = vpop.f32.mrb[0].mxu0
  %v5116 = vadd.f32 0.0, %v5115
  %v5117 = vpop.f32.mrb[0].mxu0
  %5118 = vmatprep.mubr.f32.mxu0 %v4981
  %5119 = vmatmul.mubr.f32.gmra.mrb[0].mxu0 %v4910
  %v5120 = vpop.f32.mrb[0].mxu0
  %v5121 = vadd.f32 0.0, %v5120
  %v5122 = vpop.f32.mrb[0].mxu0
  %5123 = vmatprep.mubr.f32.mxu0 %v4984
  %5124 = vmatmul.mubr.f32.gmra.mrb[0].mxu0 %v4914
  %v5125 = vpop.f32.mrb[0].mxu0
  %v5126 = vadd.f32 0.0, %v5125
  %v5127 = vpop.f32.mrb[0].mxu0
  %5128 = vmatprep.mubr.f32.mxu0 %v4987
  %5129 = vmatmul.mubr.f32.gmra.mrb[0].mxu0 %v4918
  %v5130 = vpop.f32.mrb[0].mxu0
  %v5131 = vadd.f32 0.0, %v5130
  %v5132 = vpop.f32.mrb[0].mxu0
  %5133 = vdwg.mxu0
  %vm5134 = vcmask 654336
  %5135 = vst.msk [vmem:[#allocation3] sm:$0xff] %vm5134, %v5056
  %5136 = vst.msk [vmem:[#allocation3 + $0x8] sm:$0xff] %vm5134, %v5061
  %5137 = vst.msk [vmem:[#allocation3 + $0x10] sm:$0xff] %vm5134, %v5066
  %5138 = vst.msk [vmem:[#allocation3 + $0x18] sm:$0xff] %vm5134, %v5071
  %5139 = vst.msk [vmem:[#allocation3 + $0x20] sm:$0xff] %vm5134, %v5076
  %5140 = vst.msk [vmem:[#allocation3 + $0x28] sm:$0xff] %vm5134, %v5081
  %5141 = vst.msk [vmem:[#allocation3 + $0x30] sm:$0xff] %vm5134, %v5086
  %5142 = vst.msk [vmem:[#allocation3 + $0x38] sm:$0xff] %vm5134, %v5091
  %5143 = vst.msk [vmem:[#allocation3 + $0x40] sm:$0xff] %vm5134, %v5096
  %5144 = vst.msk [vmem:[#allocation3 + $0x48] sm:$0xff] %vm5134, %v5101
  %5145 = vst.msk [vmem:[#allocation3 + $0x50] sm:$0xff] %vm5134, %v5106
  %5146 = vst.msk [vmem:[#allocation3 + $0x58] sm:$0xff] %vm5134, %v5111
  %5147 = vst.msk [vmem:[#allocation3 + $0x60] sm:$0xff] %vm5134, %v5116
  %5148 = vst.msk [vmem:[#allocation3 + $0x68] sm:$0xff] %vm5134, %v5121
  %5149 = vst.msk [vmem:[#allocation3 + $0x70] sm:$0xff] %vm5134, %v5126
  %5150 = vst.msk [vmem:[#allocation3 + $0x78] sm:$0xff] %vm5134, %v5131
  %v5151 = vld [vmem:[#allocation3] ss:$2 sm:$0xff]
  %s5152 = scalar_lea.vmem [#allocation3], 16
  %v5153 = vld [vmem:[%s5152] ss:$2 sm:$0xff]
  %s5154 = scalar_lea.vmem [#allocation3], 32
  %v5155 = vld [vmem:[%s5154] ss:$2 sm:$0xff]
  %s5156 = scalar_lea.vmem [#allocation3], 48
  %v5157 = vld [vmem:[%s5156] ss:$2 sm:$0xff]
  %s5158 = scalar_lea.vmem [#allocation3], 64
  %v5159 = vld [vmem:[%s5158] ss:$2 sm:$0xff]
  %s5160 = scalar_lea.vmem [#allocation3], 80
  %v5161 = vld [vmem:[%s5160] ss:$2 sm:$0xff]
  %s5162 = scalar_lea.vmem [#allocation3], 96
  %v5163 = vld [vmem:[%s5162] ss:$2 sm:$0xff]
  %s5164 = scalar_lea.vmem [#allocation3], 112
  %v5165 = vld [vmem:[%s5164] ss:$2 sm:$0xff]
  %s5166 = scalar_lea.vmem [#allocation3], 1
  %v5167 = vld [vmem:[%s5166] ss:$2 sm:$0xff]
  %s5168 = scalar_lea.vmem [#allocation3], 17
  %v5169 = vld [vmem:[%s5168] ss:$2 sm:$0xff]
  %s5170 = scalar_lea.vmem [#allocation3], 33
  %v5171 = vld [vmem:[%s5170] ss:$2 sm:$0xff]
  %s5172 = scalar_lea.vmem [#allocation3], 49
  %v5173 = vld [vmem:[%s5172] ss:$2 sm:$0xff]
  %s5174 = scalar_lea.vmem [#allocation3], 65
  %v5175 = vld [vmem:[%s5174] ss:$2 sm:$0xff]
  %s5176 = scalar_lea.vmem [#allocation3], 81
  %v5177 = vld [vmem:[%s5176] ss:$2 sm:$0xff]
  %s5178 = scalar_lea.vmem [#allocation3], 97
  %v5179 = vld [vmem:[%s5178] ss:$2 sm:$0xff]
  %s5180 = scalar_lea.vmem [#allocation3], 113
  %v5181 = vld [vmem:[%s5180] ss:$2 sm:$0xff]
  %v5182 = vadd.f32 %v5151, %v5167
  %v5183 = vadd.f32 %v5153, %v5169
  %v5184 = vadd.f32 %v5155, %v5171
  %v5185 = vadd.f32 %v5157, %v5173
  %v5186 = vadd.f32 %v5159, %v5175
  %v5187 = vadd.f32 %v5161, %v5177
  %v5188 = vadd.f32 %v5163, %v5179
  %v5189 = vadd.f32 %v5165, %v5181
  %v5190 = vmul.f32 %v5182, 0.5
  %v5191 = vmul.f32 %v5183, 0.5
  %v5192 = vmul.f32 %v5184, 0.5
  %v5193 = vmul.f32 %v5185, 0.5
  %v5194 = vmul.f32 %v5186, 0.5
  %v5195 = vmul.f32 %v5187, 0.5
  %v5196 = vmul.f32 %v5188, 0.5
  %v5197 = vmul.f32 %v5189, 0.5
  %v5198 = vld [vmem:[%s7] sm:$0xff]
  %v5199 = vld [vmem:[%s7 + $0x8] sm:$0xff]
  %v5200 = vld [vmem:[%s7 + $0x10] sm:$0xff]
  %v5201 = vld [vmem:[%s7 + $0x18] sm:$0xff]
  %v5202 = vld [vmem:[%s7 + $0x20] sm:$0xff]
  %v5203 = vld [vmem:[%s7 + $0x28] sm:$0xff]
  %v5204 = vld [vmem:[%s7 + $0x30] sm:$0xff]
  %v5205 = vld [vmem:[%s7 + $0x38] sm:$0xff]
  %v5206 = vld [vmem:[%s7 + $0x40] sm:$0xff]
  %v5207 = vld [vmem:[%s7 + $0x48] sm:$0xff]
  %v5208 = vrot.slane %v5190, 1
  %v5209 = vrot.slane %v5191, 1
  %v5210 = vrot.slane %v5192, 1
  %v5211 = vrot.slane %v5193, 1
  %v5212 = vrot.slane %v5194, 1
  %v5213 = vrot.slane %v5195, 1
  %v5214 = vrot.slane %v5196, 1
  %v5215 = vrot.slane %v5197, 1
  %v5216 = vsel %vm118, %v5214, %v5215
  %v5217 = vsel %vm118, %v5213, %v5214
  %v5218 = vsel %vm118, %v5212, %v5213
  %v5219 = vsel %vm118, %v5211, %v5212
  %v5220 = vsel %vm118, %v5210, %v5211
  %v5221 = vsel %vm118, %v5209, %v5210
  %v5222 = vsel %vm118, %v5208, %v5209
  %v5223 = vsel %vm118, %v5215, %v5208
  %s5224 = scalar_lea.vmem %s7, 80
  %v5225 = vld [vmem:[%s5224] sm:$0xff]
  %v5226 = vld [vmem:[%s5224 + $0x8] sm:$0xff]
  %v5227 = vld [vmem:[%s5224 + $0x10] sm:$0xff]
  %v5228 = vld [vmem:[%s5224 + $0x18] sm:$0xff]
  %v5229 = vld [vmem:[%s5224 + $0x20] sm:$0xff]
  %v5230 = vld [vmem:[%s5224 + $0x28] sm:$0xff]
  %v5231 = vld [vmem:[%s5224 + $0x30] sm:$0xff]
  %v5232 = vld [vmem:[%s5224 + $0x38] sm:$0xff]
  %v5233 = vld [vmem:[%s5224 + $0x40] sm:$0xff]
  %v5234 = vld [vmem:[%s5224 + $0x48] sm:$0xff]
  %v5236 = vsel %vm5134, %v5222, 0
  %v5239 = vsel %vm5134, %v5221, 0
  %v5242 = vsel %vm5134, %v5220, 0
  %v5245 = vsel %vm5134, %v5219, 0
  %v5248 = vsel %vm5134, %v5218, 0
  %v5251 = vsel %vm5134, %v5217, 0
  %v5254 = vsel %vm5134, %v5216, 0
  %v5257 = vsel %vm5134, %v5223, 0
  %5259 = vmatprep.subr.mxu0 0.0
  %5260 = vmatpush1.msra.mxu0 %v5225
  %5261 = vmatprep.subr.mxu0 0.0
  %5262 = vmatpush1.msra.mxu0 %v5226
  %5263 = vmatprep.subr.mxu0 0.0
  %5264 = vmatpush1.msra.mxu0 %v5227
  %5265 = vmatprep.subr.mxu0 0.0
  %5266 = vmatpush1.msra.mxu0 %v5228
  %5267 = vmatprep.subr.mxu0 0.0
  %5268 = vmatpush1.msra.mxu0 %v5229
  %5269 = vmatprep.subr.mxu0 0.0
  %5270 = vmatpush1.msra.mxu0 %v5230
  %5271 = vmatprep.subr.mxu0 0.0
  %5272 = vmatpush1.msra.mxu0 %v5231
  %5273 = vmatprep.subr.mxu0 0.0
  %5274 = vmatpush1.msra.mxu0 %v5232
  %5275 = vmatprep.subr.mxu0 0.0
  %5276 = vmatpush1.msra.mxu0 %v5233
  %5277 = vmatprep.subr.mxu0 0.0
  %5278 = vmatpush1.msra.mxu0 %v5234
  %5279 = vmatprep.subr.mxu0 0.0
  %5280 = vmatpush1.msra.mxu0 0.0
  %5281 = vmatprep.subr.mxu0 0.0
  %5282 = vmatpush1.msra.mxu0 0.0
  %5283 = vmatprep.subr.mxu0 0.0
  %5284 = vmatpush1.msra.mxu0 0.0
  %5285 = vmatprep.subr.mxu0 0.0
  %5286 = vmatpush1.msra.mxu0 0.0
  %5287 = vmatprep.subr.mxu0 0.0
  %5288 = vmatpush1.msra.mxu0 0.0
  %5289 = vmatprep.subr.mxu0 0.0
  %5290 = vmatpush1.msra.mxu0 0.0
  %5291 = vmatprep.subr.mxu0 0.0
  %5292 = vmatpush1.msra.mxu0 0.0
  %5293 = vmatprep.subr.mxu0 0.0
  %5294 = vmatpush1.msra.mxu0 0.0
  %5295 = vmatprep.subr.mxu0 0.0
  %5296 = vmatpush1.msra.mxu0 0.0
  %5297 = vmatprep.subr.mxu0 0.0
  %5298 = vmatpush1.msra.mxu0 0.0
  %5299 = vmatprep.subr.mxu0 0.0
  %5300 = vmatpush1.msra.mxu0 0.0
  %5301 = vmatprep.subr.mxu0 0.0
  %5302 = vmatpush1.msra.mxu0 0.0
  %5303 = vmatprep.subr.mxu0 0.0
  %5304 = vmatpush1.msra.mxu0 0.0
  %5305 = vmatprep.subr.mxu0 0.0
  %5306 = vmatpush1.msra.mxu0 0.0
  %5307 = vmatprep.subr.mxu0 0.0
  %5308 = vmatpush1.msra.mxu0 0.0
  %5309 = vmatprep.subr.mxu0 0.0
  %5310 = vmatpush1.msra.mxu0 0.0
  %5311 = vmatprep.subr.mxu0 0.0
  %5312 = vmatpush1.msra.mxu0 0.0
  %5313 = vmatprep.subr.mxu0 0.0
  %5314 = vmatpush1.msra.mxu0 0.0
  %5315 = vmatprep.subr.mxu0 0.0
  %5316 = vmatpush1.msra.mxu0 0.0
  %5317 = vmatprep.subr.mxu0 0.0
  %5318 = vmatpush1.msra.mxu0 0.0
  %5319 = vmatprep.subr.mxu0 0.0
  %5320 = vmatpush1.msra.mxu0 0.0
  %5321 = vmatprep.subr.mxu0 0.0
  %5322 = vmatpush1.msra.mxu0 0.0
  %5323 = vmatprep.mubr.f32.mxu0 0.0
  %5324 = vmatmul.mubr.f32.gmra.mrb[0].mxu0 %v5236
  %v5325 = vpop.f32.mrb[0].mxu0
  %v5326 = vadd.f32 0.0, %v5325
  %v5327 = vpop.f32.mrb[0].mxu0
  %5328 = vmatprep.mubr.f32.mxu0 0.0
  %5329 = vmatmul.mubr.f32.gmra.mrb[0].mxu0 %v5239
  %v5330 = vpop.f32.mrb[0].mxu0
  %v5331 = vadd.f32 0.0, %v5330
  %v5332 = vpop.f32.mrb[0].mxu0
  %5333 = vmatprep.mubr.f32.mxu0 0.0
  %5334 = vmatmul.mubr.f32.gmra.mrb[0].mxu0 %v5242
  %v5335 = vpop.f32.mrb[0].mxu0
  %v5336 = vadd.f32 0.0, %v5335
  %v5337 = vpop.f32.mrb[0].mxu0
  %5338 = vmatprep.mubr.f32.mxu0 0.0
  %5339 = vmatmul.mubr.f32.gmra.mrb[0].mxu0 %v5245
  %v5340 = vpop.f32.mrb[0].mxu0
  %v5341 = vadd.f32 0.0, %v5340
  %v5342 = vpop.f32.mrb[0].mxu0
  %5343 = vmatprep.mubr.f32.mxu0 0.0
  %5344 = vmatmul.mubr.f32.gmra.mrb[0].mxu0 %v5248
  %v5345 = vpop.f32.mrb[0].mxu0
  %v5346 = vadd.f32 0.0, %v5345
  %v5347 = vpop.f32.mrb[0].mxu0
  %5348 = vmatprep.mubr.f32.mxu0 0.0
  %5349 = vmatmul.mubr.f32.gmra.mrb[0].mxu0 %v5251
  %v5350 = vpop.f32.mrb[0].mxu0
  %v5351 = vadd.f32 0.0, %v5350
  %v5352 = vpop.f32.mrb[0].mxu0
  %5353 = vmatprep.mubr.f32.mxu0 0.0
  %5354 = vmatmul.mubr.f32.gmra.mrb[0].mxu0 %v5254
  %v5355 = vpop.f32.mrb[0].mxu0
  %v5356 = vadd.f32 0.0, %v5355
  %v5357 = vpop.f32.mrb[0].mxu0
  %5358 = vmatprep.mubr.f32.mxu0 0.0
  %5359 = vmatmul.mubr.f32.gmra.mrb[0].mxu0 %v5257
  %v5360 = vpop.f32.mrb[0].mxu0
  %v5361 = vadd.f32 0.0, %v5360
  %v5362 = vpop.f32.mrb[0].mxu0
  %5363 = vdwg.mxu0
  %v5365 = vsel %vm5134, %v5190, 0
  %v5368 = vsel %vm5134, %v5191, 0
  %v5371 = vsel %vm5134, %v5192, 0
  %v5374 = vsel %vm5134, %v5193, 0
  %v5377 = vsel %vm5134, %v5194, 0
  %v5380 = vsel %vm5134, %v5195, 0
  %v5383 = vsel %vm5134, %v5196, 0
  %v5386 = vsel %vm5134, %v5197, 0
  %5388 = vmatprep.subr.mxu0 0.0
  %5389 = vmatpush1.msra.mxu0 %v5198
  %5390 = vmatprep.subr.mxu0 0.0
  %5391 = vmatpush1.msra.mxu0 %v5199
  %5392 = vmatprep.subr.mxu0 0.0
  %5393 = vmatpush1.msra.mxu0 %v5200
  %5394 = vmatprep.subr.mxu0 0.0
  %5395 = vmatpush1.msra.mxu0 %v5201
  %5396 = vmatprep.subr.mxu0 0.0
  %5397 = vmatpush1.msra.mxu0 %v5202
  %5398 = vmatprep.subr.mxu0 0.0
  %5399 = vmatpush1.msra.mxu0 %v5203
  %5400 = vmatprep.subr.mxu0 0.0
  %5401 = vmatpush1.msra.mxu0 %v5204
  %5402 = vmatprep.subr.mxu0 0.0
  %5403 = vmatpush1.msra.mxu0 %v5205
  %5404 = vmatprep.subr.mxu0 0.0
  %5405 = vmatpush1.msra.mxu0 %v5206
  %5406 = vmatprep.subr.mxu0 0.0
  %5407 = vmatpush1.msra.mxu0 %v5207
  %5408 = vmatprep.subr.mxu0 0.0
  %5409 = vmatpush1.msra.mxu0 0.0
  %5410 = vmatprep.subr.mxu0 0.0
  %5411 = vmatpush1.msra.mxu0 0.0
  %5412 = vmatprep.subr.mxu0 0.0
  %5413 = vmatpush1.msra.mxu0 0.0
  %5414 = vmatprep.subr.mxu0 0.0
  %5415 = vmatpush1.msra.mxu0 0.0
  %5416 = vmatprep.subr.mxu0 0.0
  %5417 = vmatpush1.msra.mxu0 0.0
  %5418 = vmatprep.subr.mxu0 0.0
  %5419 = vmatpush1.msra.mxu0 0.0
  %5420 = vmatprep.subr.mxu0 0.0
  %5421 = vmatpush1.msra.mxu0 0.0
  %5422 = vmatprep.subr.mxu0 0.0
  %5423 = vmatpush1.msra.mxu0 0.0
  %5424 = vmatprep.subr.mxu0 0.0
  %5425 = vmatpush1.msra.mxu0 0.0
  %5426 = vmatprep.subr.mxu0 0.0
  %5427 = vmatpush1.msra.mxu0 0.0
  %5428 = vmatprep.subr.mxu0 0.0
  %5429 = vmatpush1.msra.mxu0 0.0
  %5430 = vmatprep.subr.mxu0 0.0
  %5431 = vmatpush1.msra.mxu0 0.0
  %5432 = vmatprep.subr.mxu0 0.0
  %5433 = vmatpush1.msra.mxu0 0.0
  %5434 = vmatprep.subr.mxu0 0.0
  %5435 = vmatpush1.msra.mxu0 0.0
  %5436 = vmatprep.subr.mxu0 0.0
  %5437 = vmatpush1.msra.mxu0 0.0
  %5438 = vmatprep.subr.mxu0 0.0
  %5439 = vmatpush1.msra.mxu0 0.0
  %5440 = vmatprep.subr.mxu0 0.0
  %5441 = vmatpush1.msra.mxu0 0.0
  %5442 = vmatprep.subr.mxu0 0.0
  %5443 = vmatpush1.msra.mxu0 0.0
  %5444 = vmatprep.subr.mxu0 0.0
  %5445 = vmatpush1.msra.mxu0 0.0
  %5446 = vmatprep.subr.mxu0 0.0
  %5447 = vmatpush1.msra.mxu0 0.0
  %5448 = vmatprep.subr.mxu0 0.0
  %5449 = vmatpush1.msra.mxu0 0.0
  %5450 = vmatprep.subr.mxu0 0.0
  %5451 = vmatpush1.msra.mxu0 0.0
  %5452 = vmatprep.mubr.f32.mxu0 0.0
  %5453 = vmatmul.mubr.f32.gmra.mrb[0].mxu0 %v5365
  %v5454 = vpop.f32.mrb[0].mxu0
  %v5455 = vadd.f32 %v5326, %v5454
  %v5456 = vpop.f32.mrb[0].mxu0
  %5457 = vmatprep.mubr.f32.mxu0 0.0
  %5458 = vmatmul.mubr.f32.gmra.mrb[0].mxu0 %v5368
  %v5459 = vpop.f32.mrb[0].mxu0
  %v5460 = vadd.f32 %v5331, %v5459
  %v5461 = vpop.f32.mrb[0].mxu0
  %5462 = vmatprep.mubr.f32.mxu0 0.0
  %5463 = vmatmul.mubr.f32.gmra.mrb[0].mxu0 %v5371
  %v5464 = vpop.f32.mrb[0].mxu0
  %v5465 = vadd.f32 %v5336, %v5464
  %v5466 = vpop.f32.mrb[0].mxu0
  %5467 = vmatprep.mubr.f32.mxu0 0.0
  %5468 = vmatmul.mubr.f32.gmra.mrb[0].mxu0 %v5374
  %v5469 = vpop.f32.mrb[0].mxu0
  %v5470 = vadd.f32 %v5341, %v5469
  %v5471 = vpop.f32.mrb[0].mxu0
  %5472 = vmatprep.mubr.f32.mxu0 0.0
  %5473 = vmatmul.mubr.f32.gmra.mrb[0].mxu0 %v5377
  %v5474 = vpop.f32.mrb[0].mxu0
  %v5475 = vadd.f32 %v5346, %v5474
  %v5476 = vpop.f32.mrb[0].mxu0
  %5477 = vmatprep.mubr.f32.mxu0 0.0
  %5478 = vmatmul.mubr.f32.gmra.mrb[0].mxu0 %v5380
  %v5479 = vpop.f32.mrb[0].mxu0
  %v5480 = vadd.f32 %v5351, %v5479
  %v5481 = vpop.f32.mrb[0].mxu0
  %5482 = vmatprep.mubr.f32.mxu0 0.0
  %5483 = vmatmul.mubr.f32.gmra.mrb[0].mxu0 %v5383
  %v5484 = vpop.f32.mrb[0].mxu0
  %v5485 = vadd.f32 %v5356, %v5484
  %v5486 = vpop.f32.mrb[0].mxu0
  %5487 = vmatprep.mubr.f32.mxu0 0.0
  %5488 = vmatmul.mubr.f32.gmra.mrb[0].mxu0 %v5386
  %v5489 = vpop.f32.mrb[0].mxu0
  %v5490 = vadd.f32 %v5361, %v5489
  %v5491 = vpop.f32.mrb[0].mxu0
  %5492 = vdwg.mxu0
  %v5493 = vrot.slane %v5190, 2
  %v5494 = vrot.slane %v5191, 2
  %v5495 = vrot.slane %v5192, 2
  %v5496 = vrot.slane %v5193, 2
  %v5497 = vrot.slane %v5194, 2
  %v5498 = vrot.slane %v5195, 2
  %v5499 = vrot.slane %v5196, 2
  %v5500 = vrot.slane %v5197, 2
  %v5501 = vsel %vm899, %v5499, %v5500
  %v5502 = vsel %vm899, %v5498, %v5499
  %v5503 = vsel %vm899, %v5497, %v5498
  %v5504 = vsel %vm899, %v5496, %v5497
  %v5505 = vsel %vm899, %v5495, %v5496
  %v5506 = vsel %vm899, %v5494, %v5495
  %v5507 = vsel %vm899, %v5493, %v5494
  %v5508 = vsel %vm899, %v5500, %v5493
  %s5509 = scalar_lea.vmem %s7, 160
  %v5510 = vld [vmem:[%s5509] sm:$0xff]
  %v5511 = vld [vmem:[%s5509 + $0x8] sm:$0xff]
  %v5512 = vld [vmem:[%s5509 + $0x10] sm:$0xff]
  %v5513 = vld [vmem:[%s5509 + $0x18] sm:$0xff]
  %v5514 = vld [vmem:[%s5509 + $0x20] sm:$0xff]
  %v5515 = vld [vmem:[%s5509 + $0x28] sm:$0xff]
  %v5516 = vld [vmem:[%s5509 + $0x30] sm:$0xff]
  %v5517 = vld [vmem:[%s5509 + $0x38] sm:$0xff]
  %v5518 = vld [vmem:[%s5509 + $0x40] sm:$0xff]
  %v5519 = vld [vmem:[%s5509 + $0x48] sm:$0xff]
  %v5521 = vsel %vm5134, %v5507, 0
  %v5524 = vsel %vm5134, %v5506, 0
  %v5527 = vsel %vm5134, %v5505, 0
  %v5530 = vsel %vm5134, %v5504, 0
  %v5533 = vsel %vm5134, %v5503, 0
  %v5536 = vsel %vm5134, %v5502, 0
  %v5539 = vsel %vm5134, %v5501, 0
  %v5542 = vsel %vm5134, %v5508, 0
  %5544 = vmatprep.subr.mxu0 0.0
  %5545 = vmatpush1.msra.mxu0 %v5510
  %5546 = vmatprep.subr.mxu0 0.0
  %5547 = vmatpush1.msra.mxu0 %v5511
  %5548 = vmatprep.subr.mxu0 0.0
  %5549 = vmatpush1.msra.mxu0 %v5512
  %5550 = vmatprep.subr.mxu0 0.0
  %5551 = vmatpush1.msra.mxu0 %v5513
  %5552 = vmatprep.subr.mxu0 0.0
  %5553 = vmatpush1.msra.mxu0 %v5514
  %5554 = vmatprep.subr.mxu0 0.0
  %5555 = vmatpush1.msra.mxu0 %v5515
  %5556 = vmatprep.subr.mxu0 0.0
  %5557 = vmatpush1.msra.mxu0 %v5516
  %5558 = vmatprep.subr.mxu0 0.0
  %5559 = vmatpush1.msra.mxu0 %v5517
  %5560 = vmatprep.subr.mxu0 0.0
  %5561 = vmatpush1.msra.mxu0 %v5518
  %5562 = vmatprep.subr.mxu0 0.0
  %5563 = vmatpush1.msra.mxu0 %v5519
  %5564 = vmatprep.subr.mxu0 0.0
  %5565 = vmatpush1.msra.mxu0 0.0
  %5566 = vmatprep.subr.mxu0 0.0
  %5567 = vmatpush1.msra.mxu0 0.0
  %5568 = vmatprep.subr.mxu0 0.0
  %5569 = vmatpush1.msra.mxu0 0.0
  %5570 = vmatprep.subr.mxu0 0.0
  %5571 = vmatpush1.msra.mxu0 0.0
  %5572 = vmatprep.subr.mxu0 0.0
  %5573 = vmatpush1.msra.mxu0 0.0
  %5574 = vmatprep.subr.mxu0 0.0
  %5575 = vmatpush1.msra.mxu0 0.0
  %5576 = vmatprep.subr.mxu0 0.0
  %5577 = vmatpush1.msra.mxu0 0.0
  %5578 = vmatprep.subr.mxu0 0.0
  %5579 = vmatpush1.msra.mxu0 0.0
  %5580 = vmatprep.subr.mxu0 0.0
  %5581 = vmatpush1.msra.mxu0 0.0
  %5582 = vmatprep.subr.mxu0 0.0
  %5583 = vmatpush1.msra.mxu0 0.0
  %5584 = vmatprep.subr.mxu0 0.0
  %5585 = vmatpush1.msra.mxu0 0.0
  %5586 = vmatprep.subr.mxu0 0.0
  %5587 = vmatpush1.msra.mxu0 0.0
  %5588 = vmatprep.subr.mxu0 0.0
  %5589 = vmatpush1.msra.mxu0 0.0
  %5590 = vmatprep.subr.mxu0 0.0
  %5591 = vmatpush1.msra.mxu0 0.0
  %5592 = vmatprep.subr.mxu0 0.0
  %5593 = vmatpush1.msra.mxu0 0.0
  %5594 = vmatprep.subr.mxu0 0.0
  %5595 = vmatpush1.msra.mxu0 0.0
  %5596 = vmatprep.subr.mxu0 0.0
  %5597 = vmatpush1.msra.mxu0 0.0
  %5598 = vmatprep.subr.mxu0 0.0
  %5599 = vmatpush1.msra.mxu0 0.0
  %5600 = vmatprep.subr.mxu0 0.0
  %5601 = vmatpush1.msra.mxu0 0.0
  %5602 = vmatprep.subr.mxu0 0.0
  %5603 = vmatpush1.msra.mxu0 0.0
  %5604 = vmatprep.subr.mxu0 0.0
  %5605 = vmatpush1.msra.mxu0 0.0
  %5606 = vmatprep.subr.mxu0 0.0
  %5607 = vmatpush1.msra.mxu0 0.0
  %5608 = vmatprep.mubr.f32.mxu0 0.0
  %5609 = vmatmul.mubr.f32.gmra.mrb[0].mxu0 %v5521
  %v5610 = vpop.f32.mrb[0].mxu0
  %v5611 = vadd.f32 0.0, %v5610
  %v5612 = vpop.f32.mrb[0].mxu0
  %5613 = vmatprep.mubr.f32.mxu0 0.0
  %5614 = vmatmul.mubr.f32.gmra.mrb[0].mxu0 %v5524
  %v5615 = vpop.f32.mrb[0].mxu0
  %v5616 = vadd.f32 0.0, %v5615
  %v5617 = vpop.f32.mrb[0].mxu0
  %5618 = vmatprep.mubr.f32.mxu0 0.0
  %5619 = vmatmul.mubr.f32.gmra.mrb[0].mxu0 %v5527
  %v5620 = vpop.f32.mrb[0].mxu0
  %v5621 = vadd.f32 0.0, %v5620
  %v5622 = vpop.f32.mrb[0].mxu0
  %5623 = vmatprep.mubr.f32.mxu0 0.0
  %5624 = vmatmul.mubr.f32.gmra.mrb[0].mxu0 %v5530
  %v5625 = vpop.f32.mrb[0].mxu0
  %v5626 = vadd.f32 0.0, %v5625
  %v5627 = vpop.f32.mrb[0].mxu0
  %5628 = vmatprep.mubr.f32.mxu0 0.0
  %5629 = vmatmul.mubr.f32.gmra.mrb[0].mxu0 %v5533
  %v5630 = vpop.f32.mrb[0].mxu0
  %v5631 = vadd.f32 0.0, %v5630
  %v5632 = vpop.f32.mrb[0].mxu0
  %5633 = vmatprep.mubr.f32.mxu0 0.0
  %5634 = vmatmul.mubr.f32.gmra.mrb[0].mxu0 %v5536
  %v5635 = vpop.f32.mrb[0].mxu0
  %v5636 = vadd.f32 0.0, %v5635
  %v5637 = vpop.f32.mrb[0].mxu0
  %5638 = vmatprep.mubr.f32.mxu0 0.0
  %5639 = vmatmul.mubr.f32.gmra.mrb[0].mxu0 %v5539
  %v5640 = vpop.f32.mrb[0].mxu0
  %v5641 = vadd.f32 0.0, %v5640
  %v5642 = vpop.f32.mrb[0].mxu0
  %5643 = vmatprep.mubr.f32.mxu0 0.0
  %5644 = vmatmul.mubr.f32.gmra.mrb[0].mxu0 %v5542
  %v5645 = vpop.f32.mrb[0].mxu0
  %v5646 = vadd.f32 0.0, %v5645
  %v5647 = vpop.f32.mrb[0].mxu0
  %5648 = vdwg.mxu0
  %v5649 = vadd.f32 %v5455, %v5611
  %v5650 = vadd.f32 %v5460, %v5616
  %v5651 = vadd.f32 %v5465, %v5621
  %v5652 = vadd.f32 %v5470, %v5626
  %v5653 = vadd.f32 %v5475, %v5631
  %v5654 = vadd.f32 %v5480, %v5636
  %v5655 = vadd.f32 %v5485, %v5641
  %v5656 = vadd.f32 %v5490, %v5646
  %v5657 = vrot.slane %v5190, 3
  %v5658 = vrot.slane %v5191, 3
  %v5659 = vrot.slane %v5192, 3
  %v5660 = vrot.slane %v5193, 3
  %v5661 = vrot.slane %v5194, 3
  %v5662 = vrot.slane %v5195, 3
  %v5663 = vrot.slane %v5196, 3
  %v5664 = vrot.slane %v5197, 3
  %v5665 = vsel %vm1390, %v5663, %v5664
  %v5666 = vsel %vm1390, %v5662, %v5663
  %v5667 = vsel %vm1390, %v5661, %v5662
  %v5668 = vsel %vm1390, %v5660, %v5661
  %v5669 = vsel %vm1390, %v5659, %v5660
  %v5670 = vsel %vm1390, %v5658, %v5659
  %v5671 = vsel %vm1390, %v5657, %v5658
  %v5672 = vsel %vm1390, %v5664, %v5657
  %s5673 = scalar_lea.vmem %s7, 240
  %v5674 = vld [vmem:[%s5673] sm:$0xff]
  %v5675 = vld [vmem:[%s5673 + $0x8] sm:$0xff]
  %v5676 = vld [vmem:[%s5673 + $0x10] sm:$0xff]
  %v5677 = vld [vmem:[%s5673 + $0x18] sm:$0xff]
  %v5678 = vld [vmem:[%s5673 + $0x20] sm:$0xff]
  %v5679 = vld [vmem:[%s5673 + $0x28] sm:$0xff]
  %v5680 = vld [vmem:[%s5673 + $0x30] sm:$0xff]
  %v5681 = vld [vmem:[%s5673 + $0x38] sm:$0xff]
  %v5682 = vld [vmem:[%s5673 + $0x40] sm:$0xff]
  %v5683 = vld [vmem:[%s5673 + $0x48] sm:$0xff]
  %v5685 = vsel %vm5134, %v5671, 0
  %v5688 = vsel %vm5134, %v5670, 0
  %v5691 = vsel %vm5134, %v5669, 0
  %v5694 = vsel %vm5134, %v5668, 0
  %v5697 = vsel %vm5134, %v5667, 0
  %v5700 = vsel %vm5134, %v5666, 0
  %v5703 = vsel %vm5134, %v5665, 0
  %v5706 = vsel %vm5134, %v5672, 0
  %5708 = vmatprep.subr.mxu0 0.0
  %5709 = vmatpush1.msra.mxu0 %v5674
  %5710 = vmatprep.subr.mxu0 0.0
  %5711 = vmatpush1.msra.mxu0 %v5675
  %5712 = vmatprep.subr.mxu0 0.0
  %5713 = vmatpush1.msra.mxu0 %v5676
  %5714 = vmatprep.subr.mxu0 0.0
  %5715 = vmatpush1.msra.mxu0 %v5677
  %5716 = vmatprep.subr.mxu0 0.0
  %5717 = vmatpush1.msra.mxu0 %v5678
  %5718 = vmatprep.subr.mxu0 0.0
  %5719 = vmatpush1.msra.mxu0 %v5679
  %5720 = vmatprep.subr.mxu0 0.0
  %5721 = vmatpush1.msra.mxu0 %v5680
  %5722 = vmatprep.subr.mxu0 0.0
  %5723 = vmatpush1.msra.mxu0 %v5681
  %5724 = vmatprep.subr.mxu0 0.0
  %5725 = vmatpush1.msra.mxu0 %v5682
  %5726 = vmatprep.subr.mxu0 0.0
  %5727 = vmatpush1.msra.mxu0 %v5683
  %5728 = vmatprep.subr.mxu0 0.0
  %5729 = vmatpush1.msra.mxu0 0.0
  %5730 = vmatprep.subr.mxu0 0.0
  %5731 = vmatpush1.msra.mxu0 0.0
  %5732 = vmatprep.subr.mxu0 0.0
  %5733 = vmatpush1.msra.mxu0 0.0
  %5734 = vmatprep.subr.mxu0 0.0
  %5735 = vmatpush1.msra.mxu0 0.0
  %5736 = vmatprep.subr.mxu0 0.0
  %5737 = vmatpush1.msra.mxu0 0.0
  %5738 = vmatprep.subr.mxu0 0.0
  %5739 = vmatpush1.msra.mxu0 0.0
  %5740 = vmatprep.subr.mxu0 0.0
  %5741 = vmatpush1.msra.mxu0 0.0
  %5742 = vmatprep.subr.mxu0 0.0
  %5743 = vmatpush1.msra.mxu0 0.0
  %5744 = vmatprep.subr.mxu0 0.0
  %5745 = vmatpush1.msra.mxu0 0.0
  %5746 = vmatprep.subr.mxu0 0.0
  %5747 = vmatpush1.msra.mxu0 0.0
  %5748 = vmatprep.subr.mxu0 0.0
  %5749 = vmatpush1.msra.mxu0 0.0
  %5750 = vmatprep.subr.mxu0 0.0
  %5751 = vmatpush1.msra.mxu0 0.0
  %5752 = vmatprep.subr.mxu0 0.0
  %5753 = vmatpush1.msra.mxu0 0.0
  %5754 = vmatprep.subr.mxu0 0.0
  %5755 = vmatpush1.msra.mxu0 0.0
  %5756 = vmatprep.subr.mxu0 0.0
  %5757 = vmatpush1.msra.mxu0 0.0
  %5758 = vmatprep.subr.mxu0 0.0
  %5759 = vmatpush1.msra.mxu0 0.0
  %5760 = vmatprep.subr.mxu0 0.0
  %5761 = vmatpush1.msra.mxu0 0.0
  %5762 = vmatprep.subr.mxu0 0.0
  %5763 = vmatpush1.msra.mxu0 0.0
  %5764 = vmatprep.subr.mxu0 0.0
  %5765 = vmatpush1.msra.mxu0 0.0
  %5766 = vmatprep.subr.mxu0 0.0
  %5767 = vmatpush1.msra.mxu0 0.0
  %5768 = vmatprep.subr.mxu0 0.0
  %5769 = vmatpush1.msra.mxu0 0.0
  %5770 = vmatprep.subr.mxu0 0.0
  %5771 = vmatpush1.msra.mxu0 0.0
  %5772 = vmatprep.mubr.f32.mxu0 0.0
  %5773 = vmatmul.mubr.f32.gmra.mrb[0].mxu0 %v5685
  %v5774 = vpop.f32.mrb[0].mxu0
  %v5775 = vadd.f32 0.0, %v5774
  %v5776 = vpop.f32.mrb[0].mxu0
  %5777 = vmatprep.mubr.f32.mxu0 0.0
  %5778 = vmatmul.mubr.f32.gmra.mrb[0].mxu0 %v5688
  %v5779 = vpop.f32.mrb[0].mxu0
  %v5780 = vadd.f32 0.0, %v5779
  %v5781 = vpop.f32.mrb[0].mxu0
  %5782 = vmatprep.mubr.f32.mxu0 0.0
  %5783 = vmatmul.mubr.f32.gmra.mrb[0].mxu0 %v5691
  %v5784 = vpop.f32.mrb[0].mxu0
  %v5785 = vadd.f32 0.0, %v5784
  %v5786 = vpop.f32.mrb[0].mxu0
  %5787 = vmatprep.mubr.f32.mxu0 0.0
  %5788 = vmatmul.mubr.f32.gmra.mrb[0].mxu0 %v5694
  %v5789 = vpop.f32.mrb[0].mxu0
  %v5790 = vadd.f32 0.0, %v5789
  %v5791 = vpop.f32.mrb[0].mxu0
  %5792 = vmatprep.mubr.f32.mxu0 0.0
  %5793 = vmatmul.mubr.f32.gmra.mrb[0].mxu0 %v5697
  %v5794 = vpop.f32.mrb[0].mxu0
  %v5795 = vadd.f32 0.0, %v5794
  %v5796 = vpop.f32.mrb[0].mxu0
  %5797 = vmatprep.mubr.f32.mxu0 0.0
  %5798 = vmatmul.mubr.f32.gmra.mrb[0].mxu0 %v5700
  %v5799 = vpop.f32.mrb[0].mxu0
  %v5800 = vadd.f32 0.0, %v5799
  %v5801 = vpop.f32.mrb[0].mxu0
  %5802 = vmatprep.mubr.f32.mxu0 0.0
  %5803 = vmatmul.mubr.f32.gmra.mrb[0].mxu0 %v5703
  %v5804 = vpop.f32.mrb[0].mxu0
  %v5805 = vadd.f32 0.0, %v5804
  %v5806 = vpop.f32.mrb[0].mxu0
  %5807 = vmatprep.mubr.f32.mxu0 0.0
  %5808 = vmatmul.mubr.f32.gmra.mrb[0].mxu0 %v5706
  %v5809 = vpop.f32.mrb[0].mxu0
  %v5810 = vadd.f32 0.0, %v5809
  %v5811 = vpop.f32.mrb[0].mxu0
  %5812 = vdwg.mxu0
  %v5813 = vadd.f32 %v5649, %v5775
  %v5814 = vadd.f32 %v5650, %v5780
  %v5815 = vadd.f32 %v5651, %v5785
  %v5816 = vadd.f32 %v5652, %v5790
  %v5817 = vadd.f32 %v5653, %v5795
  %v5818 = vadd.f32 %v5654, %v5800
  %v5819 = vadd.f32 %v5655, %v5805
  %v5820 = vadd.f32 %v5656, %v5810
  %v5821 = vrot.slane %v5190, 4
  %v5822 = vrot.slane %v5191, 4
  %v5823 = vrot.slane %v5192, 4
  %v5824 = vrot.slane %v5193, 4
  %v5825 = vrot.slane %v5194, 4
  %v5826 = vrot.slane %v5195, 4
  %v5827 = vrot.slane %v5196, 4
  %v5828 = vrot.slane %v5197, 4
  %v5829 = vsel %vm1881, %v5827, %v5828
  %v5830 = vsel %vm1881, %v5826, %v5827
  %v5831 = vsel %vm1881, %v5825, %v5826
  %v5832 = vsel %vm1881, %v5824, %v5825
  %v5833 = vsel %vm1881, %v5823, %v5824
  %v5834 = vsel %vm1881, %v5822, %v5823
  %v5835 = vsel %vm1881, %v5821, %v5822
  %v5836 = vsel %vm1881, %v5828, %v5821
  %s5837 = scalar_lea.vmem %s7, 320
  %v5838 = vld [vmem:[%s5837] sm:$0xff]
  %v5839 = vld [vmem:[%s5837 + $0x8] sm:$0xff]
  %v5840 = vld [vmem:[%s5837 + $0x10] sm:$0xff]
  %v5841 = vld [vmem:[%s5837 + $0x18] sm:$0xff]
  %v5842 = vld [vmem:[%s5837 + $0x20] sm:$0xff]
  %v5843 = vld [vmem:[%s5837 + $0x28] sm:$0xff]
  %v5844 = vld [vmem:[%s5837 + $0x30] sm:$0xff]
  %v5845 = vld [vmem:[%s5837 + $0x38] sm:$0xff]
  %v5846 = vld [vmem:[%s5837 + $0x40] sm:$0xff]
  %v5847 = vld [vmem:[%s5837 + $0x48] sm:$0xff]
  %v5849 = vsel %vm5134, %v5835, 0
  %v5852 = vsel %vm5134, %v5834, 0
  %v5855 = vsel %vm5134, %v5833, 0
  %v5858 = vsel %vm5134, %v5832, 0
  %v5861 = vsel %vm5134, %v5831, 0
  %v5864 = vsel %vm5134, %v5830, 0
  %v5867 = vsel %vm5134, %v5829, 0
  %v5870 = vsel %vm5134, %v5836, 0
  %5872 = vmatprep.subr.mxu0 0.0
  %5873 = vmatpush1.msra.mxu0 %v5838
  %5874 = vmatprep.subr.mxu0 0.0
  %5875 = vmatpush1.msra.mxu0 %v5839
  %5876 = vmatprep.subr.mxu0 0.0
  %5877 = vmatpush1.msra.mxu0 %v5840
  %5878 = vmatprep.subr.mxu0 0.0
  %5879 = vmatpush1.msra.mxu0 %v5841
  %5880 = vmatprep.subr.mxu0 0.0
  %5881 = vmatpush1.msra.mxu0 %v5842
  %5882 = vmatprep.subr.mxu0 0.0
  %5883 = vmatpush1.msra.mxu0 %v5843
  %5884 = vmatprep.subr.mxu0 0.0
  %5885 = vmatpush1.msra.mxu0 %v5844
  %5886 = vmatprep.subr.mxu0 0.0
  %5887 = vmatpush1.msra.mxu0 %v5845
  %5888 = vmatprep.subr.mxu0 0.0
  %5889 = vmatpush1.msra.mxu0 %v5846
  %5890 = vmatprep.subr.mxu0 0.0
  %5891 = vmatpush1.msra.mxu0 %v5847
  %5892 = vmatprep.subr.mxu0 0.0
  %5893 = vmatpush1.msra.mxu0 0.0
  %5894 = vmatprep.subr.mxu0 0.0
  %5895 = vmatpush1.msra.mxu0 0.0
  %5896 = vmatprep.subr.mxu0 0.0
  %5897 = vmatpush1.msra.mxu0 0.0
  %5898 = vmatprep.subr.mxu0 0.0
  %5899 = vmatpush1.msra.mxu0 0.0
  %5900 = vmatprep.subr.mxu0 0.0
  %5901 = vmatpush1.msra.mxu0 0.0
  %5902 = vmatprep.subr.mxu0 0.0
  %5903 = vmatpush1.msra.mxu0 0.0
  %5904 = vmatprep.subr.mxu0 0.0
  %5905 = vmatpush1.msra.mxu0 0.0
  %5906 = vmatprep.subr.mxu0 0.0
  %5907 = vmatpush1.msra.mxu0 0.0
  %5908 = vmatprep.subr.mxu0 0.0
  %5909 = vmatpush1.msra.mxu0 0.0
  %5910 = vmatprep.subr.mxu0 0.0
  %5911 = vmatpush1.msra.mxu0 0.0
  %5912 = vmatprep.subr.mxu0 0.0
  %5913 = vmatpush1.msra.mxu0 0.0
  %5914 = vmatprep.subr.mxu0 0.0
  %5915 = vmatpush1.msra.mxu0 0.0
  %5916 = vmatprep.subr.mxu0 0.0
  %5917 = vmatpush1.msra.mxu0 0.0
  %5918 = vmatprep.subr.mxu0 0.0
  %5919 = vmatpush1.msra.mxu0 0.0
  %5920 = vmatprep.subr.mxu0 0.0
  %5921 = vmatpush1.msra.mxu0 0.0
  %5922 = vmatprep.subr.mxu0 0.0
  %5923 = vmatpush1.msra.mxu0 0.0
  %5924 = vmatprep.subr.mxu0 0.0
  %5925 = vmatpush1.msra.mxu0 0.0
  %5926 = vmatprep.subr.mxu0 0.0
  %5927 = vmatpush1.msra.mxu0 0.0
  %5928 = vmatprep.subr.mxu0 0.0
  %5929 = vmatpush1.msra.mxu0 0.0
  %5930 = vmatprep.subr.mxu0 0.0
  %5931 = vmatpush1.msra.mxu0 0.0
  %5932 = vmatprep.subr.mxu0 0.0
  %5933 = vmatpush1.msra.mxu0 0.0
  %5934 = vmatprep.subr.mxu0 0.0
  %5935 = vmatpush1.msra.mxu0 0.0
  %5936 = vmatprep.mubr.f32.mxu0 0.0
  %5937 = vmatmul.mubr.f32.gmra.mrb[0].mxu0 %v5849
  %v5938 = vpop.f32.mrb[0].mxu0
  %v5939 = vadd.f32 0.0, %v5938
  %v5940 = vpop.f32.mrb[0].mxu0
  %5941 = vmatprep.mubr.f32.mxu0 0.0
  %5942 = vmatmul.mubr.f32.gmra.mrb[0].mxu0 %v5852
  %v5943 = vpop.f32.mrb[0].mxu0
  %v5944 = vadd.f32 0.0, %v5943
  %v5945 = vpop.f32.mrb[0].mxu0
  %5946 = vmatprep.mubr.f32.mxu0 0.0
  %5947 = vmatmul.mubr.f32.gmra.mrb[0].mxu0 %v5855
  %v5948 = vpop.f32.mrb[0].mxu0
  %v5949 = vadd.f32 0.0, %v5948
  %v5950 = vpop.f32.mrb[0].mxu0
  %5951 = vmatprep.mubr.f32.mxu0 0.0
  %5952 = vmatmul.mubr.f32.gmra.mrb[0].mxu0 %v5858
  %v5953 = vpop.f32.mrb[0].mxu0
  %v5954 = vadd.f32 0.0, %v5953
  %v5955 = vpop.f32.mrb[0].mxu0
  %5956 = vmatprep.mubr.f32.mxu0 0.0
  %5957 = vmatmul.mubr.f32.gmra.mrb[0].mxu0 %v5861
  %v5958 = vpop.f32.mrb[0].mxu0
  %v5959 = vadd.f32 0.0, %v5958
  %v5960 = vpop.f32.mrb[0].mxu0
  %5961 = vmatprep.mubr.f32.mxu0 0.0
  %5962 = vmatmul.mubr.f32.gmra.mrb[0].mxu0 %v5864
  %v5963 = vpop.f32.mrb[0].mxu0
  %v5964 = vadd.f32 0.0, %v5963
  %v5965 = vpop.f32.mrb[0].mxu0
  %5966 = vmatprep.mubr.f32.mxu0 0.0
  %5967 = vmatmul.mubr.f32.gmra.mrb[0].mxu0 %v5867
  %v5968 = vpop.f32.mrb[0].mxu0
  %v5969 = vadd.f32 0.0, %v5968
  %v5970 = vpop.f32.mrb[0].mxu0
  %5971 = vmatprep.mubr.f32.mxu0 0.0
  %5972 = vmatmul.mubr.f32.gmra.mrb[0].mxu0 %v5870
  %v5973 = vpop.f32.mrb[0].mxu0
  %v5974 = vadd.f32 0.0, %v5973
  %v5975 = vpop.f32.mrb[0].mxu0
  %5976 = vdwg.mxu0
  %v5977 = vadd.f32 %v5813, %v5939
  %v5978 = vadd.f32 %v5814, %v5944
  %v5979 = vadd.f32 %v5815, %v5949
  %v5980 = vadd.f32 %v5816, %v5954
  %v5981 = vadd.f32 %v5817, %v5959
  %v5982 = vadd.f32 %v5818, %v5964
  %v5983 = vadd.f32 %v5819, %v5969
  %v5984 = vadd.f32 %v5820, %v5974
  %vm5985 = vcmask 982016
  %5986 = vst.msk [vmem:[#allocation4] sm:$0xff] %vm5985, %v5977
  %5987 = vst.msk [vmem:[#allocation4 + $0x8] sm:$0xff] %vm5985, %v5978
  %5988 = vst.msk [vmem:[#allocation4 + $0x10] sm:$0xff] %vm5985, %v5979
  %5989 = vst.msk [vmem:[#allocation4 + $0x18] sm:$0xff] %vm5985, %v5980
  %5990 = vst.msk [vmem:[#allocation4 + $0x20] sm:$0xff] %vm5985, %v5981
  %5991 = vst.msk [vmem:[#allocation4 + $0x28] sm:$0xff] %vm5985, %v5982
  %5992 = vst.msk [vmem:[#allocation4 + $0x30] sm:$0xff] %vm5985, %v5983
  %5993 = vst.msk [vmem:[#allocation4 + $0x38] sm:$0xff] %vm5985, %v5984
  %v5994 = vld [vmem:[#allocation4] ss:$8 sm:$0xf]
  %v5995 = vld [vmem:[#allocation4] ss:$8 sm:$0xf0]
  %v5996 = vor.u32 %v5994, %v5995
  %v5997 = vld [vmem:[%s8] sm:$0x1]
  %v5999 = vlaneseq
  %v6000 = vshrl.u32 %v5999, 7
  %v6001 = vsub.s32 0, %v6000
  %v6002 = vrot.slane %v5997, %v6001
  %v6004 = vadd.f32 %v5996, %v6002
  %v6005 = vsub.f32 0.0, %v6004
  %v6006 = vmul.f32 %v6005, 1.442695
  %v6007 = vpow.pop %v6006
  %v6008 = vadd.f32 %v6007, 1.0
  %v6009 = vrcp.pop %v6008
  %v6010 = vmul.f32 1.0, %v6009
  %v6011 = vld [vmem:[%s9] sm:$0xff]
  %v6012 = vld [vmem:[%s9 + $0x8] sm:$0xff]
  %v6013 = vld [vmem:[%s9 + $0x10] sm:$0xff]
  %v6014 = vld [vmem:[%s9 + $0x18] sm:$0xff]
  %v6015 = vld [vmem:[%s9 + $0x20] sm:$0xff]
  %v6016 = vld [vmem:[%s9 + $0x28] sm:$0xff]
  %v6017 = vld [vmem:[%s9 + $0x30] sm:$0xff]
  %v6018 = vld [vmem:[%s9 + $0x38] sm:$0xff]
  %v6019 = vld [vmem:[%s9 + $0x40] sm:$0xff]
  %v6020 = vld [vmem:[%s9 + $0x48] sm:$0xff]
  %v6021 = vld [vmem:[%s9 + $0x50] sm:$0xff]
  %v6022 = vld [vmem:[%s9 + $0x58] sm:$0xff]
  %v6023 = vld [vmem:[%s9 + $0x60] sm:$0xff]
  %v6024 = vld [vmem:[%s9 + $0x68] sm:$0xff]
  %v6025 = vld [vmem:[%s9 + $0x70] sm:$0xff]
  %v6026 = vld [vmem:[%s10] sm:$0x1]
  %v6028 = vlaneseq
  %v6029 = vshrl.u32 %v6028, 7
  %v6030 = vsub.s32 0, %v6029
  %v6031 = vrot.slane %v6026, %v6030
  %v6034 = vsel %vm5985, %v6010, 0
  %6036 = vmatprep.subr.mxu0 0.0
  %6037 = vmatpush1.msra.mxu0 %v6011
  %6038 = vmatprep.subr.mxu0 0.0
  %6039 = vmatpush1.msra.mxu0 %v6012
  %6040 = vmatprep.subr.mxu0 0.0
  %6041 = vmatpush1.msra.mxu0 %v6013
  %6042 = vmatprep.subr.mxu0 0.0
  %6043 = vmatpush1.msra.mxu0 %v6014
  %6044 = vmatprep.subr.mxu0 0.0
  %6045 = vmatpush1.msra.mxu0 %v6015
  %6046 = vmatprep.subr.mxu0 0.0
  %6047 = vmatpush1.msra.mxu0 %v6016
  %6048 = vmatprep.subr.mxu0 0.0
  %6049 = vmatpush1.msra.mxu0 %v6017
  %6050 = vmatprep.subr.mxu0 0.0
  %6051 = vmatpush1.msra.mxu0 %v6018
  %6052 = vmatprep.subr.mxu0 0.0
  %6053 = vmatpush1.msra.mxu0 %v6019
  %6054 = vmatprep.subr.mxu0 0.0
  %6055 = vmatpush1.msra.mxu0 %v6020
  %6056 = vmatprep.subr.mxu0 0.0
  %6057 = vmatpush1.msra.mxu0 %v6021
  %6058 = vmatprep.subr.mxu0 0.0
  %6059 = vmatpush1.msra.mxu0 %v6022
  %6060 = vmatprep.subr.mxu0 0.0
  %6061 = vmatpush1.msra.mxu0 %v6023
  %6062 = vmatprep.subr.mxu0 0.0
  %6063 = vmatpush1.msra.mxu0 %v6024
  %6064 = vmatprep.subr.mxu0 0.0
  %6065 = vmatpush1.msra.mxu0 %v6025
  %6066 = vmatprep.subr.mxu0 0.0
  %6067 = vmatpush1.msra.mxu0 0.0
  %6068 = vmatprep.subr.mxu0 0.0
  %6069 = vmatpush1.msra.mxu0 0.0
  %6070 = vmatprep.subr.mxu0 0.0
  %6071 = vmatpush1.msra.mxu0 0.0
  %6072 = vmatprep.subr.mxu0 0.0
  %6073 = vmatpush1.msra.mxu0 0.0
  %6074 = vmatprep.subr.mxu0 0.0
  %6075 = vmatpush1.msra.mxu0 0.0
  %6076 = vmatprep.subr.mxu0 0.0
  %6077 = vmatpush1.msra.mxu0 0.0
  %6078 = vmatprep.subr.mxu0 0.0
  %6079 = vmatpush1.msra.mxu0 0.0
  %6080 = vmatprep.subr.mxu0 0.0
  %6081 = vmatpush1.msra.mxu0 0.0
  %6082 = vmatprep.subr.mxu0 0.0
  %6083 = vmatpush1.msra.mxu0 0.0
  %6084 = vmatprep.subr.mxu0 0.0
  %6085 = vmatpush1.msra.mxu0 0.0
  %6086 = vmatprep.subr.mxu0 0.0
  %6087 = vmatpush1.msra.mxu0 0.0
  %6088 = vmatprep.subr.mxu0 0.0
  %6089 = vmatpush1.msra.mxu0 0.0
  %6090 = vmatprep.subr.mxu0 0.0
  %6091 = vmatpush1.msra.mxu0 0.0
  %6092 = vmatprep.subr.mxu0 0.0
  %6093 = vmatpush1.msra.mxu0 0.0
  %6094 = vmatprep.subr.mxu0 0.0
  %6095 = vmatpush1.msra.mxu0 0.0
  %6096 = vmatprep.subr.mxu0 0.0
  %6097 = vmatpush1.msra.mxu0 0.0
  %6098 = vmatprep.subr.mxu0 0.0
  %6099 = vmatpush1.msra.mxu0 0.0
  %6100 = vmatprep.mubr.f32.mxu0 0.0
  %6101 = vmatmul.mubr.f32.gmra.mrb[0].mxu0 %v6034
  %v6102 = vpop.f32.mrb[0].mxu0
  %v6103 = vadd.f32 %v6031, %v6102
  %v6104 = vpop.f32.mrb[0].mxu0
  %6105 = vdwg.mxu0
  %v6106 = vsub.f32 0.0, %v6103
  %v6107 = vmul.f32 %v6106, 1.442695
  %v6108 = vpow.pop %v6107
  %v6109 = vadd.f32 %v6108, 1.0
  %v6110 = vrcp.pop %v6109
  %v6111 = vmul.f32 1.0, %v6110
  %v6112 = vld [vmem:[%s11] sm:$0xff]
  %v6113 = vld [vmem:[%s11 + $0x8] sm:$0xff]
  %v6114 = vld [vmem:[%s11 + $0x10] sm:$0xff]
  %v6115 = vld [vmem:[%s11 + $0x18] sm:$0xff]
  %v6116 = vld [vmem:[%s11 + $0x20] sm:$0xff]
  %v6117 = vld [vmem:[%s11 + $0x28] sm:$0xff]
  %v6118 = vld [vmem:[%s11 + $0x30] sm:$0xff]
  %v6119 = vld [vmem:[%s11 + $0x38] sm:$0xff]
  %v6120 = vld [vmem:[%s11 + $0x40] sm:$0xff]
  %v6121 = vld [vmem:[%s11 + $0x48] sm:$0xff]
  %v6122 = vld [vmem:[%s11 + $0x50] sm:$0xf]
  %v6123 = vld [vmem:[%s12] sm:$0x1]
  %v6125 = vlaneseq
  %v6126 = vshrl.u32 %v6125, 7
  %v6127 = vsub.s32 0, %v6126
  %v6128 = vrot.slane %v6123, %v6127
  %v6131 = vsel %vm3143, %v6111, 0
  %v6134 = vsel %vm3396, %v6122, 0
  %6136 = vmatprep.subr.mxu0 0.0
  %6137 = vmatpush1.msra.mxu0 %v6112
  %6138 = vmatprep.subr.mxu0 0.0
  %6139 = vmatpush1.msra.mxu0 %v6113
  %6140 = vmatprep.subr.mxu0 0.0
  %6141 = vmatpush1.msra.mxu0 %v6114
  %6142 = vmatprep.subr.mxu0 0.0
  %6143 = vmatpush1.msra.mxu0 %v6115
  %6144 = vmatprep.subr.mxu0 0.0
  %6145 = vmatpush1.msra.mxu0 %v6116
  %6146 = vmatprep.subr.mxu0 0.0
  %6147 = vmatpush1.msra.mxu0 %v6117
  %6148 = vmatprep.subr.mxu0 0.0
  %6149 = vmatpush1.msra.mxu0 %v6118
  %6150 = vmatprep.subr.mxu0 0.0
  %6151 = vmatpush1.msra.mxu0 %v6119
  %6152 = vmatprep.subr.mxu0 0.0
  %6153 = vmatpush1.msra.mxu0 %v6120
  %6154 = vmatprep.subr.mxu0 0.0
  %6155 = vmatpush1.msra.mxu0 %v6121
  %6156 = vmatprep.subr.mxu0 0.0
  %6157 = vmatpush1.msra.mxu0 %v6134
  %6158 = vmatprep.subr.mxu0 0.0
  %6159 = vmatpush1.msra.mxu0 0.0
  %6160 = vmatprep.subr.mxu0 0.0
  %6161 = vmatpush1.msra.mxu0 0.0
  %6162 = vmatprep.subr.mxu0 0.0
  %6163 = vmatpush1.msra.mxu0 0.0
  %6164 = vmatprep.subr.mxu0 0.0
  %6165 = vmatpush1.msra.mxu0 0.0
  %6166 = vmatprep.subr.mxu0 0.0
  %6167 = vmatpush1.msra.mxu0 0.0
  %6168 = vmatprep.subr.mxu0 0.0
  %6169 = vmatpush1.msra.mxu0 0.0
  %6170 = vmatprep.subr.mxu0 0.0
  %6171 = vmatpush1.msra.mxu0 0.0
  %6172 = vmatprep.subr.mxu0 0.0
  %6173 = vmatpush1.msra.mxu0 0.0
  %6174 = vmatprep.subr.mxu0 0.0
  %6175 = vmatpush1.msra.mxu0 0.0
  %6176 = vmatprep.subr.mxu0 0.0
  %6177 = vmatpush1.msra.mxu0 0.0
  %6178 = vmatprep.subr.mxu0 0.0
  %6179 = vmatpush1.msra.mxu0 0.0
  %6180 = vmatprep.subr.mxu0 0.0
  %6181 = vmatpush1.msra.mxu0 0.0
  %6182 = vmatprep.subr.mxu0 0.0
  %6183 = vmatpush1.msra.mxu0 0.0
  %6184 = vmatprep.subr.mxu0 0.0
  %6185 = vmatpush1.msra.mxu0 0.0
  %6186 = vmatprep.subr.mxu0 0.0
  %6187 = vmatpush1.msra.mxu0 0.0
  %6188 = vmatprep.subr.mxu0 0.0
  %6189 = vmatpush1.msra.mxu0 0.0
  %6190 = vmatprep.subr.mxu0 0.0
  %6191 = vmatpush1.msra.mxu0 0.0
  %6192 = vmatprep.subr.mxu0 0.0
  %6193 = vmatpush1.msra.mxu0 0.0
  %6194 = vmatprep.subr.mxu0 0.0
  %6195 = vmatpush1.msra.mxu0 0.0
  %6196 = vmatprep.subr.mxu0 0.0
  %6197 = vmatpush1.msra.mxu0 0.0
  %6198 = vmatprep.subr.mxu0 0.0
  %6199 = vmatpush1.msra.mxu0 0.0
  %6200 = vmatprep.mubr.f32.mxu0 0.0
  %6201 = vmatmul.mubr.f32.gmra.mrb[0].mxu0 %v6131
  %v6202 = vpop.f32.mrb[0].mxu0
  %v6203 = vadd.f32 %v6128, %v6202
  %v6204 = vpop.f32.mrb[0].mxu0
  %6205 = vdwg.mxu0
  %vm6206 = vcmask 80896
  %6207 = vst.msk [vmem:[%s13] sm:$0xff] %vm6206, %v6203
  // Predicated region
  $region54: #{lenet_forward.1} parent=0 // pred_check
    _
  $region55: #{lenet_forward.1} parent=0 // pred_check_branch
    %6209 = sbr.rel (0) target = $region57
  $region56: #{lenet_forward.1} parent=0 // pred_region
    _
  $region57: #{lenet_forward.1} parent=0 // pred_fallthru
    _
  // Predicated region
  $region58: #{lenet_forward.1} parent=0 // pred_check
    _
  $region59: #{lenet_forward.1} parent=0 // pred_check_branch
    %6211 = sbr.rel (0) target = $region61
  $region60: #{lenet_forward.1} parent=0 // pred_region
    _
  $region61: #{lenet_forward.1} parent=0 // pred_fallthru
    _

</llo_original>
